<compile_context>
chip_gen: v7x
topology: tpu7x:2x2x1
jax: 0.10.0
libtpu: 0.0.40
codegen_flags: <defaults>
</compile_context>

<pallas_src>
import functools

import jax
import jax.numpy as jnp
from jax.experimental import pallas as pl
from jax.experimental.pallas import tpu as pltpu


# Static model hyper-parameters (from the nn.Module definition).
KH = KW = 5        # 5x5 kernels for both convs
K1_PAD = 32        # conv1 im2col K: 25 taps, zero-padded to 32
CIN_PAD = 32       # conv1-out / conv2-in channels: 20 -> 32 (4x less K pad vs 128)
COUT_PAD = 128     # conv2 output channels: 20 -> 128 (lane-dense output stores)


def _fused_conv_relu_kernel(p1_ref, w1_ref, b1_ref, w2_ref, b2_ref, o_ref,
                            y1_ref, *, bb, ho1, wo1p, ho2, wo2):
    """relu(conv2(relu(conv1(x)))) for a block of `bb` samples, fully in VMEM.

    p1_ref : (bb, ho1*wo1p, K1_PAD)      bf16  conv1 im2col patches
    w1_ref : (K1_PAD, CIN_PAD)           bf16  conv1 weights (zero padded)
    b1_ref : (1, CIN_PAD)                f32   conv1 bias
    w2_ref : (KH*KW, CIN_PAD, COUT_PAD)  bf16  conv2 weights, per-tap slices
    b2_ref : (1, COUT_PAD)               f32   conv2 bias
    o_ref  : (bb, ho2, wo2, COUT_PAD)    f32   output block (used as accumulator)
    y1_ref : (bb, ho1, wo1p, CIN_PAD)    f32   VMEM scratch for relu(conv1)
    """
    # ---- layer 1: one MXU matmul over the whole batch block (M = bb*192) ----
    m1 = bb * ho1 * wo1p
    y1 = jnp.dot(p1_ref[...].reshape(m1, K1_PAD), w1_ref[...],
                 preferred_element_type=jnp.float32)
    y1 = jnp.maximum(y1 + b1_ref[...], 0.0)              # bias + ReLU in f32
    # Park relu(conv1) in an f32 VMEM scratch so conv2's shifted windows are
    # plain addressed loads (value-slicing at sublane offsets 1..4 would force
    # cross-vreg shuffles / spills).
    y1_ref[...] = y1.reshape(bb, ho1, wo1p, CIN_PAD)

    # ---- layer 2: 25 per-tap matmuls accumulated into the output block -----
    m2 = bb * ho2 * wo2
    for t in range(KH * KW):
        ih, iw = divmod(t, KW)
        lhs = (y1_ref[:, ih:ih + ho2, iw:iw + wo2, :]
               .reshape(m2, CIN_PAD).astype(jnp.bfloat16))
        part = jnp.dot(lhs, w2_ref[t], preferred_element_type=jnp.float32)
        part = part.reshape(bb, ho2, wo2, COUT_PAD)
        if t == 0:
            o_ref[...] = part + b2_ref[...]               # fold bias into tap 0
        else:
            o_ref[...] += part
    o_ref[...] = jnp.maximum(o_ref[...], 0.0)             # final ReLU in f32


def fused_conv_relu_x2(x_nchw, w1, b1, w2, b2, *, batch_block=8,
                       nchw_output=True):
    """PyTorch-equivalent forward: relu(conv2(relu(conv1(x)))).

    x_nchw: (N,1,H,W).  w1: (5,5,1,20) HWIO, b1: (20,), w2: (5,5,20,20), b2: (20,).
    Returns NCHW by default; pass nchw_output=False to skip the consumer-side
    channel-slice + transpose pass and get NHWC (N, ho2, wo2, 20) directly.
    """
    n, cin, h, w = x_nchw.shape
    kh, kw, cin1, cout1 = w1.shape
    cout2 = w2.shape[3]
    assert (kh, kw) == (KH, KW) and cin == cin1 == 1
    assert cout1 <= CIN_PAD and w2.shape[2] == cout1 and cout2 <= COUT_PAD

    ho1, wo1 = h - KH + 1, w - KW + 1            # conv1 output spatial (12, 12)
    ho2, wo2 = ho1 - KH + 1, wo1 - KW + 1        # conv2 output spatial (8, 8)
    wo1p = ((wo1 + 7) // 8) * 8                  # padded conv1 width (16)
    # TODO(synk): general spatial sizes would need wo2 padding as well; the
    # in-kernel reshapes assume the conv2 width is a sublane multiple.
    assert wo2 % 8 == 0, "kernel assumes conv2 output width is a multiple of 8"

    bb = max(1, min(batch_block, n))             # samples per grid step
    n_blk = -(-n // bb)                          # number of grid steps
    n_pad = n_blk * bb

    f32, bf16 = jnp.float32, jnp.bfloat16
    x2d = x_nchw[:, 0, :, :].astype(f32)         # (N, H, W)
    if n_pad != n:
        x2d = jnp.pad(x2d, ((0, n_pad - n), (0, 0), (0, 0)))

    # conv1 im2col in the wrapper (pure layout plumbing; all MACs stay in-kernel).
    # TODO(synk): for very large N, build these patches in-kernel from raw x
    # blocks to avoid the ~12x HBM read inflation of p1 vs x.
    cols = [x2d[:, ih:ih + ho1, iw:iw + wo1]
            for ih in range(KH) for iw in range(KW)]
    p1 = jnp.stack(cols, axis=-1)                                  # (Np,12,12,25)
    p1 = jnp.pad(p1, ((0, 0), (0, 0), (0, wo1p - wo1), (0, K1_PAD - KH * KW)))
    p1 = p1.reshape(n_pad, ho1 * wo1p, K1_PAD).astype(bf16)        # (Np,192,32)

    # conv1 weights: (5,5,1,20) -> (25,20), zero-pad to (32,32) bf16; bias in f32.
    w1_eff = jnp.pad(w1.reshape(KH * KW, cout1).astype(f32),
                     ((0, K1_PAD - KH * KW), (0, CIN_PAD - cout1))).astype(bf16)
    b1_p = jnp.pad(b1.astype(f32), (0, CIN_PAD - cout1)).reshape(1, CIN_PAD)

    # conv2 weights: (5,5,20,20) -> per-tap (25, 32, 128) bf16; bias (1,128) f32.
    w2_eff = jnp.pad(w2.astype(f32),
                     ((0, 0), (0, 0),
                      (0, CIN_PAD - cout1), (0, COUT_PAD - cout2)))
    w2_eff = w2_eff.reshape(KH * KW, CIN_PAD, COUT_PAD).astype(bf16)
    b2_p = jnp.pad(b2.astype(f32), (0, COUT_PAD - cout2)).reshape(1, COUT_PAD)

    kernel = functools.partial(_fused_conv_relu_kernel,
                               bb=bb, ho1=ho1, wo1p=wo1p, ho2=ho2, wo2=wo2)

    out = pl.pallas_call(
        kernel,
        out_shape=jax.ShapeDtypeStruct((n_pad, ho2, wo2, COUT_PAD), f32),
        grid_spec=pltpu.PrefetchScalarGridSpec(
            num_scalar_prefetch=0,
            grid=(n_blk,),
            in_specs=[
                pl.BlockSpec((bb, ho1 * wo1p, K1_PAD), lambda i: (i, 0, 0)),
                pl.BlockSpec((K1_PAD, CIN_PAD), lambda i: (0, 0)),
                pl.BlockSpec((1, CIN_PAD), lambda i: (0, 0)),
                pl.BlockSpec((KH * KW, CIN_PAD, COUT_PAD), lambda i: (0, 0, 0)),
                pl.BlockSpec((1, COUT_PAD), lambda i: (0, 0)),
            ],
            out_specs=pl.BlockSpec((bb, ho2, wo2, COUT_PAD),
                                   lambda i: (i, 0, 0, 0)),
            # f32 scratch (not bf16) so the odd sublane-offset window reads stay
            # simple addressed loads; ~bb*24 KB, trivially fits VMEM.
            scratch_shapes=[pltpu.VMEM((bb, ho1, wo1p, CIN_PAD), jnp.float32)],
        ),
        compiler_params=pltpu.CompilerParams(
            # Split batch blocks across v7x's two TensorCores; no-op on v5e/v6e.
            dimension_semantics=("parallel",)),
    )(p1, w1_eff, b1_p, w2_eff, b2_p)

    out = out[:n, :, :, :cout2]                  # drop batch + channel-lane padding
    if not nchw_output:
        return out                               # NHWC, no extra output pass
    return jnp.transpose(out, (0, 3, 1, 2))      # NHWC -> NCHW (PyTorch layout)


@functools.partial(jax.jit, static_argnames=("batch_block",))
def model_forward(x_nchw, w1, b1, w2, b2, batch_block=4):
    return fused_conv_relu_x2(x_nchw, w1, b1, w2, b2, batch_block=batch_block)


def init_params(key):
    """Deterministic init matching nn.Conv2d shapes (uniform +/- 1/sqrt(fan_in))."""
    k1, k2, k3, k4 = jax.random.split(key, 4)
    fan1 = 1 * 5 * 5
    w1 = jax.random.uniform(k1, (5, 5, 1, 20), jnp.float32,
                            -1.0 / fan1 ** 0.5, 1.0 / fan1 ** 0.5)
    b1 = jax.random.uniform(k2, (20,), jnp.float32,
                            -1.0 / fan1 ** 0.5, 1.0 / fan1 ** 0.5)
    fan2 = 20 * 5 * 5
    w2 = jax.random.uniform(k3, (5, 5, 20, 20), jnp.float32,
                            -1.0 / fan2 ** 0.5, 1.0 / fan2 ** 0.5)
    b2 = jax.random.uniform(k4, (20,), jnp.float32,
                            -1.0 / fan2 ** 0.5, 1.0 / fan2 ** 0.5)
    return (w1, b1), (w2, b2)


if __name__ == "__main__":
    key = jax.random.PRNGKey(0)
    kx, kp = jax.random.split(key)

    # Small input consistent with conv1 = Conv2d(1, 20, 5): N=8, C=1, H=W=16.
    # batch_block=4 -> grid=(2,): two even grid steps (keeps both v7x TCs busy).
    x = jax.random.normal(kx, (8, 1, 16, 16), dtype=jnp.float32)
    (w1, b1), (w2, b2) = init_params(kp)

    out = model_forward(x, w1, b1, w2, b2)
    jax.block_until_ready(out)

    # Cross-check against a plain-JAX f32 reference (lax.conv).  Tolerance is
    # loosened vs the previous f32-operand version because the MXU operands are
    # now bf16 (accumulation stays f32).
    ref = jax.lax.conv_general_dilated(
        x, jnp.transpose(w1, (3, 2, 0, 1)), (1, 1), "VALID",
        dimension_numbers=("NCHW", "OIHW", "NCHW"))
    ref = jnp.maximum(ref + b1[None, :, None, None], 0.0)
    ref = jax.lax.conv_general_dilated(
        ref, jnp.transpose(w2, (3, 2, 0, 1)), (1, 1), "VALID",
        dimension_numbers=("NCHW", "OIHW", "NCHW"))
    ref = jnp.maximum(ref + b2[None, :, None, None], 0.0)

    assert out.shape == (8, 20, 8, 8), out.shape
    max_err = float(jnp.max(jnp.abs(out - ref)))
    assert jnp.allclose(out, ref, atol=2e-2, rtol=2e-2), f"max_err={max_err}"
    print("KERNEL_OK")
</pallas_src>

<mosaic_0001>
module attributes {stable_mosaic.version = 11 : i64} {
  func.func @_fused_conv_relu_kernel(%arg0: i32, %arg1: memref<4x192x32xbf16, #tpu.memory_space<vmem>>, %arg2: memref<32x32xbf16, #tpu.memory_space<vmem>>, %arg3: memref<1x32xf32, #tpu.memory_space<vmem>>, %arg4: memref<25x32x128xbf16, #tpu.memory_space<vmem>>, %arg5: memref<1x128xf32, #tpu.memory_space<vmem>>, %arg6: memref<4x8x8x128xf32, #tpu.memory_space<vmem>>, %arg7: memref<4x12x16x32xf32, #tpu.memory_space<vmem>>) attributes {dimension_semantics = [#tpu.dimension_semantics<parallel>], iteration_bounds = array<i64: 2>, scalar_prefetch = 0 : i64, scratch_operands = 1 : i64, tpu.core_type = #tpu.core_type<tc>, window_params = [{transform_indices = @transform_0, window_bounds = array<i64: 4, 192, 32>}, {pipeline_mode = #tpu.pipeline_mode<synchronous>, transform_indices = @transform_1, window_bounds = array<i64: 32, 32>}, {pipeline_mode = #tpu.pipeline_mode<synchronous>, transform_indices = @transform_2, window_bounds = array<i64: 1, 32>}, {pipeline_mode = #tpu.pipeline_mode<synchronous>, transform_indices = @transform_3, window_bounds = array<i64: 25, 32, 128>}, {pipeline_mode = #tpu.pipeline_mode<synchronous>, transform_indices = @transform_4, window_bounds = array<i64: 1, 128>}, {transform_indices = @transform_5, window_bounds = array<i64: 4, 8, 8, 128>}]} {
    %c0 = arith.constant 0 : index
    %c0_0 = arith.constant 0 : index
    %c0_1 = arith.constant 0 : index
    %0 = vector.load %arg1[%c0, %c0_0, %c0_1] : memref<4x192x32xbf16, #tpu.memory_space<vmem>>, vector<4x192x32xbf16>
    %1 = vector.shape_cast %0 : vector<4x192x32xbf16> to vector<768x32xbf16>
    %c0_2 = arith.constant 0 : index
    %c0_3 = arith.constant 0 : index
    %2 = vector.load %arg2[%c0_2, %c0_3] : memref<32x32xbf16, #tpu.memory_space<vmem>>, vector<32x32xbf16>
    %cst = arith.constant dense<0.000000e+00> : vector<768x32xf32>
    %3 = tpu.matmul %1, %2, %cst {dimension_numbers = #tpu.dot_dimension_numbers<[1], [0], [0], [1], [0, 0, 1, 1], [], []>} : vector<768x32xbf16>, vector<32x32xbf16>, vector<768x32xf32> -> vector<768x32xf32>
    %c0_4 = arith.constant 0 : index
    %c0_5 = arith.constant 0 : index
    %4 = vector.load %arg3[%c0_4, %c0_5] : memref<1x32xf32, #tpu.memory_space<vmem>>, vector<1x32xf32>
    %5 = vector.broadcast %4 : vector<1x32xf32> to vector<768x32xf32>
    %6 = arith.addf %3, %5 : vector<768x32xf32>
    %cst_6 = arith.constant 0.000000e+00 : f32
    %7 = vector.broadcast %cst_6 : f32 to vector<768x32xf32>
    %8 = arith.maximumf %6, %7 : vector<768x32xf32>
    %9 = vector.shape_cast %8 : vector<768x32xf32> to vector<4x12x16x32xf32>
    %c0_7 = arith.constant 0 : index
    %c0_8 = arith.constant 0 : index
    %c0_9 = arith.constant 0 : index
    %c0_10 = arith.constant 0 : index
    %10 = vector.load %arg7[%c0_7, %c0_8, %c0_9, %c0_10] : memref<4x12x16x32xf32, #tpu.memory_space<vmem>>, vector<4x12x16x32xf32>
    tpu.vector_store %arg7[%c0_7, %c0_8, %c0_9, %c0_10], %9 {strides = array<i32>} : memref<4x12x16x32xf32, #tpu.memory_space<vmem>>, vector<4x12x16x32xf32>,
    %c0_11 = arith.constant 0 : index
    %c0_12 = arith.constant 0 : index
    %c0_13 = arith.constant 0 : index
    %c0_14 = arith.constant 0 : index
    %11 = vector.load %arg7[%c0_11, %c0_12, %c0_13, %c0_14] : memref<4x12x16x32xf32, #tpu.memory_space<vmem>>, vector<4x8x8x32xf32>
    %12 = vector.shape_cast %11 : vector<4x8x8x32xf32> to vector<256x32xf32>
    %13 = arith.truncf %12 : vector<256x32xf32> to vector<256x32xbf16>
    %c0_15 = arith.constant 0 : index
    %c0_16 = arith.constant 0 : index
    %c0_17 = arith.constant 0 : index
    %14 = vector.load %arg4[%c0_15, %c0_16, %c0_17] : memref<25x32x128xbf16, #tpu.memory_space<vmem>>, vector<1x32x128xbf16>
    %15 = vector.shape_cast %14 : vector<1x32x128xbf16> to vector<32x128xbf16>
    %cst_18 = arith.constant dense<0.000000e+00> : vector<256x128xf32>
    %16 = tpu.matmul %13, %15, %cst_18 {dimension_numbers = #tpu.dot_dimension_numbers<[1], [0], [0], [1], [0, 0, 1, 1], [], []>} : vector<256x32xbf16>, vector<32x128xbf16>, vector<256x128xf32> -> vector<256x128xf32>
    %17 = vector.shape_cast %16 : vector<256x128xf32> to vector<4x8x8x128xf32>
    %c0_19 = arith.constant 0 : index
    %c0_20 = arith.constant 0 : index
    %18 = vector.load %arg5[%c0_19, %c0_20] : memref<1x128xf32, #tpu.memory_space<vmem>>, vector<1x128xf32>
    %19 = vector.shape_cast %18 : vector<1x128xf32> to vector<1x1x1x128xf32>
    %20 = vector.broadcast %19 : vector<1x1x1x128xf32> to vector<4x8x8x128xf32>
    %21 = arith.addf %17, %20 : vector<4x8x8x128xf32>
    %c0_21 = arith.constant 0 : index
    %c0_22 = arith.constant 0 : index
    %c0_23 = arith.constant 0 : index
    %c0_24 = arith.constant 0 : index
    %22 = vector.load %arg6[%c0_21, %c0_22, %c0_23, %c0_24] : memref<4x8x8x128xf32, #tpu.memory_space<vmem>>, vector<4x8x8x128xf32>
    tpu.vector_store %arg6[%c0_21, %c0_22, %c0_23, %c0_24], %21 {strides = array<i32>} : memref<4x8x8x128xf32, #tpu.memory_space<vmem>>, vector<4x8x8x128xf32>,
    %c0_25 = arith.constant 0 : index
    %c0_26 = arith.constant 0 : index
    %c1 = arith.constant 1 : index
    %c0_27 = arith.constant 0 : index
    %23 = vector.load %arg7[%c0_25, %c0_26, %c1, %c0_27] : memref<4x12x16x32xf32, #tpu.memory_space<vmem>>, vector<4x8x8x32xf32>
    %24 = vector.shape_cast %23 : vector<4x8x8x32xf32> to vector<256x32xf32>
    %25 = arith.truncf %24 : vector<256x32xf32> to vector<256x32xbf16>
    %c1_28 = arith.constant 1 : index
    %c0_29 = arith.constant 0 : index
    %c0_30 = arith.constant 0 : index
    %26 = vector.load %arg4[%c1_28, %c0_29, %c0_30] : memref<25x32x128xbf16, #tpu.memory_space<vmem>>, vector<1x32x128xbf16>
    %27 = vector.shape_cast %26 : vector<1x32x128xbf16> to vector<32x128xbf16>
    %cst_31 = arith.constant dense<0.000000e+00> : vector<256x128xf32>
    %28 = tpu.matmul %25, %27, %cst_31 {dimension_numbers = #tpu.dot_dimension_numbers<[1], [0], [0], [1], [0, 0, 1, 1], [], []>} : vector<256x32xbf16>, vector<32x128xbf16>, vector<256x128xf32> -> vector<256x128xf32>
    %29 = vector.shape_cast %28 : vector<256x128xf32> to vector<4x8x8x128xf32>
    %c0_32 = arith.constant 0 : index
    %c0_33 = arith.constant 0 : index
    %c0_34 = arith.constant 0 : index
    %c0_35 = arith.constant 0 : index
    %30 = vector.load %arg6[%c0_32, %c0_33, %c0_34, %c0_35] : memref<4x8x8x128xf32, #tpu.memory_space<vmem>>, vector<4x8x8x128xf32>
    %31 = arith.addf %30, %29 : vector<4x8x8x128xf32>
    %c0_36 = arith.constant 0 : index
    %c0_37 = arith.constant 0 : index
    %c0_38 = arith.constant 0 : index
    %c0_39 = arith.constant 0 : index
    %32 = vector.load %arg6[%c0_36, %c0_37, %c0_38, %c0_39] : memref<4x8x8x128xf32, #tpu.memory_space<vmem>>, vector<4x8x8x128xf32>
    tpu.vector_store %arg6[%c0_36, %c0_37, %c0_38, %c0_39], %31 {strides = array<i32>} : memref<4x8x8x128xf32, #tpu.memory_space<vmem>>, vector<4x8x8x128xf32>,
    %c0_40 = arith.constant 0 : index
    %c0_41 = arith.constant 0 : index
    %c2 = arith.constant 2 : index
    %c0_42 = arith.constant 0 : index
    %33 = vector.load %arg7[%c0_40, %c0_41, %c2, %c0_42] : memref<4x12x16x32xf32, #tpu.memory_space<vmem>>, vector<4x8x8x32xf32>
    %34 = vector.shape_cast %33 : vector<4x8x8x32xf32> to vector<256x32xf32>
    %35 = arith.truncf %34 : vector<256x32xf32> to vector<256x32xbf16>
    %c2_43 = arith.constant 2 : index
    %c0_44 = arith.constant 0 : index
    %c0_45 = arith.constant 0 : index
    %36 = vector.load %arg4[%c2_43, %c0_44, %c0_45] : memref<25x32x128xbf16, #tpu.memory_space<vmem>>, vector<1x32x128xbf16>
    %37 = vector.shape_cast %36 : vector<1x32x128xbf16> to vector<32x128xbf16>
    %cst_46 = arith.constant dense<0.000000e+00> : vector<256x128xf32>
    %38 = tpu.matmul %35, %37, %cst_46 {dimension_numbers = #tpu.dot_dimension_numbers<[1], [0], [0], [1], [0, 0, 1, 1], [], []>} : vector<256x32xbf16>, vector<32x128xbf16>, vector<256x128xf32> -> vector<256x128xf32>
    %39 = vector.shape_cast %38 : vector<256x128xf32> to vector<4x8x8x128xf32>
    %c0_47 = arith.constant 0 : index
    %c0_48 = arith.constant 0 : index
    %c0_49 = arith.constant 0 : index
    %c0_50 = arith.constant 0 : index
    %40 = vector.load %arg6[%c0_47, %c0_48, %c0_49, %c0_50] : memref<4x8x8x128xf32, #tpu.memory_space<vmem>>, vector<4x8x8x128xf32>
    %41 = arith.addf %40, %39 : vector<4x8x8x128xf32>
    %c0_51 = arith.constant 0 : index
    %c0_52 = arith.constant 0 : index
    %c0_53 = arith.constant 0 : index
    %c0_54 = arith.constant 0 : index
    %42 = vector.load %arg6[%c0_51, %c0_52, %c0_53, %c0_54] : memref<4x8x8x128xf32, #tpu.memory_space<vmem>>, vector<4x8x8x128xf32>
    tpu.vector_store %arg6[%c0_51, %c0_52, %c0_53, %c0_54], %41 {strides = array<i32>} : memref<4x8x8x128xf32, #tpu.memory_space<vmem>>, vector<4x8x8x128xf32>,
    %c0_55 = arith.constant 0 : index
    %c0_56 = arith.constant 0 : index
    %c3 = arith.constant 3 : index
    %c0_57 = arith.constant 0 : index
    %43 = vector.load %arg7[%c0_55, %c0_56, %c3, %c0_57] : memref<4x12x16x32xf32, #tpu.memory_space<vmem>>, vector<4x8x8x32xf32>
    %44 = vector.shape_cast %43 : vector<4x8x8x32xf32> to vector<256x32xf32>
    %45 = arith.truncf %44 : vector<256x32xf32> to vector<256x32xbf16>
    %c3_58 = arith.constant 3 : index
    %c0_59 = arith.constant 0 : index
    %c0_60 = arith.constant 0 : index
    %46 = vector.load %arg4[%c3_58, %c0_59, %c0_60] : memref<25x32x128xbf16, #tpu.memory_space<vmem>>, vector<1x32x128xbf16>
    %47 = vector.shape_cast %46 : vector<1x32x128xbf16> to vector<32x128xbf16>
    %cst_61 = arith.constant dense<0.000000e+00> : vector<256x128xf32>
    %48 = tpu.matmul %45, %47, %cst_61 {dimension_numbers = #tpu.dot_dimension_numbers<[1], [0], [0], [1], [0, 0, 1, 1], [], []>} : vector<256x32xbf16>, vector<32x128xbf16>, vector<256x128xf32> -> vector<256x128xf32>
    %49 = vector.shape_cast %48 : vector<256x128xf32> to vector<4x8x8x128xf32>
    %c0_62 = arith.constant 0 : index
    %c0_63 = arith.constant 0 : index
    %c0_64 = arith.constant 0 : index
    %c0_65 = arith.constant 0 : index
    %50 = vector.load %arg6[%c0_62, %c0_63, %c0_64, %c0_65] : memref<4x8x8x128xf32, #tpu.memory_space<vmem>>, vector<4x8x8x128xf32>
    %51 = arith.addf %50, %49 : vector<4x8x8x128xf32>
    %c0_66 = arith.constant 0 : index
    %c0_67 = arith.constant 0 : index
    %c0_68 = arith.constant 0 : index
    %c0_69 = arith.constant 0 : index
    %52 = vector.load %arg6[%c0_66, %c0_67, %c0_68, %c0_69] : memref<4x8x8x128xf32, #tpu.memory_space<vmem>>, vector<4x8x8x128xf32>
    tpu.vector_store %arg6[%c0_66, %c0_67, %c0_68, %c0_69], %51 {strides = array<i32>} : memref<4x8x8x128xf32, #tpu.memory_space<vmem>>, vector<4x8x8x128xf32>,
    %c0_70 = arith.constant 0 : index
    %c0_71 = arith.constant 0 : index
    %c4 = arith.constant 4 : index
    %c0_72 = arith.constant 0 : index
    %53 = vector.load %arg7[%c0_70, %c0_71, %c4, %c0_72] : memref<4x12x16x32xf32, #tpu.memory_space<vmem>>, vector<4x8x8x32xf32>
    %54 = vector.shape_cast %53 : vector<4x8x8x32xf32> to vector<256x32xf32>
    %55 = arith.truncf %54 : vector<256x32xf32> to vector<256x32xbf16>
    %c4_73 = arith.constant 4 : index
    %c0_74 = arith.constant 0 : index
    %c0_75 = arith.constant 0 : index
    %56 = vector.load %arg4[%c4_73, %c0_74, %c0_75] : memref<25x32x128xbf16, #tpu.memory_space<vmem>>, vector<1x32x128xbf16>
    %57 = vector.shape_cast %56 : vector<1x32x128xbf16> to vector<32x128xbf16>
    %cst_76 = arith.constant dense<0.000000e+00> : vector<256x128xf32>
    %58 = tpu.matmul %55, %57, %cst_76 {dimension_numbers = #tpu.dot_dimension_numbers<[1], [0], [0], [1], [0, 0, 1, 1], [], []>} : vector<256x32xbf16>, vector<32x128xbf16>, vector<256x128xf32> -> vector<256x128xf32>
    %59 = vector.shape_cast %58 : vector<256x128xf32> to vector<4x8x8x128xf32>
    %c0_77 = arith.constant 0 : index
    %c0_78 = arith.constant 0 : index
    %c0_79 = arith.constant 0 : index
    %c0_80 = arith.constant 0 : index
    %60 = vector.load %arg6[%c0_77, %c0_78, %c0_79, %c0_80] : memref<4x8x8x128xf32, #tpu.memory_space<vmem>>, vector<4x8x8x128xf32>
    %61 = arith.addf %60, %59 : vector<4x8x8x128xf32>
    %c0_81 = arith.constant 0 : index
    %c0_82 = arith.constant 0 : index
    %c0_83 = arith.constant 0 : index
    %c0_84 = arith.constant 0 : index
    %62 = vector.load %arg6[%c0_81, %c0_82, %c0_83, %c0_84] : memref<4x8x8x128xf32, #tpu.memory_space<vmem>>, vector<4x8x8x128xf32>
    tpu.vector_store %arg6[%c0_81, %c0_82, %c0_83, %c0_84], %61 {strides = array<i32>} : memref<4x8x8x128xf32, #tpu.memory_space<vmem>>, vector<4x8x8x128xf32>,
    %c0_85 = arith.constant 0 : index
    %c1_86 = arith.constant 1 : index
    %c0_87 = arith.constant 0 : index
    %c0_88 = arith.constant 0 : index
    %63 = vector.load %arg7[%c0_85, %c1_86, %c0_87, %c0_88] : memref<4x12x16x32xf32, #tpu.memory_space<vmem>>, vector<4x8x8x32xf32>
    %64 = vector.shape_cast %63 : vector<4x8x8x32xf32> to vector<256x32xf32>
    %65 = arith.truncf %64 : vector<256x32xf32> to vector<256x32xbf16>
    %c5 = arith.constant 5 : index
    %c0_89 = arith.constant 0 : index
    %c0_90 = arith.constant 0 : index
    %66 = vector.load %arg4[%c5, %c0_89, %c0_90] : memref<25x32x128xbf16, #tpu.memory_space<vmem>>, vector<1x32x128xbf16>
    %67 = vector.shape_cast %66 : vector<1x32x128xbf16> to vector<32x128xbf16>
    %cst_91 = arith.constant dense<0.000000e+00> : vector<256x128xf32>
    %68 = tpu.matmul %65, %67, %cst_91 {dimension_numbers = #tpu.dot_dimension_numbers<[1], [0], [0], [1], [0, 0, 1, 1], [], []>} : vector<256x32xbf16>, vector<32x128xbf16>, vector<256x128xf32> -> vector<256x128xf32>
    %69 = vector.shape_cast %68 : vector<256x128xf32> to vector<4x8x8x128xf32>
    %c0_92 = arith.constant 0 : index
    %c0_93 = arith.constant 0 : index
    %c0_94 = arith.constant 0 : index
    %c0_95 = arith.constant 0 : index
    %70 = vector.load %arg6[%c0_92, %c0_93, %c0_94, %c0_95] : memref<4x8x8x128xf32, #tpu.memory_space<vmem>>, vector<4x8x8x128xf32>
    %71 = arith.addf %70, %69 : vector<4x8x8x128xf32>
    %c0_96 = arith.constant 0 : index
    %c0_97 = arith.constant 0 : index
    %c0_98 = arith.constant 0 : index
    %c0_99 = arith.constant 0 : index
    %72 = vector.load %arg6[%c0_96, %c0_97, %c0_98, %c0_99] : memref<4x8x8x128xf32, #tpu.memory_space<vmem>>, vector<4x8x8x128xf32>
    tpu.vector_store %arg6[%c0_96, %c0_97, %c0_98, %c0_99], %71 {strides = array<i32>} : memref<4x8x8x128xf32, #tpu.memory_space<vmem>>, vector<4x8x8x128xf32>,
    %c0_100 = arith.constant 0 : index
    %c1_101 = arith.constant 1 : index
    %c1_102 = arith.constant 1 : index
    %c0_103 = arith.constant 0 : index
    %73 = vector.load %arg7[%c0_100, %c1_101, %c1_102, %c0_103] : memref<4x12x16x32xf32, #tpu.memory_space<vmem>>, vector<4x8x8x32xf32>
    %74 = vector.shape_cast %73 : vector<4x8x8x32xf32> to vector<256x32xf32>
    %75 = arith.truncf %74 : vector<256x32xf32> to vector<256x32xbf16>
    %c6 = arith.constant 6 : index
    %c0_104 = arith.constant 0 : index
    %c0_105 = arith.constant 0 : index
    %76 = vector.load %arg4[%c6, %c0_104, %c0_105] : memref<25x32x128xbf16, #tpu.memory_space<vmem>>, vector<1x32x128xbf16>
    %77 = vector.shape_cast %76 : vector<1x32x128xbf16> to vector<32x128xbf16>
    %cst_106 = arith.constant dense<0.000000e+00> : vector<256x128xf32>
    %78 = tpu.matmul %75, %77, %cst_106 {dimension_numbers = #tpu.dot_dimension_numbers<[1], [0], [0], [1], [0, 0, 1, 1], [], []>} : vector<256x32xbf16>, vector<32x128xbf16>, vector<256x128xf32> -> vector<256x128xf32>
    %79 = vector.shape_cast %78 : vector<256x128xf32> to vector<4x8x8x128xf32>
    %c0_107 = arith.constant 0 : index
    %c0_108 = arith.constant 0 : index
    %c0_109 = arith.constant 0 : index
    %c0_110 = arith.constant 0 : index
    %80 = vector.load %arg6[%c0_107, %c0_108, %c0_109, %c0_110] : memref<4x8x8x128xf32, #tpu.memory_space<vmem>>, vector<4x8x8x128xf32>
    %81 = arith.addf %80, %79 : vector<4x8x8x128xf32>
    %c0_111 = arith.constant 0 : index
    %c0_112 = arith.constant 0 : index
    %c0_113 = arith.constant 0 : index
    %c0_114 = arith.constant 0 : index
    %82 = vector.load %arg6[%c0_111, %c0_112, %c0_113, %c0_114] : memref<4x8x8x128xf32, #tpu.memory_space<vmem>>, vector<4x8x8x128xf32>
    tpu.vector_store %arg6[%c0_111, %c0_112, %c0_113, %c0_114], %81 {strides = array<i32>} : memref<4x8x8x128xf32, #tpu.memory_space<vmem>>, vector<4x8x8x128xf32>,
    %c0_115 = arith.constant 0 : index
    %c1_116 = arith.constant 1 : index
    %c2_117 = arith.constant 2 : index
    %c0_118 = arith.constant 0 : index
    %83 = vector.load %arg7[%c0_115, %c1_116, %c2_117, %c0_118] : memref<4x12x16x32xf32, #tpu.memory_space<vmem>>, vector<4x8x8x32xf32>
    %84 = vector.shape_cast %83 : vector<4x8x8x32xf32> to vector<256x32xf32>
    %85 = arith.truncf %84 : vector<256x32xf32> to vector<256x32xbf16>
    %c7 = arith.constant 7 : index
    %c0_119 = arith.constant 0 : index
    %c0_120 = arith.constant 0 : index
    %86 = vector.load %arg4[%c7, %c0_119, %c0_120] : memref<25x32x128xbf16, #tpu.memory_space<vmem>>, vector<1x32x128xbf16>
    %87 = vector.shape_cast %86 : vector<1x32x128xbf16> to vector<32x128xbf16>
    %cst_121 = arith.constant dense<0.000000e+00> : vector<256x128xf32>
    %88 = tpu.matmul %85, %87, %cst_121 {dimension_numbers = #tpu.dot_dimension_numbers<[1], [0], [0], [1], [0, 0, 1, 1], [], []>} : vector<256x32xbf16>, vector<32x128xbf16>, vector<256x128xf32> -> vector<256x128xf32>
    %89 = vector.shape_cast %88 : vector<256x128xf32> to vector<4x8x8x128xf32>
    %c0_122 = arith.constant 0 : index
    %c0_123 = arith.constant 0 : index
    %c0_124 = arith.constant 0 : index
    %c0_125 = arith.constant 0 : index
    %90 = vector.load %arg6[%c0_122, %c0_123, %c0_124, %c0_125] : memref<4x8x8x128xf32, #tpu.memory_space<vmem>>, vector<4x8x8x128xf32>
    %91 = arith.addf %90, %89 : vector<4x8x8x128xf32>
    %c0_126 = arith.constant 0 : index
    %c0_127 = arith.constant 0 : index
    %c0_128 = arith.constant 0 : index
    %c0_129 = arith.constant 0 : index
    %92 = vector.load %arg6[%c0_126, %c0_127, %c0_128, %c0_129] : memref<4x8x8x128xf32, #tpu.memory_space<vmem>>, vector<4x8x8x128xf32>
    tpu.vector_store %arg6[%c0_126, %c0_127, %c0_128, %c0_129], %91 {strides = array<i32>} : memref<4x8x8x128xf32, #tpu.memory_space<vmem>>, vector<4x8x8x128xf32>,
    %c0_130 = arith.constant 0 : index
    %c1_131 = arith.constant 1 : index
    %c3_132 = arith.constant 3 : index
    %c0_133 = arith.constant 0 : index
    %93 = vector.load %arg7[%c0_130, %c1_131, %c3_132, %c0_133] : memref<4x12x16x32xf32, #tpu.memory_space<vmem>>, vector<4x8x8x32xf32>
    %94 = vector.shape_cast %93 : vector<4x8x8x32xf32> to vector<256x32xf32>
    %95 = arith.truncf %94 : vector<256x32xf32> to vector<256x32xbf16>
    %c8 = arith.constant 8 : index
    %c0_134 = arith.constant 0 : index
    %c0_135 = arith.constant 0 : index
    %96 = vector.load %arg4[%c8, %c0_134, %c0_135] : memref<25x32x128xbf16, #tpu.memory_space<vmem>>, vector<1x32x128xbf16>
    %97 = vector.shape_cast %96 : vector<1x32x128xbf16> to vector<32x128xbf16>
    %cst_136 = arith.constant dense<0.000000e+00> : vector<256x128xf32>
    %98 = tpu.matmul %95, %97, %cst_136 {dimension_numbers = #tpu.dot_dimension_numbers<[1], [0], [0], [1], [0, 0, 1, 1], [], []>} : vector<256x32xbf16>, vector<32x128xbf16>, vector<256x128xf32> -> vector<256x128xf32>
    %99 = vector.shape_cast %98 : vector<256x128xf32> to vector<4x8x8x128xf32>
    %c0_137 = arith.constant 0 : index
    %c0_138 = arith.constant 0 : index
    %c0_139 = arith.constant 0 : index
    %c0_140 = arith.constant 0 : index
    %100 = vector.load %arg6[%c0_137, %c0_138, %c0_139, %c0_140] : memref<4x8x8x128xf32, #tpu.memory_space<vmem>>, vector<4x8x8x128xf32>
    %101 = arith.addf %100, %99 : vector<4x8x8x128xf32>
    %c0_141 = arith.constant 0 : index
    %c0_142 = arith.constant 0 : index
    %c0_143 = arith.constant 0 : index
    %c0_144 = arith.constant 0 : index
    %102 = vector.load %arg6[%c0_141, %c0_142, %c0_143, %c0_144] : memref<4x8x8x128xf32, #tpu.memory_space<vmem>>, vector<4x8x8x128xf32>
    tpu.vector_store %arg6[%c0_141, %c0_142, %c0_143, %c0_144], %101 {strides = array<i32>} : memref<4x8x8x128xf32, #tpu.memory_space<vmem>>, vector<4x8x8x128xf32>,
    %c0_145 = arith.constant 0 : index
    %c1_146 = arith.constant 1 : index
    %c4_147 = arith.constant 4 : index
    %c0_148 = arith.constant 0 : index
    %103 = vector.load %arg7[%c0_145, %c1_146, %c4_147, %c0_148] : memref<4x12x16x32xf32, #tpu.memory_space<vmem>>, vector<4x8x8x32xf32>
    %104 = vector.shape_cast %103 : vector<4x8x8x32xf32> to vector<256x32xf32>
    %105 = arith.truncf %104 : vector<256x32xf32> to vector<256x32xbf16>
    %c9 = arith.constant 9 : index
    %c0_149 = arith.constant 0 : index
    %c0_150 = arith.constant 0 : index
    %106 = vector.load %arg4[%c9, %c0_149, %c0_150] : memref<25x32x128xbf16, #tpu.memory_space<vmem>>, vector<1x32x128xbf16>
    %107 = vector.shape_cast %106 : vector<1x32x128xbf16> to vector<32x128xbf16>
    %cst_151 = arith.constant dense<0.000000e+00> : vector<256x128xf32>
    %108 = tpu.matmul %105, %107, %cst_151 {dimension_numbers = #tpu.dot_dimension_numbers<[1], [0], [0], [1], [0, 0, 1, 1], [], []>} : vector<256x32xbf16>, vector<32x128xbf16>, vector<256x128xf32> -> vector<256x128xf32>
    %109 = vector.shape_cast %108 : vector<256x128xf32> to vector<4x8x8x128xf32>
    %c0_152 = arith.constant 0 : index
    %c0_153 = arith.constant 0 : index
    %c0_154 = arith.constant 0 : index
    %c0_155 = arith.constant 0 : index
    %110 = vector.load %arg6[%c0_152, %c0_153, %c0_154, %c0_155] : memref<4x8x8x128xf32, #tpu.memory_space<vmem>>, vector<4x8x8x128xf32>
    %111 = arith.addf %110, %109 : vector<4x8x8x128xf32>
    %c0_156 = arith.constant 0 : index
    %c0_157 = arith.constant 0 : index
    %c0_158 = arith.constant 0 : index
    %c0_159 = arith.constant 0 : index
    %112 = vector.load %arg6[%c0_156, %c0_157, %c0_158, %c0_159] : memref<4x8x8x128xf32, #tpu.memory_space<vmem>>, vector<4x8x8x128xf32>
    tpu.vector_store %arg6[%c0_156, %c0_157, %c0_158, %c0_159], %111 {strides = array<i32>} : memref<4x8x8x128xf32, #tpu.memory_space<vmem>>, vector<4x8x8x128xf32>,
    %c0_160 = arith.constant 0 : index
    %c2_161 = arith.constant 2 : index
    %c0_162 = arith.constant 0 : index
    %c0_163 = arith.constant 0 : index
    %113 = vector.load %arg7[%c0_160, %c2_161, %c0_162, %c0_163] : memref<4x12x16x32xf32, #tpu.memory_space<vmem>>, vector<4x8x8x32xf32>
    %114 = vector.shape_cast %113 : vector<4x8x8x32xf32> to vector<256x32xf32>
    %115 = arith.truncf %114 : vector<256x32xf32> to vector<256x32xbf16>
    %c10 = arith.constant 10 : index
    %c0_164 = arith.constant 0 : index
    %c0_165 = arith.constant 0 : index
    %116 = vector.load %arg4[%c10, %c0_164, %c0_165] : memref<25x32x128xbf16, #tpu.memory_space<vmem>>, vector<1x32x128xbf16>
    %117 = vector.shape_cast %116 : vector<1x32x128xbf16> to vector<32x128xbf16>
    %cst_166 = arith.constant dense<0.000000e+00> : vector<256x128xf32>
    %118 = tpu.matmul %115, %117, %cst_166 {dimension_numbers = #tpu.dot_dimension_numbers<[1], [0], [0], [1], [0, 0, 1, 1], [], []>} : vector<256x32xbf16>, vector<32x128xbf16>, vector<256x128xf32> -> vector<256x128xf32>
    %119 = vector.shape_cast %118 : vector<256x128xf32> to vector<4x8x8x128xf32>
    %c0_167 = arith.constant 0 : index
    %c0_168 = arith.constant 0 : index
    %c0_169 = arith.constant 0 : index
    %c0_170 = arith.constant 0 : index
    %120 = vector.load %arg6[%c0_167, %c0_168, %c0_169, %c0_170] : memref<4x8x8x128xf32, #tpu.memory_space<vmem>>, vector<4x8x8x128xf32>
    %121 = arith.addf %120, %119 : vector<4x8x8x128xf32>
    %c0_171 = arith.constant 0 : index
    %c0_172 = arith.constant 0 : index
    %c0_173 = arith.constant 0 : index
    %c0_174 = arith.constant 0 : index
    %122 = vector.load %arg6[%c0_171, %c0_172, %c0_173, %c0_174] : memref<4x8x8x128xf32, #tpu.memory_space<vmem>>, vector<4x8x8x128xf32>
    tpu.vector_store %arg6[%c0_171, %c0_172, %c0_173, %c0_174], %121 {strides = array<i32>} : memref<4x8x8x128xf32, #tpu.memory_space<vmem>>, vector<4x8x8x128xf32>,
    %c0_175 = arith.constant 0 : index
    %c2_176 = arith.constant 2 : index
    %c1_177 = arith.constant 1 : index
    %c0_178 = arith.constant 0 : index
    %123 = vector.load %arg7[%c0_175, %c2_176, %c1_177, %c0_178] : memref<4x12x16x32xf32, #tpu.memory_space<vmem>>, vector<4x8x8x32xf32>
    %124 = vector.shape_cast %123 : vector<4x8x8x32xf32> to vector<256x32xf32>
    %125 = arith.truncf %124 : vector<256x32xf32> to vector<256x32xbf16>
    %c11 = arith.constant 11 : index
    %c0_179 = arith.constant 0 : index
    %c0_180 = arith.constant 0 : index
    %126 = vector.load %arg4[%c11, %c0_179, %c0_180] : memref<25x32x128xbf16, #tpu.memory_space<vmem>>, vector<1x32x128xbf16>
    %127 = vector.shape_cast %126 : vector<1x32x128xbf16> to vector<32x128xbf16>
    %cst_181 = arith.constant dense<0.000000e+00> : vector<256x128xf32>
    %128 = tpu.matmul %125, %127, %cst_181 {dimension_numbers = #tpu.dot_dimension_numbers<[1], [0], [0], [1], [0, 0, 1, 1], [], []>} : vector<256x32xbf16>, vector<32x128xbf16>, vector<256x128xf32> -> vector<256x128xf32>
    %129 = vector.shape_cast %128 : vector<256x128xf32> to vector<4x8x8x128xf32>
    %c0_182 = arith.constant 0 : index
    %c0_183 = arith.constant 0 : index
    %c0_184 = arith.constant 0 : index
    %c0_185 = arith.constant 0 : index
    %130 = vector.load %arg6[%c0_182, %c0_183, %c0_184, %c0_185] : memref<4x8x8x128xf32, #tpu.memory_space<vmem>>, vector<4x8x8x128xf32>
    %131 = arith.addf %130, %129 : vector<4x8x8x128xf32>
    %c0_186 = arith.constant 0 : index
    %c0_187 = arith.constant 0 : index
    %c0_188 = arith.constant 0 : index
    %c0_189 = arith.constant 0 : index
    %132 = vector.load %arg6[%c0_186, %c0_187, %c0_188, %c0_189] : memref<4x8x8x128xf32, #tpu.memory_space<vmem>>, vector<4x8x8x128xf32>
    tpu.vector_store %arg6[%c0_186, %c0_187, %c0_188, %c0_189], %131 {strides = array<i32>} : memref<4x8x8x128xf32, #tpu.memory_space<vmem>>, vector<4x8x8x128xf32>,
    %c0_190 = arith.constant 0 : index
    %c2_191 = arith.constant 2 : index
    %c2_192 = arith.constant 2 : index
    %c0_193 = arith.constant 0 : index
    %133 = vector.load %arg7[%c0_190, %c2_191, %c2_192, %c0_193] : memref<4x12x16x32xf32, #tpu.memory_space<vmem>>, vector<4x8x8x32xf32>
    %134 = vector.shape_cast %133 : vector<4x8x8x32xf32> to vector<256x32xf32>
    %135 = arith.truncf %134 : vector<256x32xf32> to vector<256x32xbf16>
    %c12 = arith.constant 12 : index
    %c0_194 = arith.constant 0 : index
    %c0_195 = arith.constant 0 : index
    %136 = vector.load %arg4[%c12, %c0_194, %c0_195] : memref<25x32x128xbf16, #tpu.memory_space<vmem>>, vector<1x32x128xbf16>
    %137 = vector.shape_cast %136 : vector<1x32x128xbf16> to vector<32x128xbf16>
    %cst_196 = arith.constant dense<0.000000e+00> : vector<256x128xf32>
    %138 = tpu.matmul %135, %137, %cst_196 {dimension_numbers = #tpu.dot_dimension_numbers<[1], [0], [0], [1], [0, 0, 1, 1], [], []>} : vector<256x32xbf16>, vector<32x128xbf16>, vector<256x128xf32> -> vector<256x128xf32>
    %139 = vector.shape_cast %138 : vector<256x128xf32> to vector<4x8x8x128xf32>
    %c0_197 = arith.constant 0 : index
    %c0_198 = arith.constant 0 : index
    %c0_199 = arith.constant 0 : index
    %c0_200 = arith.constant 0 : index
    %140 = vector.load %arg6[%c0_197, %c0_198, %c0_199, %c0_200] : memref<4x8x8x128xf32, #tpu.memory_space<vmem>>, vector<4x8x8x128xf32>
    %141 = arith.addf %140, %139 : vector<4x8x8x128xf32>
    %c0_201 = arith.constant 0 : index
    %c0_202 = arith.constant 0 : index
    %c0_203 = arith.constant 0 : index
    %c0_204 = arith.constant 0 : index
    %142 = vector.load %arg6[%c0_201, %c0_202, %c0_203, %c0_204] : memref<4x8x8x128xf32, #tpu.memory_space<vmem>>, vector<4x8x8x128xf32>
    tpu.vector_store %arg6[%c0_201, %c0_202, %c0_203, %c0_204], %141 {strides = array<i32>} : memref<4x8x8x128xf32, #tpu.memory_space<vmem>>, vector<4x8x8x128xf32>,
    %c0_205 = arith.constant 0 : index
    %c2_206 = arith.constant 2 : index
    %c3_207 = arith.constant 3 : index
    %c0_208 = arith.constant 0 : index
    %143 = vector.load %arg7[%c0_205, %c2_206, %c3_207, %c0_208] : memref<4x12x16x32xf32, #tpu.memory_space<vmem>>, vector<4x8x8x32xf32>
    %144 = vector.shape_cast %143 : vector<4x8x8x32xf32> to vector<256x32xf32>
    %145 = arith.truncf %144 : vector<256x32xf32> to vector<256x32xbf16>
    %c13 = arith.constant 13 : index
    %c0_209 = arith.constant 0 : index
    %c0_210 = arith.constant 0 : index
    %146 = vector.load %arg4[%c13, %c0_209, %c0_210] : memref<25x32x128xbf16, #tpu.memory_space<vmem>>, vector<1x32x128xbf16>
    %147 = vector.shape_cast %146 : vector<1x32x128xbf16> to vector<32x128xbf16>
    %cst_211 = arith.constant dense<0.000000e+00> : vector<256x128xf32>
    %148 = tpu.matmul %145, %147, %cst_211 {dimension_numbers = #tpu.dot_dimension_numbers<[1], [0], [0], [1], [0, 0, 1, 1], [], []>} : vector<256x32xbf16>, vector<32x128xbf16>, vector<256x128xf32> -> vector<256x128xf32>
    %149 = vector.shape_cast %148 : vector<256x128xf32> to vector<4x8x8x128xf32>
    %c0_212 = arith.constant 0 : index
    %c0_213 = arith.constant 0 : index
    %c0_214 = arith.constant 0 : index
    %c0_215 = arith.constant 0 : index
    %150 = vector.load %arg6[%c0_212, %c0_213, %c0_214, %c0_215] : memref<4x8x8x128xf32, #tpu.memory_space<vmem>>, vector<4x8x8x128xf32>
    %151 = arith.addf %150, %149 : vector<4x8x8x128xf32>
    %c0_216 = arith.constant 0 : index
    %c0_217 = arith.constant 0 : index
    %c0_218 = arith.constant 0 : index
    %c0_219 = arith.constant 0 : index
    %152 = vector.load %arg6[%c0_216, %c0_217, %c0_218, %c0_219] : memref<4x8x8x128xf32, #tpu.memory_space<vmem>>, vector<4x8x8x128xf32>
    tpu.vector_store %arg6[%c0_216, %c0_217, %c0_218, %c0_219], %151 {strides = array<i32>} : memref<4x8x8x128xf32, #tpu.memory_space<vmem>>, vector<4x8x8x128xf32>,
    %c0_220 = arith.constant 0 : index
    %c2_221 = arith.constant 2 : index
    %c4_222 = arith.constant 4 : index
    %c0_223 = arith.constant 0 : index
    %153 = vector.load %arg7[%c0_220, %c2_221, %c4_222, %c0_223] : memref<4x12x16x32xf32, #tpu.memory_space<vmem>>, vector<4x8x8x32xf32>
    %154 = vector.shape_cast %153 : vector<4x8x8x32xf32> to vector<256x32xf32>
    %155 = arith.truncf %154 : vector<256x32xf32> to vector<256x32xbf16>
    %c14 = arith.constant 14 : index
    %c0_224 = arith.constant 0 : index
    %c0_225 = arith.constant 0 : index
    %156 = vector.load %arg4[%c14, %c0_224, %c0_225] : memref<25x32x128xbf16, #tpu.memory_space<vmem>>, vector<1x32x128xbf16>
    %157 = vector.shape_cast %156 : vector<1x32x128xbf16> to vector<32x128xbf16>
    %cst_226 = arith.constant dense<0.000000e+00> : vector<256x128xf32>
    %158 = tpu.matmul %155, %157, %cst_226 {dimension_numbers = #tpu.dot_dimension_numbers<[1], [0], [0], [1], [0, 0, 1, 1], [], []>} : vector<256x32xbf16>, vector<32x128xbf16>, vector<256x128xf32> -> vector<256x128xf32>
    %159 = vector.shape_cast %158 : vector<256x128xf32> to vector<4x8x8x128xf32>
    %c0_227 = arith.constant 0 : index
    %c0_228 = arith.constant 0 : index
    %c0_229 = arith.constant 0 : index
    %c0_230 = arith.constant 0 : index
    %160 = vector.load %arg6[%c0_227, %c0_228, %c0_229, %c0_230] : memref<4x8x8x128xf32, #tpu.memory_space<vmem>>, vector<4x8x8x128xf32>
    %161 = arith.addf %160, %159 : vector<4x8x8x128xf32>
    %c0_231 = arith.constant 0 : index
    %c0_232 = arith.constant 0 : index
    %c0_233 = arith.constant 0 : index
    %c0_234 = arith.constant 0 : index
    %162 = vector.load %arg6[%c0_231, %c0_232, %c0_233, %c0_234] : memref<4x8x8x128xf32, #tpu.memory_space<vmem>>, vector<4x8x8x128xf32>
    tpu.vector_store %arg6[%c0_231, %c0_232, %c0_233, %c0_234], %161 {strides = array<i32>} : memref<4x8x8x128xf32, #tpu.memory_space<vmem>>, vector<4x8x8x128xf32>,
    %c0_235 = arith.constant 0 : index
    %c3_236 = arith.constant 3 : index
    %c0_237 = arith.constant 0 : index
    %c0_238 = arith.constant 0 : index
    %163 = vector.load %arg7[%c0_235, %c3_236, %c0_237, %c0_238] : memref<4x12x16x32xf32, #tpu.memory_space<vmem>>, vector<4x8x8x32xf32>
    %164 = vector.shape_cast %163 : vector<4x8x8x32xf32> to vector<256x32xf32>
    %165 = arith.truncf %164 : vector<256x32xf32> to vector<256x32xbf16>
    %c15 = arith.constant 15 : index
    %c0_239 = arith.constant 0 : index
    %c0_240 = arith.constant 0 : index
    %166 = vector.load %arg4[%c15, %c0_239, %c0_240] : memref<25x32x128xbf16, #tpu.memory_space<vmem>>, vector<1x32x128xbf16>
    %167 = vector.shape_cast %166 : vector<1x32x128xbf16> to vector<32x128xbf16>
    %cst_241 = arith.constant dense<0.000000e+00> : vector<256x128xf32>
    %168 = tpu.matmul %165, %167, %cst_241 {dimension_numbers = #tpu.dot_dimension_numbers<[1], [0], [0], [1], [0, 0, 1, 1], [], []>} : vector<256x32xbf16>, vector<32x128xbf16>, vector<256x128xf32> -> vector<256x128xf32>
    %169 = vector.shape_cast %168 : vector<256x128xf32> to vector<4x8x8x128xf32>
    %c0_242 = arith.constant 0 : index
    %c0_243 = arith.constant 0 : index
    %c0_244 = arith.constant 0 : index
    %c0_245 = arith.constant 0 : index
    %170 = vector.load %arg6[%c0_242, %c0_243, %c0_244, %c0_245] : memref<4x8x8x128xf32, #tpu.memory_space<vmem>>, vector<4x8x8x128xf32>
    %171 = arith.addf %170, %169 : vector<4x8x8x128xf32>
    %c0_246 = arith.constant 0 : index
    %c0_247 = arith.constant 0 : index
    %c0_248 = arith.constant 0 : index
    %c0_249 = arith.constant 0 : index
    %172 = vector.load %arg6[%c0_246, %c0_247, %c0_248, %c0_249] : memref<4x8x8x128xf32, #tpu.memory_space<vmem>>, vector<4x8x8x128xf32>
    tpu.vector_store %arg6[%c0_246, %c0_247, %c0_248, %c0_249], %171 {strides = array<i32>} : memref<4x8x8x128xf32, #tpu.memory_space<vmem>>, vector<4x8x8x128xf32>,
    %c0_250 = arith.constant 0 : index
    %c3_251 = arith.constant 3 : index
    %c1_252 = arith.constant 1 : index
    %c0_253 = arith.constant 0 : index
    %173 = vector.load %arg7[%c0_250, %c3_251, %c1_252, %c0_253] : memref<4x12x16x32xf32, #tpu.memory_space<vmem>>, vector<4x8x8x32xf32>
    %174 = vector.shape_cast %173 : vector<4x8x8x32xf32> to vector<256x32xf32>
    %175 = arith.truncf %174 : vector<256x32xf32> to vector<256x32xbf16>
    %c16 = arith.constant 16 : index
    %c0_254 = arith.constant 0 : index
    %c0_255 = arith.constant 0 : index
    %176 = vector.load %arg4[%c16, %c0_254, %c0_255] : memref<25x32x128xbf16, #tpu.memory_space<vmem>>, vector<1x32x128xbf16>
    %177 = vector.shape_cast %176 : vector<1x32x128xbf16> to vector<32x128xbf16>
    %cst_256 = arith.constant dense<0.000000e+00> : vector<256x128xf32>
    %178 = tpu.matmul %175, %177, %cst_256 {dimension_numbers = #tpu.dot_dimension_numbers<[1], [0], [0], [1], [0, 0, 1, 1], [], []>} : vector<256x32xbf16>, vector<32x128xbf16>, vector<256x128xf32> -> vector<256x128xf32>
    %179 = vector.shape_cast %178 : vector<256x128xf32> to vector<4x8x8x128xf32>
    %c0_257 = arith.constant 0 : index
    %c0_258 = arith.constant 0 : index
    %c0_259 = arith.constant 0 : index
    %c0_260 = arith.constant 0 : index
    %180 = vector.load %arg6[%c0_257, %c0_258, %c0_259, %c0_260] : memref<4x8x8x128xf32, #tpu.memory_space<vmem>>, vector<4x8x8x128xf32>
    %181 = arith.addf %180, %179 : vector<4x8x8x128xf32>
    %c0_261 = arith.constant 0 : index
    %c0_262 = arith.constant 0 : index
    %c0_263 = arith.constant 0 : index
    %c0_264 = arith.constant 0 : index
    %182 = vector.load %arg6[%c0_261, %c0_262, %c0_263, %c0_264] : memref<4x8x8x128xf32, #tpu.memory_space<vmem>>, vector<4x8x8x128xf32>
    tpu.vector_store %arg6[%c0_261, %c0_262, %c0_263, %c0_264], %181 {strides = array<i32>} : memref<4x8x8x128xf32, #tpu.memory_space<vmem>>, vector<4x8x8x128xf32>,
    %c0_265 = arith.constant 0 : index
    %c3_266 = arith.constant 3 : index
    %c2_267 = arith.constant 2 : index
    %c0_268 = arith.constant 0 : index
    %183 = vector.load %arg7[%c0_265, %c3_266, %c2_267, %c0_268] : memref<4x12x16x32xf32, #tpu.memory_space<vmem>>, vector<4x8x8x32xf32>
    %184 = vector.shape_cast %183 : vector<4x8x8x32xf32> to vector<256x32xf32>
    %185 = arith.truncf %184 : vector<256x32xf32> to vector<256x32xbf16>
    %c17 = arith.constant 17 : index
    %c0_269 = arith.constant 0 : index
    %c0_270 = arith.constant 0 : index
    %186 = vector.load %arg4[%c17, %c0_269, %c0_270] : memref<25x32x128xbf16, #tpu.memory_space<vmem>>, vector<1x32x128xbf16>
    %187 = vector.shape_cast %186 : vector<1x32x128xbf16> to vector<32x128xbf16>
    %cst_271 = arith.constant dense<0.000000e+00> : vector<256x128xf32>
    %188 = tpu.matmul %185, %187, %cst_271 {dimension_numbers = #tpu.dot_dimension_numbers<[1], [0], [0], [1], [0, 0, 1, 1], [], []>} : vector<256x32xbf16>, vector<32x128xbf16>, vector<256x128xf32> -> vector<256x128xf32>
    %189 = vector.shape_cast %188 : vector<256x128xf32> to vector<4x8x8x128xf32>
    %c0_272 = arith.constant 0 : index
    %c0_273 = arith.constant 0 : index
    %c0_274 = arith.constant 0 : index
    %c0_275 = arith.constant 0 : index
    %190 = vector.load %arg6[%c0_272, %c0_273, %c0_274, %c0_275] : memref<4x8x8x128xf32, #tpu.memory_space<vmem>>, vector<4x8x8x128xf32>
    %191 = arith.addf %190, %189 : vector<4x8x8x128xf32>
    %c0_276 = arith.constant 0 : index
    %c0_277 = arith.constant 0 : index
    %c0_278 = arith.constant 0 : index
    %c0_279 = arith.constant 0 : index
    %192 = vector.load %arg6[%c0_276, %c0_277, %c0_278, %c0_279] : memref<4x8x8x128xf32, #tpu.memory_space<vmem>>, vector<4x8x8x128xf32>
    tpu.vector_store %arg6[%c0_276, %c0_277, %c0_278, %c0_279], %191 {strides = array<i32>} : memref<4x8x8x128xf32, #tpu.memory_space<vmem>>, vector<4x8x8x128xf32>,
    %c0_280 = arith.constant 0 : index
    %c3_281 = arith.constant 3 : index
    %c3_282 = arith.constant 3 : index
    %c0_283 = arith.constant 0 : index
    %193 = vector.load %arg7[%c0_280, %c3_281, %c3_282, %c0_283] : memref<4x12x16x32xf32, #tpu.memory_space<vmem>>, vector<4x8x8x32xf32>
    %194 = vector.shape_cast %193 : vector<4x8x8x32xf32> to vector<256x32xf32>
    %195 = arith.truncf %194 : vector<256x32xf32> to vector<256x32xbf16>
    %c18 = arith.constant 18 : index
    %c0_284 = arith.constant 0 : index
    %c0_285 = arith.constant 0 : index
    %196 = vector.load %arg4[%c18, %c0_284, %c0_285] : memref<25x32x128xbf16, #tpu.memory_space<vmem>>, vector<1x32x128xbf16>
    %197 = vector.shape_cast %196 : vector<1x32x128xbf16> to vector<32x128xbf16>
    %cst_286 = arith.constant dense<0.000000e+00> : vector<256x128xf32>
    %198 = tpu.matmul %195, %197, %cst_286 {dimension_numbers = #tpu.dot_dimension_numbers<[1], [0], [0], [1], [0, 0, 1, 1], [], []>} : vector<256x32xbf16>, vector<32x128xbf16>, vector<256x128xf32> -> vector<256x128xf32>
    %199 = vector.shape_cast %198 : vector<256x128xf32> to vector<4x8x8x128xf32>
    %c0_287 = arith.constant 0 : index
    %c0_288 = arith.constant 0 : index
    %c0_289 = arith.constant 0 : index
    %c0_290 = arith.constant 0 : index
    %200 = vector.load %arg6[%c0_287, %c0_288, %c0_289, %c0_290] : memref<4x8x8x128xf32, #tpu.memory_space<vmem>>, vector<4x8x8x128xf32>
    %201 = arith.addf %200, %199 : vector<4x8x8x128xf32>
    %c0_291 = arith.constant 0 : index
    %c0_292 = arith.constant 0 : index
    %c0_293 = arith.constant 0 : index
    %c0_294 = arith.constant 0 : index
    %202 = vector.load %arg6[%c0_291, %c0_292, %c0_293, %c0_294] : memref<4x8x8x128xf32, #tpu.memory_space<vmem>>, vector<4x8x8x128xf32>
    tpu.vector_store %arg6[%c0_291, %c0_292, %c0_293, %c0_294], %201 {strides = array<i32>} : memref<4x8x8x128xf32, #tpu.memory_space<vmem>>, vector<4x8x8x128xf32>,
    %c0_295 = arith.constant 0 : index
    %c3_296 = arith.constant 3 : index
    %c4_297 = arith.constant 4 : index
    %c0_298 = arith.constant 0 : index
    %203 = vector.load %arg7[%c0_295, %c3_296, %c4_297, %c0_298] : memref<4x12x16x32xf32, #tpu.memory_space<vmem>>, vector<4x8x8x32xf32>
    %204 = vector.shape_cast %203 : vector<4x8x8x32xf32> to vector<256x32xf32>
    %205 = arith.truncf %204 : vector<256x32xf32> to vector<256x32xbf16>
    %c19 = arith.constant 19 : index
    %c0_299 = arith.constant 0 : index
    %c0_300 = arith.constant 0 : index
    %206 = vector.load %arg4[%c19, %c0_299, %c0_300] : memref<25x32x128xbf16, #tpu.memory_space<vmem>>, vector<1x32x128xbf16>
    %207 = vector.shape_cast %206 : vector<1x32x128xbf16> to vector<32x128xbf16>
    %cst_301 = arith.constant dense<0.000000e+00> : vector<256x128xf32>
    %208 = tpu.matmul %205, %207, %cst_301 {dimension_numbers = #tpu.dot_dimension_numbers<[1], [0], [0], [1], [0, 0, 1, 1], [], []>} : vector<256x32xbf16>, vector<32x128xbf16>, vector<256x128xf32> -> vector<256x128xf32>
    %209 = vector.shape_cast %208 : vector<256x128xf32> to vector<4x8x8x128xf32>
    %c0_302 = arith.constant 0 : index
    %c0_303 = arith.constant 0 : index
    %c0_304 = arith.constant 0 : index
    %c0_305 = arith.constant 0 : index
    %210 = vector.load %arg6[%c0_302, %c0_303, %c0_304, %c0_305] : memref<4x8x8x128xf32, #tpu.memory_space<vmem>>, vector<4x8x8x128xf32>
    %211 = arith.addf %210, %209 : vector<4x8x8x128xf32>
    %c0_306 = arith.constant 0 : index
    %c0_307 = arith.constant 0 : index
    %c0_308 = arith.constant 0 : index
    %c0_309 = arith.constant 0 : index
    %212 = vector.load %arg6[%c0_306, %c0_307, %c0_308, %c0_309] : memref<4x8x8x128xf32, #tpu.memory_space<vmem>>, vector<4x8x8x128xf32>
    tpu.vector_store %arg6[%c0_306, %c0_307, %c0_308, %c0_309], %211 {strides = array<i32>} : memref<4x8x8x128xf32, #tpu.memory_space<vmem>>, vector<4x8x8x128xf32>,
    %c0_310 = arith.constant 0 : index
    %c4_311 = arith.constant 4 : index
    %c0_312 = arith.constant 0 : index
    %c0_313 = arith.constant 0 : index
    %213 = vector.load %arg7[%c0_310, %c4_311, %c0_312, %c0_313] : memref<4x12x16x32xf32, #tpu.memory_space<vmem>>, vector<4x8x8x32xf32>
    %214 = vector.shape_cast %213 : vector<4x8x8x32xf32> to vector<256x32xf32>
    %215 = arith.truncf %214 : vector<256x32xf32> to vector<256x32xbf16>
    %c20 = arith.constant 20 : index
    %c0_314 = arith.constant 0 : index
    %c0_315 = arith.constant 0 : index
    %216 = vector.load %arg4[%c20, %c0_314, %c0_315] : memref<25x32x128xbf16, #tpu.memory_space<vmem>>, vector<1x32x128xbf16>
    %217 = vector.shape_cast %216 : vector<1x32x128xbf16> to vector<32x128xbf16>
    %cst_316 = arith.constant dense<0.000000e+00> : vector<256x128xf32>
    %218 = tpu.matmul %215, %217, %cst_316 {dimension_numbers = #tpu.dot_dimension_numbers<[1], [0], [0], [1], [0, 0, 1, 1], [], []>} : vector<256x32xbf16>, vector<32x128xbf16>, vector<256x128xf32> -> vector<256x128xf32>
    %219 = vector.shape_cast %218 : vector<256x128xf32> to vector<4x8x8x128xf32>
    %c0_317 = arith.constant 0 : index
    %c0_318 = arith.constant 0 : index
    %c0_319 = arith.constant 0 : index
    %c0_320 = arith.constant 0 : index
    %220 = vector.load %arg6[%c0_317, %c0_318, %c0_319, %c0_320] : memref<4x8x8x128xf32, #tpu.memory_space<vmem>>, vector<4x8x8x128xf32>
    %221 = arith.addf %220, %219 : vector<4x8x8x128xf32>
    %c0_321 = arith.constant 0 : index
    %c0_322 = arith.constant 0 : index
    %c0_323 = arith.constant 0 : index
    %c0_324 = arith.constant 0 : index
    %222 = vector.load %arg6[%c0_321, %c0_322, %c0_323, %c0_324] : memref<4x8x8x128xf32, #tpu.memory_space<vmem>>, vector<4x8x8x128xf32>
    tpu.vector_store %arg6[%c0_321, %c0_322, %c0_323, %c0_324], %221 {strides = array<i32>} : memref<4x8x8x128xf32, #tpu.memory_space<vmem>>, vector<4x8x8x128xf32>,
    %c0_325 = arith.constant 0 : index
    %c4_326 = arith.constant 4 : index
    %c1_327 = arith.constant 1 : index
    %c0_328 = arith.constant 0 : index
    %223 = vector.load %arg7[%c0_325, %c4_326, %c1_327, %c0_328] : memref<4x12x16x32xf32, #tpu.memory_space<vmem>>, vector<4x8x8x32xf32>
    %224 = vector.shape_cast %223 : vector<4x8x8x32xf32> to vector<256x32xf32>
    %225 = arith.truncf %224 : vector<256x32xf32> to vector<256x32xbf16>
    %c21 = arith.constant 21 : index
    %c0_329 = arith.constant 0 : index
    %c0_330 = arith.constant 0 : index
    %226 = vector.load %arg4[%c21, %c0_329, %c0_330] : memref<25x32x128xbf16, #tpu.memory_space<vmem>>, vector<1x32x128xbf16>
    %227 = vector.shape_cast %226 : vector<1x32x128xbf16> to vector<32x128xbf16>
    %cst_331 = arith.constant dense<0.000000e+00> : vector<256x128xf32>
    %228 = tpu.matmul %225, %227, %cst_331 {dimension_numbers = #tpu.dot_dimension_numbers<[1], [0], [0], [1], [0, 0, 1, 1], [], []>} : vector<256x32xbf16>, vector<32x128xbf16>, vector<256x128xf32> -> vector<256x128xf32>
    %229 = vector.shape_cast %228 : vector<256x128xf32> to vector<4x8x8x128xf32>
    %c0_332 = arith.constant 0 : index
    %c0_333 = arith.constant 0 : index
    %c0_334 = arith.constant 0 : index
    %c0_335 = arith.constant 0 : index
    %230 = vector.load %arg6[%c0_332, %c0_333, %c0_334, %c0_335] : memref<4x8x8x128xf32, #tpu.memory_space<vmem>>, vector<4x8x8x128xf32>
    %231 = arith.addf %230, %229 : vector<4x8x8x128xf32>
    %c0_336 = arith.constant 0 : index
    %c0_337 = arith.constant 0 : index
    %c0_338 = arith.constant 0 : index
    %c0_339 = arith.constant 0 : index
    %232 = vector.load %arg6[%c0_336, %c0_337, %c0_338, %c0_339] : memref<4x8x8x128xf32, #tpu.memory_space<vmem>>, vector<4x8x8x128xf32>
    tpu.vector_store %arg6[%c0_336, %c0_337, %c0_338, %c0_339], %231 {strides = array<i32>} : memref<4x8x8x128xf32, #tpu.memory_space<vmem>>, vector<4x8x8x128xf32>,
    %c0_340 = arith.constant 0 : index
    %c4_341 = arith.constant 4 : index
    %c2_342 = arith.constant 2 : index
    %c0_343 = arith.constant 0 : index
    %233 = vector.load %arg7[%c0_340, %c4_341, %c2_342, %c0_343] : memref<4x12x16x32xf32, #tpu.memory_space<vmem>>, vector<4x8x8x32xf32>
    %234 = vector.shape_cast %233 : vector<4x8x8x32xf32> to vector<256x32xf32>
    %235 = arith.truncf %234 : vector<256x32xf32> to vector<256x32xbf16>
    %c22 = arith.constant 22 : index
    %c0_344 = arith.constant 0 : index
    %c0_345 = arith.constant 0 : index
    %236 = vector.load %arg4[%c22, %c0_344, %c0_345] : memref<25x32x128xbf16, #tpu.memory_space<vmem>>, vector<1x32x128xbf16>
    %237 = vector.shape_cast %236 : vector<1x32x128xbf16> to vector<32x128xbf16>
    %cst_346 = arith.constant dense<0.000000e+00> : vector<256x128xf32>
    %238 = tpu.matmul %235, %237, %cst_346 {dimension_numbers = #tpu.dot_dimension_numbers<[1], [0], [0], [1], [0, 0, 1, 1], [], []>} : vector<256x32xbf16>, vector<32x128xbf16>, vector<256x128xf32> -> vector<256x128xf32>
    %239 = vector.shape_cast %238 : vector<256x128xf32> to vector<4x8x8x128xf32>
    %c0_347 = arith.constant 0 : index
    %c0_348 = arith.constant 0 : index
    %c0_349 = arith.constant 0 : index
    %c0_350 = arith.constant 0 : index
    %240 = vector.load %arg6[%c0_347, %c0_348, %c0_349, %c0_350] : memref<4x8x8x128xf32, #tpu.memory_space<vmem>>, vector<4x8x8x128xf32>
    %241 = arith.addf %240, %239 : vector<4x8x8x128xf32>
    %c0_351 = arith.constant 0 : index
    %c0_352 = arith.constant 0 : index
    %c0_353 = arith.constant 0 : index
    %c0_354 = arith.constant 0 : index
    %242 = vector.load %arg6[%c0_351, %c0_352, %c0_353, %c0_354] : memref<4x8x8x128xf32, #tpu.memory_space<vmem>>, vector<4x8x8x128xf32>
    tpu.vector_store %arg6[%c0_351, %c0_352, %c0_353, %c0_354], %241 {strides = array<i32>} : memref<4x8x8x128xf32, #tpu.memory_space<vmem>>, vector<4x8x8x128xf32>,
    %c0_355 = arith.constant 0 : index
    %c4_356 = arith.constant 4 : index
    %c3_357 = arith.constant 3 : index
    %c0_358 = arith.constant 0 : index
    %243 = vector.load %arg7[%c0_355, %c4_356, %c3_357, %c0_358] : memref<4x12x16x32xf32, #tpu.memory_space<vmem>>, vector<4x8x8x32xf32>
    %244 = vector.shape_cast %243 : vector<4x8x8x32xf32> to vector<256x32xf32>
    %245 = arith.truncf %244 : vector<256x32xf32> to vector<256x32xbf16>
    %c23 = arith.constant 23 : index
    %c0_359 = arith.constant 0 : index
    %c0_360 = arith.constant 0 : index
    %246 = vector.load %arg4[%c23, %c0_359, %c0_360] : memref<25x32x128xbf16, #tpu.memory_space<vmem>>, vector<1x32x128xbf16>
    %247 = vector.shape_cast %246 : vector<1x32x128xbf16> to vector<32x128xbf16>
    %cst_361 = arith.constant dense<0.000000e+00> : vector<256x128xf32>
    %248 = tpu.matmul %245, %247, %cst_361 {dimension_numbers = #tpu.dot_dimension_numbers<[1], [0], [0], [1], [0, 0, 1, 1], [], []>} : vector<256x32xbf16>, vector<32x128xbf16>, vector<256x128xf32> -> vector<256x128xf32>
    %249 = vector.shape_cast %248 : vector<256x128xf32> to vector<4x8x8x128xf32>
    %c0_362 = arith.constant 0 : index
    %c0_363 = arith.constant 0 : index
    %c0_364 = arith.constant 0 : index
    %c0_365 = arith.constant 0 : index
    %250 = vector.load %arg6[%c0_362, %c0_363, %c0_364, %c0_365] : memref<4x8x8x128xf32, #tpu.memory_space<vmem>>, vector<4x8x8x128xf32>
    %251 = arith.addf %250, %249 : vector<4x8x8x128xf32>
    %c0_366 = arith.constant 0 : index
    %c0_367 = arith.constant 0 : index
    %c0_368 = arith.constant 0 : index
    %c0_369 = arith.constant 0 : index
    %252 = vector.load %arg6[%c0_366, %c0_367, %c0_368, %c0_369] : memref<4x8x8x128xf32, #tpu.memory_space<vmem>>, vector<4x8x8x128xf32>
    tpu.vector_store %arg6[%c0_366, %c0_367, %c0_368, %c0_369], %251 {strides = array<i32>} : memref<4x8x8x128xf32, #tpu.memory_space<vmem>>, vector<4x8x8x128xf32>,
    %c0_370 = arith.constant 0 : index
    %c4_371 = arith.constant 4 : index
    %c4_372 = arith.constant 4 : index
    %c0_373 = arith.constant 0 : index
    %253 = vector.load %arg7[%c0_370, %c4_371, %c4_372, %c0_373] : memref<4x12x16x32xf32, #tpu.memory_space<vmem>>, vector<4x8x8x32xf32>
    %254 = vector.shape_cast %253 : vector<4x8x8x32xf32> to vector<256x32xf32>
    %255 = arith.truncf %254 : vector<256x32xf32> to vector<256x32xbf16>
    %c24 = arith.constant 24 : index
    %c0_374 = arith.constant 0 : index
    %c0_375 = arith.constant 0 : index
    %256 = vector.load %arg4[%c24, %c0_374, %c0_375] : memref<25x32x128xbf16, #tpu.memory_space<vmem>>, vector<1x32x128xbf16>
    %257 = vector.shape_cast %256 : vector<1x32x128xbf16> to vector<32x128xbf16>
    %cst_376 = arith.constant dense<0.000000e+00> : vector<256x128xf32>
    %258 = tpu.matmul %255, %257, %cst_376 {dimension_numbers = #tpu.dot_dimension_numbers<[1], [0], [0], [1], [0, 0, 1, 1], [], []>} : vector<256x32xbf16>, vector<32x128xbf16>, vector<256x128xf32> -> vector<256x128xf32>
    %259 = vector.shape_cast %258 : vector<256x128xf32> to vector<4x8x8x128xf32>
    %c0_377 = arith.constant 0 : index
    %c0_378 = arith.constant 0 : index
    %c0_379 = arith.constant 0 : index
    %c0_380 = arith.constant 0 : index
    %260 = vector.load %arg6[%c0_377, %c0_378, %c0_379, %c0_380] : memref<4x8x8x128xf32, #tpu.memory_space<vmem>>, vector<4x8x8x128xf32>
    %261 = arith.addf %260, %259 : vector<4x8x8x128xf32>
    %c0_381 = arith.constant 0 : index
    %c0_382 = arith.constant 0 : index
    %c0_383 = arith.constant 0 : index
    %c0_384 = arith.constant 0 : index
    %262 = vector.load %arg6[%c0_381, %c0_382, %c0_383, %c0_384] : memref<4x8x8x128xf32, #tpu.memory_space<vmem>>, vector<4x8x8x128xf32>
    tpu.vector_store %arg6[%c0_381, %c0_382, %c0_383, %c0_384], %261 {strides = array<i32>} : memref<4x8x8x128xf32, #tpu.memory_space<vmem>>, vector<4x8x8x128xf32>,
    %c0_385 = arith.constant 0 : index
    %c0_386 = arith.constant 0 : index
    %c0_387 = arith.constant 0 : index
    %c0_388 = arith.constant 0 : index
    %263 = vector.load %arg6[%c0_385, %c0_386, %c0_387, %c0_388] : memref<4x8x8x128xf32, #tpu.memory_space<vmem>>, vector<4x8x8x128xf32>
    %cst_389 = arith.constant 0.000000e+00 : f32
    %264 = vector.broadcast %cst_389 : f32 to vector<4x8x8x128xf32>
    %265 = arith.maximumf %263, %264 : vector<4x8x8x128xf32>
    %c0_390 = arith.constant 0 : index
    %c0_391 = arith.constant 0 : index
    %c0_392 = arith.constant 0 : index
    %c0_393 = arith.constant 0 : index
    %266 = vector.load %arg6[%c0_390, %c0_391, %c0_392, %c0_393] : memref<4x8x8x128xf32, #tpu.memory_space<vmem>>, vector<4x8x8x128xf32>
    tpu.vector_store %arg6[%c0_390, %c0_391, %c0_392, %c0_393], %265 {strides = array<i32>} : memref<4x8x8x128xf32, #tpu.memory_space<vmem>>, vector<4x8x8x128xf32>,
    return
  }
  func.func @transform_0(%arg0: i32) -> (i32, i32, i32) {
    %c0_i32 = arith.constant 0 : i32
    %c0_i32_0 = arith.constant 0 : i32
    %c0_i32_1 = arith.constant 0 : i32
    return %arg0, %c0_i32, %c0_i32_0 : i32, i32, i32
  }
  func.func @transform_1(%arg0: i32) -> (i32, i32) {
    %c0_i32 = arith.constant 0 : i32
    %c0_i32_0 = arith.constant 0 : i32
    %c0_i32_1 = arith.constant 0 : i32
    return %c0_i32, %c0_i32_0 : i32, i32
  }
  func.func @transform_2(%arg0: i32) -> (i32, i32) {
    %c0_i32 = arith.constant 0 : i32
    %c0_i32_0 = arith.constant 0 : i32
    %c0_i32_1 = arith.constant 0 : i32
    return %c0_i32, %c0_i32_0 : i32, i32
  }
  func.func @transform_3(%arg0: i32) -> (i32, i32, i32) {
    %c0_i32 = arith.constant 0 : i32
    %c0_i32_0 = arith.constant 0 : i32
    %c0_i32_1 = arith.constant 0 : i32
    %c0_i32_2 = arith.constant 0 : i32
    return %c0_i32, %c0_i32_0, %c0_i32_1 : i32, i32, i32
  }
  func.func @transform_4(%arg0: i32) -> (i32, i32) {
    %c0_i32 = arith.constant 0 : i32
    %c0_i32_0 = arith.constant 0 : i32
    %c0_i32_1 = arith.constant 0 : i32
    return %c0_i32, %c0_i32_0 : i32, i32
  }
  func.func @transform_5(%arg0: i32) -> (i32, i32, i32, i32) {
    %c0_i32 = arith.constant 0 : i32
    %c0_i32_0 = arith.constant 0 : i32
    %c0_i32_1 = arith.constant 0 : i32
    %c0_i32_2 = arith.constant 0 : i32
    return %arg0, %c0_i32, %c0_i32_0, %c0_i32_1 : i32, i32, i32, i32
  }
}

</mosaic_0001>

<llo_original>
// kernel: model_forward.1
$region0: #{model_forward.1}
  #allocation0 [shape = 'u32[]', space=smem, size = 0x4, offset = 0x4, fixed_abs, tag = 'smem constant byte address 0x4 - core index']
  #allocation1 [shape = 'u32[144,128]{1,0:T(1,128)}', space=vmem, size = 0x12000, scoped, tag = 'internal scratch']
  #allocation2 [shape = 'f32[4,12,16,32]{3,2,1,0:T(8,128)}', space=vmem, size = 0x60000, scoped, tag = 'scratch operand']
  %s0 = inlined_call_operand.vmem [shape: bf16[8,192,32], index: 0, kind: input, shape index: {}]
  %s1 = inlined_call_operand.vmem [shape: bf16[32,32], index: 1, kind: input, shape index: {}]
  %s2 = inlined_call_operand.vmem [shape: f32[1,32], index: 2, kind: input, shape index: {}]
  %s3 = inlined_call_operand.vmem [shape: bf16[25,32,128], index: 3, kind: input, shape index: {}]
  %s4 = inlined_call_operand.vmem [shape: f32[1,128], index: 4, kind: input, shape index: {}]
  %s5 = inlined_call_operand.vmem [shape: f32[8,8,8,128], index: 5, kind: output, shape index: {}]
  %s6 = sld [smem:[#allocation0]]
  $region53: #{model_forward.1} parent=0
    _
  %s8 = ssub.s32 1, %s6
  %s9 = scalar_select 0, %s8, %s6
  loop: start=0, step=1, limit=4
  $region2: #{model_forward.1} parent=0 // loop_pre_header
    _
  $region3: #{model_forward.1} parent=0 // loop_header
    %s11 = sphi 0, %s15
    %p12 = scmp.ge.s32.totalorder %s11, 4
    %s21 = sphi 0, %s23
    %s24 = sphi 0, %s21
    %s25 = sphi 0, %s24
    %s41 = sphi 0, %s25
    %s45 = sphi 0, %s45
    %s47 = sphi 0, %s45
    %s48 = sphi 0, %s47
    %s62 = sphi 0, %s48
    %s66 = sphi 0, %s66
    %s68 = sphi 0, %s66
    %s69 = sphi 0, %s68
    %s83 = sphi 0, %s69
    %s87 = sphi 0, %s87
    %s89 = sphi 0, %s87
    %s90 = sphi 0, %s89
    %s104 = sphi 0, %s90
    %s108 = sphi 0, %s108
    %s110 = sphi 0, %s108
    %s111 = sphi 0, %s110
    %s125 = sphi 0, %s111
    %s131 = sphi 0, %s133
    %s134 = sphi 0, %s131
    %s135 = sphi 0, %s134
    %s151 = sphi 0, %s135
  $region4: #{model_forward.1} parent=0 // loop_header_branch
    %14 = sbr.rel (%p12) target = $region8
  $region5: #{model_forward.1} parent=0 // loop_body
    %s16 = ssub.s32 %s11, 1
    %s17 = ssub.s32 %s11, 2
    %s18 = sadd.s32 %s11, 1
    %s19 = ssub.s32 %s11, %s18
    %p20 = scmp.eq.s32.totalorder %s19, 0
    %s22 = sadd.s32 %s21, 1
    %s23 = scalar_select %p20, %s21, %s22
    %p26 = pneg %p20
    %p27 = scmp.eq.s32.totalorder %s11, 1
    %p28 = por %p26, %p27
    %p29 = scmp.ne.s32.totalorder %s21, %s24
    %p30 = scmp.eq.s32.totalorder %s11, 0
    %p31 = por %p29, %p30
    %p32 = scmp.ne.s32.totalorder %s21, %s24
    %p33 = scmp.eq.s32.totalorder %s16, 1
    %p34 = por %p32, %p33
    %p35 = scmp.ne.s32.totalorder %s24, %s25
    %p36 = scmp.eq.s32.totalorder %s16, 0
    %p37 = por %p35, %p36
    %p38 = scmp.ne.s32.totalorder %s24, %s25
    %p39 = scmp.eq.s32.totalorder %s17, 1
    %p40 = por %p38, %p39
    %p42 = scmp.ne.s32.totalorder %s25, %s41
    %p43 = scmp.eq.s32.totalorder %s17, 0
    %p44 = por %p42, %p43
    %s46 = sadd.s32 %s45, 1
    %p49 = scmp.eq.s32.totalorder %s11, 1
    %p50 = scmp.ne.s32.totalorder %s45, %s47
    %p51 = scmp.eq.s32.totalorder %s11, 0
    %p52 = por %p50, %p51
    %p53 = scmp.ne.s32.totalorder %s45, %s47
    %p54 = scmp.eq.s32.totalorder %s16, 1
    %p55 = por %p53, %p54
    %p56 = scmp.ne.s32.totalorder %s47, %s48
    %p57 = scmp.eq.s32.totalorder %s16, 0
    %p58 = por %p56, %p57
    %p59 = scmp.ne.s32.totalorder %s47, %s48
    %p60 = scmp.eq.s32.totalorder %s17, 1
    %p61 = por %p59, %p60
    %p63 = scmp.ne.s32.totalorder %s48, %s62
    %p64 = scmp.eq.s32.totalorder %s17, 0
    %p65 = por %p63, %p64
    %s67 = sadd.s32 %s66, 1
    %p70 = scmp.eq.s32.totalorder %s11, 1
    %p71 = scmp.ne.s32.totalorder %s66, %s68
    %p72 = scmp.eq.s32.totalorder %s11, 0
    %p73 = por %p71, %p72
    %p74 = scmp.ne.s32.totalorder %s66, %s68
    %p75 = scmp.eq.s32.totalorder %s16, 1
    %p76 = por %p74, %p75
    %p77 = scmp.ne.s32.totalorder %s68, %s69
    %p78 = scmp.eq.s32.totalorder %s16, 0
    %p79 = por %p77, %p78
    %p80 = scmp.ne.s32.totalorder %s68, %s69
    %p81 = scmp.eq.s32.totalorder %s17, 1
    %p82 = por %p80, %p81
    %p84 = scmp.ne.s32.totalorder %s69, %s83
    %p85 = scmp.eq.s32.totalorder %s17, 0
    %p86 = por %p84, %p85
    %s88 = sadd.s32 %s87, 1
    %p91 = scmp.eq.s32.totalorder %s11, 1
    %p92 = scmp.ne.s32.totalorder %s87, %s89
    %p93 = scmp.eq.s32.totalorder %s11, 0
    %p94 = por %p92, %p93
    %p95 = scmp.ne.s32.totalorder %s87, %s89
    %p96 = scmp.eq.s32.totalorder %s16, 1
    %p97 = por %p95, %p96
    %p98 = scmp.ne.s32.totalorder %s89, %s90
    %p99 = scmp.eq.s32.totalorder %s16, 0
    %p100 = por %p98, %p99
    %p101 = scmp.ne.s32.totalorder %s89, %s90
    %p102 = scmp.eq.s32.totalorder %s17, 1
    %p103 = por %p101, %p102
    %p105 = scmp.ne.s32.totalorder %s90, %s104
    %p106 = scmp.eq.s32.totalorder %s17, 0
    %p107 = por %p105, %p106
    %s109 = sadd.s32 %s108, 1
    %p112 = scmp.eq.s32.totalorder %s11, 1
    %p113 = scmp.ne.s32.totalorder %s108, %s110
    %p114 = scmp.eq.s32.totalorder %s11, 0
    %p115 = por %p113, %p114
    %p116 = scmp.ne.s32.totalorder %s108, %s110
    %p117 = scmp.eq.s32.totalorder %s16, 1
    %p118 = por %p116, %p117
    %p119 = scmp.ne.s32.totalorder %s110, %s111
    %p120 = scmp.eq.s32.totalorder %s16, 0
    %p121 = por %p119, %p120
    %p122 = scmp.ne.s32.totalorder %s110, %s111
    %p123 = scmp.eq.s32.totalorder %s17, 1
    %p124 = por %p122, %p123
    %p126 = scmp.ne.s32.totalorder %s111, %s125
    %p127 = scmp.eq.s32.totalorder %s17, 0
    %p128 = por %p126, %p127
    %s129 = ssub.s32 %s11, %s18
    %p130 = scmp.eq.s32.totalorder %s129, 0
    %s132 = sadd.s32 %s131, 1
    %s133 = scalar_select %p130, %s131, %s132
    %p136 = pneg %p130
    %p137 = scmp.eq.s32.totalorder %s11, 1
    %p138 = por %p136, %p137
    %p139 = scmp.ne.s32.totalorder %s131, %s134
    %p140 = scmp.eq.s32.totalorder %s11, 0
    %p141 = por %p139, %p140
    %p142 = scmp.ne.s32.totalorder %s131, %s134
    %p143 = scmp.eq.s32.totalorder %s16, 1
    %p144 = por %p142, %p143
    %p145 = scmp.ne.s32.totalorder %s134, %s135
    %p146 = scmp.eq.s32.totalorder %s16, 0
    %p147 = por %p145, %p146
    %p148 = scmp.ne.s32.totalorder %s134, %s135
    %p149 = scmp.eq.s32.totalorder %s17, 1
    %p150 = por %p148, %p149
    %p152 = scmp.ne.s32.totalorder %s135, %s151
    %p153 = scmp.eq.s32.totalorder %s17, 0
    %p154 = por %p152, %p153
    %p155 = scmp.le.s32.totalorder 1, %s11
    %p156 = scmp.lt.s32.totalorder %s11, 3
    %p157 = pnand %p155, %p156
    %p158 = pneg %p157
    // Predicated region
    $region9: #{model_forward.1} parent=5 // pred_check
      _
    $region10: #{model_forward.1} parent=5 // pred_check_branch
      %160 = sbr.rel (%p157) target = $region12
    $region11: #{model_forward.1} parent=5 // pred_region
      %s161 = ssub.s32 %s11, 1
      // Predicated region
      $region13: #{model_forward.1} parent=11 // pred_check
        %p162 = pneg %p58
      $region14: #{model_forward.1} parent=11 // pred_check_branch
        %164 = sbr.rel (%p162) target = $region16
      $region15: #{model_forward.1} parent=11 // pred_region
        _
      $region16: #{model_forward.1} parent=11 // pred_fallthru
        _
      // Predicated region
      $region17: #{model_forward.1} parent=11 // pred_check
        %p165 = pneg %p79
      $region18: #{model_forward.1} parent=11 // pred_check_branch
        %167 = sbr.rel (%p165) target = $region20
      $region19: #{model_forward.1} parent=11 // pred_region
        _
      $region20: #{model_forward.1} parent=11 // pred_fallthru
        _
      // Predicated region
      $region21: #{model_forward.1} parent=11 // pred_check
        %p168 = pneg %p100
      $region22: #{model_forward.1} parent=11 // pred_check_branch
        %170 = sbr.rel (%p168) target = $region24
      $region23: #{model_forward.1} parent=11 // pred_region
        _
      $region24: #{model_forward.1} parent=11 // pred_fallthru
        _
      // Predicated region
      $region25: #{model_forward.1} parent=11 // pred_check
        %p171 = pneg %p121
      $region26: #{model_forward.1} parent=11 // pred_check_branch
        %173 = sbr.rel (%p171) target = $region28
      $region27: #{model_forward.1} parent=11 // pred_region
        _
      $region28: #{model_forward.1} parent=11 // pred_fallthru
        _
    $region12: #{model_forward.1} parent=5 // pred_fallthru
      _
    %p174 = scmp.lt.s32.totalorder %s11, 2
    // Predicated region
    $region29: #{model_forward.1} parent=5 // pred_check
      %p175 = pneg %p174
    $region30: #{model_forward.1} parent=5 // pred_check_branch
      %177 = sbr.rel (%p175) target = $region32
    $region31: #{model_forward.1} parent=5 // pred_region
      // Predicated region
      $region33: #{model_forward.1} parent=31 // pred_check
        %p178 = pneg %p31
      $region34: #{model_forward.1} parent=31 // pred_check_branch
        %180 = sbr.rel (%p178) target = $region36
      $region35: #{model_forward.1} parent=31 // pred_region
        %s181 = smul.u32 4, %s11
        %p182 = scmp.lt.s32.totalorder %s181, 7
        %s183 = scalar_select %p182, %s181, 7
        %s184 = smul.addr %s183, 24
        %s185 = smul.addr %s184, 4
        %s186 = scalar_lea.vmem %s0, %s185
        %s187 = smul.u32 4, %s11
      $region36: #{model_forward.1} parent=31 // pred_fallthru
        _
    $region32: #{model_forward.1} parent=5 // pred_fallthru
      _
    %p188 = scmp.le.s32.totalorder 1, %s11
    %p189 = scmp.lt.s32.totalorder %s11, 3
    %p190 = pnand %p188, %p189
    %p191 = pneg %p190
    // Predicated region
    $region37: #{model_forward.1} parent=5 // pred_check
      _
    $region38: #{model_forward.1} parent=5 // pred_check_branch
      %193 = sbr.rel (%p190) target = $region40
    $region39: #{model_forward.1} parent=5 // pred_region
      %s194 = ssub.s32 %s11, 1
      %s195 = smul.u32 4, %s16
      %p196 = scmp.lt.s32.totalorder %s195, 7
      %s197 = scalar_select %p196, %s195, 7
      %s198 = smul.addr %s197, 24
      %s199 = smul.addr %s198, 4
      %s200 = scalar_lea.vmem %s0, %s199
      %p201 = pneg %p37
      %p202 = pneg %p34
      %p203 = pneg %p58
      %p204 = pneg %p55
      %p205 = pneg %p79
      %p206 = pneg %p76
      %p207 = pneg %p100
      %p208 = pneg %p97
      %p209 = pneg %p121
      %p210 = pneg %p118
      %p211 = pneg %p147
      %p212 = pneg %p144
      %s213 = smul.u32 4, %s16
      %p214 = scmp.lt.s32.totalorder %s213, 7
      %s215 = scalar_select %p214, %s213, 7
      %s216 = smul.addr %s215, 8
      %s217 = smul.addr %s216, 8
      %s218 = scalar_lea.vmem %s5, %s217
      %s219 = smul.u32 4, %s16
      %p220 = scmp.lt.s32.totalorder %s219, 7
      %s221 = scalar_select %p220, %s219, 7
      %s222 = smul.addr %s221, 24
      %s223 = smul.addr %s222, 4
      %s224 = scalar_lea.vmem %s0, %s223
      %s225 = smul.u32 4, %s16
      %s226 = smul.u32 4, %s16
      %p227 = scmp.lt.s32.totalorder %s226, 7
      %s228 = scalar_select %p227, %s226, 7
      %s229 = smul.addr %s228, 8
      %s230 = smul.addr %s229, 8
      %s231 = scalar_lea.vmem %s5, %s230
      %s232 = smul.u32 4, %s16
      %v234 = vld [vmem:[%s224] sm:$0xf]
      %v235 = vld [vmem:[%s224 + $0x4] sm:$0xf]
      %v236 = vld [vmem:[%s224 + $0x8] sm:$0xf]
      %v237 = vld [vmem:[%s224 + $0xc] sm:$0xf]
      %v238 = vld [vmem:[%s224 + $0x10] sm:$0xf]
      %v239 = vld [vmem:[%s224 + $0x14] sm:$0xf]
      %v240 = vld [vmem:[%s224 + $0x18] sm:$0xf]
      %v241 = vld [vmem:[%s224 + $0x1c] sm:$0xf]
      %v242 = vld [vmem:[%s224 + $0x20] sm:$0xf]
      %v243 = vld [vmem:[%s224 + $0x24] sm:$0xf]
      %v244 = vld [vmem:[%s224 + $0x28] sm:$0xf]
      %v245 = vld [vmem:[%s224 + $0x2c] sm:$0xf]
      %v246 = vld [vmem:[%s224 + $0x30] sm:$0xf]
      %v247 = vld [vmem:[%s224 + $0x34] sm:$0xf]
      %v248 = vld [vmem:[%s224 + $0x38] sm:$0xf]
      %v249 = vld [vmem:[%s224 + $0x3c] sm:$0xf]
      %v250 = vld [vmem:[%s224 + $0x40] sm:$0xf]
      %v251 = vld [vmem:[%s224 + $0x44] sm:$0xf]
      %v252 = vld [vmem:[%s224 + $0x48] sm:$0xf]
      %v253 = vld [vmem:[%s224 + $0x4c] sm:$0xf]
      %v254 = vld [vmem:[%s224 + $0x50] sm:$0xf]
      %v255 = vld [vmem:[%s224 + $0x54] sm:$0xf]
      %v256 = vld [vmem:[%s224 + $0x58] sm:$0xf]
      %v257 = vld [vmem:[%s224 + $0x5c] sm:$0xf]
      %v258 = vld [vmem:[%s224 + $0x60] sm:$0xf]
      %v259 = vld [vmem:[%s224 + $0x64] sm:$0xf]
      %v260 = vld [vmem:[%s224 + $0x68] sm:$0xf]
      %v261 = vld [vmem:[%s224 + $0x6c] sm:$0xf]
      %v262 = vld [vmem:[%s224 + $0x70] sm:$0xf]
      %v263 = vld [vmem:[%s224 + $0x74] sm:$0xf]
      %v264 = vld [vmem:[%s224 + $0x78] sm:$0xf]
      %v265 = vld [vmem:[%s224 + $0x7c] sm:$0xf]
      %v266 = vld [vmem:[%s224 + $0x80] sm:$0xf]
      %v267 = vld [vmem:[%s224 + $0x84] sm:$0xf]
      %v268 = vld [vmem:[%s224 + $0x88] sm:$0xf]
      %v269 = vld [vmem:[%s224 + $0x8c] sm:$0xf]
      %v270 = vld [vmem:[%s224 + $0x90] sm:$0xf]
      %v271 = vld [vmem:[%s224 + $0x94] sm:$0xf]
      %v272 = vld [vmem:[%s224 + $0x98] sm:$0xf]
      %v273 = vld [vmem:[%s224 + $0x9c] sm:$0xf]
      %v274 = vld [vmem:[%s224 + $0xa0] sm:$0xf]
      %v275 = vld [vmem:[%s224 + $0xa4] sm:$0xf]
      %v276 = vld [vmem:[%s224 + $0xa8] sm:$0xf]
      %v277 = vld [vmem:[%s224 + $0xac] sm:$0xf]
      %v278 = vld [vmem:[%s224 + $0xb0] sm:$0xf]
      %v279 = vld [vmem:[%s224 + $0xb4] sm:$0xf]
      %v280 = vld [vmem:[%s224 + $0xb8] sm:$0xf]
      %v281 = vld [vmem:[%s224 + $0xbc] sm:$0xf]
      %v282 = vld [vmem:[%s224 + $0xc0] sm:$0xf]
      %v283 = vld [vmem:[%s224 + $0xc4] sm:$0xf]
      %v284 = vld [vmem:[%s224 + $0xc8] sm:$0xf]
      %v285 = vld [vmem:[%s224 + $0xcc] sm:$0xf]
      %v286 = vld [vmem:[%s224 + $0xd0] sm:$0xf]
      %v287 = vld [vmem:[%s224 + $0xd4] sm:$0xf]
      %v288 = vld [vmem:[%s224 + $0xd8] sm:$0xf]
      %v289 = vld [vmem:[%s224 + $0xdc] sm:$0xf]
      %v290 = vld [vmem:[%s224 + $0xe0] sm:$0xf]
      %v291 = vld [vmem:[%s224 + $0xe4] sm:$0xf]
      %v292 = vld [vmem:[%s224 + $0xe8] sm:$0xf]
      %v293 = vld [vmem:[%s224 + $0xec] sm:$0xf]
      %v294 = vld [vmem:[%s224 + $0xf0] sm:$0xf]
      %v295 = vld [vmem:[%s224 + $0xf4] sm:$0xf]
      %v296 = vld [vmem:[%s224 + $0xf8] sm:$0xf]
      %v297 = vld [vmem:[%s224 + $0xfc] sm:$0xf]
      %v298 = vld [vmem:[%s224 + $0x100] sm:$0xf]
      %v299 = vld [vmem:[%s224 + $0x104] sm:$0xf]
      %v300 = vld [vmem:[%s224 + $0x108] sm:$0xf]
      %v301 = vld [vmem:[%s224 + $0x10c] sm:$0xf]
      %v302 = vld [vmem:[%s224 + $0x110] sm:$0xf]
      %v303 = vld [vmem:[%s224 + $0x114] sm:$0xf]
      %v304 = vld [vmem:[%s224 + $0x118] sm:$0xf]
      %v305 = vld [vmem:[%s224 + $0x11c] sm:$0xf]
      %v306 = vld [vmem:[%s224 + $0x120] sm:$0xf]
      %v307 = vld [vmem:[%s224 + $0x124] sm:$0xf]
      %v308 = vld [vmem:[%s224 + $0x128] sm:$0xf]
      %v309 = vld [vmem:[%s224 + $0x12c] sm:$0xf]
      %v310 = vld [vmem:[%s224 + $0x130] sm:$0xf]
      %v311 = vld [vmem:[%s224 + $0x134] sm:$0xf]
      %v312 = vld [vmem:[%s224 + $0x138] sm:$0xf]
      %v313 = vld [vmem:[%s224 + $0x13c] sm:$0xf]
      %v314 = vld [vmem:[%s224 + $0x140] sm:$0xf]
      %v315 = vld [vmem:[%s224 + $0x144] sm:$0xf]
      %v316 = vld [vmem:[%s224 + $0x148] sm:$0xf]
      %v317 = vld [vmem:[%s224 + $0x14c] sm:$0xf]
      %v318 = vld [vmem:[%s224 + $0x150] sm:$0xf]
      %v319 = vld [vmem:[%s224 + $0x154] sm:$0xf]
      %v320 = vld [vmem:[%s224 + $0x158] sm:$0xf]
      %v321 = vld [vmem:[%s224 + $0x15c] sm:$0xf]
      %v322 = vld [vmem:[%s224 + $0x160] sm:$0xf]
      %v323 = vld [vmem:[%s224 + $0x164] sm:$0xf]
      %v324 = vld [vmem:[%s224 + $0x168] sm:$0xf]
      %v325 = vld [vmem:[%s224 + $0x16c] sm:$0xf]
      %v326 = vld [vmem:[%s224 + $0x170] sm:$0xf]
      %v327 = vld [vmem:[%s224 + $0x174] sm:$0xf]
      %v328 = vld [vmem:[%s224 + $0x178] sm:$0xf]
      %v329 = vld [vmem:[%s224 + $0x17c] sm:$0xf]
      %v330 = vld [vmem:[%s1] sm:$0xf]
      %v331 = vld [vmem:[%s1 + $0x4] sm:$0xf]
      %v332 = vld [vmem:[%s1 + $0x8] sm:$0xf]
      %v333 = vld [vmem:[%s1 + $0xc] sm:$0xf]
      %v334 = vld [vmem:[%s2] sm:$0x1]
      %v336 = vlaneseq
      %v337 = vshrl.u32 %v336, 7
      %v338 = vsub.s32 0, %v337
      %v339 = vrot.slane %v334, %v338
      %v437 = vunpack.c.l.b16 %v234
      %v438 = vunpack.c.l.b16 %v235
      %v439 = vunpack.c.l.b16 %v236
      %v440 = vunpack.c.l.b16 %v237
      %v441 = vunpack.c.l.b16 %v238
      %v442 = vunpack.c.l.b16 %v239
      %v443 = vunpack.c.l.b16 %v240
      %v444 = vunpack.c.l.b16 %v241
      %v445 = vunpack.c.l.b16 %v242
      %v446 = vunpack.c.l.b16 %v243
      %v447 = vunpack.c.l.b16 %v244
      %v448 = vunpack.c.l.b16 %v245
      %v449 = vunpack.c.l.b16 %v246
      %v450 = vunpack.c.l.b16 %v247
      %v451 = vunpack.c.l.b16 %v248
      %v452 = vunpack.c.l.b16 %v249
      %v453 = vunpack.c.l.b16 %v250
      %v454 = vunpack.c.l.b16 %v251
      %v455 = vunpack.c.l.b16 %v252
      %v456 = vunpack.c.l.b16 %v253
      %v457 = vunpack.c.l.b16 %v254
      %v458 = vunpack.c.l.b16 %v255
      %v459 = vunpack.c.l.b16 %v256
      %v460 = vunpack.c.l.b16 %v257
      %v461 = vunpack.c.l.b16 %v258
      %v462 = vunpack.c.l.b16 %v259
      %v463 = vunpack.c.l.b16 %v260
      %v464 = vunpack.c.l.b16 %v261
      %v465 = vunpack.c.l.b16 %v262
      %v466 = vunpack.c.l.b16 %v263
      %v467 = vunpack.c.l.b16 %v264
      %v468 = vunpack.c.l.b16 %v265
      %v469 = vunpack.c.l.b16 %v266
      %v470 = vunpack.c.l.b16 %v267
      %v471 = vunpack.c.l.b16 %v268
      %v472 = vunpack.c.l.b16 %v269
      %v473 = vunpack.c.l.b16 %v270
      %v474 = vunpack.c.l.b16 %v271
      %v475 = vunpack.c.l.b16 %v272
      %v476 = vunpack.c.l.b16 %v273
      %v477 = vunpack.c.l.b16 %v274
      %v478 = vunpack.c.l.b16 %v275
      %v479 = vunpack.c.l.b16 %v276
      %v480 = vunpack.c.l.b16 %v277
      %v481 = vunpack.c.l.b16 %v278
      %v482 = vunpack.c.l.b16 %v279
      %v483 = vunpack.c.l.b16 %v280
      %v484 = vunpack.c.l.b16 %v281
      %v485 = vunpack.c.l.b16 %v282
      %v486 = vunpack.c.l.b16 %v283
      %v487 = vunpack.c.l.b16 %v284
      %v488 = vunpack.c.l.b16 %v285
      %v489 = vunpack.c.l.b16 %v286
      %v490 = vunpack.c.l.b16 %v287
      %v491 = vunpack.c.l.b16 %v288
      %v492 = vunpack.c.l.b16 %v289
      %v493 = vunpack.c.l.b16 %v290
      %v494 = vunpack.c.l.b16 %v291
      %v495 = vunpack.c.l.b16 %v292
      %v496 = vunpack.c.l.b16 %v293
      %v497 = vunpack.c.l.b16 %v294
      %v498 = vunpack.c.l.b16 %v295
      %v499 = vunpack.c.l.b16 %v296
      %v500 = vunpack.c.l.b16 %v297
      %v501 = vunpack.c.l.b16 %v298
      %v502 = vunpack.c.l.b16 %v299
      %v503 = vunpack.c.l.b16 %v300
      %v504 = vunpack.c.l.b16 %v301
      %v505 = vunpack.c.l.b16 %v302
      %v506 = vunpack.c.l.b16 %v303
      %v507 = vunpack.c.l.b16 %v304
      %v508 = vunpack.c.l.b16 %v305
      %v509 = vunpack.c.l.b16 %v306
      %v510 = vunpack.c.l.b16 %v307
      %v511 = vunpack.c.l.b16 %v308
      %v512 = vunpack.c.l.b16 %v309
      %v513 = vunpack.c.l.b16 %v310
      %v514 = vunpack.c.l.b16 %v311
      %v515 = vunpack.c.l.b16 %v312
      %v516 = vunpack.c.l.b16 %v313
      %v517 = vunpack.c.l.b16 %v314
      %v518 = vunpack.c.l.b16 %v315
      %v519 = vunpack.c.l.b16 %v316
      %v520 = vunpack.c.l.b16 %v317
      %v521 = vunpack.c.l.b16 %v318
      %v522 = vunpack.c.l.b16 %v319
      %v523 = vunpack.c.l.b16 %v320
      %v524 = vunpack.c.l.b16 %v321
      %v525 = vunpack.c.l.b16 %v322
      %v526 = vunpack.c.l.b16 %v323
      %v527 = vunpack.c.l.b16 %v324
      %v528 = vunpack.c.l.b16 %v325
      %v529 = vunpack.c.l.b16 %v326
      %v530 = vunpack.c.l.b16 %v327
      %v531 = vunpack.c.l.b16 %v328
      %v532 = vunpack.c.l.b16 %v329
      %v533 = vpack.c.b16 %v438, %v437
      %v534 = vpack.c.b16 %v440, %v439
      %v535 = vpack.c.b16 %v442, %v441
      %v536 = vpack.c.b16 %v444, %v443
      %v537 = vpack.c.b16 %v446, %v445
      %v538 = vpack.c.b16 %v448, %v447
      %v539 = vpack.c.b16 %v450, %v449
      %v540 = vpack.c.b16 %v452, %v451
      %v541 = vpack.c.b16 %v454, %v453
      %v542 = vpack.c.b16 %v456, %v455
      %v543 = vpack.c.b16 %v458, %v457
      %v544 = vpack.c.b16 %v460, %v459
      %v545 = vpack.c.b16 %v462, %v461
      %v546 = vpack.c.b16 %v464, %v463
      %v547 = vpack.c.b16 %v466, %v465
      %v548 = vpack.c.b16 %v468, %v467
      %v549 = vpack.c.b16 %v470, %v469
      %v550 = vpack.c.b16 %v472, %v471
      %v551 = vpack.c.b16 %v474, %v473
      %v552 = vpack.c.b16 %v476, %v475
      %v553 = vpack.c.b16 %v478, %v477
      %v554 = vpack.c.b16 %v480, %v479
      %v555 = vpack.c.b16 %v482, %v481
      %v556 = vpack.c.b16 %v484, %v483
      %v557 = vpack.c.b16 %v486, %v485
      %v558 = vpack.c.b16 %v488, %v487
      %v559 = vpack.c.b16 %v490, %v489
      %v560 = vpack.c.b16 %v492, %v491
      %v561 = vpack.c.b16 %v494, %v493
      %v562 = vpack.c.b16 %v496, %v495
      %v563 = vpack.c.b16 %v498, %v497
      %v564 = vpack.c.b16 %v500, %v499
      %v565 = vpack.c.b16 %v502, %v501
      %v566 = vpack.c.b16 %v504, %v503
      %v567 = vpack.c.b16 %v506, %v505
      %v568 = vpack.c.b16 %v508, %v507
      %v569 = vpack.c.b16 %v510, %v509
      %v570 = vpack.c.b16 %v512, %v511
      %v571 = vpack.c.b16 %v514, %v513
      %v572 = vpack.c.b16 %v516, %v515
      %v573 = vpack.c.b16 %v518, %v517
      %v574 = vpack.c.b16 %v520, %v519
      %v575 = vpack.c.b16 %v522, %v521
      %v576 = vpack.c.b16 %v524, %v523
      %v577 = vpack.c.b16 %v526, %v525
      %v578 = vpack.c.b16 %v528, %v527
      %v579 = vpack.c.b16 %v530, %v529
      %v580 = vpack.c.b16 %v532, %v531
      %v585 = vunpack.c.l.b16 %v330
      %v586 = vunpack.c.l.b16 %v331
      %v587 = vunpack.c.l.b16 %v332
      %v588 = vunpack.c.l.b16 %v333
      %v589 = vpack.c.b16 %v586, %v585
      %v590 = vpack.c.b16 %v588, %v587
      %vm593 = vcmask 261120
      %v595 = vsel %vm593, %v533, 0
      %v598 = vsel %vm593, %v534, 0
      %v601 = vsel %vm593, %v535, 0
      %v604 = vsel %vm593, %v536, 0
      %v607 = vsel %vm593, %v537, 0
      %v610 = vsel %vm593, %v538, 0
      %v613 = vsel %vm593, %v539, 0
      %v616 = vsel %vm593, %v540, 0
      %v619 = vsel %vm593, %v541, 0
      %v622 = vsel %vm593, %v542, 0
      %v625 = vsel %vm593, %v543, 0
      %v628 = vsel %vm593, %v544, 0
      %v631 = vsel %vm593, %v545, 0
      %v634 = vsel %vm593, %v546, 0
      %v637 = vsel %vm593, %v547, 0
      %v640 = vsel %vm593, %v548, 0
      %v643 = vsel %vm593, %v549, 0
      %v646 = vsel %vm593, %v550, 0
      %v649 = vsel %vm593, %v551, 0
      %v652 = vsel %vm593, %v552, 0
      %v655 = vsel %vm593, %v553, 0
      %v658 = vsel %vm593, %v554, 0
      %v661 = vsel %vm593, %v555, 0
      %v664 = vsel %vm593, %v556, 0
      %v667 = vsel %vm593, %v557, 0
      %v670 = vsel %vm593, %v558, 0
      %v673 = vsel %vm593, %v559, 0
      %v676 = vsel %vm593, %v560, 0
      %v679 = vsel %vm593, %v561, 0
      %v682 = vsel %vm593, %v562, 0
      %v685 = vsel %vm593, %v563, 0
      %v688 = vsel %vm593, %v564, 0
      %v691 = vsel %vm593, %v565, 0
      %v694 = vsel %vm593, %v566, 0
      %v697 = vsel %vm593, %v567, 0
      %v700 = vsel %vm593, %v568, 0
      %v703 = vsel %vm593, %v569, 0
      %v706 = vsel %vm593, %v570, 0
      %v709 = vsel %vm593, %v571, 0
      %v712 = vsel %vm593, %v572, 0
      %v715 = vsel %vm593, %v573, 0
      %v718 = vsel %vm593, %v574, 0
      %v721 = vsel %vm593, %v575, 0
      %v724 = vsel %vm593, %v576, 0
      %v727 = vsel %vm593, %v577, 0
      %v730 = vsel %vm593, %v578, 0
      %v733 = vsel %vm593, %v579, 0
      %v736 = vsel %vm593, %v580, 0
      %738 = vmatprep.subr.bf16.mxu0 0
      %739 = vmatpush1.bf16.msra.mxu0 %v589
      %740 = vmatprep.subr.bf16.mxu0 0
      %741 = vmatpush1.bf16.msra.mxu0 %v590
      %742 = vmatprep.subr.bf16.mxu0 0
      %743 = vmatpush1.bf16.msra.mxu0 0
      %744 = vmatprep.subr.bf16.mxu0 0
      %745 = vmatpush1.bf16.msra.mxu0 0
      %746 = vmatprep.subr.bf16.mxu0 0
      %747 = vmatpush1.bf16.msra.mxu0 0
      %748 = vmatprep.subr.bf16.mxu0 0
      %749 = vmatpush1.bf16.msra.mxu0 0
      %750 = vmatprep.subr.bf16.mxu0 0
      %751 = vmatpush1.bf16.msra.mxu0 0
      %752 = vmatprep.subr.bf16.mxu0 0
      %753 = vmatpush1.bf16.msra.mxu0 0
      %754 = vmatprep.subr.bf16.mxu0 0
      %755 = vmatpush1.bf16.msra.mxu0 0
      %756 = vmatprep.subr.bf16.mxu0 0
      %757 = vmatpush1.bf16.msra.mxu0 0
      %758 = vmatprep.subr.bf16.mxu0 0
      %759 = vmatpush1.bf16.msra.mxu0 0
      %760 = vmatprep.subr.bf16.mxu0 0
      %761 = vmatpush1.bf16.msra.mxu0 0
      %762 = vmatprep.subr.bf16.mxu0 0
      %763 = vmatpush1.bf16.msra.mxu0 0
      %764 = vmatprep.subr.bf16.mxu0 0
      %765 = vmatpush1.bf16.msra.mxu0 0
      %766 = vmatprep.subr.bf16.mxu0 0
      %767 = vmatpush1.bf16.msra.mxu0 0
      %768 = vmatprep.subr.bf16.mxu0 0
      %769 = vmatpush1.bf16.msra.mxu0 0
      %770 = vmatprep.mubr.bf16.mxu0 0
      %771 = vmatmul.mubr.bf16.gmra.mrb[0].mxu0 %v595
      %v772 = vpop.f32.mrb[0].mxu0
      %v773 = vadd.f32 %v339, %v772
      %v774 = vpop.f32.mrb[0].mxu0
      %v775 = vpop.f32.mrb[0].mxu0
      %v776 = vadd.f32 %v339, %v775
      %v777 = vpop.f32.mrb[0].mxu0
      %778 = vmatprep.mubr.bf16.mxu0 0
      %779 = vmatmul.mubr.bf16.gmra.mrb[0].mxu0 %v598
      %v780 = vpop.f32.mrb[0].mxu0
      %v781 = vadd.f32 %v339, %v780
      %v782 = vpop.f32.mrb[0].mxu0
      %v783 = vpop.f32.mrb[0].mxu0
      %v784 = vadd.f32 %v339, %v783
      %v785 = vpop.f32.mrb[0].mxu0
      %786 = vmatprep.mubr.bf16.mxu0 0
      %787 = vmatmul.mubr.bf16.gmra.mrb[0].mxu0 %v601
      %v788 = vpop.f32.mrb[0].mxu0
      %v789 = vadd.f32 %v339, %v788
      %v790 = vpop.f32.mrb[0].mxu0
      %v791 = vpop.f32.mrb[0].mxu0
      %v792 = vadd.f32 %v339, %v791
      %v793 = vpop.f32.mrb[0].mxu0
      %794 = vmatprep.mubr.bf16.mxu0 0
      %795 = vmatmul.mubr.bf16.gmra.mrb[0].mxu0 %v604
      %v796 = vpop.f32.mrb[0].mxu0
      %v797 = vadd.f32 %v339, %v796
      %v798 = vpop.f32.mrb[0].mxu0
      %v799 = vpop.f32.mrb[0].mxu0
      %v800 = vadd.f32 %v339, %v799
      %v801 = vpop.f32.mrb[0].mxu0
      %802 = vmatprep.mubr.bf16.mxu0 0
      %803 = vmatmul.mubr.bf16.gmra.mrb[0].mxu0 %v607
      %v804 = vpop.f32.mrb[0].mxu0
      %v805 = vadd.f32 %v339, %v804
      %v806 = vpop.f32.mrb[0].mxu0
      %v807 = vpop.f32.mrb[0].mxu0
      %v808 = vadd.f32 %v339, %v807
      %v809 = vpop.f32.mrb[0].mxu0
      %810 = vmatprep.mubr.bf16.mxu0 0
      %811 = vmatmul.mubr.bf16.gmra.mrb[0].mxu0 %v610
      %v812 = vpop.f32.mrb[0].mxu0
      %v813 = vadd.f32 %v339, %v812
      %v814 = vpop.f32.mrb[0].mxu0
      %v815 = vpop.f32.mrb[0].mxu0
      %v816 = vadd.f32 %v339, %v815
      %v817 = vpop.f32.mrb[0].mxu0
      %818 = vmatprep.mubr.bf16.mxu0 0
      %819 = vmatmul.mubr.bf16.gmra.mrb[0].mxu0 %v613
      %v820 = vpop.f32.mrb[0].mxu0
      %v821 = vadd.f32 %v339, %v820
      %v822 = vpop.f32.mrb[0].mxu0
      %v823 = vpop.f32.mrb[0].mxu0
      %v824 = vadd.f32 %v339, %v823
      %v825 = vpop.f32.mrb[0].mxu0
      %826 = vmatprep.mubr.bf16.mxu0 0
      %827 = vmatmul.mubr.bf16.gmra.mrb[0].mxu0 %v616
      %v828 = vpop.f32.mrb[0].mxu0
      %v829 = vadd.f32 %v339, %v828
      %v830 = vpop.f32.mrb[0].mxu0
      %v831 = vpop.f32.mrb[0].mxu0
      %v832 = vadd.f32 %v339, %v831
      %v833 = vpop.f32.mrb[0].mxu0
      %834 = vmatprep.mubr.bf16.mxu0 0
      %835 = vmatmul.mubr.bf16.gmra.mrb[0].mxu0 %v619
      %v836 = vpop.f32.mrb[0].mxu0
      %v837 = vadd.f32 %v339, %v836
      %v838 = vpop.f32.mrb[0].mxu0
      %v839 = vpop.f32.mrb[0].mxu0
      %v840 = vadd.f32 %v339, %v839
      %v841 = vpop.f32.mrb[0].mxu0
      %842 = vmatprep.mubr.bf16.mxu0 0
      %843 = vmatmul.mubr.bf16.gmra.mrb[0].mxu0 %v622
      %v844 = vpop.f32.mrb[0].mxu0
      %v845 = vadd.f32 %v339, %v844
      %v846 = vpop.f32.mrb[0].mxu0
      %v847 = vpop.f32.mrb[0].mxu0
      %v848 = vadd.f32 %v339, %v847
      %v849 = vpop.f32.mrb[0].mxu0
      %850 = vmatprep.mubr.bf16.mxu0 0
      %851 = vmatmul.mubr.bf16.gmra.mrb[0].mxu0 %v625
      %v852 = vpop.f32.mrb[0].mxu0
      %v853 = vadd.f32 %v339, %v852
      %v854 = vpop.f32.mrb[0].mxu0
      %v855 = vpop.f32.mrb[0].mxu0
      %v856 = vadd.f32 %v339, %v855
      %v857 = vpop.f32.mrb[0].mxu0
      %858 = vmatprep.mubr.bf16.mxu0 0
      %859 = vmatmul.mubr.bf16.gmra.mrb[0].mxu0 %v628
      %v860 = vpop.f32.mrb[0].mxu0
      %v861 = vadd.f32 %v339, %v860
      %v862 = vpop.f32.mrb[0].mxu0
      %v863 = vpop.f32.mrb[0].mxu0
      %v864 = vadd.f32 %v339, %v863
      %v865 = vpop.f32.mrb[0].mxu0
      %866 = vmatprep.mubr.bf16.mxu0 0
      %867 = vmatmul.mubr.bf16.gmra.mrb[0].mxu0 %v631
      %v868 = vpop.f32.mrb[0].mxu0
      %v869 = vadd.f32 %v339, %v868
      %v870 = vpop.f32.mrb[0].mxu0
      %v871 = vpop.f32.mrb[0].mxu0
      %v872 = vadd.f32 %v339, %v871
      %v873 = vpop.f32.mrb[0].mxu0
      %874 = vmatprep.mubr.bf16.mxu0 0
      %875 = vmatmul.mubr.bf16.gmra.mrb[0].mxu0 %v634
      %v876 = vpop.f32.mrb[0].mxu0
      %v877 = vadd.f32 %v339, %v876
      %v878 = vpop.f32.mrb[0].mxu0
      %v879 = vpop.f32.mrb[0].mxu0
      %v880 = vadd.f32 %v339, %v879
      %v881 = vpop.f32.mrb[0].mxu0
      %882 = vmatprep.mubr.bf16.mxu0 0
      %883 = vmatmul.mubr.bf16.gmra.mrb[0].mxu0 %v637
      %v884 = vpop.f32.mrb[0].mxu0
      %v885 = vadd.f32 %v339, %v884
      %v886 = vpop.f32.mrb[0].mxu0
      %v887 = vpop.f32.mrb[0].mxu0
      %v888 = vadd.f32 %v339, %v887
      %v889 = vpop.f32.mrb[0].mxu0
      %890 = vmatprep.mubr.bf16.mxu0 0
      %891 = vmatmul.mubr.bf16.gmra.mrb[0].mxu0 %v640
      %v892 = vpop.f32.mrb[0].mxu0
      %v893 = vadd.f32 %v339, %v892
      %v894 = vpop.f32.mrb[0].mxu0
      %v895 = vpop.f32.mrb[0].mxu0
      %v896 = vadd.f32 %v339, %v895
      %v897 = vpop.f32.mrb[0].mxu0
      %898 = vmatprep.mubr.bf16.mxu0 0
      %899 = vmatmul.mubr.bf16.gmra.mrb[0].mxu0 %v643
      %v900 = vpop.f32.mrb[0].mxu0
      %v901 = vadd.f32 %v339, %v900
      %v902 = vpop.f32.mrb[0].mxu0
      %v903 = vpop.f32.mrb[0].mxu0
      %v904 = vadd.f32 %v339, %v903
      %v905 = vpop.f32.mrb[0].mxu0
      %906 = vmatprep.mubr.bf16.mxu0 0
      %907 = vmatmul.mubr.bf16.gmra.mrb[0].mxu0 %v646
      %v908 = vpop.f32.mrb[0].mxu0
      %v909 = vadd.f32 %v339, %v908
      %v910 = vpop.f32.mrb[0].mxu0
      %v911 = vpop.f32.mrb[0].mxu0
      %v912 = vadd.f32 %v339, %v911
      %v913 = vpop.f32.mrb[0].mxu0
      %914 = vmatprep.mubr.bf16.mxu0 0
      %915 = vmatmul.mubr.bf16.gmra.mrb[0].mxu0 %v649
      %v916 = vpop.f32.mrb[0].mxu0
      %v917 = vadd.f32 %v339, %v916
      %v918 = vpop.f32.mrb[0].mxu0
      %v919 = vpop.f32.mrb[0].mxu0
      %v920 = vadd.f32 %v339, %v919
      %v921 = vpop.f32.mrb[0].mxu0
      %922 = vmatprep.mubr.bf16.mxu0 0
      %923 = vmatmul.mubr.bf16.gmra.mrb[0].mxu0 %v652
      %v924 = vpop.f32.mrb[0].mxu0
      %v925 = vadd.f32 %v339, %v924
      %v926 = vpop.f32.mrb[0].mxu0
      %v927 = vpop.f32.mrb[0].mxu0
      %v928 = vadd.f32 %v339, %v927
      %v929 = vpop.f32.mrb[0].mxu0
      %930 = vmatprep.mubr.bf16.mxu0 0
      %931 = vmatmul.mubr.bf16.gmra.mrb[0].mxu0 %v655
      %v932 = vpop.f32.mrb[0].mxu0
      %v933 = vadd.f32 %v339, %v932
      %v934 = vpop.f32.mrb[0].mxu0
      %v935 = vpop.f32.mrb[0].mxu0
      %v936 = vadd.f32 %v339, %v935
      %v937 = vpop.f32.mrb[0].mxu0
      %938 = vmatprep.mubr.bf16.mxu0 0
      %939 = vmatmul.mubr.bf16.gmra.mrb[0].mxu0 %v658
      %v940 = vpop.f32.mrb[0].mxu0
      %v941 = vadd.f32 %v339, %v940
      %v942 = vpop.f32.mrb[0].mxu0
      %v943 = vpop.f32.mrb[0].mxu0
      %v944 = vadd.f32 %v339, %v943
      %v945 = vpop.f32.mrb[0].mxu0
      %946 = vmatprep.mubr.bf16.mxu0 0
      %947 = vmatmul.mubr.bf16.gmra.mrb[0].mxu0 %v661
      %v948 = vpop.f32.mrb[0].mxu0
      %v949 = vadd.f32 %v339, %v948
      %v950 = vpop.f32.mrb[0].mxu0
      %v951 = vpop.f32.mrb[0].mxu0
      %v952 = vadd.f32 %v339, %v951
      %v953 = vpop.f32.mrb[0].mxu0
      %954 = vmatprep.mubr.bf16.mxu0 0
      %955 = vmatmul.mubr.bf16.gmra.mrb[0].mxu0 %v664
      %v956 = vpop.f32.mrb[0].mxu0
      %v957 = vadd.f32 %v339, %v956
      %v958 = vpop.f32.mrb[0].mxu0
      %v959 = vpop.f32.mrb[0].mxu0
      %v960 = vadd.f32 %v339, %v959
      %v961 = vpop.f32.mrb[0].mxu0
      %962 = vmatprep.mubr.bf16.mxu0 0
      %963 = vmatmul.mubr.bf16.gmra.mrb[0].mxu0 %v667
      %v964 = vpop.f32.mrb[0].mxu0
      %v965 = vadd.f32 %v339, %v964
      %v966 = vpop.f32.mrb[0].mxu0
      %v967 = vpop.f32.mrb[0].mxu0
      %v968 = vadd.f32 %v339, %v967
      %v969 = vpop.f32.mrb[0].mxu0
      %970 = vmatprep.mubr.bf16.mxu0 0
      %971 = vmatmul.mubr.bf16.gmra.mrb[0].mxu0 %v670
      %v972 = vpop.f32.mrb[0].mxu0
      %v973 = vadd.f32 %v339, %v972
      %v974 = vpop.f32.mrb[0].mxu0
      %v975 = vpop.f32.mrb[0].mxu0
      %v976 = vadd.f32 %v339, %v975
      %v977 = vpop.f32.mrb[0].mxu0
      %978 = vmatprep.mubr.bf16.mxu0 0
      %979 = vmatmul.mubr.bf16.gmra.mrb[0].mxu0 %v673
      %v980 = vpop.f32.mrb[0].mxu0
      %v981 = vadd.f32 %v339, %v980
      %v982 = vpop.f32.mrb[0].mxu0
      %v983 = vpop.f32.mrb[0].mxu0
      %v984 = vadd.f32 %v339, %v983
      %v985 = vpop.f32.mrb[0].mxu0
      %986 = vmatprep.mubr.bf16.mxu0 0
      %987 = vmatmul.mubr.bf16.gmra.mrb[0].mxu0 %v676
      %v988 = vpop.f32.mrb[0].mxu0
      %v989 = vadd.f32 %v339, %v988
      %v990 = vpop.f32.mrb[0].mxu0
      %v991 = vpop.f32.mrb[0].mxu0
      %v992 = vadd.f32 %v339, %v991
      %v993 = vpop.f32.mrb[0].mxu0
      %994 = vmatprep.mubr.bf16.mxu0 0
      %995 = vmatmul.mubr.bf16.gmra.mrb[0].mxu0 %v679
      %v996 = vpop.f32.mrb[0].mxu0
      %v997 = vadd.f32 %v339, %v996
      %v998 = vpop.f32.mrb[0].mxu0
      %v999 = vpop.f32.mrb[0].mxu0
      %v1000 = vadd.f32 %v339, %v999
      %v1001 = vpop.f32.mrb[0].mxu0
      %1002 = vmatprep.mubr.bf16.mxu0 0
      %1003 = vmatmul.mubr.bf16.gmra.mrb[0].mxu0 %v682
      %v1004 = vpop.f32.mrb[0].mxu0
      %v1005 = vadd.f32 %v339, %v1004
      %v1006 = vpop.f32.mrb[0].mxu0
      %v1007 = vpop.f32.mrb[0].mxu0
      %v1008 = vadd.f32 %v339, %v1007
      %v1009 = vpop.f32.mrb[0].mxu0
      %1010 = vmatprep.mubr.bf16.mxu0 0
      %1011 = vmatmul.mubr.bf16.gmra.mrb[0].mxu0 %v685
      %v1012 = vpop.f32.mrb[0].mxu0
      %v1013 = vadd.f32 %v339, %v1012
      %v1014 = vpop.f32.mrb[0].mxu0
      %v1015 = vpop.f32.mrb[0].mxu0
      %v1016 = vadd.f32 %v339, %v1015
      %v1017 = vpop.f32.mrb[0].mxu0
      %1018 = vmatprep.mubr.bf16.mxu0 0
      %1019 = vmatmul.mubr.bf16.gmra.mrb[0].mxu0 %v688
      %v1020 = vpop.f32.mrb[0].mxu0
      %v1021 = vadd.f32 %v339, %v1020
      %v1022 = vpop.f32.mrb[0].mxu0
      %v1023 = vpop.f32.mrb[0].mxu0
      %v1024 = vadd.f32 %v339, %v1023
      %v1025 = vpop.f32.mrb[0].mxu0
      %1026 = vmatprep.mubr.bf16.mxu0 0
      %1027 = vmatmul.mubr.bf16.gmra.mrb[0].mxu0 %v691
      %v1028 = vpop.f32.mrb[0].mxu0
      %v1029 = vadd.f32 %v339, %v1028
      %v1030 = vpop.f32.mrb[0].mxu0
      %v1031 = vpop.f32.mrb[0].mxu0
      %v1032 = vadd.f32 %v339, %v1031
      %v1033 = vpop.f32.mrb[0].mxu0
      %1034 = vmatprep.mubr.bf16.mxu0 0
      %1035 = vmatmul.mubr.bf16.gmra.mrb[0].mxu0 %v694
      %v1036 = vpop.f32.mrb[0].mxu0
      %v1037 = vadd.f32 %v339, %v1036
      %v1038 = vpop.f32.mrb[0].mxu0
      %v1039 = vpop.f32.mrb[0].mxu0
      %v1040 = vadd.f32 %v339, %v1039
      %v1041 = vpop.f32.mrb[0].mxu0
      %1042 = vmatprep.mubr.bf16.mxu0 0
      %1043 = vmatmul.mubr.bf16.gmra.mrb[0].mxu0 %v697
      %v1044 = vpop.f32.mrb[0].mxu0
      %v1045 = vadd.f32 %v339, %v1044
      %v1046 = vpop.f32.mrb[0].mxu0
      %v1047 = vpop.f32.mrb[0].mxu0
      %v1048 = vadd.f32 %v339, %v1047
      %v1049 = vpop.f32.mrb[0].mxu0
      %1050 = vmatprep.mubr.bf16.mxu0 0
      %1051 = vmatmul.mubr.bf16.gmra.mrb[0].mxu0 %v700
      %v1052 = vpop.f32.mrb[0].mxu0
      %v1053 = vadd.f32 %v339, %v1052
      %v1054 = vpop.f32.mrb[0].mxu0
      %v1055 = vpop.f32.mrb[0].mxu0
      %v1056 = vadd.f32 %v339, %v1055
      %v1057 = vpop.f32.mrb[0].mxu0
      %1058 = vmatprep.mubr.bf16.mxu0 0
      %1059 = vmatmul.mubr.bf16.gmra.mrb[0].mxu0 %v703
      %v1060 = vpop.f32.mrb[0].mxu0
      %v1061 = vadd.f32 %v339, %v1060
      %v1062 = vpop.f32.mrb[0].mxu0
      %v1063 = vpop.f32.mrb[0].mxu0
      %v1064 = vadd.f32 %v339, %v1063
      %v1065 = vpop.f32.mrb[0].mxu0
      %1066 = vmatprep.mubr.bf16.mxu0 0
      %1067 = vmatmul.mubr.bf16.gmra.mrb[0].mxu0 %v706
      %v1068 = vpop.f32.mrb[0].mxu0
      %v1069 = vadd.f32 %v339, %v1068
      %v1070 = vpop.f32.mrb[0].mxu0
      %v1071 = vpop.f32.mrb[0].mxu0
      %v1072 = vadd.f32 %v339, %v1071
      %v1073 = vpop.f32.mrb[0].mxu0
      %1074 = vmatprep.mubr.bf16.mxu0 0
      %1075 = vmatmul.mubr.bf16.gmra.mrb[0].mxu0 %v709
      %v1076 = vpop.f32.mrb[0].mxu0
      %v1077 = vadd.f32 %v339, %v1076
      %v1078 = vpop.f32.mrb[0].mxu0
      %v1079 = vpop.f32.mrb[0].mxu0
      %v1080 = vadd.f32 %v339, %v1079
      %v1081 = vpop.f32.mrb[0].mxu0
      %1082 = vmatprep.mubr.bf16.mxu0 0
      %1083 = vmatmul.mubr.bf16.gmra.mrb[0].mxu0 %v712
      %v1084 = vpop.f32.mrb[0].mxu0
      %v1085 = vadd.f32 %v339, %v1084
      %v1086 = vpop.f32.mrb[0].mxu0
      %v1087 = vpop.f32.mrb[0].mxu0
      %v1088 = vadd.f32 %v339, %v1087
      %v1089 = vpop.f32.mrb[0].mxu0
      %1090 = vmatprep.mubr.bf16.mxu0 0
      %1091 = vmatmul.mubr.bf16.gmra.mrb[0].mxu0 %v715
      %v1092 = vpop.f32.mrb[0].mxu0
      %v1093 = vadd.f32 %v339, %v1092
      %v1094 = vpop.f32.mrb[0].mxu0
      %v1095 = vpop.f32.mrb[0].mxu0
      %v1096 = vadd.f32 %v339, %v1095
      %v1097 = vpop.f32.mrb[0].mxu0
      %1098 = vmatprep.mubr.bf16.mxu0 0
      %1099 = vmatmul.mubr.bf16.gmra.mrb[0].mxu0 %v718
      %v1100 = vpop.f32.mrb[0].mxu0
      %v1101 = vadd.f32 %v339, %v1100
      %v1102 = vpop.f32.mrb[0].mxu0
      %v1103 = vpop.f32.mrb[0].mxu0
      %v1104 = vadd.f32 %v339, %v1103
      %v1105 = vpop.f32.mrb[0].mxu0
      %1106 = vmatprep.mubr.bf16.mxu0 0
      %1107 = vmatmul.mubr.bf16.gmra.mrb[0].mxu0 %v721
      %v1108 = vpop.f32.mrb[0].mxu0
      %v1109 = vadd.f32 %v339, %v1108
      %v1110 = vpop.f32.mrb[0].mxu0
      %v1111 = vpop.f32.mrb[0].mxu0
      %v1112 = vadd.f32 %v339, %v1111
      %v1113 = vpop.f32.mrb[0].mxu0
      %1114 = vmatprep.mubr.bf16.mxu0 0
      %1115 = vmatmul.mubr.bf16.gmra.mrb[0].mxu0 %v724
      %v1116 = vpop.f32.mrb[0].mxu0
      %v1117 = vadd.f32 %v339, %v1116
      %v1118 = vpop.f32.mrb[0].mxu0
      %v1119 = vpop.f32.mrb[0].mxu0
      %v1120 = vadd.f32 %v339, %v1119
      %v1121 = vpop.f32.mrb[0].mxu0
      %1122 = vmatprep.mubr.bf16.mxu0 0
      %1123 = vmatmul.mubr.bf16.gmra.mrb[0].mxu0 %v727
      %v1124 = vpop.f32.mrb[0].mxu0
      %v1125 = vadd.f32 %v339, %v1124
      %v1126 = vpop.f32.mrb[0].mxu0
      %v1127 = vpop.f32.mrb[0].mxu0
      %v1128 = vadd.f32 %v339, %v1127
      %v1129 = vpop.f32.mrb[0].mxu0
      %1130 = vmatprep.mubr.bf16.mxu0 0
      %1131 = vmatmul.mubr.bf16.gmra.mrb[0].mxu0 %v730
      %v1132 = vpop.f32.mrb[0].mxu0
      %v1133 = vadd.f32 %v339, %v1132
      %v1134 = vpop.f32.mrb[0].mxu0
      %v1135 = vpop.f32.mrb[0].mxu0
      %v1136 = vadd.f32 %v339, %v1135
      %v1137 = vpop.f32.mrb[0].mxu0
      %1138 = vmatprep.mubr.bf16.mxu0 0
      %1139 = vmatmul.mubr.bf16.gmra.mrb[0].mxu0 %v733
      %v1140 = vpop.f32.mrb[0].mxu0
      %v1141 = vadd.f32 %v339, %v1140
      %v1142 = vpop.f32.mrb[0].mxu0
      %v1143 = vpop.f32.mrb[0].mxu0
      %v1144 = vadd.f32 %v339, %v1143
      %v1145 = vpop.f32.mrb[0].mxu0
      %1146 = vmatprep.mubr.bf16.mxu0 0
      %1147 = vmatmul.mubr.bf16.gmra.mrb[0].mxu0 %v736
      %v1148 = vpop.f32.mrb[0].mxu0
      %v1149 = vadd.f32 %v339, %v1148
      %v1150 = vpop.f32.mrb[0].mxu0
      %v1151 = vpop.f32.mrb[0].mxu0
      %v1152 = vadd.f32 %v339, %v1151
      %v1153 = vpop.f32.mrb[0].mxu0
      %1154 = vdwg.mxu0
      %v1155 = vmax.f32 %v773, 0.0
      %v1156 = vmax.f32 %v776, 0.0
      %v1157 = vmax.f32 %v781, 0.0
      %v1158 = vmax.f32 %v784, 0.0
      %v1159 = vmax.f32 %v789, 0.0
      %v1160 = vmax.f32 %v792, 0.0
      %v1161 = vmax.f32 %v797, 0.0
      %v1162 = vmax.f32 %v800, 0.0
      %v1163 = vmax.f32 %v805, 0.0
      %v1164 = vmax.f32 %v808, 0.0
      %v1165 = vmax.f32 %v813, 0.0
      %v1166 = vmax.f32 %v816, 0.0
      %v1167 = vmax.f32 %v821, 0.0
      %v1168 = vmax.f32 %v824, 0.0
      %v1169 = vmax.f32 %v829, 0.0
      %v1170 = vmax.f32 %v832, 0.0
      %v1171 = vmax.f32 %v837, 0.0
      %v1172 = vmax.f32 %v840, 0.0
      %v1173 = vmax.f32 %v845, 0.0
      %v1174 = vmax.f32 %v848, 0.0
      %v1175 = vmax.f32 %v853, 0.0
      %v1176 = vmax.f32 %v856, 0.0
      %v1177 = vmax.f32 %v861, 0.0
      %v1178 = vmax.f32 %v864, 0.0
      %v1179 = vmax.f32 %v869, 0.0
      %v1180 = vmax.f32 %v872, 0.0
      %v1181 = vmax.f32 %v877, 0.0
      %v1182 = vmax.f32 %v880, 0.0
      %v1183 = vmax.f32 %v885, 0.0
      %v1184 = vmax.f32 %v888, 0.0
      %v1185 = vmax.f32 %v893, 0.0
      %v1186 = vmax.f32 %v896, 0.0
      %v1187 = vmax.f32 %v901, 0.0
      %v1188 = vmax.f32 %v904, 0.0
      %v1189 = vmax.f32 %v909, 0.0
      %v1190 = vmax.f32 %v912, 0.0
      %v1191 = vmax.f32 %v917, 0.0
      %v1192 = vmax.f32 %v920, 0.0
      %v1193 = vmax.f32 %v925, 0.0
      %v1194 = vmax.f32 %v928, 0.0
      %v1195 = vmax.f32 %v933, 0.0
      %v1196 = vmax.f32 %v936, 0.0
      %v1197 = vmax.f32 %v941, 0.0
      %v1198 = vmax.f32 %v944, 0.0
      %v1199 = vmax.f32 %v949, 0.0
      %v1200 = vmax.f32 %v952, 0.0
      %v1201 = vmax.f32 %v957, 0.0
      %v1202 = vmax.f32 %v960, 0.0
      %v1203 = vmax.f32 %v965, 0.0
      %v1204 = vmax.f32 %v968, 0.0
      %v1205 = vmax.f32 %v973, 0.0
      %v1206 = vmax.f32 %v976, 0.0
      %v1207 = vmax.f32 %v981, 0.0
      %v1208 = vmax.f32 %v984, 0.0
      %v1209 = vmax.f32 %v989, 0.0
      %v1210 = vmax.f32 %v992, 0.0
      %v1211 = vmax.f32 %v997, 0.0
      %v1212 = vmax.f32 %v1000, 0.0
      %v1213 = vmax.f32 %v1005, 0.0
      %v1214 = vmax.f32 %v1008, 0.0
      %v1215 = vmax.f32 %v1013, 0.0
      %v1216 = vmax.f32 %v1016, 0.0
      %v1217 = vmax.f32 %v1021, 0.0
      %v1218 = vmax.f32 %v1024, 0.0
      %v1219 = vmax.f32 %v1029, 0.0
      %v1220 = vmax.f32 %v1032, 0.0
      %v1221 = vmax.f32 %v1037, 0.0
      %v1222 = vmax.f32 %v1040, 0.0
      %v1223 = vmax.f32 %v1045, 0.0
      %v1224 = vmax.f32 %v1048, 0.0
      %v1225 = vmax.f32 %v1053, 0.0
      %v1226 = vmax.f32 %v1056, 0.0
      %v1227 = vmax.f32 %v1061, 0.0
      %v1228 = vmax.f32 %v1064, 0.0
      %v1229 = vmax.f32 %v1069, 0.0
      %v1230 = vmax.f32 %v1072, 0.0
      %v1231 = vmax.f32 %v1077, 0.0
      %v1232 = vmax.f32 %v1080, 0.0
      %v1233 = vmax.f32 %v1085, 0.0
      %v1234 = vmax.f32 %v1088, 0.0
      %v1235 = vmax.f32 %v1093, 0.0
      %v1236 = vmax.f32 %v1096, 0.0
      %v1237 = vmax.f32 %v1101, 0.0
      %v1238 = vmax.f32 %v1104, 0.0
      %v1239 = vmax.f32 %v1109, 0.0
      %v1240 = vmax.f32 %v1112, 0.0
      %v1241 = vmax.f32 %v1117, 0.0
      %v1242 = vmax.f32 %v1120, 0.0
      %v1243 = vmax.f32 %v1125, 0.0
      %v1244 = vmax.f32 %v1128, 0.0
      %v1245 = vmax.f32 %v1133, 0.0
      %v1246 = vmax.f32 %v1136, 0.0
      %v1247 = vmax.f32 %v1141, 0.0
      %v1248 = vmax.f32 %v1144, 0.0
      %v1249 = vmax.f32 %v1149, 0.0
      %v1250 = vmax.f32 %v1152, 0.0
      %1251 = vst.msk [vmem:[#allocation2] sm:$0xff] %vm593, %v1155
      %1252 = vst.msk [vmem:[#allocation2 + $0x8] sm:$0xff] %vm593, %v1156
      %1253 = vst.msk [vmem:[#allocation2 + $0x10] sm:$0xff] %vm593, %v1157
      %1254 = vst.msk [vmem:[#allocation2 + $0x18] sm:$0xff] %vm593, %v1158
      %1255 = vst.msk [vmem:[#allocation2 + $0x20] sm:$0xff] %vm593, %v1159
      %1256 = vst.msk [vmem:[#allocation2 + $0x28] sm:$0xff] %vm593, %v1160
      %1257 = vst.msk [vmem:[#allocation2 + $0x30] sm:$0xff] %vm593, %v1161
      %1258 = vst.msk [vmem:[#allocation2 + $0x38] sm:$0xff] %vm593, %v1162
      %1259 = vst.msk [vmem:[#allocation2 + $0x40] sm:$0xff] %vm593, %v1163
      %1260 = vst.msk [vmem:[#allocation2 + $0x48] sm:$0xff] %vm593, %v1164
      %1261 = vst.msk [vmem:[#allocation2 + $0x50] sm:$0xff] %vm593, %v1165
      %1262 = vst.msk [vmem:[#allocation2 + $0x58] sm:$0xff] %vm593, %v1166
      %1263 = vst.msk [vmem:[#allocation2 + $0x60] sm:$0xff] %vm593, %v1167
      %1264 = vst.msk [vmem:[#allocation2 + $0x68] sm:$0xff] %vm593, %v1168
      %1265 = vst.msk [vmem:[#allocation2 + $0x70] sm:$0xff] %vm593, %v1169
      %1266 = vst.msk [vmem:[#allocation2 + $0x78] sm:$0xff] %vm593, %v1170
      %1267 = vst.msk [vmem:[#allocation2 + $0x80] sm:$0xff] %vm593, %v1171
      %1268 = vst.msk [vmem:[#allocation2 + $0x88] sm:$0xff] %vm593, %v1172
      %1269 = vst.msk [vmem:[#allocation2 + $0x90] sm:$0xff] %vm593, %v1173
      %1270 = vst.msk [vmem:[#allocation2 + $0x98] sm:$0xff] %vm593, %v1174
      %1271 = vst.msk [vmem:[#allocation2 + $0xa0] sm:$0xff] %vm593, %v1175
      %1272 = vst.msk [vmem:[#allocation2 + $0xa8] sm:$0xff] %vm593, %v1176
      %1273 = vst.msk [vmem:[#allocation2 + $0xb0] sm:$0xff] %vm593, %v1177
      %1274 = vst.msk [vmem:[#allocation2 + $0xb8] sm:$0xff] %vm593, %v1178
      %1275 = vst.msk [vmem:[#allocation2 + $0xc0] sm:$0xff] %vm593, %v1179
      %1276 = vst.msk [vmem:[#allocation2 + $0xc8] sm:$0xff] %vm593, %v1180
      %1277 = vst.msk [vmem:[#allocation2 + $0xd0] sm:$0xff] %vm593, %v1181
      %1278 = vst.msk [vmem:[#allocation2 + $0xd8] sm:$0xff] %vm593, %v1182
      %1279 = vst.msk [vmem:[#allocation2 + $0xe0] sm:$0xff] %vm593, %v1183
      %1280 = vst.msk [vmem:[#allocation2 + $0xe8] sm:$0xff] %vm593, %v1184
      %1281 = vst.msk [vmem:[#allocation2 + $0xf0] sm:$0xff] %vm593, %v1185
      %1282 = vst.msk [vmem:[#allocation2 + $0xf8] sm:$0xff] %vm593, %v1186
      %1283 = vst.msk [vmem:[#allocation2 + $0x100] sm:$0xff] %vm593, %v1187
      %1284 = vst.msk [vmem:[#allocation2 + $0x108] sm:$0xff] %vm593, %v1188
      %1285 = vst.msk [vmem:[#allocation2 + $0x110] sm:$0xff] %vm593, %v1189
      %1286 = vst.msk [vmem:[#allocation2 + $0x118] sm:$0xff] %vm593, %v1190
      %1287 = vst.msk [vmem:[#allocation2 + $0x120] sm:$0xff] %vm593, %v1191
      %1288 = vst.msk [vmem:[#allocation2 + $0x128] sm:$0xff] %vm593, %v1192
      %1289 = vst.msk [vmem:[#allocation2 + $0x130] sm:$0xff] %vm593, %v1193
      %1290 = vst.msk [vmem:[#allocation2 + $0x138] sm:$0xff] %vm593, %v1194
      %1291 = vst.msk [vmem:[#allocation2 + $0x140] sm:$0xff] %vm593, %v1195
      %1292 = vst.msk [vmem:[#allocation2 + $0x148] sm:$0xff] %vm593, %v1196
      %1293 = vst.msk [vmem:[#allocation2 + $0x150] sm:$0xff] %vm593, %v1197
      %1294 = vst.msk [vmem:[#allocation2 + $0x158] sm:$0xff] %vm593, %v1198
      %1295 = vst.msk [vmem:[#allocation2 + $0x160] sm:$0xff] %vm593, %v1199
      %1296 = vst.msk [vmem:[#allocation2 + $0x168] sm:$0xff] %vm593, %v1200
      %1297 = vst.msk [vmem:[#allocation2 + $0x170] sm:$0xff] %vm593, %v1201
      %1298 = vst.msk [vmem:[#allocation2 + $0x178] sm:$0xff] %vm593, %v1202
      %1299 = vst.msk [vmem:[#allocation2 + $0x180] sm:$0xff] %vm593, %v1203
      %1300 = vst.msk [vmem:[#allocation2 + $0x188] sm:$0xff] %vm593, %v1204
      %1301 = vst.msk [vmem:[#allocation2 + $0x190] sm:$0xff] %vm593, %v1205
      %1302 = vst.msk [vmem:[#allocation2 + $0x198] sm:$0xff] %vm593, %v1206
      %1303 = vst.msk [vmem:[#allocation2 + $0x1a0] sm:$0xff] %vm593, %v1207
      %1304 = vst.msk [vmem:[#allocation2 + $0x1a8] sm:$0xff] %vm593, %v1208
      %1305 = vst.msk [vmem:[#allocation2 + $0x1b0] sm:$0xff] %vm593, %v1209
      %1306 = vst.msk [vmem:[#allocation2 + $0x1b8] sm:$0xff] %vm593, %v1210
      %1307 = vst.msk [vmem:[#allocation2 + $0x1c0] sm:$0xff] %vm593, %v1211
      %1308 = vst.msk [vmem:[#allocation2 + $0x1c8] sm:$0xff] %vm593, %v1212
      %1309 = vst.msk [vmem:[#allocation2 + $0x1d0] sm:$0xff] %vm593, %v1213
      %1310 = vst.msk [vmem:[#allocation2 + $0x1d8] sm:$0xff] %vm593, %v1214
      %1311 = vst.msk [vmem:[#allocation2 + $0x1e0] sm:$0xff] %vm593, %v1215
      %1312 = vst.msk [vmem:[#allocation2 + $0x1e8] sm:$0xff] %vm593, %v1216
      %1313 = vst.msk [vmem:[#allocation2 + $0x1f0] sm:$0xff] %vm593, %v1217
      %1314 = vst.msk [vmem:[#allocation2 + $0x1f8] sm:$0xff] %vm593, %v1218
      %1315 = vst.msk [vmem:[#allocation2 + $0x200] sm:$0xff] %vm593, %v1219
      %1316 = vst.msk [vmem:[#allocation2 + $0x208] sm:$0xff] %vm593, %v1220
      %1317 = vst.msk [vmem:[#allocation2 + $0x210] sm:$0xff] %vm593, %v1221
      %1318 = vst.msk [vmem:[#allocation2 + $0x218] sm:$0xff] %vm593, %v1222
      %1319 = vst.msk [vmem:[#allocation2 + $0x220] sm:$0xff] %vm593, %v1223
      %1320 = vst.msk [vmem:[#allocation2 + $0x228] sm:$0xff] %vm593, %v1224
      %1321 = vst.msk [vmem:[#allocation2 + $0x230] sm:$0xff] %vm593, %v1225
      %1322 = vst.msk [vmem:[#allocation2 + $0x238] sm:$0xff] %vm593, %v1226
      %1323 = vst.msk [vmem:[#allocation2 + $0x240] sm:$0xff] %vm593, %v1227
      %1324 = vst.msk [vmem:[#allocation2 + $0x248] sm:$0xff] %vm593, %v1228
      %1325 = vst.msk [vmem:[#allocation2 + $0x250] sm:$0xff] %vm593, %v1229
      %1326 = vst.msk [vmem:[#allocation2 + $0x258] sm:$0xff] %vm593, %v1230
      %1327 = vst.msk [vmem:[#allocation2 + $0x260] sm:$0xff] %vm593, %v1231
      %1328 = vst.msk [vmem:[#allocation2 + $0x268] sm:$0xff] %vm593, %v1232
      %1329 = vst.msk [vmem:[#allocation2 + $0x270] sm:$0xff] %vm593, %v1233
      %1330 = vst.msk [vmem:[#allocation2 + $0x278] sm:$0xff] %vm593, %v1234
      %1331 = vst.msk [vmem:[#allocation2 + $0x280] sm:$0xff] %vm593, %v1235
      %1332 = vst.msk [vmem:[#allocation2 + $0x288] sm:$0xff] %vm593, %v1236
      %1333 = vst.msk [vmem:[#allocation2 + $0x290] sm:$0xff] %vm593, %v1237
      %1334 = vst.msk [vmem:[#allocation2 + $0x298] sm:$0xff] %vm593, %v1238
      %1335 = vst.msk [vmem:[#allocation2 + $0x2a0] sm:$0xff] %vm593, %v1239
      %1336 = vst.msk [vmem:[#allocation2 + $0x2a8] sm:$0xff] %vm593, %v1240
      %1337 = vst.msk [vmem:[#allocation2 + $0x2b0] sm:$0xff] %vm593, %v1241
      %1338 = vst.msk [vmem:[#allocation2 + $0x2b8] sm:$0xff] %vm593, %v1242
      %1339 = vst.msk [vmem:[#allocation2 + $0x2c0] sm:$0xff] %vm593, %v1243
      %1340 = vst.msk [vmem:[#allocation2 + $0x2c8] sm:$0xff] %vm593, %v1244
      %1341 = vst.msk [vmem:[#allocation2 + $0x2d0] sm:$0xff] %vm593, %v1245
      %1342 = vst.msk [vmem:[#allocation2 + $0x2d8] sm:$0xff] %vm593, %v1246
      %1343 = vst.msk [vmem:[#allocation2 + $0x2e0] sm:$0xff] %vm593, %v1247
      %1344 = vst.msk [vmem:[#allocation2 + $0x2e8] sm:$0xff] %vm593, %v1248
      %1345 = vst.msk [vmem:[#allocation2 + $0x2f0] sm:$0xff] %vm593, %v1249
      %1346 = vst.msk [vmem:[#allocation2 + $0x2f8] sm:$0xff] %vm593, %v1250
      %v1347 = vld [vmem:[#allocation2] sm:$0xff]
      %v1348 = vld [vmem:[#allocation2 + $0x10] sm:$0xff]
      %v1349 = vld [vmem:[#allocation2 + $0x20] sm:$0xff]
      %v1350 = vld [vmem:[#allocation2 + $0x30] sm:$0xff]
      %v1351 = vld [vmem:[#allocation2 + $0x40] sm:$0xff]
      %v1352 = vld [vmem:[#allocation2 + $0x50] sm:$0xff]
      %v1353 = vld [vmem:[#allocation2 + $0x60] sm:$0xff]
      %v1354 = vld [vmem:[#allocation2 + $0x70] sm:$0xff]
      %v1355 = vld [vmem:[#allocation2 + $0xc0] sm:$0xff]
      %v1356 = vld [vmem:[#allocation2 + $0xd0] sm:$0xff]
      %v1357 = vld [vmem:[#allocation2 + $0xe0] sm:$0xff]
      %v1358 = vld [vmem:[#allocation2 + $0xf0] sm:$0xff]
      %v1359 = vld [vmem:[#allocation2 + $0x100] sm:$0xff]
      %v1360 = vld [vmem:[#allocation2 + $0x110] sm:$0xff]
      %v1361 = vld [vmem:[#allocation2 + $0x120] sm:$0xff]
      %v1362 = vld [vmem:[#allocation2 + $0x130] sm:$0xff]
      %v1363 = vld [vmem:[#allocation2 + $0x180] sm:$0xff]
      %v1364 = vld [vmem:[#allocation2 + $0x190] sm:$0xff]
      %v1365 = vld [vmem:[#allocation2 + $0x1a0] sm:$0xff]
      %v1366 = vld [vmem:[#allocation2 + $0x1b0] sm:$0xff]
      %v1367 = vld [vmem:[#allocation2 + $0x1c0] sm:$0xff]
      %v1368 = vld [vmem:[#allocation2 + $0x1d0] sm:$0xff]
      %v1369 = vld [vmem:[#allocation2 + $0x1e0] sm:$0xff]
      %v1370 = vld [vmem:[#allocation2 + $0x1f0] sm:$0xff]
      %v1371 = vld [vmem:[#allocation2 + $0x240] sm:$0xff]
      %v1372 = vld [vmem:[#allocation2 + $0x250] sm:$0xff]
      %v1373 = vld [vmem:[#allocation2 + $0x260] sm:$0xff]
      %v1374 = vld [vmem:[#allocation2 + $0x270] sm:$0xff]
      %v1375 = vld [vmem:[#allocation2 + $0x280] sm:$0xff]
      %v1376 = vld [vmem:[#allocation2 + $0x290] sm:$0xff]
      %v1377 = vld [vmem:[#allocation2 + $0x2a0] sm:$0xff]
      %v1378 = vld [vmem:[#allocation2 + $0x2b0] sm:$0xff]
      %v1379 = vpack.c.bf16 %v1348, %v1347
      %v1380 = vpack.c.bf16 %v1350, %v1349
      %v1381 = vpack.c.bf16 %v1352, %v1351
      %v1382 = vpack.c.bf16 %v1354, %v1353
      %v1383 = vpack.c.bf16 %v1356, %v1355
      %v1384 = vpack.c.bf16 %v1358, %v1357
      %v1385 = vpack.c.bf16 %v1360, %v1359
      %v1386 = vpack.c.bf16 %v1362, %v1361
      %v1387 = vpack.c.bf16 %v1364, %v1363
      %v1388 = vpack.c.bf16 %v1366, %v1365
      %v1389 = vpack.c.bf16 %v1368, %v1367
      %v1390 = vpack.c.bf16 %v1370, %v1369
      %v1391 = vpack.c.bf16 %v1372, %v1371
      %v1392 = vpack.c.bf16 %v1374, %v1373
      %v1393 = vpack.c.bf16 %v1376, %v1375
      %v1394 = vpack.c.bf16 %v1378, %v1377
      %v1395 = vld [vmem:[%s3] sm:$0xf]
      %v1396 = vld [vmem:[%s3 + $0x4] sm:$0xf]
      %v1397 = vld [vmem:[%s3 + $0x8] sm:$0xf]
      %v1398 = vld [vmem:[%s3 + $0xc] sm:$0xf]
      %v1403 = vunpack.c.l.b16 %v1395
      %v1404 = vunpack.c.l.b16 %v1396
      %v1405 = vunpack.c.l.b16 %v1397
      %v1406 = vunpack.c.l.b16 %v1398
      %v1407 = vpack.c.b16 %v1404, %v1403
      %v1408 = vpack.c.b16 %v1406, %v1405
      %v1412 = vsel %vm593, %v1379, 0
      %v1415 = vsel %vm593, %v1380, 0
      %v1418 = vsel %vm593, %v1381, 0
      %v1421 = vsel %vm593, %v1382, 0
      %v1424 = vsel %vm593, %v1383, 0
      %v1427 = vsel %vm593, %v1384, 0
      %v1430 = vsel %vm593, %v1385, 0
      %v1433 = vsel %vm593, %v1386, 0
      %v1436 = vsel %vm593, %v1387, 0
      %v1439 = vsel %vm593, %v1388, 0
      %v1442 = vsel %vm593, %v1389, 0
      %v1445 = vsel %vm593, %v1390, 0
      %v1448 = vsel %vm593, %v1391, 0
      %v1451 = vsel %vm593, %v1392, 0
      %v1454 = vsel %vm593, %v1393, 0
      %v1457 = vsel %vm593, %v1394, 0
      %1459 = vmatprep.subr.bf16.mxu0 0
      %1460 = vmatpush1.bf16.msra.mxu0 %v1407
      %1461 = vmatprep.subr.bf16.mxu0 0
      %1462 = vmatpush1.bf16.msra.mxu0 %v1408
      %1463 = vmatprep.subr.bf16.mxu0 0
      %1464 = vmatpush1.bf16.msra.mxu0 0
      %1465 = vmatprep.subr.bf16.mxu0 0
      %1466 = vmatpush1.bf16.msra.mxu0 0
      %1467 = vmatprep.subr.bf16.mxu0 0
      %1468 = vmatpush1.bf16.msra.mxu0 0
      %1469 = vmatprep.subr.bf16.mxu0 0
      %1470 = vmatpush1.bf16.msra.mxu0 0
      %1471 = vmatprep.subr.bf16.mxu0 0
      %1472 = vmatpush1.bf16.msra.mxu0 0
      %1473 = vmatprep.subr.bf16.mxu0 0
      %1474 = vmatpush1.bf16.msra.mxu0 0
      %1475 = vmatprep.subr.bf16.mxu0 0
      %1476 = vmatpush1.bf16.msra.mxu0 0
      %1477 = vmatprep.subr.bf16.mxu0 0
      %1478 = vmatpush1.bf16.msra.mxu0 0
      %1479 = vmatprep.subr.bf16.mxu0 0
      %1480 = vmatpush1.bf16.msra.mxu0 0
      %1481 = vmatprep.subr.bf16.mxu0 0
      %1482 = vmatpush1.bf16.msra.mxu0 0
      %1483 = vmatprep.subr.bf16.mxu0 0
      %1484 = vmatpush1.bf16.msra.mxu0 0
      %1485 = vmatprep.subr.bf16.mxu0 0
      %1486 = vmatpush1.bf16.msra.mxu0 0
      %1487 = vmatprep.subr.bf16.mxu0 0
      %1488 = vmatpush1.bf16.msra.mxu0 0
      %1489 = vmatprep.subr.bf16.mxu0 0
      %1490 = vmatpush1.bf16.msra.mxu0 0
      %1491 = vmatprep.mubr.bf16.mxu0 0
      %1492 = vmatmul.mubr.bf16.gmra.mrb[0].mxu0 %v1412
      %v1493 = vpop.f32.mrb[0].mxu0
      %v1494 = vadd.f32 0.0, %v1493
      %v1495 = vpop.f32.mrb[0].mxu0
      %v1496 = vpop.f32.mrb[0].mxu0
      %v1497 = vadd.f32 0.0, %v1496
      %v1498 = vpop.f32.mrb[0].mxu0
      %1499 = vmatprep.mubr.bf16.mxu0 0
      %1500 = vmatmul.mubr.bf16.gmra.mrb[0].mxu0 %v1415
      %v1501 = vpop.f32.mrb[0].mxu0
      %v1502 = vadd.f32 0.0, %v1501
      %v1503 = vpop.f32.mrb[0].mxu0
      %v1504 = vpop.f32.mrb[0].mxu0
      %v1505 = vadd.f32 0.0, %v1504
      %v1506 = vpop.f32.mrb[0].mxu0
      %1507 = vmatprep.mubr.bf16.mxu0 0
      %1508 = vmatmul.mubr.bf16.gmra.mrb[0].mxu0 %v1418
      %v1509 = vpop.f32.mrb[0].mxu0
      %v1510 = vadd.f32 0.0, %v1509
      %v1511 = vpop.f32.mrb[0].mxu0
      %v1512 = vpop.f32.mrb[0].mxu0
      %v1513 = vadd.f32 0.0, %v1512
      %v1514 = vpop.f32.mrb[0].mxu0
      %1515 = vmatprep.mubr.bf16.mxu0 0
      %1516 = vmatmul.mubr.bf16.gmra.mrb[0].mxu0 %v1421
      %v1517 = vpop.f32.mrb[0].mxu0
      %v1518 = vadd.f32 0.0, %v1517
      %v1519 = vpop.f32.mrb[0].mxu0
      %v1520 = vpop.f32.mrb[0].mxu0
      %v1521 = vadd.f32 0.0, %v1520
      %v1522 = vpop.f32.mrb[0].mxu0
      %1523 = vmatprep.mubr.bf16.mxu0 0
      %1524 = vmatmul.mubr.bf16.gmra.mrb[0].mxu0 %v1424
      %v1525 = vpop.f32.mrb[0].mxu0
      %v1526 = vadd.f32 0.0, %v1525
      %v1527 = vpop.f32.mrb[0].mxu0
      %v1528 = vpop.f32.mrb[0].mxu0
      %v1529 = vadd.f32 0.0, %v1528
      %v1530 = vpop.f32.mrb[0].mxu0
      %1531 = vmatprep.mubr.bf16.mxu0 0
      %1532 = vmatmul.mubr.bf16.gmra.mrb[0].mxu0 %v1427
      %v1533 = vpop.f32.mrb[0].mxu0
      %v1534 = vadd.f32 0.0, %v1533
      %v1535 = vpop.f32.mrb[0].mxu0
      %v1536 = vpop.f32.mrb[0].mxu0
      %v1537 = vadd.f32 0.0, %v1536
      %v1538 = vpop.f32.mrb[0].mxu0
      %1539 = vmatprep.mubr.bf16.mxu0 0
      %1540 = vmatmul.mubr.bf16.gmra.mrb[0].mxu0 %v1430
      %v1541 = vpop.f32.mrb[0].mxu0
      %v1542 = vadd.f32 0.0, %v1541
      %v1543 = vpop.f32.mrb[0].mxu0
      %v1544 = vpop.f32.mrb[0].mxu0
      %v1545 = vadd.f32 0.0, %v1544
      %v1546 = vpop.f32.mrb[0].mxu0
      %1547 = vmatprep.mubr.bf16.mxu0 0
      %1548 = vmatmul.mubr.bf16.gmra.mrb[0].mxu0 %v1433
      %v1549 = vpop.f32.mrb[0].mxu0
      %v1550 = vadd.f32 0.0, %v1549
      %v1551 = vpop.f32.mrb[0].mxu0
      %v1552 = vpop.f32.mrb[0].mxu0
      %v1553 = vadd.f32 0.0, %v1552
      %v1554 = vpop.f32.mrb[0].mxu0
      %1555 = vmatprep.mubr.bf16.mxu0 0
      %1556 = vmatmul.mubr.bf16.gmra.mrb[0].mxu0 %v1436
      %v1557 = vpop.f32.mrb[0].mxu0
      %v1558 = vadd.f32 0.0, %v1557
      %v1559 = vpop.f32.mrb[0].mxu0
      %v1560 = vpop.f32.mrb[0].mxu0
      %v1561 = vadd.f32 0.0, %v1560
      %v1562 = vpop.f32.mrb[0].mxu0
      %1563 = vmatprep.mubr.bf16.mxu0 0
      %1564 = vmatmul.mubr.bf16.gmra.mrb[0].mxu0 %v1439
      %v1565 = vpop.f32.mrb[0].mxu0
      %v1566 = vadd.f32 0.0, %v1565
      %v1567 = vpop.f32.mrb[0].mxu0
      %v1568 = vpop.f32.mrb[0].mxu0
      %v1569 = vadd.f32 0.0, %v1568
      %v1570 = vpop.f32.mrb[0].mxu0
      %1571 = vmatprep.mubr.bf16.mxu0 0
      %1572 = vmatmul.mubr.bf16.gmra.mrb[0].mxu0 %v1442
      %v1573 = vpop.f32.mrb[0].mxu0
      %v1574 = vadd.f32 0.0, %v1573
      %v1575 = vpop.f32.mrb[0].mxu0
      %v1576 = vpop.f32.mrb[0].mxu0
      %v1577 = vadd.f32 0.0, %v1576
      %v1578 = vpop.f32.mrb[0].mxu0
      %1579 = vmatprep.mubr.bf16.mxu0 0
      %1580 = vmatmul.mubr.bf16.gmra.mrb[0].mxu0 %v1445
      %v1581 = vpop.f32.mrb[0].mxu0
      %v1582 = vadd.f32 0.0, %v1581
      %v1583 = vpop.f32.mrb[0].mxu0
      %v1584 = vpop.f32.mrb[0].mxu0
      %v1585 = vadd.f32 0.0, %v1584
      %v1586 = vpop.f32.mrb[0].mxu0
      %1587 = vmatprep.mubr.bf16.mxu0 0
      %1588 = vmatmul.mubr.bf16.gmra.mrb[0].mxu0 %v1448
      %v1589 = vpop.f32.mrb[0].mxu0
      %v1590 = vadd.f32 0.0, %v1589
      %v1591 = vpop.f32.mrb[0].mxu0
      %v1592 = vpop.f32.mrb[0].mxu0
      %v1593 = vadd.f32 0.0, %v1592
      %v1594 = vpop.f32.mrb[0].mxu0
      %1595 = vmatprep.mubr.bf16.mxu0 0
      %1596 = vmatmul.mubr.bf16.gmra.mrb[0].mxu0 %v1451
      %v1597 = vpop.f32.mrb[0].mxu0
      %v1598 = vadd.f32 0.0, %v1597
      %v1599 = vpop.f32.mrb[0].mxu0
      %v1600 = vpop.f32.mrb[0].mxu0
      %v1601 = vadd.f32 0.0, %v1600
      %v1602 = vpop.f32.mrb[0].mxu0
      %1603 = vmatprep.mubr.bf16.mxu0 0
      %1604 = vmatmul.mubr.bf16.gmra.mrb[0].mxu0 %v1454
      %v1605 = vpop.f32.mrb[0].mxu0
      %v1606 = vadd.f32 0.0, %v1605
      %v1607 = vpop.f32.mrb[0].mxu0
      %v1608 = vpop.f32.mrb[0].mxu0
      %v1609 = vadd.f32 0.0, %v1608
      %v1610 = vpop.f32.mrb[0].mxu0
      %1611 = vmatprep.mubr.bf16.mxu0 0
      %1612 = vmatmul.mubr.bf16.gmra.mrb[0].mxu0 %v1457
      %v1613 = vpop.f32.mrb[0].mxu0
      %v1614 = vadd.f32 0.0, %v1613
      %v1615 = vpop.f32.mrb[0].mxu0
      %v1616 = vpop.f32.mrb[0].mxu0
      %v1617 = vadd.f32 0.0, %v1616
      %v1618 = vpop.f32.mrb[0].mxu0
      %1619 = vdwg.mxu0
      %v1620 = vld [vmem:[%s4] sm:$0x1]
      %v1622 = vlaneseq
      %v1623 = vshrl.u32 %v1622, 7
      %v1624 = vsub.s32 0, %v1623
      %v1625 = vrot.slane %v1620, %v1624
      %v1627 = vadd.f32 %v1494, %v1625
      %v1628 = vadd.f32 %v1497, %v1625
      %v1629 = vadd.f32 %v1502, %v1625
      %v1630 = vadd.f32 %v1505, %v1625
      %v1631 = vadd.f32 %v1510, %v1625
      %v1632 = vadd.f32 %v1513, %v1625
      %v1633 = vadd.f32 %v1518, %v1625
      %v1634 = vadd.f32 %v1521, %v1625
      %v1635 = vadd.f32 %v1526, %v1625
      %v1636 = vadd.f32 %v1529, %v1625
      %v1637 = vadd.f32 %v1534, %v1625
      %v1638 = vadd.f32 %v1537, %v1625
      %v1639 = vadd.f32 %v1542, %v1625
      %v1640 = vadd.f32 %v1545, %v1625
      %v1641 = vadd.f32 %v1550, %v1625
      %v1642 = vadd.f32 %v1553, %v1625
      %v1643 = vadd.f32 %v1558, %v1625
      %v1644 = vadd.f32 %v1561, %v1625
      %v1645 = vadd.f32 %v1566, %v1625
      %v1646 = vadd.f32 %v1569, %v1625
      %v1647 = vadd.f32 %v1574, %v1625
      %v1648 = vadd.f32 %v1577, %v1625
      %v1649 = vadd.f32 %v1582, %v1625
      %v1650 = vadd.f32 %v1585, %v1625
      %v1651 = vadd.f32 %v1590, %v1625
      %v1652 = vadd.f32 %v1593, %v1625
      %v1653 = vadd.f32 %v1598, %v1625
      %v1654 = vadd.f32 %v1601, %v1625
      %v1655 = vadd.f32 %v1606, %v1625
      %v1656 = vadd.f32 %v1609, %v1625
      %v1657 = vadd.f32 %v1614, %v1625
      %v1658 = vadd.f32 %v1617, %v1625
      %1659 = vst [vmem:[%s231] sm:$0xff] %v1627
      %1660 = vst [vmem:[%s231 + $0x8] sm:$0xff] %v1628
      %1661 = vst [vmem:[%s231 + $0x10] sm:$0xff] %v1629
      %1662 = vst [vmem:[%s231 + $0x18] sm:$0xff] %v1630
      %1663 = vst [vmem:[%s231 + $0x20] sm:$0xff] %v1631
      %1664 = vst [vmem:[%s231 + $0x28] sm:$0xff] %v1632
      %1665 = vst [vmem:[%s231 + $0x30] sm:$0xff] %v1633
      %1666 = vst [vmem:[%s231 + $0x38] sm:$0xff] %v1634
      %1667 = vst [vmem:[%s231 + $0x40] sm:$0xff] %v1635
      %1668 = vst [vmem:[%s231 + $0x48] sm:$0xff] %v1636
      %1669 = vst [vmem:[%s231 + $0x50] sm:$0xff] %v1637
      %1670 = vst [vmem:[%s231 + $0x58] sm:$0xff] %v1638
      %1671 = vst [vmem:[%s231 + $0x60] sm:$0xff] %v1639
      %1672 = vst [vmem:[%s231 + $0x68] sm:$0xff] %v1640
      %1673 = vst [vmem:[%s231 + $0x70] sm:$0xff] %v1641
      %1674 = vst [vmem:[%s231 + $0x78] sm:$0xff] %v1642
      %1675 = vst [vmem:[%s231 + $0x80] sm:$0xff] %v1643
      %1676 = vst [vmem:[%s231 + $0x88] sm:$0xff] %v1644
      %1677 = vst [vmem:[%s231 + $0x90] sm:$0xff] %v1645
      %1678 = vst [vmem:[%s231 + $0x98] sm:$0xff] %v1646
      %1679 = vst [vmem:[%s231 + $0xa0] sm:$0xff] %v1647
      %1680 = vst [vmem:[%s231 + $0xa8] sm:$0xff] %v1648
      %1681 = vst [vmem:[%s231 + $0xb0] sm:$0xff] %v1649
      %1682 = vst [vmem:[%s231 + $0xb8] sm:$0xff] %v1650
      %1683 = vst [vmem:[%s231 + $0xc0] sm:$0xff] %v1651
      %1684 = vst [vmem:[%s231 + $0xc8] sm:$0xff] %v1652
      %1685 = vst [vmem:[%s231 + $0xd0] sm:$0xff] %v1653
      %1686 = vst [vmem:[%s231 + $0xd8] sm:$0xff] %v1654
      %1687 = vst [vmem:[%s231 + $0xe0] sm:$0xff] %v1655
      %1688 = vst [vmem:[%s231 + $0xe8] sm:$0xff] %v1656
      %1689 = vst [vmem:[%s231 + $0xf0] sm:$0xff] %v1657
      %1690 = vst [vmem:[%s231 + $0xf8] sm:$0xff] %v1658
      %v1691 = vld [vmem:[#allocation2 + $0x1] sm:$0xff]
      %v1692 = vld [vmem:[#allocation2 + $0x11] sm:$0xff]
      %v1693 = vld [vmem:[#allocation2 + $0x21] sm:$0xff]
      %v1694 = vld [vmem:[#allocation2 + $0x31] sm:$0xff]
      %v1695 = vld [vmem:[#allocation2 + $0x41] sm:$0xff]
      %v1696 = vld [vmem:[#allocation2 + $0x51] sm:$0xff]
      %v1697 = vld [vmem:[#allocation2 + $0x61] sm:$0xff]
      %v1698 = vld [vmem:[#allocation2 + $0x71] sm:$0xff]
      %v1699 = vld [vmem:[#allocation2 + $0xc1] sm:$0xff]
      %v1700 = vld [vmem:[#allocation2 + $0xd1] sm:$0xff]
      %v1701 = vld [vmem:[#allocation2 + $0xe1] sm:$0xff]
      %v1702 = vld [vmem:[#allocation2 + $0xf1] sm:$0xff]
      %v1703 = vld [vmem:[#allocation2 + $0x101] sm:$0xff]
      %v1704 = vld [vmem:[#allocation2 + $0x111] sm:$0xff]
      %v1705 = vld [vmem:[#allocation2 + $0x121] sm:$0xff]
      %v1706 = vld [vmem:[#allocation2 + $0x131] sm:$0xff]
      %v1707 = vld [vmem:[#allocation2 + $0x181] sm:$0xff]
      %v1708 = vld [vmem:[#allocation2 + $0x191] sm:$0xff]
      %v1709 = vld [vmem:[#allocation2 + $0x1a1] sm:$0xff]
      %v1710 = vld [vmem:[#allocation2 + $0x1b1] sm:$0xff]
      %v1711 = vld [vmem:[#allocation2 + $0x1c1] sm:$0xff]
      %v1712 = vld [vmem:[#allocation2 + $0x1d1] sm:$0xff]
      %v1713 = vld [vmem:[#allocation2 + $0x1e1] sm:$0xff]
      %v1714 = vld [vmem:[#allocation2 + $0x1f1] sm:$0xff]
      %v1715 = vld [vmem:[#allocation2 + $0x241] sm:$0xff]
      %v1716 = vld [vmem:[#allocation2 + $0x251] sm:$0xff]
      %v1717 = vld [vmem:[#allocation2 + $0x261] sm:$0xff]
      %v1718 = vld [vmem:[#allocation2 + $0x271] sm:$0xff]
      %v1719 = vld [vmem:[#allocation2 + $0x281] sm:$0xff]
      %v1720 = vld [vmem:[#allocation2 + $0x291] sm:$0xff]
      %v1721 = vld [vmem:[#allocation2 + $0x2a1] sm:$0xff]
      %v1722 = vld [vmem:[#allocation2 + $0x2b1] sm:$0xff]
      %v1723 = vpack.c.bf16 %v1692, %v1691
      %v1724 = vpack.c.bf16 %v1694, %v1693
      %v1725 = vpack.c.bf16 %v1696, %v1695
      %v1726 = vpack.c.bf16 %v1698, %v1697
      %v1727 = vpack.c.bf16 %v1700, %v1699
      %v1728 = vpack.c.bf16 %v1702, %v1701
      %v1729 = vpack.c.bf16 %v1704, %v1703
      %v1730 = vpack.c.bf16 %v1706, %v1705
      %v1731 = vpack.c.bf16 %v1708, %v1707
      %v1732 = vpack.c.bf16 %v1710, %v1709
      %v1733 = vpack.c.bf16 %v1712, %v1711
      %v1734 = vpack.c.bf16 %v1714, %v1713
      %v1735 = vpack.c.bf16 %v1716, %v1715
      %v1736 = vpack.c.bf16 %v1718, %v1717
      %v1737 = vpack.c.bf16 %v1720, %v1719
      %v1738 = vpack.c.bf16 %v1722, %v1721
      %s1739 = scalar_lea.vmem %s3, 16
      %v1740 = vld [vmem:[%s1739] sm:$0xf]
      %v1741 = vld [vmem:[%s1739 + $0x4] sm:$0xf]
      %v1742 = vld [vmem:[%s1739 + $0x8] sm:$0xf]
      %v1743 = vld [vmem:[%s1739 + $0xc] sm:$0xf]
      %v1748 = vunpack.c.l.b16 %v1740
      %v1749 = vunpack.c.l.b16 %v1741
      %v1750 = vunpack.c.l.b16 %v1742
      %v1751 = vunpack.c.l.b16 %v1743
      %v1752 = vpack.c.b16 %v1749, %v1748
      %v1753 = vpack.c.b16 %v1751, %v1750
      %v1757 = vsel %vm593, %v1723, 0
      %v1760 = vsel %vm593, %v1724, 0
      %v1763 = vsel %vm593, %v1725, 0
      %v1766 = vsel %vm593, %v1726, 0
      %v1769 = vsel %vm593, %v1727, 0
      %v1772 = vsel %vm593, %v1728, 0
      %v1775 = vsel %vm593, %v1729, 0
      %v1778 = vsel %vm593, %v1730, 0
      %v1781 = vsel %vm593, %v1731, 0
      %v1784 = vsel %vm593, %v1732, 0
      %v1787 = vsel %vm593, %v1733, 0
      %v1790 = vsel %vm593, %v1734, 0
      %v1793 = vsel %vm593, %v1735, 0
      %v1796 = vsel %vm593, %v1736, 0
      %v1799 = vsel %vm593, %v1737, 0
      %v1802 = vsel %vm593, %v1738, 0
      %1804 = vmatprep.subr.bf16.mxu0 0
      %1805 = vmatpush1.bf16.msra.mxu0 %v1752
      %1806 = vmatprep.subr.bf16.mxu0 0
      %1807 = vmatpush1.bf16.msra.mxu0 %v1753
      %1808 = vmatprep.subr.bf16.mxu0 0
      %1809 = vmatpush1.bf16.msra.mxu0 0
      %1810 = vmatprep.subr.bf16.mxu0 0
      %1811 = vmatpush1.bf16.msra.mxu0 0
      %1812 = vmatprep.subr.bf16.mxu0 0
      %1813 = vmatpush1.bf16.msra.mxu0 0
      %1814 = vmatprep.subr.bf16.mxu0 0
      %1815 = vmatpush1.bf16.msra.mxu0 0
      %1816 = vmatprep.subr.bf16.mxu0 0
      %1817 = vmatpush1.bf16.msra.mxu0 0
      %1818 = vmatprep.subr.bf16.mxu0 0
      %1819 = vmatpush1.bf16.msra.mxu0 0
      %1820 = vmatprep.subr.bf16.mxu0 0
      %1821 = vmatpush1.bf16.msra.mxu0 0
      %1822 = vmatprep.subr.bf16.mxu0 0
      %1823 = vmatpush1.bf16.msra.mxu0 0
      %1824 = vmatprep.subr.bf16.mxu0 0
      %1825 = vmatpush1.bf16.msra.mxu0 0
      %1826 = vmatprep.subr.bf16.mxu0 0
      %1827 = vmatpush1.bf16.msra.mxu0 0
      %1828 = vmatprep.subr.bf16.mxu0 0
      %1829 = vmatpush1.bf16.msra.mxu0 0
      %1830 = vmatprep.subr.bf16.mxu0 0
      %1831 = vmatpush1.bf16.msra.mxu0 0
      %1832 = vmatprep.subr.bf16.mxu0 0
      %1833 = vmatpush1.bf16.msra.mxu0 0
      %1834 = vmatprep.subr.bf16.mxu0 0
      %1835 = vmatpush1.bf16.msra.mxu0 0
      %1836 = vmatprep.mubr.bf16.mxu0 0
      %1837 = vmatmul.mubr.bf16.gmra.mrb[0].mxu0 %v1757
      %v1838 = vpop.f32.mrb[0].mxu0
      %v1839 = vadd.f32 0.0, %v1838
      %v1840 = vpop.f32.mrb[0].mxu0
      %v1841 = vpop.f32.mrb[0].mxu0
      %v1842 = vadd.f32 0.0, %v1841
      %v1843 = vpop.f32.mrb[0].mxu0
      %1844 = vmatprep.mubr.bf16.mxu0 0
      %1845 = vmatmul.mubr.bf16.gmra.mrb[0].mxu0 %v1760
      %v1846 = vpop.f32.mrb[0].mxu0
      %v1847 = vadd.f32 0.0, %v1846
      %v1848 = vpop.f32.mrb[0].mxu0
      %v1849 = vpop.f32.mrb[0].mxu0
      %v1850 = vadd.f32 0.0, %v1849
      %v1851 = vpop.f32.mrb[0].mxu0
      %1852 = vmatprep.mubr.bf16.mxu0 0
      %1853 = vmatmul.mubr.bf16.gmra.mrb[0].mxu0 %v1763
      %v1854 = vpop.f32.mrb[0].mxu0
      %v1855 = vadd.f32 0.0, %v1854
      %v1856 = vpop.f32.mrb[0].mxu0
      %v1857 = vpop.f32.mrb[0].mxu0
      %v1858 = vadd.f32 0.0, %v1857
      %v1859 = vpop.f32.mrb[0].mxu0
      %1860 = vmatprep.mubr.bf16.mxu0 0
      %1861 = vmatmul.mubr.bf16.gmra.mrb[0].mxu0 %v1766
      %v1862 = vpop.f32.mrb[0].mxu0
      %v1863 = vadd.f32 0.0, %v1862
      %v1864 = vpop.f32.mrb[0].mxu0
      %v1865 = vpop.f32.mrb[0].mxu0
      %v1866 = vadd.f32 0.0, %v1865
      %v1867 = vpop.f32.mrb[0].mxu0
      %1868 = vmatprep.mubr.bf16.mxu0 0
      %1869 = vmatmul.mubr.bf16.gmra.mrb[0].mxu0 %v1769
      %v1870 = vpop.f32.mrb[0].mxu0
      %v1871 = vadd.f32 0.0, %v1870
      %v1872 = vpop.f32.mrb[0].mxu0
      %v1873 = vpop.f32.mrb[0].mxu0
      %v1874 = vadd.f32 0.0, %v1873
      %v1875 = vpop.f32.mrb[0].mxu0
      %1876 = vmatprep.mubr.bf16.mxu0 0
      %1877 = vmatmul.mubr.bf16.gmra.mrb[0].mxu0 %v1772
      %v1878 = vpop.f32.mrb[0].mxu0
      %v1879 = vadd.f32 0.0, %v1878
      %v1880 = vpop.f32.mrb[0].mxu0
      %v1881 = vpop.f32.mrb[0].mxu0
      %v1882 = vadd.f32 0.0, %v1881
      %v1883 = vpop.f32.mrb[0].mxu0
      %1884 = vmatprep.mubr.bf16.mxu0 0
      %1885 = vmatmul.mubr.bf16.gmra.mrb[0].mxu0 %v1775
      %v1886 = vpop.f32.mrb[0].mxu0
      %v1887 = vadd.f32 0.0, %v1886
      %v1888 = vpop.f32.mrb[0].mxu0
      %v1889 = vpop.f32.mrb[0].mxu0
      %v1890 = vadd.f32 0.0, %v1889
      %v1891 = vpop.f32.mrb[0].mxu0
      %1892 = vmatprep.mubr.bf16.mxu0 0
      %1893 = vmatmul.mubr.bf16.gmra.mrb[0].mxu0 %v1778
      %v1894 = vpop.f32.mrb[0].mxu0
      %v1895 = vadd.f32 0.0, %v1894
      %v1896 = vpop.f32.mrb[0].mxu0
      %v1897 = vpop.f32.mrb[0].mxu0
      %v1898 = vadd.f32 0.0, %v1897
      %v1899 = vpop.f32.mrb[0].mxu0
      %1900 = vmatprep.mubr.bf16.mxu0 0
      %1901 = vmatmul.mubr.bf16.gmra.mrb[0].mxu0 %v1781
      %v1902 = vpop.f32.mrb[0].mxu0
      %v1903 = vadd.f32 0.0, %v1902
      %v1904 = vpop.f32.mrb[0].mxu0
      %v1905 = vpop.f32.mrb[0].mxu0
      %v1906 = vadd.f32 0.0, %v1905
      %v1907 = vpop.f32.mrb[0].mxu0
      %1908 = vmatprep.mubr.bf16.mxu0 0
      %1909 = vmatmul.mubr.bf16.gmra.mrb[0].mxu0 %v1784
      %v1910 = vpop.f32.mrb[0].mxu0
      %v1911 = vadd.f32 0.0, %v1910
      %v1912 = vpop.f32.mrb[0].mxu0
      %v1913 = vpop.f32.mrb[0].mxu0
      %v1914 = vadd.f32 0.0, %v1913
      %v1915 = vpop.f32.mrb[0].mxu0
      %1916 = vmatprep.mubr.bf16.mxu0 0
      %1917 = vmatmul.mubr.bf16.gmra.mrb[0].mxu0 %v1787
      %v1918 = vpop.f32.mrb[0].mxu0
      %v1919 = vadd.f32 0.0, %v1918
      %v1920 = vpop.f32.mrb[0].mxu0
      %v1921 = vpop.f32.mrb[0].mxu0
      %v1922 = vadd.f32 0.0, %v1921
      %v1923 = vpop.f32.mrb[0].mxu0
      %1924 = vmatprep.mubr.bf16.mxu0 0
      %1925 = vmatmul.mubr.bf16.gmra.mrb[0].mxu0 %v1790
      %v1926 = vpop.f32.mrb[0].mxu0
      %v1927 = vadd.f32 0.0, %v1926
      %v1928 = vpop.f32.mrb[0].mxu0
      %v1929 = vpop.f32.mrb[0].mxu0
      %v1930 = vadd.f32 0.0, %v1929
      %v1931 = vpop.f32.mrb[0].mxu0
      %1932 = vmatprep.mubr.bf16.mxu0 0
      %1933 = vmatmul.mubr.bf16.gmra.mrb[0].mxu0 %v1793
      %v1934 = vpop.f32.mrb[0].mxu0
      %v1935 = vadd.f32 0.0, %v1934
      %v1936 = vpop.f32.mrb[0].mxu0
      %v1937 = vpop.f32.mrb[0].mxu0
      %v1938 = vadd.f32 0.0, %v1937
      %v1939 = vpop.f32.mrb[0].mxu0
      %1940 = vmatprep.mubr.bf16.mxu0 0
      %1941 = vmatmul.mubr.bf16.gmra.mrb[0].mxu0 %v1796
      %v1942 = vpop.f32.mrb[0].mxu0
      %v1943 = vadd.f32 0.0, %v1942
      %v1944 = vpop.f32.mrb[0].mxu0
      %v1945 = vpop.f32.mrb[0].mxu0
      %v1946 = vadd.f32 0.0, %v1945
      %v1947 = vpop.f32.mrb[0].mxu0
      %1948 = vmatprep.mubr.bf16.mxu0 0
      %1949 = vmatmul.mubr.bf16.gmra.mrb[0].mxu0 %v1799
      %v1950 = vpop.f32.mrb[0].mxu0
      %v1951 = vadd.f32 0.0, %v1950
      %v1952 = vpop.f32.mrb[0].mxu0
      %v1953 = vpop.f32.mrb[0].mxu0
      %v1954 = vadd.f32 0.0, %v1953
      %v1955 = vpop.f32.mrb[0].mxu0
      %1956 = vmatprep.mubr.bf16.mxu0 0
      %1957 = vmatmul.mubr.bf16.gmra.mrb[0].mxu0 %v1802
      %v1958 = vpop.f32.mrb[0].mxu0
      %v1959 = vadd.f32 0.0, %v1958
      %v1960 = vpop.f32.mrb[0].mxu0
      %v1961 = vpop.f32.mrb[0].mxu0
      %v1962 = vadd.f32 0.0, %v1961
      %v1963 = vpop.f32.mrb[0].mxu0
      %1964 = vdwg.mxu0
      %v1965 = vld [vmem:[%s231] sm:$0xff]
      %v1966 = vld [vmem:[%s231 + $0x8] sm:$0xff]
      %v1967 = vld [vmem:[%s231 + $0x10] sm:$0xff]
      %v1968 = vld [vmem:[%s231 + $0x18] sm:$0xff]
      %v1969 = vld [vmem:[%s231 + $0x20] sm:$0xff]
      %v1970 = vld [vmem:[%s231 + $0x28] sm:$0xff]
      %v1971 = vld [vmem:[%s231 + $0x30] sm:$0xff]
      %v1972 = vld [vmem:[%s231 + $0x38] sm:$0xff]
      %v1973 = vld [vmem:[%s231 + $0x40] sm:$0xff]
      %v1974 = vld [vmem:[%s231 + $0x48] sm:$0xff]
      %v1975 = vld [vmem:[%s231 + $0x50] sm:$0xff]
      %v1976 = vld [vmem:[%s231 + $0x58] sm:$0xff]
      %v1977 = vld [vmem:[%s231 + $0x60] sm:$0xff]
      %v1978 = vld [vmem:[%s231 + $0x68] sm:$0xff]
      %v1979 = vld [vmem:[%s231 + $0x70] sm:$0xff]
      %v1980 = vld [vmem:[%s231 + $0x78] sm:$0xff]
      %v1981 = vld [vmem:[%s231 + $0x80] sm:$0xff]
      %v1982 = vld [vmem:[%s231 + $0x88] sm:$0xff]
      %v1983 = vld [vmem:[%s231 + $0x90] sm:$0xff]
      %v1984 = vld [vmem:[%s231 + $0x98] sm:$0xff]
      %v1985 = vld [vmem:[%s231 + $0xa0] sm:$0xff]
      %v1986 = vld [vmem:[%s231 + $0xa8] sm:$0xff]
      %v1987 = vld [vmem:[%s231 + $0xb0] sm:$0xff]
      %v1988 = vld [vmem:[%s231 + $0xb8] sm:$0xff]
      %v1989 = vld [vmem:[%s231 + $0xc0] sm:$0xff]
      %v1990 = vld [vmem:[%s231 + $0xc8] sm:$0xff]
      %v1991 = vld [vmem:[%s231 + $0xd0] sm:$0xff]
      %v1992 = vld [vmem:[%s231 + $0xd8] sm:$0xff]
      %v1993 = vld [vmem:[%s231 + $0xe0] sm:$0xff]
      %v1994 = vld [vmem:[%s231 + $0xe8] sm:$0xff]
      %v1995 = vld [vmem:[%s231 + $0xf0] sm:$0xff]
      %v1996 = vld [vmem:[%s231 + $0xf8] sm:$0xff]
      %v1997 = vadd.f32 %v1965, %v1839
      %v1998 = vadd.f32 %v1966, %v1842
      %v1999 = vadd.f32 %v1967, %v1847
      %v2000 = vadd.f32 %v1968, %v1850
      %v2001 = vadd.f32 %v1969, %v1855
      %v2002 = vadd.f32 %v1970, %v1858
      %v2003 = vadd.f32 %v1971, %v1863
      %v2004 = vadd.f32 %v1972, %v1866
      %v2005 = vadd.f32 %v1973, %v1871
      %v2006 = vadd.f32 %v1974, %v1874
      %v2007 = vadd.f32 %v1975, %v1879
      %v2008 = vadd.f32 %v1976, %v1882
      %v2009 = vadd.f32 %v1977, %v1887
      %v2010 = vadd.f32 %v1978, %v1890
      %v2011 = vadd.f32 %v1979, %v1895
      %v2012 = vadd.f32 %v1980, %v1898
      %v2013 = vadd.f32 %v1981, %v1903
      %v2014 = vadd.f32 %v1982, %v1906
      %v2015 = vadd.f32 %v1983, %v1911
      %v2016 = vadd.f32 %v1984, %v1914
      %v2017 = vadd.f32 %v1985, %v1919
      %v2018 = vadd.f32 %v1986, %v1922
      %v2019 = vadd.f32 %v1987, %v1927
      %v2020 = vadd.f32 %v1988, %v1930
      %v2021 = vadd.f32 %v1989, %v1935
      %v2022 = vadd.f32 %v1990, %v1938
      %v2023 = vadd.f32 %v1991, %v1943
      %v2024 = vadd.f32 %v1992, %v1946
      %v2025 = vadd.f32 %v1993, %v1951
      %v2026 = vadd.f32 %v1994, %v1954
      %v2027 = vadd.f32 %v1995, %v1959
      %v2028 = vadd.f32 %v1996, %v1962
      %2029 = vst [vmem:[%s231] sm:$0xff] %v1997
      %2030 = vst [vmem:[%s231 + $0x8] sm:$0xff] %v1998
      %2031 = vst [vmem:[%s231 + $0x10] sm:$0xff] %v1999
      %2032 = vst [vmem:[%s231 + $0x18] sm:$0xff] %v2000
      %2033 = vst [vmem:[%s231 + $0x20] sm:$0xff] %v2001
      %2034 = vst [vmem:[%s231 + $0x28] sm:$0xff] %v2002
      %2035 = vst [vmem:[%s231 + $0x30] sm:$0xff] %v2003
      %2036 = vst [vmem:[%s231 + $0x38] sm:$0xff] %v2004
      %2037 = vst [vmem:[%s231 + $0x40] sm:$0xff] %v2005
      %2038 = vst [vmem:[%s231 + $0x48] sm:$0xff] %v2006
      %2039 = vst [vmem:[%s231 + $0x50] sm:$0xff] %v2007
      %2040 = vst [vmem:[%s231 + $0x58] sm:$0xff] %v2008
      %2041 = vst [vmem:[%s231 + $0x60] sm:$0xff] %v2009
      %2042 = vst [vmem:[%s231 + $0x68] sm:$0xff] %v2010
      %2043 = vst [vmem:[%s231 + $0x70] sm:$0xff] %v2011
      %2044 = vst [vmem:[%s231 + $0x78] sm:$0xff] %v2012
      %2045 = vst [vmem:[%s231 + $0x80] sm:$0xff] %v2013
      %2046 = vst [vmem:[%s231 + $0x88] sm:$0xff] %v2014
      %2047 = vst [vmem:[%s231 + $0x90] sm:$0xff] %v2015
      %2048 = vst [vmem:[%s231 + $0x98] sm:$0xff] %v2016
      %2049 = vst [vmem:[%s231 + $0xa0] sm:$0xff] %v2017
      %2050 = vst [vmem:[%s231 + $0xa8] sm:$0xff] %v2018
      %2051 = vst [vmem:[%s231 + $0xb0] sm:$0xff] %v2019
      %2052 = vst [vmem:[%s231 + $0xb8] sm:$0xff] %v2020
      %2053 = vst [vmem:[%s231 + $0xc0] sm:$0xff] %v2021
      %2054 = vst [vmem:[%s231 + $0xc8] sm:$0xff] %v2022
      %2055 = vst [vmem:[%s231 + $0xd0] sm:$0xff] %v2023
      %2056 = vst [vmem:[%s231 + $0xd8] sm:$0xff] %v2024
      %2057 = vst [vmem:[%s231 + $0xe0] sm:$0xff] %v2025
      %2058 = vst [vmem:[%s231 + $0xe8] sm:$0xff] %v2026
      %2059 = vst [vmem:[%s231 + $0xf0] sm:$0xff] %v2027
      %2060 = vst [vmem:[%s231 + $0xf8] sm:$0xff] %v2028
      %v2061 = vld [vmem:[#allocation2 + $0x2] sm:$0xff]
      %v2062 = vld [vmem:[#allocation2 + $0x12] sm:$0xff]
      %v2063 = vld [vmem:[#allocation2 + $0x22] sm:$0xff]
      %v2064 = vld [vmem:[#allocation2 + $0x32] sm:$0xff]
      %v2065 = vld [vmem:[#allocation2 + $0x42] sm:$0xff]
      %v2066 = vld [vmem:[#allocation2 + $0x52] sm:$0xff]
      %v2067 = vld [vmem:[#allocation2 + $0x62] sm:$0xff]
      %v2068 = vld [vmem:[#allocation2 + $0x72] sm:$0xff]
      %v2069 = vld [vmem:[#allocation2 + $0xc2] sm:$0xff]
      %v2070 = vld [vmem:[#allocation2 + $0xd2] sm:$0xff]
      %v2071 = vld [vmem:[#allocation2 + $0xe2] sm:$0xff]
      %v2072 = vld [vmem:[#allocation2 + $0xf2] sm:$0xff]
      %v2073 = vld [vmem:[#allocation2 + $0x102] sm:$0xff]
      %v2074 = vld [vmem:[#allocation2 + $0x112] sm:$0xff]
      %v2075 = vld [vmem:[#allocation2 + $0x122] sm:$0xff]
      %v2076 = vld [vmem:[#allocation2 + $0x132] sm:$0xff]
      %v2077 = vld [vmem:[#allocation2 + $0x182] sm:$0xff]
      %v2078 = vld [vmem:[#allocation2 + $0x192] sm:$0xff]
      %v2079 = vld [vmem:[#allocation2 + $0x1a2] sm:$0xff]
      %v2080 = vld [vmem:[#allocation2 + $0x1b2] sm:$0xff]
      %v2081 = vld [vmem:[#allocation2 + $0x1c2] sm:$0xff]
      %v2082 = vld [vmem:[#allocation2 + $0x1d2] sm:$0xff]
      %v2083 = vld [vmem:[#allocation2 + $0x1e2] sm:$0xff]
      %v2084 = vld [vmem:[#allocation2 + $0x1f2] sm:$0xff]
      %v2085 = vld [vmem:[#allocation2 + $0x242] sm:$0xff]
      %v2086 = vld [vmem:[#allocation2 + $0x252] sm:$0xff]
      %v2087 = vld [vmem:[#allocation2 + $0x262] sm:$0xff]
      %v2088 = vld [vmem:[#allocation2 + $0x272] sm:$0xff]
      %v2089 = vld [vmem:[#allocation2 + $0x282] sm:$0xff]
      %v2090 = vld [vmem:[#allocation2 + $0x292] sm:$0xff]
      %v2091 = vld [vmem:[#allocation2 + $0x2a2] sm:$0xff]
      %v2092 = vld [vmem:[#allocation2 + $0x2b2] sm:$0xff]
      %v2093 = vpack.c.bf16 %v2062, %v2061
      %v2094 = vpack.c.bf16 %v2064, %v2063
      %v2095 = vpack.c.bf16 %v2066, %v2065
      %v2096 = vpack.c.bf16 %v2068, %v2067
      %v2097 = vpack.c.bf16 %v2070, %v2069
      %v2098 = vpack.c.bf16 %v2072, %v2071
      %v2099 = vpack.c.bf16 %v2074, %v2073
      %v2100 = vpack.c.bf16 %v2076, %v2075
      %v2101 = vpack.c.bf16 %v2078, %v2077
      %v2102 = vpack.c.bf16 %v2080, %v2079
      %v2103 = vpack.c.bf16 %v2082, %v2081
      %v2104 = vpack.c.bf16 %v2084, %v2083
      %v2105 = vpack.c.bf16 %v2086, %v2085
      %v2106 = vpack.c.bf16 %v2088, %v2087
      %v2107 = vpack.c.bf16 %v2090, %v2089
      %v2108 = vpack.c.bf16 %v2092, %v2091
      %s2109 = scalar_lea.vmem %s3, 32
      %v2110 = vld [vmem:[%s2109] sm:$0xf]
      %v2111 = vld [vmem:[%s2109 + $0x4] sm:$0xf]
      %v2112 = vld [vmem:[%s2109 + $0x8] sm:$0xf]
      %v2113 = vld [vmem:[%s2109 + $0xc] sm:$0xf]
      %v2118 = vunpack.c.l.b16 %v2110
      %v2119 = vunpack.c.l.b16 %v2111
      %v2120 = vunpack.c.l.b16 %v2112
      %v2121 = vunpack.c.l.b16 %v2113
      %v2122 = vpack.c.b16 %v2119, %v2118
      %v2123 = vpack.c.b16 %v2121, %v2120
      %v2127 = vsel %vm593, %v2093, 0
      %v2130 = vsel %vm593, %v2094, 0
      %v2133 = vsel %vm593, %v2095, 0
      %v2136 = vsel %vm593, %v2096, 0
      %v2139 = vsel %vm593, %v2097, 0
      %v2142 = vsel %vm593, %v2098, 0
      %v2145 = vsel %vm593, %v2099, 0
      %v2148 = vsel %vm593, %v2100, 0
      %v2151 = vsel %vm593, %v2101, 0
      %v2154 = vsel %vm593, %v2102, 0
      %v2157 = vsel %vm593, %v2103, 0
      %v2160 = vsel %vm593, %v2104, 0
      %v2163 = vsel %vm593, %v2105, 0
      %v2166 = vsel %vm593, %v2106, 0
      %v2169 = vsel %vm593, %v2107, 0
      %v2172 = vsel %vm593, %v2108, 0
      %2174 = vmatprep.subr.bf16.mxu0 0
      %2175 = vmatpush1.bf16.msra.mxu0 %v2122
      %2176 = vmatprep.subr.bf16.mxu0 0
      %2177 = vmatpush1.bf16.msra.mxu0 %v2123
      %2178 = vmatprep.subr.bf16.mxu0 0
      %2179 = vmatpush1.bf16.msra.mxu0 0
      %2180 = vmatprep.subr.bf16.mxu0 0
      %2181 = vmatpush1.bf16.msra.mxu0 0
      %2182 = vmatprep.subr.bf16.mxu0 0
      %2183 = vmatpush1.bf16.msra.mxu0 0
      %2184 = vmatprep.subr.bf16.mxu0 0
      %2185 = vmatpush1.bf16.msra.mxu0 0
      %2186 = vmatprep.subr.bf16.mxu0 0
      %2187 = vmatpush1.bf16.msra.mxu0 0
      %2188 = vmatprep.subr.bf16.mxu0 0
      %2189 = vmatpush1.bf16.msra.mxu0 0
      %2190 = vmatprep.subr.bf16.mxu0 0
      %2191 = vmatpush1.bf16.msra.mxu0 0
      %2192 = vmatprep.subr.bf16.mxu0 0
      %2193 = vmatpush1.bf16.msra.mxu0 0
      %2194 = vmatprep.subr.bf16.mxu0 0
      %2195 = vmatpush1.bf16.msra.mxu0 0
      %2196 = vmatprep.subr.bf16.mxu0 0
      %2197 = vmatpush1.bf16.msra.mxu0 0
      %2198 = vmatprep.subr.bf16.mxu0 0
      %2199 = vmatpush1.bf16.msra.mxu0 0
      %2200 = vmatprep.subr.bf16.mxu0 0
      %2201 = vmatpush1.bf16.msra.mxu0 0
      %2202 = vmatprep.subr.bf16.mxu0 0
      %2203 = vmatpush1.bf16.msra.mxu0 0
      %2204 = vmatprep.subr.bf16.mxu0 0
      %2205 = vmatpush1.bf16.msra.mxu0 0
      %2206 = vmatprep.mubr.bf16.mxu0 0
      %2207 = vmatmul.mubr.bf16.gmra.mrb[0].mxu0 %v2127
      %v2208 = vpop.f32.mrb[0].mxu0
      %v2209 = vadd.f32 0.0, %v2208
      %v2210 = vpop.f32.mrb[0].mxu0
      %v2211 = vpop.f32.mrb[0].mxu0
      %v2212 = vadd.f32 0.0, %v2211
      %v2213 = vpop.f32.mrb[0].mxu0
      %2214 = vmatprep.mubr.bf16.mxu0 0
      %2215 = vmatmul.mubr.bf16.gmra.mrb[0].mxu0 %v2130
      %v2216 = vpop.f32.mrb[0].mxu0
      %v2217 = vadd.f32 0.0, %v2216
      %v2218 = vpop.f32.mrb[0].mxu0
      %v2219 = vpop.f32.mrb[0].mxu0
      %v2220 = vadd.f32 0.0, %v2219
      %v2221 = vpop.f32.mrb[0].mxu0
      %2222 = vmatprep.mubr.bf16.mxu0 0
      %2223 = vmatmul.mubr.bf16.gmra.mrb[0].mxu0 %v2133
      %v2224 = vpop.f32.mrb[0].mxu0
      %v2225 = vadd.f32 0.0, %v2224
      %v2226 = vpop.f32.mrb[0].mxu0
      %v2227 = vpop.f32.mrb[0].mxu0
      %v2228 = vadd.f32 0.0, %v2227
      %v2229 = vpop.f32.mrb[0].mxu0
      %2230 = vmatprep.mubr.bf16.mxu0 0
      %2231 = vmatmul.mubr.bf16.gmra.mrb[0].mxu0 %v2136
      %v2232 = vpop.f32.mrb[0].mxu0
      %v2233 = vadd.f32 0.0, %v2232
      %v2234 = vpop.f32.mrb[0].mxu0
      %v2235 = vpop.f32.mrb[0].mxu0
      %v2236 = vadd.f32 0.0, %v2235
      %v2237 = vpop.f32.mrb[0].mxu0
      %2238 = vmatprep.mubr.bf16.mxu0 0
      %2239 = vmatmul.mubr.bf16.gmra.mrb[0].mxu0 %v2139
      %v2240 = vpop.f32.mrb[0].mxu0
      %v2241 = vadd.f32 0.0, %v2240
      %v2242 = vpop.f32.mrb[0].mxu0
      %v2243 = vpop.f32.mrb[0].mxu0
      %v2244 = vadd.f32 0.0, %v2243
      %v2245 = vpop.f32.mrb[0].mxu0
      %2246 = vmatprep.mubr.bf16.mxu0 0
      %2247 = vmatmul.mubr.bf16.gmra.mrb[0].mxu0 %v2142
      %v2248 = vpop.f32.mrb[0].mxu0
      %v2249 = vadd.f32 0.0, %v2248
      %v2250 = vpop.f32.mrb[0].mxu0
      %v2251 = vpop.f32.mrb[0].mxu0
      %v2252 = vadd.f32 0.0, %v2251
      %v2253 = vpop.f32.mrb[0].mxu0
      %2254 = vmatprep.mubr.bf16.mxu0 0
      %2255 = vmatmul.mubr.bf16.gmra.mrb[0].mxu0 %v2145
      %v2256 = vpop.f32.mrb[0].mxu0
      %v2257 = vadd.f32 0.0, %v2256
      %v2258 = vpop.f32.mrb[0].mxu0
      %v2259 = vpop.f32.mrb[0].mxu0
      %v2260 = vadd.f32 0.0, %v2259
      %v2261 = vpop.f32.mrb[0].mxu0
      %2262 = vmatprep.mubr.bf16.mxu0 0
      %2263 = vmatmul.mubr.bf16.gmra.mrb[0].mxu0 %v2148
      %v2264 = vpop.f32.mrb[0].mxu0
      %v2265 = vadd.f32 0.0, %v2264
      %v2266 = vpop.f32.mrb[0].mxu0
      %v2267 = vpop.f32.mrb[0].mxu0
      %v2268 = vadd.f32 0.0, %v2267
      %v2269 = vpop.f32.mrb[0].mxu0
      %2270 = vmatprep.mubr.bf16.mxu0 0
      %2271 = vmatmul.mubr.bf16.gmra.mrb[0].mxu0 %v2151
      %v2272 = vpop.f32.mrb[0].mxu0
      %v2273 = vadd.f32 0.0, %v2272
      %v2274 = vpop.f32.mrb[0].mxu0
      %v2275 = vpop.f32.mrb[0].mxu0
      %v2276 = vadd.f32 0.0, %v2275
      %v2277 = vpop.f32.mrb[0].mxu0
      %2278 = vmatprep.mubr.bf16.mxu0 0
      %2279 = vmatmul.mubr.bf16.gmra.mrb[0].mxu0 %v2154
      %v2280 = vpop.f32.mrb[0].mxu0
      %v2281 = vadd.f32 0.0, %v2280
      %v2282 = vpop.f32.mrb[0].mxu0
      %v2283 = vpop.f32.mrb[0].mxu0
      %v2284 = vadd.f32 0.0, %v2283
      %v2285 = vpop.f32.mrb[0].mxu0
      %2286 = vmatprep.mubr.bf16.mxu0 0
      %2287 = vmatmul.mubr.bf16.gmra.mrb[0].mxu0 %v2157
      %v2288 = vpop.f32.mrb[0].mxu0
      %v2289 = vadd.f32 0.0, %v2288
      %v2290 = vpop.f32.mrb[0].mxu0
      %v2291 = vpop.f32.mrb[0].mxu0
      %v2292 = vadd.f32 0.0, %v2291
      %v2293 = vpop.f32.mrb[0].mxu0
      %2294 = vmatprep.mubr.bf16.mxu0 0
      %2295 = vmatmul.mubr.bf16.gmra.mrb[0].mxu0 %v2160
      %v2296 = vpop.f32.mrb[0].mxu0
      %v2297 = vadd.f32 0.0, %v2296
      %v2298 = vpop.f32.mrb[0].mxu0
      %v2299 = vpop.f32.mrb[0].mxu0
      %v2300 = vadd.f32 0.0, %v2299
      %v2301 = vpop.f32.mrb[0].mxu0
      %2302 = vmatprep.mubr.bf16.mxu0 0
      %2303 = vmatmul.mubr.bf16.gmra.mrb[0].mxu0 %v2163
      %v2304 = vpop.f32.mrb[0].mxu0
      %v2305 = vadd.f32 0.0, %v2304
      %v2306 = vpop.f32.mrb[0].mxu0
      %v2307 = vpop.f32.mrb[0].mxu0
      %v2308 = vadd.f32 0.0, %v2307
      %v2309 = vpop.f32.mrb[0].mxu0
      %2310 = vmatprep.mubr.bf16.mxu0 0
      %2311 = vmatmul.mubr.bf16.gmra.mrb[0].mxu0 %v2166
      %v2312 = vpop.f32.mrb[0].mxu0
      %v2313 = vadd.f32 0.0, %v2312
      %v2314 = vpop.f32.mrb[0].mxu0
      %v2315 = vpop.f32.mrb[0].mxu0
      %v2316 = vadd.f32 0.0, %v2315
      %v2317 = vpop.f32.mrb[0].mxu0
      %2318 = vmatprep.mubr.bf16.mxu0 0
      %2319 = vmatmul.mubr.bf16.gmra.mrb[0].mxu0 %v2169
      %v2320 = vpop.f32.mrb[0].mxu0
      %v2321 = vadd.f32 0.0, %v2320
      %v2322 = vpop.f32.mrb[0].mxu0
      %v2323 = vpop.f32.mrb[0].mxu0
      %v2324 = vadd.f32 0.0, %v2323
      %v2325 = vpop.f32.mrb[0].mxu0
      %2326 = vmatprep.mubr.bf16.mxu0 0
      %2327 = vmatmul.mubr.bf16.gmra.mrb[0].mxu0 %v2172
      %v2328 = vpop.f32.mrb[0].mxu0
      %v2329 = vadd.f32 0.0, %v2328
      %v2330 = vpop.f32.mrb[0].mxu0
      %v2331 = vpop.f32.mrb[0].mxu0
      %v2332 = vadd.f32 0.0, %v2331
      %v2333 = vpop.f32.mrb[0].mxu0
      %2334 = vdwg.mxu0
      %v2335 = vld [vmem:[%s231] sm:$0xff]
      %v2336 = vld [vmem:[%s231 + $0x8] sm:$0xff]
      %v2337 = vld [vmem:[%s231 + $0x10] sm:$0xff]
      %v2338 = vld [vmem:[%s231 + $0x18] sm:$0xff]
      %v2339 = vld [vmem:[%s231 + $0x20] sm:$0xff]
      %v2340 = vld [vmem:[%s231 + $0x28] sm:$0xff]
      %v2341 = vld [vmem:[%s231 + $0x30] sm:$0xff]
      %v2342 = vld [vmem:[%s231 + $0x38] sm:$0xff]
      %v2343 = vld [vmem:[%s231 + $0x40] sm:$0xff]
      %v2344 = vld [vmem:[%s231 + $0x48] sm:$0xff]
      %v2345 = vld [vmem:[%s231 + $0x50] sm:$0xff]
      %v2346 = vld [vmem:[%s231 + $0x58] sm:$0xff]
      %v2347 = vld [vmem:[%s231 + $0x60] sm:$0xff]
      %v2348 = vld [vmem:[%s231 + $0x68] sm:$0xff]
      %v2349 = vld [vmem:[%s231 + $0x70] sm:$0xff]
      %v2350 = vld [vmem:[%s231 + $0x78] sm:$0xff]
      %v2351 = vld [vmem:[%s231 + $0x80] sm:$0xff]
      %v2352 = vld [vmem:[%s231 + $0x88] sm:$0xff]
      %v2353 = vld [vmem:[%s231 + $0x90] sm:$0xff]
      %v2354 = vld [vmem:[%s231 + $0x98] sm:$0xff]
      %v2355 = vld [vmem:[%s231 + $0xa0] sm:$0xff]
      %v2356 = vld [vmem:[%s231 + $0xa8] sm:$0xff]
      %v2357 = vld [vmem:[%s231 + $0xb0] sm:$0xff]
      %v2358 = vld [vmem:[%s231 + $0xb8] sm:$0xff]
      %v2359 = vld [vmem:[%s231 + $0xc0] sm:$0xff]
      %v2360 = vld [vmem:[%s231 + $0xc8] sm:$0xff]
      %v2361 = vld [vmem:[%s231 + $0xd0] sm:$0xff]
      %v2362 = vld [vmem:[%s231 + $0xd8] sm:$0xff]
      %v2363 = vld [vmem:[%s231 + $0xe0] sm:$0xff]
      %v2364 = vld [vmem:[%s231 + $0xe8] sm:$0xff]
      %v2365 = vld [vmem:[%s231 + $0xf0] sm:$0xff]
      %v2366 = vld [vmem:[%s231 + $0xf8] sm:$0xff]
      %v2367 = vadd.f32 %v2335, %v2209
      %v2368 = vadd.f32 %v2336, %v2212
      %v2369 = vadd.f32 %v2337, %v2217
      %v2370 = vadd.f32 %v2338, %v2220
      %v2371 = vadd.f32 %v2339, %v2225
      %v2372 = vadd.f32 %v2340, %v2228
      %v2373 = vadd.f32 %v2341, %v2233
      %v2374 = vadd.f32 %v2342, %v2236
      %v2375 = vadd.f32 %v2343, %v2241
      %v2376 = vadd.f32 %v2344, %v2244
      %v2377 = vadd.f32 %v2345, %v2249
      %v2378 = vadd.f32 %v2346, %v2252
      %v2379 = vadd.f32 %v2347, %v2257
      %v2380 = vadd.f32 %v2348, %v2260
      %v2381 = vadd.f32 %v2349, %v2265
      %v2382 = vadd.f32 %v2350, %v2268
      %v2383 = vadd.f32 %v2351, %v2273
      %v2384 = vadd.f32 %v2352, %v2276
      %v2385 = vadd.f32 %v2353, %v2281
      %v2386 = vadd.f32 %v2354, %v2284
      %v2387 = vadd.f32 %v2355, %v2289
      %v2388 = vadd.f32 %v2356, %v2292
      %v2389 = vadd.f32 %v2357, %v2297
      %v2390 = vadd.f32 %v2358, %v2300
      %v2391 = vadd.f32 %v2359, %v2305
      %v2392 = vadd.f32 %v2360, %v2308
      %v2393 = vadd.f32 %v2361, %v2313
      %v2394 = vadd.f32 %v2362, %v2316
      %v2395 = vadd.f32 %v2363, %v2321
      %v2396 = vadd.f32 %v2364, %v2324
      %v2397 = vadd.f32 %v2365, %v2329
      %v2398 = vadd.f32 %v2366, %v2332
      %2399 = vst [vmem:[%s231] sm:$0xff] %v2367
      %2400 = vst [vmem:[%s231 + $0x8] sm:$0xff] %v2368
      %2401 = vst [vmem:[%s231 + $0x10] sm:$0xff] %v2369
      %2402 = vst [vmem:[%s231 + $0x18] sm:$0xff] %v2370
      %2403 = vst [vmem:[%s231 + $0x20] sm:$0xff] %v2371
      %2404 = vst [vmem:[%s231 + $0x28] sm:$0xff] %v2372
      %2405 = vst [vmem:[%s231 + $0x30] sm:$0xff] %v2373
      %2406 = vst [vmem:[%s231 + $0x38] sm:$0xff] %v2374
      %2407 = vst [vmem:[%s231 + $0x40] sm:$0xff] %v2375
      %2408 = vst [vmem:[%s231 + $0x48] sm:$0xff] %v2376
      %2409 = vst [vmem:[%s231 + $0x50] sm:$0xff] %v2377
      %2410 = vst [vmem:[%s231 + $0x58] sm:$0xff] %v2378
      %2411 = vst [vmem:[%s231 + $0x60] sm:$0xff] %v2379
      %2412 = vst [vmem:[%s231 + $0x68] sm:$0xff] %v2380
      %2413 = vst [vmem:[%s231 + $0x70] sm:$0xff] %v2381
      %2414 = vst [vmem:[%s231 + $0x78] sm:$0xff] %v2382
      %2415 = vst [vmem:[%s231 + $0x80] sm:$0xff] %v2383
      %2416 = vst [vmem:[%s231 + $0x88] sm:$0xff] %v2384
      %2417 = vst [vmem:[%s231 + $0x90] sm:$0xff] %v2385
      %2418 = vst [vmem:[%s231 + $0x98] sm:$0xff] %v2386
      %2419 = vst [vmem:[%s231 + $0xa0] sm:$0xff] %v2387
      %2420 = vst [vmem:[%s231 + $0xa8] sm:$0xff] %v2388
      %2421 = vst [vmem:[%s231 + $0xb0] sm:$0xff] %v2389
      %2422 = vst [vmem:[%s231 + $0xb8] sm:$0xff] %v2390
      %2423 = vst [vmem:[%s231 + $0xc0] sm:$0xff] %v2391
      %2424 = vst [vmem:[%s231 + $0xc8] sm:$0xff] %v2392
      %2425 = vst [vmem:[%s231 + $0xd0] sm:$0xff] %v2393
      %2426 = vst [vmem:[%s231 + $0xd8] sm:$0xff] %v2394
      %2427 = vst [vmem:[%s231 + $0xe0] sm:$0xff] %v2395
      %2428 = vst [vmem:[%s231 + $0xe8] sm:$0xff] %v2396
      %2429 = vst [vmem:[%s231 + $0xf0] sm:$0xff] %v2397
      %2430 = vst [vmem:[%s231 + $0xf8] sm:$0xff] %v2398
      %v2431 = vld [vmem:[#allocation2 + $0x3] sm:$0xff]
      %v2432 = vld [vmem:[#allocation2 + $0x13] sm:$0xff]
      %v2433 = vld [vmem:[#allocation2 + $0x23] sm:$0xff]
      %v2434 = vld [vmem:[#allocation2 + $0x33] sm:$0xff]
      %v2435 = vld [vmem:[#allocation2 + $0x43] sm:$0xff]
      %v2436 = vld [vmem:[#allocation2 + $0x53] sm:$0xff]
      %v2437 = vld [vmem:[#allocation2 + $0x63] sm:$0xff]
      %v2438 = vld [vmem:[#allocation2 + $0x73] sm:$0xff]
      %v2439 = vld [vmem:[#allocation2 + $0xc3] sm:$0xff]
      %v2440 = vld [vmem:[#allocation2 + $0xd3] sm:$0xff]
      %v2441 = vld [vmem:[#allocation2 + $0xe3] sm:$0xff]
      %v2442 = vld [vmem:[#allocation2 + $0xf3] sm:$0xff]
      %v2443 = vld [vmem:[#allocation2 + $0x103] sm:$0xff]
      %v2444 = vld [vmem:[#allocation2 + $0x113] sm:$0xff]
      %v2445 = vld [vmem:[#allocation2 + $0x123] sm:$0xff]
      %v2446 = vld [vmem:[#allocation2 + $0x133] sm:$0xff]
      %v2447 = vld [vmem:[#allocation2 + $0x183] sm:$0xff]
      %v2448 = vld [vmem:[#allocation2 + $0x193] sm:$0xff]
      %v2449 = vld [vmem:[#allocation2 + $0x1a3] sm:$0xff]
      %v2450 = vld [vmem:[#allocation2 + $0x1b3] sm:$0xff]
      %v2451 = vld [vmem:[#allocation2 + $0x1c3] sm:$0xff]
      %v2452 = vld [vmem:[#allocation2 + $0x1d3] sm:$0xff]
      %v2453 = vld [vmem:[#allocation2 + $0x1e3] sm:$0xff]
      %v2454 = vld [vmem:[#allocation2 + $0x1f3] sm:$0xff]
      %v2455 = vld [vmem:[#allocation2 + $0x243] sm:$0xff]
      %v2456 = vld [vmem:[#allocation2 + $0x253] sm:$0xff]
      %v2457 = vld [vmem:[#allocation2 + $0x263] sm:$0xff]
      %v2458 = vld [vmem:[#allocation2 + $0x273] sm:$0xff]
      %v2459 = vld [vmem:[#allocation2 + $0x283] sm:$0xff]
      %v2460 = vld [vmem:[#allocation2 + $0x293] sm:$0xff]
      %v2461 = vld [vmem:[#allocation2 + $0x2a3] sm:$0xff]
      %v2462 = vld [vmem:[#allocation2 + $0x2b3] sm:$0xff]
      %v2463 = vpack.c.bf16 %v2432, %v2431
      %v2464 = vpack.c.bf16 %v2434, %v2433
      %v2465 = vpack.c.bf16 %v2436, %v2435
      %v2466 = vpack.c.bf16 %v2438, %v2437
      %v2467 = vpack.c.bf16 %v2440, %v2439
      %v2468 = vpack.c.bf16 %v2442, %v2441
      %v2469 = vpack.c.bf16 %v2444, %v2443
      %v2470 = vpack.c.bf16 %v2446, %v2445
      %v2471 = vpack.c.bf16 %v2448, %v2447
      %v2472 = vpack.c.bf16 %v2450, %v2449
      %v2473 = vpack.c.bf16 %v2452, %v2451
      %v2474 = vpack.c.bf16 %v2454, %v2453
      %v2475 = vpack.c.bf16 %v2456, %v2455
      %v2476 = vpack.c.bf16 %v2458, %v2457
      %v2477 = vpack.c.bf16 %v2460, %v2459
      %v2478 = vpack.c.bf16 %v2462, %v2461
      %s2479 = scalar_lea.vmem %s3, 48
      %v2480 = vld [vmem:[%s2479] sm:$0xf]
      %v2481 = vld [vmem:[%s2479 + $0x4] sm:$0xf]
      %v2482 = vld [vmem:[%s2479 + $0x8] sm:$0xf]
      %v2483 = vld [vmem:[%s2479 + $0xc] sm:$0xf]
      %v2488 = vunpack.c.l.b16 %v2480
      %v2489 = vunpack.c.l.b16 %v2481
      %v2490 = vunpack.c.l.b16 %v2482
      %v2491 = vunpack.c.l.b16 %v2483
      %v2492 = vpack.c.b16 %v2489, %v2488
      %v2493 = vpack.c.b16 %v2491, %v2490
      %v2497 = vsel %vm593, %v2463, 0
      %v2500 = vsel %vm593, %v2464, 0
      %v2503 = vsel %vm593, %v2465, 0
      %v2506 = vsel %vm593, %v2466, 0
      %v2509 = vsel %vm593, %v2467, 0
      %v2512 = vsel %vm593, %v2468, 0
      %v2515 = vsel %vm593, %v2469, 0
      %v2518 = vsel %vm593, %v2470, 0
      %v2521 = vsel %vm593, %v2471, 0
      %v2524 = vsel %vm593, %v2472, 0
      %v2527 = vsel %vm593, %v2473, 0
      %v2530 = vsel %vm593, %v2474, 0
      %v2533 = vsel %vm593, %v2475, 0
      %v2536 = vsel %vm593, %v2476, 0
      %v2539 = vsel %vm593, %v2477, 0
      %v2542 = vsel %vm593, %v2478, 0
      %2544 = vmatprep.subr.bf16.mxu0 0
      %2545 = vmatpush1.bf16.msra.mxu0 %v2492
      %2546 = vmatprep.subr.bf16.mxu0 0
      %2547 = vmatpush1.bf16.msra.mxu0 %v2493
      %2548 = vmatprep.subr.bf16.mxu0 0
      %2549 = vmatpush1.bf16.msra.mxu0 0
      %2550 = vmatprep.subr.bf16.mxu0 0
      %2551 = vmatpush1.bf16.msra.mxu0 0
      %2552 = vmatprep.subr.bf16.mxu0 0
      %2553 = vmatpush1.bf16.msra.mxu0 0
      %2554 = vmatprep.subr.bf16.mxu0 0
      %2555 = vmatpush1.bf16.msra.mxu0 0
      %2556 = vmatprep.subr.bf16.mxu0 0
      %2557 = vmatpush1.bf16.msra.mxu0 0
      %2558 = vmatprep.subr.bf16.mxu0 0
      %2559 = vmatpush1.bf16.msra.mxu0 0
      %2560 = vmatprep.subr.bf16.mxu0 0
      %2561 = vmatpush1.bf16.msra.mxu0 0
      %2562 = vmatprep.subr.bf16.mxu0 0
      %2563 = vmatpush1.bf16.msra.mxu0 0
      %2564 = vmatprep.subr.bf16.mxu0 0
      %2565 = vmatpush1.bf16.msra.mxu0 0
      %2566 = vmatprep.subr.bf16.mxu0 0
      %2567 = vmatpush1.bf16.msra.mxu0 0
      %2568 = vmatprep.subr.bf16.mxu0 0
      %2569 = vmatpush1.bf16.msra.mxu0 0
      %2570 = vmatprep.subr.bf16.mxu0 0
      %2571 = vmatpush1.bf16.msra.mxu0 0
      %2572 = vmatprep.subr.bf16.mxu0 0
      %2573 = vmatpush1.bf16.msra.mxu0 0
      %2574 = vmatprep.subr.bf16.mxu0 0
      %2575 = vmatpush1.bf16.msra.mxu0 0
      %2576 = vmatprep.mubr.bf16.mxu0 0
      %2577 = vmatmul.mubr.bf16.gmra.mrb[0].mxu0 %v2497
      %v2578 = vpop.f32.mrb[0].mxu0
      %v2579 = vadd.f32 0.0, %v2578
      %v2580 = vpop.f32.mrb[0].mxu0
      %v2581 = vpop.f32.mrb[0].mxu0
      %v2582 = vadd.f32 0.0, %v2581
      %v2583 = vpop.f32.mrb[0].mxu0
      %2584 = vmatprep.mubr.bf16.mxu0 0
      %2585 = vmatmul.mubr.bf16.gmra.mrb[0].mxu0 %v2500
      %v2586 = vpop.f32.mrb[0].mxu0
      %v2587 = vadd.f32 0.0, %v2586
      %v2588 = vpop.f32.mrb[0].mxu0
      %v2589 = vpop.f32.mrb[0].mxu0
      %v2590 = vadd.f32 0.0, %v2589
      %v2591 = vpop.f32.mrb[0].mxu0
      %2592 = vmatprep.mubr.bf16.mxu0 0
      %2593 = vmatmul.mubr.bf16.gmra.mrb[0].mxu0 %v2503
      %v2594 = vpop.f32.mrb[0].mxu0
      %v2595 = vadd.f32 0.0, %v2594
      %v2596 = vpop.f32.mrb[0].mxu0
      %v2597 = vpop.f32.mrb[0].mxu0
      %v2598 = vadd.f32 0.0, %v2597
      %v2599 = vpop.f32.mrb[0].mxu0
      %2600 = vmatprep.mubr.bf16.mxu0 0
      %2601 = vmatmul.mubr.bf16.gmra.mrb[0].mxu0 %v2506
      %v2602 = vpop.f32.mrb[0].mxu0
      %v2603 = vadd.f32 0.0, %v2602
      %v2604 = vpop.f32.mrb[0].mxu0
      %v2605 = vpop.f32.mrb[0].mxu0
      %v2606 = vadd.f32 0.0, %v2605
      %v2607 = vpop.f32.mrb[0].mxu0
      %2608 = vmatprep.mubr.bf16.mxu0 0
      %2609 = vmatmul.mubr.bf16.gmra.mrb[0].mxu0 %v2509
      %v2610 = vpop.f32.mrb[0].mxu0
      %v2611 = vadd.f32 0.0, %v2610
      %v2612 = vpop.f32.mrb[0].mxu0
      %v2613 = vpop.f32.mrb[0].mxu0
      %v2614 = vadd.f32 0.0, %v2613
      %v2615 = vpop.f32.mrb[0].mxu0
      %2616 = vmatprep.mubr.bf16.mxu0 0
      %2617 = vmatmul.mubr.bf16.gmra.mrb[0].mxu0 %v2512
      %v2618 = vpop.f32.mrb[0].mxu0
      %v2619 = vadd.f32 0.0, %v2618
      %v2620 = vpop.f32.mrb[0].mxu0
      %v2621 = vpop.f32.mrb[0].mxu0
      %v2622 = vadd.f32 0.0, %v2621
      %v2623 = vpop.f32.mrb[0].mxu0
      %2624 = vmatprep.mubr.bf16.mxu0 0
      %2625 = vmatmul.mubr.bf16.gmra.mrb[0].mxu0 %v2515
      %v2626 = vpop.f32.mrb[0].mxu0
      %v2627 = vadd.f32 0.0, %v2626
      %v2628 = vpop.f32.mrb[0].mxu0
      %v2629 = vpop.f32.mrb[0].mxu0
      %v2630 = vadd.f32 0.0, %v2629
      %v2631 = vpop.f32.mrb[0].mxu0
      %2632 = vmatprep.mubr.bf16.mxu0 0
      %2633 = vmatmul.mubr.bf16.gmra.mrb[0].mxu0 %v2518
      %v2634 = vpop.f32.mrb[0].mxu0
      %v2635 = vadd.f32 0.0, %v2634
      %v2636 = vpop.f32.mrb[0].mxu0
      %v2637 = vpop.f32.mrb[0].mxu0
      %v2638 = vadd.f32 0.0, %v2637
      %v2639 = vpop.f32.mrb[0].mxu0
      %2640 = vmatprep.mubr.bf16.mxu0 0
      %2641 = vmatmul.mubr.bf16.gmra.mrb[0].mxu0 %v2521
      %v2642 = vpop.f32.mrb[0].mxu0
      %v2643 = vadd.f32 0.0, %v2642
      %v2644 = vpop.f32.mrb[0].mxu0
      %v2645 = vpop.f32.mrb[0].mxu0
      %v2646 = vadd.f32 0.0, %v2645
      %v2647 = vpop.f32.mrb[0].mxu0
      %2648 = vmatprep.mubr.bf16.mxu0 0
      %2649 = vmatmul.mubr.bf16.gmra.mrb[0].mxu0 %v2524
      %v2650 = vpop.f32.mrb[0].mxu0
      %v2651 = vadd.f32 0.0, %v2650
      %v2652 = vpop.f32.mrb[0].mxu0
      %v2653 = vpop.f32.mrb[0].mxu0
      %v2654 = vadd.f32 0.0, %v2653
      %v2655 = vpop.f32.mrb[0].mxu0
      %2656 = vmatprep.mubr.bf16.mxu0 0
      %2657 = vmatmul.mubr.bf16.gmra.mrb[0].mxu0 %v2527
      %v2658 = vpop.f32.mrb[0].mxu0
      %v2659 = vadd.f32 0.0, %v2658
      %v2660 = vpop.f32.mrb[0].mxu0
      %v2661 = vpop.f32.mrb[0].mxu0
      %v2662 = vadd.f32 0.0, %v2661
      %v2663 = vpop.f32.mrb[0].mxu0
      %2664 = vmatprep.mubr.bf16.mxu0 0
      %2665 = vmatmul.mubr.bf16.gmra.mrb[0].mxu0 %v2530
      %v2666 = vpop.f32.mrb[0].mxu0
      %v2667 = vadd.f32 0.0, %v2666
      %v2668 = vpop.f32.mrb[0].mxu0
      %v2669 = vpop.f32.mrb[0].mxu0
      %v2670 = vadd.f32 0.0, %v2669
      %v2671 = vpop.f32.mrb[0].mxu0
      %2672 = vmatprep.mubr.bf16.mxu0 0
      %2673 = vmatmul.mubr.bf16.gmra.mrb[0].mxu0 %v2533
      %v2674 = vpop.f32.mrb[0].mxu0
      %v2675 = vadd.f32 0.0, %v2674
      %v2676 = vpop.f32.mrb[0].mxu0
      %v2677 = vpop.f32.mrb[0].mxu0
      %v2678 = vadd.f32 0.0, %v2677
      %v2679 = vpop.f32.mrb[0].mxu0
      %2680 = vmatprep.mubr.bf16.mxu0 0
      %2681 = vmatmul.mubr.bf16.gmra.mrb[0].mxu0 %v2536
      %v2682 = vpop.f32.mrb[0].mxu0
      %v2683 = vadd.f32 0.0, %v2682
      %v2684 = vpop.f32.mrb[0].mxu0
      %v2685 = vpop.f32.mrb[0].mxu0
      %v2686 = vadd.f32 0.0, %v2685
      %v2687 = vpop.f32.mrb[0].mxu0
      %2688 = vmatprep.mubr.bf16.mxu0 0
      %2689 = vmatmul.mubr.bf16.gmra.mrb[0].mxu0 %v2539
      %v2690 = vpop.f32.mrb[0].mxu0
      %v2691 = vadd.f32 0.0, %v2690
      %v2692 = vpop.f32.mrb[0].mxu0
      %v2693 = vpop.f32.mrb[0].mxu0
      %v2694 = vadd.f32 0.0, %v2693
      %v2695 = vpop.f32.mrb[0].mxu0
      %2696 = vmatprep.mubr.bf16.mxu0 0
      %2697 = vmatmul.mubr.bf16.gmra.mrb[0].mxu0 %v2542
      %v2698 = vpop.f32.mrb[0].mxu0
      %v2699 = vadd.f32 0.0, %v2698
      %v2700 = vpop.f32.mrb[0].mxu0
      %v2701 = vpop.f32.mrb[0].mxu0
      %v2702 = vadd.f32 0.0, %v2701
      %v2703 = vpop.f32.mrb[0].mxu0
      %2704 = vdwg.mxu0
      %v2705 = vld [vmem:[%s231] sm:$0xff]
      %v2706 = vld [vmem:[%s231 + $0x8] sm:$0xff]
      %v2707 = vld [vmem:[%s231 + $0x10] sm:$0xff]
      %v2708 = vld [vmem:[%s231 + $0x18] sm:$0xff]
      %v2709 = vld [vmem:[%s231 + $0x20] sm:$0xff]
      %v2710 = vld [vmem:[%s231 + $0x28] sm:$0xff]
      %v2711 = vld [vmem:[%s231 + $0x30] sm:$0xff]
      %v2712 = vld [vmem:[%s231 + $0x38] sm:$0xff]
      %v2713 = vld [vmem:[%s231 + $0x40] sm:$0xff]
      %v2714 = vld [vmem:[%s231 + $0x48] sm:$0xff]
      %v2715 = vld [vmem:[%s231 + $0x50] sm:$0xff]
      %v2716 = vld [vmem:[%s231 + $0x58] sm:$0xff]
      %v2717 = vld [vmem:[%s231 + $0x60] sm:$0xff]
      %v2718 = vld [vmem:[%s231 + $0x68] sm:$0xff]
      %v2719 = vld [vmem:[%s231 + $0x70] sm:$0xff]
      %v2720 = vld [vmem:[%s231 + $0x78] sm:$0xff]
      %v2721 = vld [vmem:[%s231 + $0x80] sm:$0xff]
      %v2722 = vld [vmem:[%s231 + $0x88] sm:$0xff]
      %v2723 = vld [vmem:[%s231 + $0x90] sm:$0xff]
      %v2724 = vld [vmem:[%s231 + $0x98] sm:$0xff]
      %v2725 = vld [vmem:[%s231 + $0xa0] sm:$0xff]
      %v2726 = vld [vmem:[%s231 + $0xa8] sm:$0xff]
      %v2727 = vld [vmem:[%s231 + $0xb0] sm:$0xff]
      %v2728 = vld [vmem:[%s231 + $0xb8] sm:$0xff]
      %v2729 = vld [vmem:[%s231 + $0xc0] sm:$0xff]
      %v2730 = vld [vmem:[%s231 + $0xc8] sm:$0xff]
      %v2731 = vld [vmem:[%s231 + $0xd0] sm:$0xff]
      %v2732 = vld [vmem:[%s231 + $0xd8] sm:$0xff]
      %v2733 = vld [vmem:[%s231 + $0xe0] sm:$0xff]
      %v2734 = vld [vmem:[%s231 + $0xe8] sm:$0xff]
      %v2735 = vld [vmem:[%s231 + $0xf0] sm:$0xff]
      %v2736 = vld [vmem:[%s231 + $0xf8] sm:$0xff]
      %v2737 = vadd.f32 %v2705, %v2579
      %v2738 = vadd.f32 %v2706, %v2582
      %v2739 = vadd.f32 %v2707, %v2587
      %v2740 = vadd.f32 %v2708, %v2590
      %v2741 = vadd.f32 %v2709, %v2595
      %v2742 = vadd.f32 %v2710, %v2598
      %v2743 = vadd.f32 %v2711, %v2603
      %v2744 = vadd.f32 %v2712, %v2606
      %v2745 = vadd.f32 %v2713, %v2611
      %v2746 = vadd.f32 %v2714, %v2614
      %v2747 = vadd.f32 %v2715, %v2619
      %v2748 = vadd.f32 %v2716, %v2622
      %v2749 = vadd.f32 %v2717, %v2627
      %v2750 = vadd.f32 %v2718, %v2630
      %v2751 = vadd.f32 %v2719, %v2635
      %v2752 = vadd.f32 %v2720, %v2638
      %v2753 = vadd.f32 %v2721, %v2643
      %v2754 = vadd.f32 %v2722, %v2646
      %v2755 = vadd.f32 %v2723, %v2651
      %v2756 = vadd.f32 %v2724, %v2654
      %v2757 = vadd.f32 %v2725, %v2659
      %v2758 = vadd.f32 %v2726, %v2662
      %v2759 = vadd.f32 %v2727, %v2667
      %v2760 = vadd.f32 %v2728, %v2670
      %v2761 = vadd.f32 %v2729, %v2675
      %v2762 = vadd.f32 %v2730, %v2678
      %v2763 = vadd.f32 %v2731, %v2683
      %v2764 = vadd.f32 %v2732, %v2686
      %v2765 = vadd.f32 %v2733, %v2691
      %v2766 = vadd.f32 %v2734, %v2694
      %v2767 = vadd.f32 %v2735, %v2699
      %v2768 = vadd.f32 %v2736, %v2702
      %2769 = vst [vmem:[%s231] sm:$0xff] %v2737
      %2770 = vst [vmem:[%s231 + $0x8] sm:$0xff] %v2738
      %2771 = vst [vmem:[%s231 + $0x10] sm:$0xff] %v2739
      %2772 = vst [vmem:[%s231 + $0x18] sm:$0xff] %v2740
      %2773 = vst [vmem:[%s231 + $0x20] sm:$0xff] %v2741
      %2774 = vst [vmem:[%s231 + $0x28] sm:$0xff] %v2742
      %2775 = vst [vmem:[%s231 + $0x30] sm:$0xff] %v2743
      %2776 = vst [vmem:[%s231 + $0x38] sm:$0xff] %v2744
      %2777 = vst [vmem:[%s231 + $0x40] sm:$0xff] %v2745
      %2778 = vst [vmem:[%s231 + $0x48] sm:$0xff] %v2746
      %2779 = vst [vmem:[%s231 + $0x50] sm:$0xff] %v2747
      %2780 = vst [vmem:[%s231 + $0x58] sm:$0xff] %v2748
      %2781 = vst [vmem:[%s231 + $0x60] sm:$0xff] %v2749
      %2782 = vst [vmem:[%s231 + $0x68] sm:$0xff] %v2750
      %2783 = vst [vmem:[%s231 + $0x70] sm:$0xff] %v2751
      %2784 = vst [vmem:[%s231 + $0x78] sm:$0xff] %v2752
      %2785 = vst [vmem:[%s231 + $0x80] sm:$0xff] %v2753
      %2786 = vst [vmem:[%s231 + $0x88] sm:$0xff] %v2754
      %2787 = vst [vmem:[%s231 + $0x90] sm:$0xff] %v2755
      %2788 = vst [vmem:[%s231 + $0x98] sm:$0xff] %v2756
      %2789 = vst [vmem:[%s231 + $0xa0] sm:$0xff] %v2757
      %2790 = vst [vmem:[%s231 + $0xa8] sm:$0xff] %v2758
      %2791 = vst [vmem:[%s231 + $0xb0] sm:$0xff] %v2759
      %2792 = vst [vmem:[%s231 + $0xb8] sm:$0xff] %v2760
      %2793 = vst [vmem:[%s231 + $0xc0] sm:$0xff] %v2761
      %2794 = vst [vmem:[%s231 + $0xc8] sm:$0xff] %v2762
      %2795 = vst [vmem:[%s231 + $0xd0] sm:$0xff] %v2763
      %2796 = vst [vmem:[%s231 + $0xd8] sm:$0xff] %v2764
      %2797 = vst [vmem:[%s231 + $0xe0] sm:$0xff] %v2765
      %2798 = vst [vmem:[%s231 + $0xe8] sm:$0xff] %v2766
      %2799 = vst [vmem:[%s231 + $0xf0] sm:$0xff] %v2767
      %2800 = vst [vmem:[%s231 + $0xf8] sm:$0xff] %v2768
      %v2801 = vld [vmem:[#allocation2 + $0x4] sm:$0xff]
      %v2802 = vld [vmem:[#allocation2 + $0x14] sm:$0xff]
      %v2803 = vld [vmem:[#allocation2 + $0x24] sm:$0xff]
      %v2804 = vld [vmem:[#allocation2 + $0x34] sm:$0xff]
      %v2805 = vld [vmem:[#allocation2 + $0x44] sm:$0xff]
      %v2806 = vld [vmem:[#allocation2 + $0x54] sm:$0xff]
      %v2807 = vld [vmem:[#allocation2 + $0x64] sm:$0xff]
      %v2808 = vld [vmem:[#allocation2 + $0x74] sm:$0xff]
      %v2809 = vld [vmem:[#allocation2 + $0xc4] sm:$0xff]
      %v2810 = vld [vmem:[#allocation2 + $0xd4] sm:$0xff]
      %v2811 = vld [vmem:[#allocation2 + $0xe4] sm:$0xff]
      %v2812 = vld [vmem:[#allocation2 + $0xf4] sm:$0xff]
      %v2813 = vld [vmem:[#allocation2 + $0x104] sm:$0xff]
      %v2814 = vld [vmem:[#allocation2 + $0x114] sm:$0xff]
      %v2815 = vld [vmem:[#allocation2 + $0x124] sm:$0xff]
      %v2816 = vld [vmem:[#allocation2 + $0x134] sm:$0xff]
      %v2817 = vld [vmem:[#allocation2 + $0x184] sm:$0xff]
      %v2818 = vld [vmem:[#allocation2 + $0x194] sm:$0xff]
      %v2819 = vld [vmem:[#allocation2 + $0x1a4] sm:$0xff]
      %v2820 = vld [vmem:[#allocation2 + $0x1b4] sm:$0xff]
      %v2821 = vld [vmem:[#allocation2 + $0x1c4] sm:$0xff]
      %v2822 = vld [vmem:[#allocation2 + $0x1d4] sm:$0xff]
      %v2823 = vld [vmem:[#allocation2 + $0x1e4] sm:$0xff]
      %v2824 = vld [vmem:[#allocation2 + $0x1f4] sm:$0xff]
      %v2825 = vld [vmem:[#allocation2 + $0x244] sm:$0xff]
      %v2826 = vld [vmem:[#allocation2 + $0x254] sm:$0xff]
      %v2827 = vld [vmem:[#allocation2 + $0x264] sm:$0xff]
      %v2828 = vld [vmem:[#allocation2 + $0x274] sm:$0xff]
      %v2829 = vld [vmem:[#allocation2 + $0x284] sm:$0xff]
      %v2830 = vld [vmem:[#allocation2 + $0x294] sm:$0xff]
      %v2831 = vld [vmem:[#allocation2 + $0x2a4] sm:$0xff]
      %v2832 = vld [vmem:[#allocation2 + $0x2b4] sm:$0xff]
      %v2833 = vpack.c.bf16 %v2802, %v2801
      %v2834 = vpack.c.bf16 %v2804, %v2803
      %v2835 = vpack.c.bf16 %v2806, %v2805
      %v2836 = vpack.c.bf16 %v2808, %v2807
      %v2837 = vpack.c.bf16 %v2810, %v2809
      %v2838 = vpack.c.bf16 %v2812, %v2811
      %v2839 = vpack.c.bf16 %v2814, %v2813
      %v2840 = vpack.c.bf16 %v2816, %v2815
      %v2841 = vpack.c.bf16 %v2818, %v2817
      %v2842 = vpack.c.bf16 %v2820, %v2819
      %v2843 = vpack.c.bf16 %v2822, %v2821
      %v2844 = vpack.c.bf16 %v2824, %v2823
      %v2845 = vpack.c.bf16 %v2826, %v2825
      %v2846 = vpack.c.bf16 %v2828, %v2827
      %v2847 = vpack.c.bf16 %v2830, %v2829
      %v2848 = vpack.c.bf16 %v2832, %v2831
      %s2849 = scalar_lea.vmem %s3, 64
      %v2850 = vld [vmem:[%s2849] sm:$0xf]
      %v2851 = vld [vmem:[%s2849 + $0x4] sm:$0xf]
      %v2852 = vld [vmem:[%s2849 + $0x8] sm:$0xf]
      %v2853 = vld [vmem:[%s2849 + $0xc] sm:$0xf]
      %v2858 = vunpack.c.l.b16 %v2850
      %v2859 = vunpack.c.l.b16 %v2851
      %v2860 = vunpack.c.l.b16 %v2852
      %v2861 = vunpack.c.l.b16 %v2853
      %v2862 = vpack.c.b16 %v2859, %v2858
      %v2863 = vpack.c.b16 %v2861, %v2860
      %v2867 = vsel %vm593, %v2833, 0
      %v2870 = vsel %vm593, %v2834, 0
      %v2873 = vsel %vm593, %v2835, 0
      %v2876 = vsel %vm593, %v2836, 0
      %v2879 = vsel %vm593, %v2837, 0
      %v2882 = vsel %vm593, %v2838, 0
      %v2885 = vsel %vm593, %v2839, 0
      %v2888 = vsel %vm593, %v2840, 0
      %v2891 = vsel %vm593, %v2841, 0
      %v2894 = vsel %vm593, %v2842, 0
      %v2897 = vsel %vm593, %v2843, 0
      %v2900 = vsel %vm593, %v2844, 0
      %v2903 = vsel %vm593, %v2845, 0
      %v2906 = vsel %vm593, %v2846, 0
      %v2909 = vsel %vm593, %v2847, 0
      %v2912 = vsel %vm593, %v2848, 0
      %2914 = vmatprep.subr.bf16.mxu0 0
      %2915 = vmatpush1.bf16.msra.mxu0 %v2862
      %2916 = vmatprep.subr.bf16.mxu0 0
      %2917 = vmatpush1.bf16.msra.mxu0 %v2863
      %2918 = vmatprep.subr.bf16.mxu0 0
      %2919 = vmatpush1.bf16.msra.mxu0 0
      %2920 = vmatprep.subr.bf16.mxu0 0
      %2921 = vmatpush1.bf16.msra.mxu0 0
      %2922 = vmatprep.subr.bf16.mxu0 0
      %2923 = vmatpush1.bf16.msra.mxu0 0
      %2924 = vmatprep.subr.bf16.mxu0 0
      %2925 = vmatpush1.bf16.msra.mxu0 0
      %2926 = vmatprep.subr.bf16.mxu0 0
      %2927 = vmatpush1.bf16.msra.mxu0 0
      %2928 = vmatprep.subr.bf16.mxu0 0
      %2929 = vmatpush1.bf16.msra.mxu0 0
      %2930 = vmatprep.subr.bf16.mxu0 0
      %2931 = vmatpush1.bf16.msra.mxu0 0
      %2932 = vmatprep.subr.bf16.mxu0 0
      %2933 = vmatpush1.bf16.msra.mxu0 0
      %2934 = vmatprep.subr.bf16.mxu0 0
      %2935 = vmatpush1.bf16.msra.mxu0 0
      %2936 = vmatprep.subr.bf16.mxu0 0
      %2937 = vmatpush1.bf16.msra.mxu0 0
      %2938 = vmatprep.subr.bf16.mxu0 0
      %2939 = vmatpush1.bf16.msra.mxu0 0
      %2940 = vmatprep.subr.bf16.mxu0 0
      %2941 = vmatpush1.bf16.msra.mxu0 0
      %2942 = vmatprep.subr.bf16.mxu0 0
      %2943 = vmatpush1.bf16.msra.mxu0 0
      %2944 = vmatprep.subr.bf16.mxu0 0
      %2945 = vmatpush1.bf16.msra.mxu0 0
      %2946 = vmatprep.mubr.bf16.mxu0 0
      %2947 = vmatmul.mubr.bf16.gmra.mrb[0].mxu0 %v2867
      %v2948 = vpop.f32.mrb[0].mxu0
      %v2949 = vadd.f32 0.0, %v2948
      %v2950 = vpop.f32.mrb[0].mxu0
      %v2951 = vpop.f32.mrb[0].mxu0
      %v2952 = vadd.f32 0.0, %v2951
      %v2953 = vpop.f32.mrb[0].mxu0
      %2954 = vmatprep.mubr.bf16.mxu0 0
      %2955 = vmatmul.mubr.bf16.gmra.mrb[0].mxu0 %v2870
      %v2956 = vpop.f32.mrb[0].mxu0
      %v2957 = vadd.f32 0.0, %v2956
      %v2958 = vpop.f32.mrb[0].mxu0
      %v2959 = vpop.f32.mrb[0].mxu0
      %v2960 = vadd.f32 0.0, %v2959
      %v2961 = vpop.f32.mrb[0].mxu0
      %2962 = vmatprep.mubr.bf16.mxu0 0
      %2963 = vmatmul.mubr.bf16.gmra.mrb[0].mxu0 %v2873
      %v2964 = vpop.f32.mrb[0].mxu0
      %v2965 = vadd.f32 0.0, %v2964
      %v2966 = vpop.f32.mrb[0].mxu0
      %v2967 = vpop.f32.mrb[0].mxu0
      %v2968 = vadd.f32 0.0, %v2967
      %v2969 = vpop.f32.mrb[0].mxu0
      %2970 = vmatprep.mubr.bf16.mxu0 0
      %2971 = vmatmul.mubr.bf16.gmra.mrb[0].mxu0 %v2876
      %v2972 = vpop.f32.mrb[0].mxu0
      %v2973 = vadd.f32 0.0, %v2972
      %v2974 = vpop.f32.mrb[0].mxu0
      %v2975 = vpop.f32.mrb[0].mxu0
      %v2976 = vadd.f32 0.0, %v2975
      %v2977 = vpop.f32.mrb[0].mxu0
      %2978 = vmatprep.mubr.bf16.mxu0 0
      %2979 = vmatmul.mubr.bf16.gmra.mrb[0].mxu0 %v2879
      %v2980 = vpop.f32.mrb[0].mxu0
      %v2981 = vadd.f32 0.0, %v2980
      %v2982 = vpop.f32.mrb[0].mxu0
      %v2983 = vpop.f32.mrb[0].mxu0
      %v2984 = vadd.f32 0.0, %v2983
      %v2985 = vpop.f32.mrb[0].mxu0
      %2986 = vmatprep.mubr.bf16.mxu0 0
      %2987 = vmatmul.mubr.bf16.gmra.mrb[0].mxu0 %v2882
      %v2988 = vpop.f32.mrb[0].mxu0
      %v2989 = vadd.f32 0.0, %v2988
      %v2990 = vpop.f32.mrb[0].mxu0
      %v2991 = vpop.f32.mrb[0].mxu0
      %v2992 = vadd.f32 0.0, %v2991
      %v2993 = vpop.f32.mrb[0].mxu0
      %2994 = vmatprep.mubr.bf16.mxu0 0
      %2995 = vmatmul.mubr.bf16.gmra.mrb[0].mxu0 %v2885
      %v2996 = vpop.f32.mrb[0].mxu0
      %v2997 = vadd.f32 0.0, %v2996
      %v2998 = vpop.f32.mrb[0].mxu0
      %v2999 = vpop.f32.mrb[0].mxu0
      %v3000 = vadd.f32 0.0, %v2999
      %v3001 = vpop.f32.mrb[0].mxu0
      %3002 = vmatprep.mubr.bf16.mxu0 0
      %3003 = vmatmul.mubr.bf16.gmra.mrb[0].mxu0 %v2888
      %v3004 = vpop.f32.mrb[0].mxu0
      %v3005 = vadd.f32 0.0, %v3004
      %v3006 = vpop.f32.mrb[0].mxu0
      %v3007 = vpop.f32.mrb[0].mxu0
      %v3008 = vadd.f32 0.0, %v3007
      %v3009 = vpop.f32.mrb[0].mxu0
      %3010 = vmatprep.mubr.bf16.mxu0 0
      %3011 = vmatmul.mubr.bf16.gmra.mrb[0].mxu0 %v2891
      %v3012 = vpop.f32.mrb[0].mxu0
      %v3013 = vadd.f32 0.0, %v3012
      %v3014 = vpop.f32.mrb[0].mxu0
      %v3015 = vpop.f32.mrb[0].mxu0
      %v3016 = vadd.f32 0.0, %v3015
      %v3017 = vpop.f32.mrb[0].mxu0
      %3018 = vmatprep.mubr.bf16.mxu0 0
      %3019 = vmatmul.mubr.bf16.gmra.mrb[0].mxu0 %v2894
      %v3020 = vpop.f32.mrb[0].mxu0
      %v3021 = vadd.f32 0.0, %v3020
      %v3022 = vpop.f32.mrb[0].mxu0
      %v3023 = vpop.f32.mrb[0].mxu0
      %v3024 = vadd.f32 0.0, %v3023
      %v3025 = vpop.f32.mrb[0].mxu0
      %3026 = vmatprep.mubr.bf16.mxu0 0
      %3027 = vmatmul.mubr.bf16.gmra.mrb[0].mxu0 %v2897
      %v3028 = vpop.f32.mrb[0].mxu0
      %v3029 = vadd.f32 0.0, %v3028
      %v3030 = vpop.f32.mrb[0].mxu0
      %v3031 = vpop.f32.mrb[0].mxu0
      %v3032 = vadd.f32 0.0, %v3031
      %v3033 = vpop.f32.mrb[0].mxu0
      %3034 = vmatprep.mubr.bf16.mxu0 0
      %3035 = vmatmul.mubr.bf16.gmra.mrb[0].mxu0 %v2900
      %v3036 = vpop.f32.mrb[0].mxu0
      %v3037 = vadd.f32 0.0, %v3036
      %v3038 = vpop.f32.mrb[0].mxu0
      %v3039 = vpop.f32.mrb[0].mxu0
      %v3040 = vadd.f32 0.0, %v3039
      %v3041 = vpop.f32.mrb[0].mxu0
      %3042 = vmatprep.mubr.bf16.mxu0 0
      %3043 = vmatmul.mubr.bf16.gmra.mrb[0].mxu0 %v2903
      %v3044 = vpop.f32.mrb[0].mxu0
      %v3045 = vadd.f32 0.0, %v3044
      %v3046 = vpop.f32.mrb[0].mxu0
      %v3047 = vpop.f32.mrb[0].mxu0
      %v3048 = vadd.f32 0.0, %v3047
      %v3049 = vpop.f32.mrb[0].mxu0
      %3050 = vmatprep.mubr.bf16.mxu0 0
      %3051 = vmatmul.mubr.bf16.gmra.mrb[0].mxu0 %v2906
      %v3052 = vpop.f32.mrb[0].mxu0
      %v3053 = vadd.f32 0.0, %v3052
      %v3054 = vpop.f32.mrb[0].mxu0
      %v3055 = vpop.f32.mrb[0].mxu0
      %v3056 = vadd.f32 0.0, %v3055
      %v3057 = vpop.f32.mrb[0].mxu0
      %3058 = vmatprep.mubr.bf16.mxu0 0
      %3059 = vmatmul.mubr.bf16.gmra.mrb[0].mxu0 %v2909
      %v3060 = vpop.f32.mrb[0].mxu0
      %v3061 = vadd.f32 0.0, %v3060
      %v3062 = vpop.f32.mrb[0].mxu0
      %v3063 = vpop.f32.mrb[0].mxu0
      %v3064 = vadd.f32 0.0, %v3063
      %v3065 = vpop.f32.mrb[0].mxu0
      %3066 = vmatprep.mubr.bf16.mxu0 0
      %3067 = vmatmul.mubr.bf16.gmra.mrb[0].mxu0 %v2912
      %v3068 = vpop.f32.mrb[0].mxu0
      %v3069 = vadd.f32 0.0, %v3068
      %v3070 = vpop.f32.mrb[0].mxu0
      %v3071 = vpop.f32.mrb[0].mxu0
      %v3072 = vadd.f32 0.0, %v3071
      %v3073 = vpop.f32.mrb[0].mxu0
      %3074 = vdwg.mxu0
      %v3075 = vld [vmem:[%s231] sm:$0xff]
      %v3076 = vld [vmem:[%s231 + $0x8] sm:$0xff]
      %v3077 = vld [vmem:[%s231 + $0x10] sm:$0xff]
      %v3078 = vld [vmem:[%s231 + $0x18] sm:$0xff]
      %v3079 = vld [vmem:[%s231 + $0x20] sm:$0xff]
      %v3080 = vld [vmem:[%s231 + $0x28] sm:$0xff]
      %v3081 = vld [vmem:[%s231 + $0x30] sm:$0xff]
      %v3082 = vld [vmem:[%s231 + $0x38] sm:$0xff]
      %v3083 = vld [vmem:[%s231 + $0x40] sm:$0xff]
      %v3084 = vld [vmem:[%s231 + $0x48] sm:$0xff]
      %v3085 = vld [vmem:[%s231 + $0x50] sm:$0xff]
      %v3086 = vld [vmem:[%s231 + $0x58] sm:$0xff]
      %v3087 = vld [vmem:[%s231 + $0x60] sm:$0xff]
      %v3088 = vld [vmem:[%s231 + $0x68] sm:$0xff]
      %v3089 = vld [vmem:[%s231 + $0x70] sm:$0xff]
      %v3090 = vld [vmem:[%s231 + $0x78] sm:$0xff]
      %v3091 = vld [vmem:[%s231 + $0x80] sm:$0xff]
      %v3092 = vld [vmem:[%s231 + $0x88] sm:$0xff]
      %v3093 = vld [vmem:[%s231 + $0x90] sm:$0xff]
      %v3094 = vld [vmem:[%s231 + $0x98] sm:$0xff]
      %v3095 = vld [vmem:[%s231 + $0xa0] sm:$0xff]
      %v3096 = vld [vmem:[%s231 + $0xa8] sm:$0xff]
      %v3097 = vld [vmem:[%s231 + $0xb0] sm:$0xff]
      %v3098 = vld [vmem:[%s231 + $0xb8] sm:$0xff]
      %v3099 = vld [vmem:[%s231 + $0xc0] sm:$0xff]
      %v3100 = vld [vmem:[%s231 + $0xc8] sm:$0xff]
      %v3101 = vld [vmem:[%s231 + $0xd0] sm:$0xff]
      %v3102 = vld [vmem:[%s231 + $0xd8] sm:$0xff]
      %v3103 = vld [vmem:[%s231 + $0xe0] sm:$0xff]
      %v3104 = vld [vmem:[%s231 + $0xe8] sm:$0xff]
      %v3105 = vld [vmem:[%s231 + $0xf0] sm:$0xff]
      %v3106 = vld [vmem:[%s231 + $0xf8] sm:$0xff]
      %v3107 = vadd.f32 %v3075, %v2949
      %v3108 = vadd.f32 %v3076, %v2952
      %v3109 = vadd.f32 %v3077, %v2957
      %v3110 = vadd.f32 %v3078, %v2960
      %v3111 = vadd.f32 %v3079, %v2965
      %v3112 = vadd.f32 %v3080, %v2968
      %v3113 = vadd.f32 %v3081, %v2973
      %v3114 = vadd.f32 %v3082, %v2976
      %v3115 = vadd.f32 %v3083, %v2981
      %v3116 = vadd.f32 %v3084, %v2984
      %v3117 = vadd.f32 %v3085, %v2989
      %v3118 = vadd.f32 %v3086, %v2992
      %v3119 = vadd.f32 %v3087, %v2997
      %v3120 = vadd.f32 %v3088, %v3000
      %v3121 = vadd.f32 %v3089, %v3005
      %v3122 = vadd.f32 %v3090, %v3008
      %v3123 = vadd.f32 %v3091, %v3013
      %v3124 = vadd.f32 %v3092, %v3016
      %v3125 = vadd.f32 %v3093, %v3021
      %v3126 = vadd.f32 %v3094, %v3024
      %v3127 = vadd.f32 %v3095, %v3029
      %v3128 = vadd.f32 %v3096, %v3032
      %v3129 = vadd.f32 %v3097, %v3037
      %v3130 = vadd.f32 %v3098, %v3040
      %v3131 = vadd.f32 %v3099, %v3045
      %v3132 = vadd.f32 %v3100, %v3048
      %v3133 = vadd.f32 %v3101, %v3053
      %v3134 = vadd.f32 %v3102, %v3056
      %v3135 = vadd.f32 %v3103, %v3061
      %v3136 = vadd.f32 %v3104, %v3064
      %v3137 = vadd.f32 %v3105, %v3069
      %v3138 = vadd.f32 %v3106, %v3072
      %3139 = vst [vmem:[%s231] sm:$0xff] %v3107
      %3140 = vst [vmem:[%s231 + $0x8] sm:$0xff] %v3108
      %3141 = vst [vmem:[%s231 + $0x10] sm:$0xff] %v3109
      %3142 = vst [vmem:[%s231 + $0x18] sm:$0xff] %v3110
      %3143 = vst [vmem:[%s231 + $0x20] sm:$0xff] %v3111
      %3144 = vst [vmem:[%s231 + $0x28] sm:$0xff] %v3112
      %3145 = vst [vmem:[%s231 + $0x30] sm:$0xff] %v3113
      %3146 = vst [vmem:[%s231 + $0x38] sm:$0xff] %v3114
      %3147 = vst [vmem:[%s231 + $0x40] sm:$0xff] %v3115
      %3148 = vst [vmem:[%s231 + $0x48] sm:$0xff] %v3116
      %3149 = vst [vmem:[%s231 + $0x50] sm:$0xff] %v3117
      %3150 = vst [vmem:[%s231 + $0x58] sm:$0xff] %v3118
      %3151 = vst [vmem:[%s231 + $0x60] sm:$0xff] %v3119
      %3152 = vst [vmem:[%s231 + $0x68] sm:$0xff] %v3120
      %3153 = vst [vmem:[%s231 + $0x70] sm:$0xff] %v3121
      %3154 = vst [vmem:[%s231 + $0x78] sm:$0xff] %v3122
      %3155 = vst [vmem:[%s231 + $0x80] sm:$0xff] %v3123
      %3156 = vst [vmem:[%s231 + $0x88] sm:$0xff] %v3124
      %3157 = vst [vmem:[%s231 + $0x90] sm:$0xff] %v3125
      %3158 = vst [vmem:[%s231 + $0x98] sm:$0xff] %v3126
      %3159 = vst [vmem:[%s231 + $0xa0] sm:$0xff] %v3127
      %3160 = vst [vmem:[%s231 + $0xa8] sm:$0xff] %v3128
      %3161 = vst [vmem:[%s231 + $0xb0] sm:$0xff] %v3129
      %3162 = vst [vmem:[%s231 + $0xb8] sm:$0xff] %v3130
      %3163 = vst [vmem:[%s231 + $0xc0] sm:$0xff] %v3131
      %3164 = vst [vmem:[%s231 + $0xc8] sm:$0xff] %v3132
      %3165 = vst [vmem:[%s231 + $0xd0] sm:$0xff] %v3133
      %3166 = vst [vmem:[%s231 + $0xd8] sm:$0xff] %v3134
      %3167 = vst [vmem:[%s231 + $0xe0] sm:$0xff] %v3135
      %3168 = vst [vmem:[%s231 + $0xe8] sm:$0xff] %v3136
      %3169 = vst [vmem:[%s231 + $0xf0] sm:$0xff] %v3137
      %3170 = vst [vmem:[%s231 + $0xf8] sm:$0xff] %v3138
      %s3171 = scalar_lea.vmem [#allocation2], 16
      %v3172 = vld [vmem:[%s3171] sm:$0xff]
      %v3173 = vld [vmem:[%s3171 + $0x10] sm:$0xff]
      %v3174 = vld [vmem:[%s3171 + $0x20] sm:$0xff]
      %v3175 = vld [vmem:[%s3171 + $0x30] sm:$0xff]
      %v3176 = vld [vmem:[%s3171 + $0x40] sm:$0xff]
      %v3177 = vld [vmem:[%s3171 + $0x50] sm:$0xff]
      %v3178 = vld [vmem:[%s3171 + $0x60] sm:$0xff]
      %v3179 = vld [vmem:[%s3171 + $0x70] sm:$0xff]
      %v3180 = vld [vmem:[%s3171 + $0xc0] sm:$0xff]
      %v3181 = vld [vmem:[%s3171 + $0xd0] sm:$0xff]
      %v3182 = vld [vmem:[%s3171 + $0xe0] sm:$0xff]
      %v3183 = vld [vmem:[%s3171 + $0xf0] sm:$0xff]
      %v3184 = vld [vmem:[%s3171 + $0x100] sm:$0xff]
      %v3185 = vld [vmem:[%s3171 + $0x110] sm:$0xff]
      %v3186 = vld [vmem:[%s3171 + $0x120] sm:$0xff]
      %v3187 = vld [vmem:[%s3171 + $0x130] sm:$0xff]
      %v3188 = vld [vmem:[%s3171 + $0x180] sm:$0xff]
      %v3189 = vld [vmem:[%s3171 + $0x190] sm:$0xff]
      %v3190 = vld [vmem:[%s3171 + $0x1a0] sm:$0xff]
      %v3191 = vld [vmem:[%s3171 + $0x1b0] sm:$0xff]
      %v3192 = vld [vmem:[%s3171 + $0x1c0] sm:$0xff]
      %v3193 = vld [vmem:[%s3171 + $0x1d0] sm:$0xff]
      %v3194 = vld [vmem:[%s3171 + $0x1e0] sm:$0xff]
      %v3195 = vld [vmem:[%s3171 + $0x1f0] sm:$0xff]
      %v3196 = vld [vmem:[%s3171 + $0x240] sm:$0xff]
      %v3197 = vld [vmem:[%s3171 + $0x250] sm:$0xff]
      %v3198 = vld [vmem:[%s3171 + $0x260] sm:$0xff]
      %v3199 = vld [vmem:[%s3171 + $0x270] sm:$0xff]
      %v3200 = vld [vmem:[%s3171 + $0x280] sm:$0xff]
      %v3201 = vld [vmem:[%s3171 + $0x290] sm:$0xff]
      %v3202 = vld [vmem:[%s3171 + $0x2a0] sm:$0xff]
      %v3203 = vld [vmem:[%s3171 + $0x2b0] sm:$0xff]
      %v3204 = vpack.c.bf16 %v3173, %v3172
      %v3205 = vpack.c.bf16 %v3175, %v3174
      %v3206 = vpack.c.bf16 %v3177, %v3176
      %v3207 = vpack.c.bf16 %v3179, %v3178
      %v3208 = vpack.c.bf16 %v3181, %v3180
      %v3209 = vpack.c.bf16 %v3183, %v3182
      %v3210 = vpack.c.bf16 %v3185, %v3184
      %v3211 = vpack.c.bf16 %v3187, %v3186
      %v3212 = vpack.c.bf16 %v3189, %v3188
      %v3213 = vpack.c.bf16 %v3191, %v3190
      %v3214 = vpack.c.bf16 %v3193, %v3192
      %v3215 = vpack.c.bf16 %v3195, %v3194
      %v3216 = vpack.c.bf16 %v3197, %v3196
      %v3217 = vpack.c.bf16 %v3199, %v3198
      %v3218 = vpack.c.bf16 %v3201, %v3200
      %v3219 = vpack.c.bf16 %v3203, %v3202
      %s3220 = scalar_lea.vmem %s3, 80
      %v3221 = vld [vmem:[%s3220] sm:$0xf]
      %v3222 = vld [vmem:[%s3220 + $0x4] sm:$0xf]
      %v3223 = vld [vmem:[%s3220 + $0x8] sm:$0xf]
      %v3224 = vld [vmem:[%s3220 + $0xc] sm:$0xf]
      %v3229 = vunpack.c.l.b16 %v3221
      %v3230 = vunpack.c.l.b16 %v3222
      %v3231 = vunpack.c.l.b16 %v3223
      %v3232 = vunpack.c.l.b16 %v3224
      %v3233 = vpack.c.b16 %v3230, %v3229
      %v3234 = vpack.c.b16 %v3232, %v3231
      %v3238 = vsel %vm593, %v3204, 0
      %v3241 = vsel %vm593, %v3205, 0
      %v3244 = vsel %vm593, %v3206, 0
      %v3247 = vsel %vm593, %v3207, 0
      %v3250 = vsel %vm593, %v3208, 0
      %v3253 = vsel %vm593, %v3209, 0
      %v3256 = vsel %vm593, %v3210, 0
      %v3259 = vsel %vm593, %v3211, 0
      %v3262 = vsel %vm593, %v3212, 0
      %v3265 = vsel %vm593, %v3213, 0
      %v3268 = vsel %vm593, %v3214, 0
      %v3271 = vsel %vm593, %v3215, 0
      %v3274 = vsel %vm593, %v3216, 0
      %v3277 = vsel %vm593, %v3217, 0
      %v3280 = vsel %vm593, %v3218, 0
      %v3283 = vsel %vm593, %v3219, 0
      %3285 = vmatprep.subr.bf16.mxu0 0
      %3286 = vmatpush1.bf16.msra.mxu0 %v3233
      %3287 = vmatprep.subr.bf16.mxu0 0
      %3288 = vmatpush1.bf16.msra.mxu0 %v3234
      %3289 = vmatprep.subr.bf16.mxu0 0
      %3290 = vmatpush1.bf16.msra.mxu0 0
      %3291 = vmatprep.subr.bf16.mxu0 0
      %3292 = vmatpush1.bf16.msra.mxu0 0
      %3293 = vmatprep.subr.bf16.mxu0 0
      %3294 = vmatpush1.bf16.msra.mxu0 0
      %3295 = vmatprep.subr.bf16.mxu0 0
      %3296 = vmatpush1.bf16.msra.mxu0 0
      %3297 = vmatprep.subr.bf16.mxu0 0
      %3298 = vmatpush1.bf16.msra.mxu0 0
      %3299 = vmatprep.subr.bf16.mxu0 0
      %3300 = vmatpush1.bf16.msra.mxu0 0
      %3301 = vmatprep.subr.bf16.mxu0 0
      %3302 = vmatpush1.bf16.msra.mxu0 0
      %3303 = vmatprep.subr.bf16.mxu0 0
      %3304 = vmatpush1.bf16.msra.mxu0 0
      %3305 = vmatprep.subr.bf16.mxu0 0
      %3306 = vmatpush1.bf16.msra.mxu0 0
      %3307 = vmatprep.subr.bf16.mxu0 0
      %3308 = vmatpush1.bf16.msra.mxu0 0
      %3309 = vmatprep.subr.bf16.mxu0 0
      %3310 = vmatpush1.bf16.msra.mxu0 0
      %3311 = vmatprep.subr.bf16.mxu0 0
      %3312 = vmatpush1.bf16.msra.mxu0 0
      %3313 = vmatprep.subr.bf16.mxu0 0
      %3314 = vmatpush1.bf16.msra.mxu0 0
      %3315 = vmatprep.subr.bf16.mxu0 0
      %3316 = vmatpush1.bf16.msra.mxu0 0
      %3317 = vmatprep.mubr.bf16.mxu0 0
      %3318 = vmatmul.mubr.bf16.gmra.mrb[0].mxu0 %v3238
      %v3319 = vpop.f32.mrb[0].mxu0
      %v3320 = vadd.f32 0.0, %v3319
      %v3321 = vpop.f32.mrb[0].mxu0
      %v3322 = vpop.f32.mrb[0].mxu0
      %v3323 = vadd.f32 0.0, %v3322
      %v3324 = vpop.f32.mrb[0].mxu0
      %3325 = vmatprep.mubr.bf16.mxu0 0
      %3326 = vmatmul.mubr.bf16.gmra.mrb[0].mxu0 %v3241
      %v3327 = vpop.f32.mrb[0].mxu0
      %v3328 = vadd.f32 0.0, %v3327
      %v3329 = vpop.f32.mrb[0].mxu0
      %v3330 = vpop.f32.mrb[0].mxu0
      %v3331 = vadd.f32 0.0, %v3330
      %v3332 = vpop.f32.mrb[0].mxu0
      %3333 = vmatprep.mubr.bf16.mxu0 0
      %3334 = vmatmul.mubr.bf16.gmra.mrb[0].mxu0 %v3244
      %v3335 = vpop.f32.mrb[0].mxu0
      %v3336 = vadd.f32 0.0, %v3335
      %v3337 = vpop.f32.mrb[0].mxu0
      %v3338 = vpop.f32.mrb[0].mxu0
      %v3339 = vadd.f32 0.0, %v3338
      %v3340 = vpop.f32.mrb[0].mxu0
      %3341 = vmatprep.mubr.bf16.mxu0 0
      %3342 = vmatmul.mubr.bf16.gmra.mrb[0].mxu0 %v3247
      %v3343 = vpop.f32.mrb[0].mxu0
      %v3344 = vadd.f32 0.0, %v3343
      %v3345 = vpop.f32.mrb[0].mxu0
      %v3346 = vpop.f32.mrb[0].mxu0
      %v3347 = vadd.f32 0.0, %v3346
      %v3348 = vpop.f32.mrb[0].mxu0
      %3349 = vmatprep.mubr.bf16.mxu0 0
      %3350 = vmatmul.mubr.bf16.gmra.mrb[0].mxu0 %v3250
      %v3351 = vpop.f32.mrb[0].mxu0
      %v3352 = vadd.f32 0.0, %v3351
      %v3353 = vpop.f32.mrb[0].mxu0
      %v3354 = vpop.f32.mrb[0].mxu0
      %v3355 = vadd.f32 0.0, %v3354
      %v3356 = vpop.f32.mrb[0].mxu0
      %3357 = vmatprep.mubr.bf16.mxu0 0
      %3358 = vmatmul.mubr.bf16.gmra.mrb[0].mxu0 %v3253
      %v3359 = vpop.f32.mrb[0].mxu0
      %v3360 = vadd.f32 0.0, %v3359
      %v3361 = vpop.f32.mrb[0].mxu0
      %v3362 = vpop.f32.mrb[0].mxu0
      %v3363 = vadd.f32 0.0, %v3362
      %v3364 = vpop.f32.mrb[0].mxu0
      %3365 = vmatprep.mubr.bf16.mxu0 0
      %3366 = vmatmul.mubr.bf16.gmra.mrb[0].mxu0 %v3256
      %v3367 = vpop.f32.mrb[0].mxu0
      %v3368 = vadd.f32 0.0, %v3367
      %v3369 = vpop.f32.mrb[0].mxu0
      %v3370 = vpop.f32.mrb[0].mxu0
      %v3371 = vadd.f32 0.0, %v3370
      %v3372 = vpop.f32.mrb[0].mxu0
      %3373 = vmatprep.mubr.bf16.mxu0 0
      %3374 = vmatmul.mubr.bf16.gmra.mrb[0].mxu0 %v3259
      %v3375 = vpop.f32.mrb[0].mxu0
      %v3376 = vadd.f32 0.0, %v3375
      %v3377 = vpop.f32.mrb[0].mxu0
      %v3378 = vpop.f32.mrb[0].mxu0
      %v3379 = vadd.f32 0.0, %v3378
      %v3380 = vpop.f32.mrb[0].mxu0
      %3381 = vmatprep.mubr.bf16.mxu0 0
      %3382 = vmatmul.mubr.bf16.gmra.mrb[0].mxu0 %v3262
      %v3383 = vpop.f32.mrb[0].mxu0
      %v3384 = vadd.f32 0.0, %v3383
      %v3385 = vpop.f32.mrb[0].mxu0
      %v3386 = vpop.f32.mrb[0].mxu0
      %v3387 = vadd.f32 0.0, %v3386
      %v3388 = vpop.f32.mrb[0].mxu0
      %3389 = vmatprep.mubr.bf16.mxu0 0
      %3390 = vmatmul.mubr.bf16.gmra.mrb[0].mxu0 %v3265
      %v3391 = vpop.f32.mrb[0].mxu0
      %v3392 = vadd.f32 0.0, %v3391
      %v3393 = vpop.f32.mrb[0].mxu0
      %v3394 = vpop.f32.mrb[0].mxu0
      %v3395 = vadd.f32 0.0, %v3394
      %v3396 = vpop.f32.mrb[0].mxu0
      %3397 = vmatprep.mubr.bf16.mxu0 0
      %3398 = vmatmul.mubr.bf16.gmra.mrb[0].mxu0 %v3268
      %v3399 = vpop.f32.mrb[0].mxu0
      %v3400 = vadd.f32 0.0, %v3399
      %v3401 = vpop.f32.mrb[0].mxu0
      %v3402 = vpop.f32.mrb[0].mxu0
      %v3403 = vadd.f32 0.0, %v3402
      %v3404 = vpop.f32.mrb[0].mxu0
      %3405 = vmatprep.mubr.bf16.mxu0 0
      %3406 = vmatmul.mubr.bf16.gmra.mrb[0].mxu0 %v3271
      %v3407 = vpop.f32.mrb[0].mxu0
      %v3408 = vadd.f32 0.0, %v3407
      %v3409 = vpop.f32.mrb[0].mxu0
      %v3410 = vpop.f32.mrb[0].mxu0
      %v3411 = vadd.f32 0.0, %v3410
      %v3412 = vpop.f32.mrb[0].mxu0
      %3413 = vmatprep.mubr.bf16.mxu0 0
      %3414 = vmatmul.mubr.bf16.gmra.mrb[0].mxu0 %v3274
      %v3415 = vpop.f32.mrb[0].mxu0
      %v3416 = vadd.f32 0.0, %v3415
      %v3417 = vpop.f32.mrb[0].mxu0
      %v3418 = vpop.f32.mrb[0].mxu0
      %v3419 = vadd.f32 0.0, %v3418
      %v3420 = vpop.f32.mrb[0].mxu0
      %3421 = vmatprep.mubr.bf16.mxu0 0
      %3422 = vmatmul.mubr.bf16.gmra.mrb[0].mxu0 %v3277
      %v3423 = vpop.f32.mrb[0].mxu0
      %v3424 = vadd.f32 0.0, %v3423
      %v3425 = vpop.f32.mrb[0].mxu0
      %v3426 = vpop.f32.mrb[0].mxu0
      %v3427 = vadd.f32 0.0, %v3426
      %v3428 = vpop.f32.mrb[0].mxu0
      %3429 = vmatprep.mubr.bf16.mxu0 0
      %3430 = vmatmul.mubr.bf16.gmra.mrb[0].mxu0 %v3280
      %v3431 = vpop.f32.mrb[0].mxu0
      %v3432 = vadd.f32 0.0, %v3431
      %v3433 = vpop.f32.mrb[0].mxu0
      %v3434 = vpop.f32.mrb[0].mxu0
      %v3435 = vadd.f32 0.0, %v3434
      %v3436 = vpop.f32.mrb[0].mxu0
      %3437 = vmatprep.mubr.bf16.mxu0 0
      %3438 = vmatmul.mubr.bf16.gmra.mrb[0].mxu0 %v3283
      %v3439 = vpop.f32.mrb[0].mxu0
      %v3440 = vadd.f32 0.0, %v3439
      %v3441 = vpop.f32.mrb[0].mxu0
      %v3442 = vpop.f32.mrb[0].mxu0
      %v3443 = vadd.f32 0.0, %v3442
      %v3444 = vpop.f32.mrb[0].mxu0
      %3445 = vdwg.mxu0
      %v3446 = vld [vmem:[%s231] sm:$0xff]
      %v3447 = vld [vmem:[%s231 + $0x8] sm:$0xff]
      %v3448 = vld [vmem:[%s231 + $0x10] sm:$0xff]
      %v3449 = vld [vmem:[%s231 + $0x18] sm:$0xff]
      %v3450 = vld [vmem:[%s231 + $0x20] sm:$0xff]
      %v3451 = vld [vmem:[%s231 + $0x28] sm:$0xff]
      %v3452 = vld [vmem:[%s231 + $0x30] sm:$0xff]
      %v3453 = vld [vmem:[%s231 + $0x38] sm:$0xff]
      %v3454 = vld [vmem:[%s231 + $0x40] sm:$0xff]
      %v3455 = vld [vmem:[%s231 + $0x48] sm:$0xff]
      %v3456 = vld [vmem:[%s231 + $0x50] sm:$0xff]
      %v3457 = vld [vmem:[%s231 + $0x58] sm:$0xff]
      %v3458 = vld [vmem:[%s231 + $0x60] sm:$0xff]
      %v3459 = vld [vmem:[%s231 + $0x68] sm:$0xff]
      %v3460 = vld [vmem:[%s231 + $0x70] sm:$0xff]
      %v3461 = vld [vmem:[%s231 + $0x78] sm:$0xff]
      %v3462 = vld [vmem:[%s231 + $0x80] sm:$0xff]
      %v3463 = vld [vmem:[%s231 + $0x88] sm:$0xff]
      %v3464 = vld [vmem:[%s231 + $0x90] sm:$0xff]
      %v3465 = vld [vmem:[%s231 + $0x98] sm:$0xff]
      %v3466 = vld [vmem:[%s231 + $0xa0] sm:$0xff]
      %v3467 = vld [vmem:[%s231 + $0xa8] sm:$0xff]
      %v3468 = vld [vmem:[%s231 + $0xb0] sm:$0xff]
      %v3469 = vld [vmem:[%s231 + $0xb8] sm:$0xff]
      %v3470 = vld [vmem:[%s231 + $0xc0] sm:$0xff]
      %v3471 = vld [vmem:[%s231 + $0xc8] sm:$0xff]
      %v3472 = vld [vmem:[%s231 + $0xd0] sm:$0xff]
      %v3473 = vld [vmem:[%s231 + $0xd8] sm:$0xff]
      %v3474 = vld [vmem:[%s231 + $0xe0] sm:$0xff]
      %v3475 = vld [vmem:[%s231 + $0xe8] sm:$0xff]
      %v3476 = vld [vmem:[%s231 + $0xf0] sm:$0xff]
      %v3477 = vld [vmem:[%s231 + $0xf8] sm:$0xff]
      %v3478 = vadd.f32 %v3446, %v3320
      %v3479 = vadd.f32 %v3447, %v3323
      %v3480 = vadd.f32 %v3448, %v3328
      %v3481 = vadd.f32 %v3449, %v3331
      %v3482 = vadd.f32 %v3450, %v3336
      %v3483 = vadd.f32 %v3451, %v3339
      %v3484 = vadd.f32 %v3452, %v3344
      %v3485 = vadd.f32 %v3453, %v3347
      %v3486 = vadd.f32 %v3454, %v3352
      %v3487 = vadd.f32 %v3455, %v3355
      %v3488 = vadd.f32 %v3456, %v3360
      %v3489 = vadd.f32 %v3457, %v3363
      %v3490 = vadd.f32 %v3458, %v3368
      %v3491 = vadd.f32 %v3459, %v3371
      %v3492 = vadd.f32 %v3460, %v3376
      %v3493 = vadd.f32 %v3461, %v3379
      %v3494 = vadd.f32 %v3462, %v3384
      %v3495 = vadd.f32 %v3463, %v3387
      %v3496 = vadd.f32 %v3464, %v3392
      %v3497 = vadd.f32 %v3465, %v3395
      %v3498 = vadd.f32 %v3466, %v3400
      %v3499 = vadd.f32 %v3467, %v3403
      %v3500 = vadd.f32 %v3468, %v3408
      %v3501 = vadd.f32 %v3469, %v3411
      %v3502 = vadd.f32 %v3470, %v3416
      %v3503 = vadd.f32 %v3471, %v3419
      %v3504 = vadd.f32 %v3472, %v3424
      %v3505 = vadd.f32 %v3473, %v3427
      %v3506 = vadd.f32 %v3474, %v3432
      %v3507 = vadd.f32 %v3475, %v3435
      %v3508 = vadd.f32 %v3476, %v3440
      %v3509 = vadd.f32 %v3477, %v3443
      %3510 = vst [vmem:[%s231] sm:$0xff] %v3478
      %3511 = vst [vmem:[%s231 + $0x8] sm:$0xff] %v3479
      %3512 = vst [vmem:[%s231 + $0x10] sm:$0xff] %v3480
      %3513 = vst [vmem:[%s231 + $0x18] sm:$0xff] %v3481
      %3514 = vst [vmem:[%s231 + $0x20] sm:$0xff] %v3482
      %3515 = vst [vmem:[%s231 + $0x28] sm:$0xff] %v3483
      %3516 = vst [vmem:[%s231 + $0x30] sm:$0xff] %v3484
      %3517 = vst [vmem:[%s231 + $0x38] sm:$0xff] %v3485
      %3518 = vst [vmem:[%s231 + $0x40] sm:$0xff] %v3486
      %3519 = vst [vmem:[%s231 + $0x48] sm:$0xff] %v3487
      %3520 = vst [vmem:[%s231 + $0x50] sm:$0xff] %v3488
      %3521 = vst [vmem:[%s231 + $0x58] sm:$0xff] %v3489
      %3522 = vst [vmem:[%s231 + $0x60] sm:$0xff] %v3490
      %3523 = vst [vmem:[%s231 + $0x68] sm:$0xff] %v3491
      %3524 = vst [vmem:[%s231 + $0x70] sm:$0xff] %v3492
      %3525 = vst [vmem:[%s231 + $0x78] sm:$0xff] %v3493
      %3526 = vst [vmem:[%s231 + $0x80] sm:$0xff] %v3494
      %3527 = vst [vmem:[%s231 + $0x88] sm:$0xff] %v3495
      %3528 = vst [vmem:[%s231 + $0x90] sm:$0xff] %v3496
      %3529 = vst [vmem:[%s231 + $0x98] sm:$0xff] %v3497
      %3530 = vst [vmem:[%s231 + $0xa0] sm:$0xff] %v3498
      %3531 = vst [vmem:[%s231 + $0xa8] sm:$0xff] %v3499
      %3532 = vst [vmem:[%s231 + $0xb0] sm:$0xff] %v3500
      %3533 = vst [vmem:[%s231 + $0xb8] sm:$0xff] %v3501
      %3534 = vst [vmem:[%s231 + $0xc0] sm:$0xff] %v3502
      %3535 = vst [vmem:[%s231 + $0xc8] sm:$0xff] %v3503
      %3536 = vst [vmem:[%s231 + $0xd0] sm:$0xff] %v3504
      %3537 = vst [vmem:[%s231 + $0xd8] sm:$0xff] %v3505
      %3538 = vst [vmem:[%s231 + $0xe0] sm:$0xff] %v3506
      %3539 = vst [vmem:[%s231 + $0xe8] sm:$0xff] %v3507
      %3540 = vst [vmem:[%s231 + $0xf0] sm:$0xff] %v3508
      %3541 = vst [vmem:[%s231 + $0xf8] sm:$0xff] %v3509
      %v3542 = vld [vmem:[%s3171 + $0x1] sm:$0xff]
      %v3543 = vld [vmem:[%s3171 + $0x11] sm:$0xff]
      %v3544 = vld [vmem:[%s3171 + $0x21] sm:$0xff]
      %v3545 = vld [vmem:[%s3171 + $0x31] sm:$0xff]
      %v3546 = vld [vmem:[%s3171 + $0x41] sm:$0xff]
      %v3547 = vld [vmem:[%s3171 + $0x51] sm:$0xff]
      %v3548 = vld [vmem:[%s3171 + $0x61] sm:$0xff]
      %v3549 = vld [vmem:[%s3171 + $0x71] sm:$0xff]
      %v3550 = vld [vmem:[%s3171 + $0xc1] sm:$0xff]
      %v3551 = vld [vmem:[%s3171 + $0xd1] sm:$0xff]
      %v3552 = vld [vmem:[%s3171 + $0xe1] sm:$0xff]
      %v3553 = vld [vmem:[%s3171 + $0xf1] sm:$0xff]
      %v3554 = vld [vmem:[%s3171 + $0x101] sm:$0xff]
      %v3555 = vld [vmem:[%s3171 + $0x111] sm:$0xff]
      %v3556 = vld [vmem:[%s3171 + $0x121] sm:$0xff]
      %v3557 = vld [vmem:[%s3171 + $0x131] sm:$0xff]
      %v3558 = vld [vmem:[%s3171 + $0x181] sm:$0xff]
      %v3559 = vld [vmem:[%s3171 + $0x191] sm:$0xff]
      %v3560 = vld [vmem:[%s3171 + $0x1a1] sm:$0xff]
      %v3561 = vld [vmem:[%s3171 + $0x1b1] sm:$0xff]
      %v3562 = vld [vmem:[%s3171 + $0x1c1] sm:$0xff]
      %v3563 = vld [vmem:[%s3171 + $0x1d1] sm:$0xff]
      %v3564 = vld [vmem:[%s3171 + $0x1e1] sm:$0xff]
      %v3565 = vld [vmem:[%s3171 + $0x1f1] sm:$0xff]
      %v3566 = vld [vmem:[%s3171 + $0x241] sm:$0xff]
      %v3567 = vld [vmem:[%s3171 + $0x251] sm:$0xff]
      %v3568 = vld [vmem:[%s3171 + $0x261] sm:$0xff]
      %v3569 = vld [vmem:[%s3171 + $0x271] sm:$0xff]
      %v3570 = vld [vmem:[%s3171 + $0x281] sm:$0xff]
      %v3571 = vld [vmem:[%s3171 + $0x291] sm:$0xff]
      %v3572 = vld [vmem:[%s3171 + $0x2a1] sm:$0xff]
      %v3573 = vld [vmem:[%s3171 + $0x2b1] sm:$0xff]
      %v3574 = vpack.c.bf16 %v3543, %v3542
      %v3575 = vpack.c.bf16 %v3545, %v3544
      %v3576 = vpack.c.bf16 %v3547, %v3546
      %v3577 = vpack.c.bf16 %v3549, %v3548
      %v3578 = vpack.c.bf16 %v3551, %v3550
      %v3579 = vpack.c.bf16 %v3553, %v3552
      %v3580 = vpack.c.bf16 %v3555, %v3554
      %v3581 = vpack.c.bf16 %v3557, %v3556
      %v3582 = vpack.c.bf16 %v3559, %v3558
      %v3583 = vpack.c.bf16 %v3561, %v3560
      %v3584 = vpack.c.bf16 %v3563, %v3562
      %v3585 = vpack.c.bf16 %v3565, %v3564
      %v3586 = vpack.c.bf16 %v3567, %v3566
      %v3587 = vpack.c.bf16 %v3569, %v3568
      %v3588 = vpack.c.bf16 %v3571, %v3570
      %v3589 = vpack.c.bf16 %v3573, %v3572
      %s3590 = scalar_lea.vmem %s3, 96
      %v3591 = vld [vmem:[%s3590] sm:$0xf]
      %v3592 = vld [vmem:[%s3590 + $0x4] sm:$0xf]
      %v3593 = vld [vmem:[%s3590 + $0x8] sm:$0xf]
      %v3594 = vld [vmem:[%s3590 + $0xc] sm:$0xf]
      %v3599 = vunpack.c.l.b16 %v3591
      %v3600 = vunpack.c.l.b16 %v3592
      %v3601 = vunpack.c.l.b16 %v3593
      %v3602 = vunpack.c.l.b16 %v3594
      %v3603 = vpack.c.b16 %v3600, %v3599
      %v3604 = vpack.c.b16 %v3602, %v3601
      %v3608 = vsel %vm593, %v3574, 0
      %v3611 = vsel %vm593, %v3575, 0
      %v3614 = vsel %vm593, %v3576, 0
      %v3617 = vsel %vm593, %v3577, 0
      %v3620 = vsel %vm593, %v3578, 0
      %v3623 = vsel %vm593, %v3579, 0
      %v3626 = vsel %vm593, %v3580, 0
      %v3629 = vsel %vm593, %v3581, 0
      %v3632 = vsel %vm593, %v3582, 0
      %v3635 = vsel %vm593, %v3583, 0
      %v3638 = vsel %vm593, %v3584, 0
      %v3641 = vsel %vm593, %v3585, 0
      %v3644 = vsel %vm593, %v3586, 0
      %v3647 = vsel %vm593, %v3587, 0
      %v3650 = vsel %vm593, %v3588, 0
      %v3653 = vsel %vm593, %v3589, 0
      %3655 = vmatprep.subr.bf16.mxu0 0
      %3656 = vmatpush1.bf16.msra.mxu0 %v3603
      %3657 = vmatprep.subr.bf16.mxu0 0
      %3658 = vmatpush1.bf16.msra.mxu0 %v3604
      %3659 = vmatprep.subr.bf16.mxu0 0
      %3660 = vmatpush1.bf16.msra.mxu0 0
      %3661 = vmatprep.subr.bf16.mxu0 0
      %3662 = vmatpush1.bf16.msra.mxu0 0
      %3663 = vmatprep.subr.bf16.mxu0 0
      %3664 = vmatpush1.bf16.msra.mxu0 0
      %3665 = vmatprep.subr.bf16.mxu0 0
      %3666 = vmatpush1.bf16.msra.mxu0 0
      %3667 = vmatprep.subr.bf16.mxu0 0
      %3668 = vmatpush1.bf16.msra.mxu0 0
      %3669 = vmatprep.subr.bf16.mxu0 0
      %3670 = vmatpush1.bf16.msra.mxu0 0
      %3671 = vmatprep.subr.bf16.mxu0 0
      %3672 = vmatpush1.bf16.msra.mxu0 0
      %3673 = vmatprep.subr.bf16.mxu0 0
      %3674 = vmatpush1.bf16.msra.mxu0 0
      %3675 = vmatprep.subr.bf16.mxu0 0
      %3676 = vmatpush1.bf16.msra.mxu0 0
      %3677 = vmatprep.subr.bf16.mxu0 0
      %3678 = vmatpush1.bf16.msra.mxu0 0
      %3679 = vmatprep.subr.bf16.mxu0 0
      %3680 = vmatpush1.bf16.msra.mxu0 0
      %3681 = vmatprep.subr.bf16.mxu0 0
      %3682 = vmatpush1.bf16.msra.mxu0 0
      %3683 = vmatprep.subr.bf16.mxu0 0
      %3684 = vmatpush1.bf16.msra.mxu0 0
      %3685 = vmatprep.subr.bf16.mxu0 0
      %3686 = vmatpush1.bf16.msra.mxu0 0
      %3687 = vmatprep.mubr.bf16.mxu0 0
      %3688 = vmatmul.mubr.bf16.gmra.mrb[0].mxu0 %v3608
      %v3689 = vpop.f32.mrb[0].mxu0
      %v3690 = vadd.f32 0.0, %v3689
      %v3691 = vpop.f32.mrb[0].mxu0
      %v3692 = vpop.f32.mrb[0].mxu0
      %v3693 = vadd.f32 0.0, %v3692
      %v3694 = vpop.f32.mrb[0].mxu0
      %3695 = vmatprep.mubr.bf16.mxu0 0
      %3696 = vmatmul.mubr.bf16.gmra.mrb[0].mxu0 %v3611
      %v3697 = vpop.f32.mrb[0].mxu0
      %v3698 = vadd.f32 0.0, %v3697
      %v3699 = vpop.f32.mrb[0].mxu0
      %v3700 = vpop.f32.mrb[0].mxu0
      %v3701 = vadd.f32 0.0, %v3700
      %v3702 = vpop.f32.mrb[0].mxu0
      %3703 = vmatprep.mubr.bf16.mxu0 0
      %3704 = vmatmul.mubr.bf16.gmra.mrb[0].mxu0 %v3614
      %v3705 = vpop.f32.mrb[0].mxu0
      %v3706 = vadd.f32 0.0, %v3705
      %v3707 = vpop.f32.mrb[0].mxu0
      %v3708 = vpop.f32.mrb[0].mxu0
      %v3709 = vadd.f32 0.0, %v3708
      %v3710 = vpop.f32.mrb[0].mxu0
      %3711 = vmatprep.mubr.bf16.mxu0 0
      %3712 = vmatmul.mubr.bf16.gmra.mrb[0].mxu0 %v3617
      %v3713 = vpop.f32.mrb[0].mxu0
      %v3714 = vadd.f32 0.0, %v3713
      %v3715 = vpop.f32.mrb[0].mxu0
      %v3716 = vpop.f32.mrb[0].mxu0
      %v3717 = vadd.f32 0.0, %v3716
      %v3718 = vpop.f32.mrb[0].mxu0
      %3719 = vmatprep.mubr.bf16.mxu0 0
      %3720 = vmatmul.mubr.bf16.gmra.mrb[0].mxu0 %v3620
      %v3721 = vpop.f32.mrb[0].mxu0
      %v3722 = vadd.f32 0.0, %v3721
      %v3723 = vpop.f32.mrb[0].mxu0
      %v3724 = vpop.f32.mrb[0].mxu0
      %v3725 = vadd.f32 0.0, %v3724
      %v3726 = vpop.f32.mrb[0].mxu0
      %3727 = vmatprep.mubr.bf16.mxu0 0
      %3728 = vmatmul.mubr.bf16.gmra.mrb[0].mxu0 %v3623
      %v3729 = vpop.f32.mrb[0].mxu0
      %v3730 = vadd.f32 0.0, %v3729
      %v3731 = vpop.f32.mrb[0].mxu0
      %v3732 = vpop.f32.mrb[0].mxu0
      %v3733 = vadd.f32 0.0, %v3732
      %v3734 = vpop.f32.mrb[0].mxu0
      %3735 = vmatprep.mubr.bf16.mxu0 0
      %3736 = vmatmul.mubr.bf16.gmra.mrb[0].mxu0 %v3626
      %v3737 = vpop.f32.mrb[0].mxu0
      %v3738 = vadd.f32 0.0, %v3737
      %v3739 = vpop.f32.mrb[0].mxu0
      %v3740 = vpop.f32.mrb[0].mxu0
      %v3741 = vadd.f32 0.0, %v3740
      %v3742 = vpop.f32.mrb[0].mxu0
      %3743 = vmatprep.mubr.bf16.mxu0 0
      %3744 = vmatmul.mubr.bf16.gmra.mrb[0].mxu0 %v3629
      %v3745 = vpop.f32.mrb[0].mxu0
      %v3746 = vadd.f32 0.0, %v3745
      %v3747 = vpop.f32.mrb[0].mxu0
      %v3748 = vpop.f32.mrb[0].mxu0
      %v3749 = vadd.f32 0.0, %v3748
      %v3750 = vpop.f32.mrb[0].mxu0
      %3751 = vmatprep.mubr.bf16.mxu0 0
      %3752 = vmatmul.mubr.bf16.gmra.mrb[0].mxu0 %v3632
      %v3753 = vpop.f32.mrb[0].mxu0
      %v3754 = vadd.f32 0.0, %v3753
      %v3755 = vpop.f32.mrb[0].mxu0
      %v3756 = vpop.f32.mrb[0].mxu0
      %v3757 = vadd.f32 0.0, %v3756
      %v3758 = vpop.f32.mrb[0].mxu0
      %3759 = vmatprep.mubr.bf16.mxu0 0
      %3760 = vmatmul.mubr.bf16.gmra.mrb[0].mxu0 %v3635
      %v3761 = vpop.f32.mrb[0].mxu0
      %v3762 = vadd.f32 0.0, %v3761
      %v3763 = vpop.f32.mrb[0].mxu0
      %v3764 = vpop.f32.mrb[0].mxu0
      %v3765 = vadd.f32 0.0, %v3764
      %v3766 = vpop.f32.mrb[0].mxu0
      %3767 = vmatprep.mubr.bf16.mxu0 0
      %3768 = vmatmul.mubr.bf16.gmra.mrb[0].mxu0 %v3638
      %v3769 = vpop.f32.mrb[0].mxu0
      %v3770 = vadd.f32 0.0, %v3769
      %v3771 = vpop.f32.mrb[0].mxu0
      %v3772 = vpop.f32.mrb[0].mxu0
      %v3773 = vadd.f32 0.0, %v3772
      %v3774 = vpop.f32.mrb[0].mxu0
      %3775 = vmatprep.mubr.bf16.mxu0 0
      %3776 = vmatmul.mubr.bf16.gmra.mrb[0].mxu0 %v3641
      %v3777 = vpop.f32.mrb[0].mxu0
      %v3778 = vadd.f32 0.0, %v3777
      %v3779 = vpop.f32.mrb[0].mxu0
      %v3780 = vpop.f32.mrb[0].mxu0
      %v3781 = vadd.f32 0.0, %v3780
      %v3782 = vpop.f32.mrb[0].mxu0
      %3783 = vmatprep.mubr.bf16.mxu0 0
      %3784 = vmatmul.mubr.bf16.gmra.mrb[0].mxu0 %v3644
      %v3785 = vpop.f32.mrb[0].mxu0
      %v3786 = vadd.f32 0.0, %v3785
      %v3787 = vpop.f32.mrb[0].mxu0
      %v3788 = vpop.f32.mrb[0].mxu0
      %v3789 = vadd.f32 0.0, %v3788
      %v3790 = vpop.f32.mrb[0].mxu0
      %3791 = vmatprep.mubr.bf16.mxu0 0
      %3792 = vmatmul.mubr.bf16.gmra.mrb[0].mxu0 %v3647
      %v3793 = vpop.f32.mrb[0].mxu0
      %v3794 = vadd.f32 0.0, %v3793
      %v3795 = vpop.f32.mrb[0].mxu0
      %v3796 = vpop.f32.mrb[0].mxu0
      %v3797 = vadd.f32 0.0, %v3796
      %v3798 = vpop.f32.mrb[0].mxu0
      %3799 = vmatprep.mubr.bf16.mxu0 0
      %3800 = vmatmul.mubr.bf16.gmra.mrb[0].mxu0 %v3650
      %v3801 = vpop.f32.mrb[0].mxu0
      %v3802 = vadd.f32 0.0, %v3801
      %v3803 = vpop.f32.mrb[0].mxu0
      %v3804 = vpop.f32.mrb[0].mxu0
      %v3805 = vadd.f32 0.0, %v3804
      %v3806 = vpop.f32.mrb[0].mxu0
      %3807 = vmatprep.mubr.bf16.mxu0 0
      %3808 = vmatmul.mubr.bf16.gmra.mrb[0].mxu0 %v3653
      %v3809 = vpop.f32.mrb[0].mxu0
      %v3810 = vadd.f32 0.0, %v3809
      %v3811 = vpop.f32.mrb[0].mxu0
      %v3812 = vpop.f32.mrb[0].mxu0
      %v3813 = vadd.f32 0.0, %v3812
      %v3814 = vpop.f32.mrb[0].mxu0
      %3815 = vdwg.mxu0
      %v3816 = vld [vmem:[%s231] sm:$0xff]
      %v3817 = vld [vmem:[%s231 + $0x8] sm:$0xff]
      %v3818 = vld [vmem:[%s231 + $0x10] sm:$0xff]
      %v3819 = vld [vmem:[%s231 + $0x18] sm:$0xff]
      %v3820 = vld [vmem:[%s231 + $0x20] sm:$0xff]
      %v3821 = vld [vmem:[%s231 + $0x28] sm:$0xff]
      %v3822 = vld [vmem:[%s231 + $0x30] sm:$0xff]
      %v3823 = vld [vmem:[%s231 + $0x38] sm:$0xff]
      %v3824 = vld [vmem:[%s231 + $0x40] sm:$0xff]
      %v3825 = vld [vmem:[%s231 + $0x48] sm:$0xff]
      %v3826 = vld [vmem:[%s231 + $0x50] sm:$0xff]
      %v3827 = vld [vmem:[%s231 + $0x58] sm:$0xff]
      %v3828 = vld [vmem:[%s231 + $0x60] sm:$0xff]
      %v3829 = vld [vmem:[%s231 + $0x68] sm:$0xff]
      %v3830 = vld [vmem:[%s231 + $0x70] sm:$0xff]
      %v3831 = vld [vmem:[%s231 + $0x78] sm:$0xff]
      %v3832 = vld [vmem:[%s231 + $0x80] sm:$0xff]
      %v3833 = vld [vmem:[%s231 + $0x88] sm:$0xff]
      %v3834 = vld [vmem:[%s231 + $0x90] sm:$0xff]
      %v3835 = vld [vmem:[%s231 + $0x98] sm:$0xff]
      %v3836 = vld [vmem:[%s231 + $0xa0] sm:$0xff]
      %v3837 = vld [vmem:[%s231 + $0xa8] sm:$0xff]
      %v3838 = vld [vmem:[%s231 + $0xb0] sm:$0xff]
      %v3839 = vld [vmem:[%s231 + $0xb8] sm:$0xff]
      %v3840 = vld [vmem:[%s231 + $0xc0] sm:$0xff]
      %v3841 = vld [vmem:[%s231 + $0xc8] sm:$0xff]
      %v3842 = vld [vmem:[%s231 + $0xd0] sm:$0xff]
      %v3843 = vld [vmem:[%s231 + $0xd8] sm:$0xff]
      %v3844 = vld [vmem:[%s231 + $0xe0] sm:$0xff]
      %v3845 = vld [vmem:[%s231 + $0xe8] sm:$0xff]
      %v3846 = vld [vmem:[%s231 + $0xf0] sm:$0xff]
      %v3847 = vld [vmem:[%s231 + $0xf8] sm:$0xff]
      %v3848 = vadd.f32 %v3816, %v3690
      %v3849 = vadd.f32 %v3817, %v3693
      %v3850 = vadd.f32 %v3818, %v3698
      %v3851 = vadd.f32 %v3819, %v3701
      %v3852 = vadd.f32 %v3820, %v3706
      %v3853 = vadd.f32 %v3821, %v3709
      %v3854 = vadd.f32 %v3822, %v3714
      %v3855 = vadd.f32 %v3823, %v3717
      %v3856 = vadd.f32 %v3824, %v3722
      %v3857 = vadd.f32 %v3825, %v3725
      %v3858 = vadd.f32 %v3826, %v3730
      %v3859 = vadd.f32 %v3827, %v3733
      %v3860 = vadd.f32 %v3828, %v3738
      %v3861 = vadd.f32 %v3829, %v3741
      %v3862 = vadd.f32 %v3830, %v3746
      %v3863 = vadd.f32 %v3831, %v3749
      %v3864 = vadd.f32 %v3832, %v3754
      %v3865 = vadd.f32 %v3833, %v3757
      %v3866 = vadd.f32 %v3834, %v3762
      %v3867 = vadd.f32 %v3835, %v3765
      %v3868 = vadd.f32 %v3836, %v3770
      %v3869 = vadd.f32 %v3837, %v3773
      %v3870 = vadd.f32 %v3838, %v3778
      %v3871 = vadd.f32 %v3839, %v3781
      %v3872 = vadd.f32 %v3840, %v3786
      %v3873 = vadd.f32 %v3841, %v3789
      %v3874 = vadd.f32 %v3842, %v3794
      %v3875 = vadd.f32 %v3843, %v3797
      %v3876 = vadd.f32 %v3844, %v3802
      %v3877 = vadd.f32 %v3845, %v3805
      %v3878 = vadd.f32 %v3846, %v3810
      %v3879 = vadd.f32 %v3847, %v3813
      %3880 = vst [vmem:[%s231] sm:$0xff] %v3848
      %3881 = vst [vmem:[%s231 + $0x8] sm:$0xff] %v3849
      %3882 = vst [vmem:[%s231 + $0x10] sm:$0xff] %v3850
      %3883 = vst [vmem:[%s231 + $0x18] sm:$0xff] %v3851
      %3884 = vst [vmem:[%s231 + $0x20] sm:$0xff] %v3852
      %3885 = vst [vmem:[%s231 + $0x28] sm:$0xff] %v3853
      %3886 = vst [vmem:[%s231 + $0x30] sm:$0xff] %v3854
      %3887 = vst [vmem:[%s231 + $0x38] sm:$0xff] %v3855
      %3888 = vst [vmem:[%s231 + $0x40] sm:$0xff] %v3856
      %3889 = vst [vmem:[%s231 + $0x48] sm:$0xff] %v3857
      %3890 = vst [vmem:[%s231 + $0x50] sm:$0xff] %v3858
      %3891 = vst [vmem:[%s231 + $0x58] sm:$0xff] %v3859
      %3892 = vst [vmem:[%s231 + $0x60] sm:$0xff] %v3860
      %3893 = vst [vmem:[%s231 + $0x68] sm:$0xff] %v3861
      %3894 = vst [vmem:[%s231 + $0x70] sm:$0xff] %v3862
      %3895 = vst [vmem:[%s231 + $0x78] sm:$0xff] %v3863
      %3896 = vst [vmem:[%s231 + $0x80] sm:$0xff] %v3864
      %3897 = vst [vmem:[%s231 + $0x88] sm:$0xff] %v3865
      %3898 = vst [vmem:[%s231 + $0x90] sm:$0xff] %v3866
      %3899 = vst [vmem:[%s231 + $0x98] sm:$0xff] %v3867
      %3900 = vst [vmem:[%s231 + $0xa0] sm:$0xff] %v3868
      %3901 = vst [vmem:[%s231 + $0xa8] sm:$0xff] %v3869
      %3902 = vst [vmem:[%s231 + $0xb0] sm:$0xff] %v3870
      %3903 = vst [vmem:[%s231 + $0xb8] sm:$0xff] %v3871
      %3904 = vst [vmem:[%s231 + $0xc0] sm:$0xff] %v3872
      %3905 = vst [vmem:[%s231 + $0xc8] sm:$0xff] %v3873
      %3906 = vst [vmem:[%s231 + $0xd0] sm:$0xff] %v3874
      %3907 = vst [vmem:[%s231 + $0xd8] sm:$0xff] %v3875
      %3908 = vst [vmem:[%s231 + $0xe0] sm:$0xff] %v3876
      %3909 = vst [vmem:[%s231 + $0xe8] sm:$0xff] %v3877
      %3910 = vst [vmem:[%s231 + $0xf0] sm:$0xff] %v3878
      %3911 = vst [vmem:[%s231 + $0xf8] sm:$0xff] %v3879
      %v3912 = vld [vmem:[%s3171 + $0x2] sm:$0xff]
      %v3913 = vld [vmem:[%s3171 + $0x12] sm:$0xff]
      %v3914 = vld [vmem:[%s3171 + $0x22] sm:$0xff]
      %v3915 = vld [vmem:[%s3171 + $0x32] sm:$0xff]
      %v3916 = vld [vmem:[%s3171 + $0x42] sm:$0xff]
      %v3917 = vld [vmem:[%s3171 + $0x52] sm:$0xff]
      %v3918 = vld [vmem:[%s3171 + $0x62] sm:$0xff]
      %v3919 = vld [vmem:[%s3171 + $0x72] sm:$0xff]
      %v3920 = vld [vmem:[%s3171 + $0xc2] sm:$0xff]
      %v3921 = vld [vmem:[%s3171 + $0xd2] sm:$0xff]
      %v3922 = vld [vmem:[%s3171 + $0xe2] sm:$0xff]
      %v3923 = vld [vmem:[%s3171 + $0xf2] sm:$0xff]
      %v3924 = vld [vmem:[%s3171 + $0x102] sm:$0xff]
      %v3925 = vld [vmem:[%s3171 + $0x112] sm:$0xff]
      %v3926 = vld [vmem:[%s3171 + $0x122] sm:$0xff]
      %v3927 = vld [vmem:[%s3171 + $0x132] sm:$0xff]
      %v3928 = vld [vmem:[%s3171 + $0x182] sm:$0xff]
      %v3929 = vld [vmem:[%s3171 + $0x192] sm:$0xff]
      %v3930 = vld [vmem:[%s3171 + $0x1a2] sm:$0xff]
      %v3931 = vld [vmem:[%s3171 + $0x1b2] sm:$0xff]
      %v3932 = vld [vmem:[%s3171 + $0x1c2] sm:$0xff]
      %v3933 = vld [vmem:[%s3171 + $0x1d2] sm:$0xff]
      %v3934 = vld [vmem:[%s3171 + $0x1e2] sm:$0xff]
      %v3935 = vld [vmem:[%s3171 + $0x1f2] sm:$0xff]
      %v3936 = vld [vmem:[%s3171 + $0x242] sm:$0xff]
      %v3937 = vld [vmem:[%s3171 + $0x252] sm:$0xff]
      %v3938 = vld [vmem:[%s3171 + $0x262] sm:$0xff]
      %v3939 = vld [vmem:[%s3171 + $0x272] sm:$0xff]
      %v3940 = vld [vmem:[%s3171 + $0x282] sm:$0xff]
      %v3941 = vld [vmem:[%s3171 + $0x292] sm:$0xff]
      %v3942 = vld [vmem:[%s3171 + $0x2a2] sm:$0xff]
      %v3943 = vld [vmem:[%s3171 + $0x2b2] sm:$0xff]
      %v3944 = vpack.c.bf16 %v3913, %v3912
      %v3945 = vpack.c.bf16 %v3915, %v3914
      %v3946 = vpack.c.bf16 %v3917, %v3916
      %v3947 = vpack.c.bf16 %v3919, %v3918
      %v3948 = vpack.c.bf16 %v3921, %v3920
      %v3949 = vpack.c.bf16 %v3923, %v3922
      %v3950 = vpack.c.bf16 %v3925, %v3924
      %v3951 = vpack.c.bf16 %v3927, %v3926
      %v3952 = vpack.c.bf16 %v3929, %v3928
      %v3953 = vpack.c.bf16 %v3931, %v3930
      %v3954 = vpack.c.bf16 %v3933, %v3932
      %v3955 = vpack.c.bf16 %v3935, %v3934
      %v3956 = vpack.c.bf16 %v3937, %v3936
      %v3957 = vpack.c.bf16 %v3939, %v3938
      %v3958 = vpack.c.bf16 %v3941, %v3940
      %v3959 = vpack.c.bf16 %v3943, %v3942
      %s3960 = scalar_lea.vmem %s3, 112
      %v3961 = vld [vmem:[%s3960] sm:$0xf]
      %v3962 = vld [vmem:[%s3960 + $0x4] sm:$0xf]
      %v3963 = vld [vmem:[%s3960 + $0x8] sm:$0xf]
      %v3964 = vld [vmem:[%s3960 + $0xc] sm:$0xf]
      %v3969 = vunpack.c.l.b16 %v3961
      %v3970 = vunpack.c.l.b16 %v3962
      %v3971 = vunpack.c.l.b16 %v3963
      %v3972 = vunpack.c.l.b16 %v3964
      %v3973 = vpack.c.b16 %v3970, %v3969
      %v3974 = vpack.c.b16 %v3972, %v3971
      %v3978 = vsel %vm593, %v3944, 0
      %v3981 = vsel %vm593, %v3945, 0
      %v3984 = vsel %vm593, %v3946, 0
      %v3987 = vsel %vm593, %v3947, 0
      %v3990 = vsel %vm593, %v3948, 0
      %v3993 = vsel %vm593, %v3949, 0
      %v3996 = vsel %vm593, %v3950, 0
      %v3999 = vsel %vm593, %v3951, 0
      %v4002 = vsel %vm593, %v3952, 0
      %v4005 = vsel %vm593, %v3953, 0
      %v4008 = vsel %vm593, %v3954, 0
      %v4011 = vsel %vm593, %v3955, 0
      %v4014 = vsel %vm593, %v3956, 0
      %v4017 = vsel %vm593, %v3957, 0
      %v4020 = vsel %vm593, %v3958, 0
      %v4023 = vsel %vm593, %v3959, 0
      %4025 = vmatprep.subr.bf16.mxu0 0
      %4026 = vmatpush1.bf16.msra.mxu0 %v3973
      %4027 = vmatprep.subr.bf16.mxu0 0
      %4028 = vmatpush1.bf16.msra.mxu0 %v3974
      %4029 = vmatprep.subr.bf16.mxu0 0
      %4030 = vmatpush1.bf16.msra.mxu0 0
      %4031 = vmatprep.subr.bf16.mxu0 0
      %4032 = vmatpush1.bf16.msra.mxu0 0
      %4033 = vmatprep.subr.bf16.mxu0 0
      %4034 = vmatpush1.bf16.msra.mxu0 0
      %4035 = vmatprep.subr.bf16.mxu0 0
      %4036 = vmatpush1.bf16.msra.mxu0 0
      %4037 = vmatprep.subr.bf16.mxu0 0
      %4038 = vmatpush1.bf16.msra.mxu0 0
      %4039 = vmatprep.subr.bf16.mxu0 0
      %4040 = vmatpush1.bf16.msra.mxu0 0
      %4041 = vmatprep.subr.bf16.mxu0 0
      %4042 = vmatpush1.bf16.msra.mxu0 0
      %4043 = vmatprep.subr.bf16.mxu0 0
      %4044 = vmatpush1.bf16.msra.mxu0 0
      %4045 = vmatprep.subr.bf16.mxu0 0
      %4046 = vmatpush1.bf16.msra.mxu0 0
      %4047 = vmatprep.subr.bf16.mxu0 0
      %4048 = vmatpush1.bf16.msra.mxu0 0
      %4049 = vmatprep.subr.bf16.mxu0 0
      %4050 = vmatpush1.bf16.msra.mxu0 0
      %4051 = vmatprep.subr.bf16.mxu0 0
      %4052 = vmatpush1.bf16.msra.mxu0 0
      %4053 = vmatprep.subr.bf16.mxu0 0
      %4054 = vmatpush1.bf16.msra.mxu0 0
      %4055 = vmatprep.subr.bf16.mxu0 0
      %4056 = vmatpush1.bf16.msra.mxu0 0
      %4057 = vmatprep.mubr.bf16.mxu0 0
      %4058 = vmatmul.mubr.bf16.gmra.mrb[0].mxu0 %v3978
      %v4059 = vpop.f32.mrb[0].mxu0
      %v4060 = vadd.f32 0.0, %v4059
      %v4061 = vpop.f32.mrb[0].mxu0
      %v4062 = vpop.f32.mrb[0].mxu0
      %v4063 = vadd.f32 0.0, %v4062
      %v4064 = vpop.f32.mrb[0].mxu0
      %4065 = vmatprep.mubr.bf16.mxu0 0
      %4066 = vmatmul.mubr.bf16.gmra.mrb[0].mxu0 %v3981
      %v4067 = vpop.f32.mrb[0].mxu0
      %v4068 = vadd.f32 0.0, %v4067
      %v4069 = vpop.f32.mrb[0].mxu0
      %v4070 = vpop.f32.mrb[0].mxu0
      %v4071 = vadd.f32 0.0, %v4070
      %v4072 = vpop.f32.mrb[0].mxu0
      %4073 = vmatprep.mubr.bf16.mxu0 0
      %4074 = vmatmul.mubr.bf16.gmra.mrb[0].mxu0 %v3984
      %v4075 = vpop.f32.mrb[0].mxu0
      %v4076 = vadd.f32 0.0, %v4075
      %v4077 = vpop.f32.mrb[0].mxu0
      %v4078 = vpop.f32.mrb[0].mxu0
      %v4079 = vadd.f32 0.0, %v4078
      %v4080 = vpop.f32.mrb[0].mxu0
      %4081 = vmatprep.mubr.bf16.mxu0 0
      %4082 = vmatmul.mubr.bf16.gmra.mrb[0].mxu0 %v3987
      %v4083 = vpop.f32.mrb[0].mxu0
      %v4084 = vadd.f32 0.0, %v4083
      %v4085 = vpop.f32.mrb[0].mxu0
      %v4086 = vpop.f32.mrb[0].mxu0
      %v4087 = vadd.f32 0.0, %v4086
      %v4088 = vpop.f32.mrb[0].mxu0
      %4089 = vmatprep.mubr.bf16.mxu0 0
      %4090 = vmatmul.mubr.bf16.gmra.mrb[0].mxu0 %v3990
      %v4091 = vpop.f32.mrb[0].mxu0
      %v4092 = vadd.f32 0.0, %v4091
      %v4093 = vpop.f32.mrb[0].mxu0
      %v4094 = vpop.f32.mrb[0].mxu0
      %v4095 = vadd.f32 0.0, %v4094
      %v4096 = vpop.f32.mrb[0].mxu0
      %4097 = vmatprep.mubr.bf16.mxu0 0
      %4098 = vmatmul.mubr.bf16.gmra.mrb[0].mxu0 %v3993
      %v4099 = vpop.f32.mrb[0].mxu0
      %v4100 = vadd.f32 0.0, %v4099
      %v4101 = vpop.f32.mrb[0].mxu0
      %v4102 = vpop.f32.mrb[0].mxu0
      %v4103 = vadd.f32 0.0, %v4102
      %v4104 = vpop.f32.mrb[0].mxu0
      %4105 = vmatprep.mubr.bf16.mxu0 0
      %4106 = vmatmul.mubr.bf16.gmra.mrb[0].mxu0 %v3996
      %v4107 = vpop.f32.mrb[0].mxu0
      %v4108 = vadd.f32 0.0, %v4107
      %v4109 = vpop.f32.mrb[0].mxu0
      %v4110 = vpop.f32.mrb[0].mxu0
      %v4111 = vadd.f32 0.0, %v4110
      %v4112 = vpop.f32.mrb[0].mxu0
      %4113 = vmatprep.mubr.bf16.mxu0 0
      %4114 = vmatmul.mubr.bf16.gmra.mrb[0].mxu0 %v3999
      %v4115 = vpop.f32.mrb[0].mxu0
      %v4116 = vadd.f32 0.0, %v4115
      %v4117 = vpop.f32.mrb[0].mxu0
      %v4118 = vpop.f32.mrb[0].mxu0
      %v4119 = vadd.f32 0.0, %v4118
      %v4120 = vpop.f32.mrb[0].mxu0
      %4121 = vmatprep.mubr.bf16.mxu0 0
      %4122 = vmatmul.mubr.bf16.gmra.mrb[0].mxu0 %v4002
      %v4123 = vpop.f32.mrb[0].mxu0
      %v4124 = vadd.f32 0.0, %v4123
      %v4125 = vpop.f32.mrb[0].mxu0
      %v4126 = vpop.f32.mrb[0].mxu0
      %v4127 = vadd.f32 0.0, %v4126
      %v4128 = vpop.f32.mrb[0].mxu0
      %4129 = vmatprep.mubr.bf16.mxu0 0
      %4130 = vmatmul.mubr.bf16.gmra.mrb[0].mxu0 %v4005
      %v4131 = vpop.f32.mrb[0].mxu0
      %v4132 = vadd.f32 0.0, %v4131
      %v4133 = vpop.f32.mrb[0].mxu0
      %v4134 = vpop.f32.mrb[0].mxu0
      %v4135 = vadd.f32 0.0, %v4134
      %v4136 = vpop.f32.mrb[0].mxu0
      %4137 = vmatprep.mubr.bf16.mxu0 0
      %4138 = vmatmul.mubr.bf16.gmra.mrb[0].mxu0 %v4008
      %v4139 = vpop.f32.mrb[0].mxu0
      %v4140 = vadd.f32 0.0, %v4139
      %v4141 = vpop.f32.mrb[0].mxu0
      %v4142 = vpop.f32.mrb[0].mxu0
      %v4143 = vadd.f32 0.0, %v4142
      %v4144 = vpop.f32.mrb[0].mxu0
      %4145 = vmatprep.mubr.bf16.mxu0 0
      %4146 = vmatmul.mubr.bf16.gmra.mrb[0].mxu0 %v4011
      %v4147 = vpop.f32.mrb[0].mxu0
      %v4148 = vadd.f32 0.0, %v4147
      %v4149 = vpop.f32.mrb[0].mxu0
      %v4150 = vpop.f32.mrb[0].mxu0
      %v4151 = vadd.f32 0.0, %v4150
      %v4152 = vpop.f32.mrb[0].mxu0
      %4153 = vmatprep.mubr.bf16.mxu0 0
      %4154 = vmatmul.mubr.bf16.gmra.mrb[0].mxu0 %v4014
      %v4155 = vpop.f32.mrb[0].mxu0
      %v4156 = vadd.f32 0.0, %v4155
      %v4157 = vpop.f32.mrb[0].mxu0
      %v4158 = vpop.f32.mrb[0].mxu0
      %v4159 = vadd.f32 0.0, %v4158
      %v4160 = vpop.f32.mrb[0].mxu0
      %4161 = vmatprep.mubr.bf16.mxu0 0
      %4162 = vmatmul.mubr.bf16.gmra.mrb[0].mxu0 %v4017
      %v4163 = vpop.f32.mrb[0].mxu0
      %v4164 = vadd.f32 0.0, %v4163
      %v4165 = vpop.f32.mrb[0].mxu0
      %v4166 = vpop.f32.mrb[0].mxu0
      %v4167 = vadd.f32 0.0, %v4166
      %v4168 = vpop.f32.mrb[0].mxu0
      %4169 = vmatprep.mubr.bf16.mxu0 0
      %4170 = vmatmul.mubr.bf16.gmra.mrb[0].mxu0 %v4020
      %v4171 = vpop.f32.mrb[0].mxu0
      %v4172 = vadd.f32 0.0, %v4171
      %v4173 = vpop.f32.mrb[0].mxu0
      %v4174 = vpop.f32.mrb[0].mxu0
      %v4175 = vadd.f32 0.0, %v4174
      %v4176 = vpop.f32.mrb[0].mxu0
      %4177 = vmatprep.mubr.bf16.mxu0 0
      %4178 = vmatmul.mubr.bf16.gmra.mrb[0].mxu0 %v4023
      %v4179 = vpop.f32.mrb[0].mxu0
      %v4180 = vadd.f32 0.0, %v4179
      %v4181 = vpop.f32.mrb[0].mxu0
      %v4182 = vpop.f32.mrb[0].mxu0
      %v4183 = vadd.f32 0.0, %v4182
      %v4184 = vpop.f32.mrb[0].mxu0
      %4185 = vdwg.mxu0
      %v4186 = vld [vmem:[%s231] sm:$0xff]
      %v4187 = vld [vmem:[%s231 + $0x8] sm:$0xff]
      %v4188 = vld [vmem:[%s231 + $0x10] sm:$0xff]
      %v4189 = vld [vmem:[%s231 + $0x18] sm:$0xff]
      %v4190 = vld [vmem:[%s231 + $0x20] sm:$0xff]
      %v4191 = vld [vmem:[%s231 + $0x28] sm:$0xff]
      %v4192 = vld [vmem:[%s231 + $0x30] sm:$0xff]
      %v4193 = vld [vmem:[%s231 + $0x38] sm:$0xff]
      %v4194 = vld [vmem:[%s231 + $0x40] sm:$0xff]
      %v4195 = vld [vmem:[%s231 + $0x48] sm:$0xff]
      %v4196 = vld [vmem:[%s231 + $0x50] sm:$0xff]
      %v4197 = vld [vmem:[%s231 + $0x58] sm:$0xff]
      %v4198 = vld [vmem:[%s231 + $0x60] sm:$0xff]
      %v4199 = vld [vmem:[%s231 + $0x68] sm:$0xff]
      %v4200 = vld [vmem:[%s231 + $0x70] sm:$0xff]
      %v4201 = vld [vmem:[%s231 + $0x78] sm:$0xff]
      %v4202 = vld [vmem:[%s231 + $0x80] sm:$0xff]
      %v4203 = vld [vmem:[%s231 + $0x88] sm:$0xff]
      %v4204 = vld [vmem:[%s231 + $0x90] sm:$0xff]
      %v4205 = vld [vmem:[%s231 + $0x98] sm:$0xff]
      %v4206 = vld [vmem:[%s231 + $0xa0] sm:$0xff]
      %v4207 = vld [vmem:[%s231 + $0xa8] sm:$0xff]
      %v4208 = vld [vmem:[%s231 + $0xb0] sm:$0xff]
      %v4209 = vld [vmem:[%s231 + $0xb8] sm:$0xff]
      %v4210 = vld [vmem:[%s231 + $0xc0] sm:$0xff]
      %v4211 = vld [vmem:[%s231 + $0xc8] sm:$0xff]
      %v4212 = vld [vmem:[%s231 + $0xd0] sm:$0xff]
      %v4213 = vld [vmem:[%s231 + $0xd8] sm:$0xff]
      %v4214 = vld [vmem:[%s231 + $0xe0] sm:$0xff]
      %v4215 = vld [vmem:[%s231 + $0xe8] sm:$0xff]
      %v4216 = vld [vmem:[%s231 + $0xf0] sm:$0xff]
      %v4217 = vld [vmem:[%s231 + $0xf8] sm:$0xff]
      %v4218 = vadd.f32 %v4186, %v4060
      %v4219 = vadd.f32 %v4187, %v4063
      %v4220 = vadd.f32 %v4188, %v4068
      %v4221 = vadd.f32 %v4189, %v4071
      %v4222 = vadd.f32 %v4190, %v4076
      %v4223 = vadd.f32 %v4191, %v4079
      %v4224 = vadd.f32 %v4192, %v4084
      %v4225 = vadd.f32 %v4193, %v4087
      %v4226 = vadd.f32 %v4194, %v4092
      %v4227 = vadd.f32 %v4195, %v4095
      %v4228 = vadd.f32 %v4196, %v4100
      %v4229 = vadd.f32 %v4197, %v4103
      %v4230 = vadd.f32 %v4198, %v4108
      %v4231 = vadd.f32 %v4199, %v4111
      %v4232 = vadd.f32 %v4200, %v4116
      %v4233 = vadd.f32 %v4201, %v4119
      %v4234 = vadd.f32 %v4202, %v4124
      %v4235 = vadd.f32 %v4203, %v4127
      %v4236 = vadd.f32 %v4204, %v4132
      %v4237 = vadd.f32 %v4205, %v4135
      %v4238 = vadd.f32 %v4206, %v4140
      %v4239 = vadd.f32 %v4207, %v4143
      %v4240 = vadd.f32 %v4208, %v4148
      %v4241 = vadd.f32 %v4209, %v4151
      %v4242 = vadd.f32 %v4210, %v4156
      %v4243 = vadd.f32 %v4211, %v4159
      %v4244 = vadd.f32 %v4212, %v4164
      %v4245 = vadd.f32 %v4213, %v4167
      %v4246 = vadd.f32 %v4214, %v4172
      %v4247 = vadd.f32 %v4215, %v4175
      %v4248 = vadd.f32 %v4216, %v4180
      %v4249 = vadd.f32 %v4217, %v4183
      %4250 = vst [vmem:[%s231] sm:$0xff] %v4218
      %4251 = vst [vmem:[%s231 + $0x8] sm:$0xff] %v4219
      %4252 = vst [vmem:[%s231 + $0x10] sm:$0xff] %v4220
      %4253 = vst [vmem:[%s231 + $0x18] sm:$0xff] %v4221
      %4254 = vst [vmem:[%s231 + $0x20] sm:$0xff] %v4222
      %4255 = vst [vmem:[%s231 + $0x28] sm:$0xff] %v4223
      %4256 = vst [vmem:[%s231 + $0x30] sm:$0xff] %v4224
      %4257 = vst [vmem:[%s231 + $0x38] sm:$0xff] %v4225
      %4258 = vst [vmem:[%s231 + $0x40] sm:$0xff] %v4226
      %4259 = vst [vmem:[%s231 + $0x48] sm:$0xff] %v4227
      %4260 = vst [vmem:[%s231 + $0x50] sm:$0xff] %v4228
      %4261 = vst [vmem:[%s231 + $0x58] sm:$0xff] %v4229
      %4262 = vst [vmem:[%s231 + $0x60] sm:$0xff] %v4230
      %4263 = vst [vmem:[%s231 + $0x68] sm:$0xff] %v4231
      %4264 = vst [vmem:[%s231 + $0x70] sm:$0xff] %v4232
      %4265 = vst [vmem:[%s231 + $0x78] sm:$0xff] %v4233
      %4266 = vst [vmem:[%s231 + $0x80] sm:$0xff] %v4234
      %4267 = vst [vmem:[%s231 + $0x88] sm:$0xff] %v4235
      %4268 = vst [vmem:[%s231 + $0x90] sm:$0xff] %v4236
      %4269 = vst [vmem:[%s231 + $0x98] sm:$0xff] %v4237
      %4270 = vst [vmem:[%s231 + $0xa0] sm:$0xff] %v4238
      %4271 = vst [vmem:[%s231 + $0xa8] sm:$0xff] %v4239
      %4272 = vst [vmem:[%s231 + $0xb0] sm:$0xff] %v4240
      %4273 = vst [vmem:[%s231 + $0xb8] sm:$0xff] %v4241
      %4274 = vst [vmem:[%s231 + $0xc0] sm:$0xff] %v4242
      %4275 = vst [vmem:[%s231 + $0xc8] sm:$0xff] %v4243
      %4276 = vst [vmem:[%s231 + $0xd0] sm:$0xff] %v4244
      %4277 = vst [vmem:[%s231 + $0xd8] sm:$0xff] %v4245
      %4278 = vst [vmem:[%s231 + $0xe0] sm:$0xff] %v4246
      %4279 = vst [vmem:[%s231 + $0xe8] sm:$0xff] %v4247
      %4280 = vst [vmem:[%s231 + $0xf0] sm:$0xff] %v4248
      %4281 = vst [vmem:[%s231 + $0xf8] sm:$0xff] %v4249
      %v4282 = vld [vmem:[%s3171 + $0x3] sm:$0xff]
      %v4283 = vld [vmem:[%s3171 + $0x13] sm:$0xff]
      %v4284 = vld [vmem:[%s3171 + $0x23] sm:$0xff]
      %v4285 = vld [vmem:[%s3171 + $0x33] sm:$0xff]
      %v4286 = vld [vmem:[%s3171 + $0x43] sm:$0xff]
      %v4287 = vld [vmem:[%s3171 + $0x53] sm:$0xff]
      %v4288 = vld [vmem:[%s3171 + $0x63] sm:$0xff]
      %v4289 = vld [vmem:[%s3171 + $0x73] sm:$0xff]
      %v4290 = vld [vmem:[%s3171 + $0xc3] sm:$0xff]
      %v4291 = vld [vmem:[%s3171 + $0xd3] sm:$0xff]
      %v4292 = vld [vmem:[%s3171 + $0xe3] sm:$0xff]
      %v4293 = vld [vmem:[%s3171 + $0xf3] sm:$0xff]
      %v4294 = vld [vmem:[%s3171 + $0x103] sm:$0xff]
      %v4295 = vld [vmem:[%s3171 + $0x113] sm:$0xff]
      %v4296 = vld [vmem:[%s3171 + $0x123] sm:$0xff]
      %v4297 = vld [vmem:[%s3171 + $0x133] sm:$0xff]
      %v4298 = vld [vmem:[%s3171 + $0x183] sm:$0xff]
      %v4299 = vld [vmem:[%s3171 + $0x193] sm:$0xff]
      %v4300 = vld [vmem:[%s3171 + $0x1a3] sm:$0xff]
      %v4301 = vld [vmem:[%s3171 + $0x1b3] sm:$0xff]
      %v4302 = vld [vmem:[%s3171 + $0x1c3] sm:$0xff]
      %v4303 = vld [vmem:[%s3171 + $0x1d3] sm:$0xff]
      %v4304 = vld [vmem:[%s3171 + $0x1e3] sm:$0xff]
      %v4305 = vld [vmem:[%s3171 + $0x1f3] sm:$0xff]
      %v4306 = vld [vmem:[%s3171 + $0x243] sm:$0xff]
      %v4307 = vld [vmem:[%s3171 + $0x253] sm:$0xff]
      %v4308 = vld [vmem:[%s3171 + $0x263] sm:$0xff]
      %v4309 = vld [vmem:[%s3171 + $0x273] sm:$0xff]
      %v4310 = vld [vmem:[%s3171 + $0x283] sm:$0xff]
      %v4311 = vld [vmem:[%s3171 + $0x293] sm:$0xff]
      %v4312 = vld [vmem:[%s3171 + $0x2a3] sm:$0xff]
      %v4313 = vld [vmem:[%s3171 + $0x2b3] sm:$0xff]
      %v4314 = vpack.c.bf16 %v4283, %v4282
      %v4315 = vpack.c.bf16 %v4285, %v4284
      %v4316 = vpack.c.bf16 %v4287, %v4286
      %v4317 = vpack.c.bf16 %v4289, %v4288
      %v4318 = vpack.c.bf16 %v4291, %v4290
      %v4319 = vpack.c.bf16 %v4293, %v4292
      %v4320 = vpack.c.bf16 %v4295, %v4294
      %v4321 = vpack.c.bf16 %v4297, %v4296
      %v4322 = vpack.c.bf16 %v4299, %v4298
      %v4323 = vpack.c.bf16 %v4301, %v4300
      %v4324 = vpack.c.bf16 %v4303, %v4302
      %v4325 = vpack.c.bf16 %v4305, %v4304
      %v4326 = vpack.c.bf16 %v4307, %v4306
      %v4327 = vpack.c.bf16 %v4309, %v4308
      %v4328 = vpack.c.bf16 %v4311, %v4310
      %v4329 = vpack.c.bf16 %v4313, %v4312
      %s4330 = scalar_lea.vmem %s3, 128
      %v4331 = vld [vmem:[%s4330] sm:$0xf]
      %v4332 = vld [vmem:[%s4330 + $0x4] sm:$0xf]
      %v4333 = vld [vmem:[%s4330 + $0x8] sm:$0xf]
      %v4334 = vld [vmem:[%s4330 + $0xc] sm:$0xf]
      %v4339 = vunpack.c.l.b16 %v4331
      %v4340 = vunpack.c.l.b16 %v4332
      %v4341 = vunpack.c.l.b16 %v4333
      %v4342 = vunpack.c.l.b16 %v4334
      %v4343 = vpack.c.b16 %v4340, %v4339
      %v4344 = vpack.c.b16 %v4342, %v4341
      %v4348 = vsel %vm593, %v4314, 0
      %v4351 = vsel %vm593, %v4315, 0
      %v4354 = vsel %vm593, %v4316, 0
      %v4357 = vsel %vm593, %v4317, 0
      %v4360 = vsel %vm593, %v4318, 0
      %v4363 = vsel %vm593, %v4319, 0
      %v4366 = vsel %vm593, %v4320, 0
      %v4369 = vsel %vm593, %v4321, 0
      %v4372 = vsel %vm593, %v4322, 0
      %v4375 = vsel %vm593, %v4323, 0
      %v4378 = vsel %vm593, %v4324, 0
      %v4381 = vsel %vm593, %v4325, 0
      %v4384 = vsel %vm593, %v4326, 0
      %v4387 = vsel %vm593, %v4327, 0
      %v4390 = vsel %vm593, %v4328, 0
      %v4393 = vsel %vm593, %v4329, 0
      %4395 = vmatprep.subr.bf16.mxu0 0
      %4396 = vmatpush1.bf16.msra.mxu0 %v4343
      %4397 = vmatprep.subr.bf16.mxu0 0
      %4398 = vmatpush1.bf16.msra.mxu0 %v4344
      %4399 = vmatprep.subr.bf16.mxu0 0
      %4400 = vmatpush1.bf16.msra.mxu0 0
      %4401 = vmatprep.subr.bf16.mxu0 0
      %4402 = vmatpush1.bf16.msra.mxu0 0
      %4403 = vmatprep.subr.bf16.mxu0 0
      %4404 = vmatpush1.bf16.msra.mxu0 0
      %4405 = vmatprep.subr.bf16.mxu0 0
      %4406 = vmatpush1.bf16.msra.mxu0 0
      %4407 = vmatprep.subr.bf16.mxu0 0
      %4408 = vmatpush1.bf16.msra.mxu0 0
      %4409 = vmatprep.subr.bf16.mxu0 0
      %4410 = vmatpush1.bf16.msra.mxu0 0
      %4411 = vmatprep.subr.bf16.mxu0 0
      %4412 = vmatpush1.bf16.msra.mxu0 0
      %4413 = vmatprep.subr.bf16.mxu0 0
      %4414 = vmatpush1.bf16.msra.mxu0 0
      %4415 = vmatprep.subr.bf16.mxu0 0
      %4416 = vmatpush1.bf16.msra.mxu0 0
      %4417 = vmatprep.subr.bf16.mxu0 0
      %4418 = vmatpush1.bf16.msra.mxu0 0
      %4419 = vmatprep.subr.bf16.mxu0 0
      %4420 = vmatpush1.bf16.msra.mxu0 0
      %4421 = vmatprep.subr.bf16.mxu0 0
      %4422 = vmatpush1.bf16.msra.mxu0 0
      %4423 = vmatprep.subr.bf16.mxu0 0
      %4424 = vmatpush1.bf16.msra.mxu0 0
      %4425 = vmatprep.subr.bf16.mxu0 0
      %4426 = vmatpush1.bf16.msra.mxu0 0
      %4427 = vmatprep.mubr.bf16.mxu0 0
      %4428 = vmatmul.mubr.bf16.gmra.mrb[0].mxu0 %v4348
      %v4429 = vpop.f32.mrb[0].mxu0
      %v4430 = vadd.f32 0.0, %v4429
      %v4431 = vpop.f32.mrb[0].mxu0
      %v4432 = vpop.f32.mrb[0].mxu0
      %v4433 = vadd.f32 0.0, %v4432
      %v4434 = vpop.f32.mrb[0].mxu0
      %4435 = vmatprep.mubr.bf16.mxu0 0
      %4436 = vmatmul.mubr.bf16.gmra.mrb[0].mxu0 %v4351
      %v4437 = vpop.f32.mrb[0].mxu0
      %v4438 = vadd.f32 0.0, %v4437
      %v4439 = vpop.f32.mrb[0].mxu0
      %v4440 = vpop.f32.mrb[0].mxu0
      %v4441 = vadd.f32 0.0, %v4440
      %v4442 = vpop.f32.mrb[0].mxu0
      %4443 = vmatprep.mubr.bf16.mxu0 0
      %4444 = vmatmul.mubr.bf16.gmra.mrb[0].mxu0 %v4354
      %v4445 = vpop.f32.mrb[0].mxu0
      %v4446 = vadd.f32 0.0, %v4445
      %v4447 = vpop.f32.mrb[0].mxu0
      %v4448 = vpop.f32.mrb[0].mxu0
      %v4449 = vadd.f32 0.0, %v4448
      %v4450 = vpop.f32.mrb[0].mxu0
      %4451 = vmatprep.mubr.bf16.mxu0 0
      %4452 = vmatmul.mubr.bf16.gmra.mrb[0].mxu0 %v4357
      %v4453 = vpop.f32.mrb[0].mxu0
      %v4454 = vadd.f32 0.0, %v4453
      %v4455 = vpop.f32.mrb[0].mxu0
      %v4456 = vpop.f32.mrb[0].mxu0
      %v4457 = vadd.f32 0.0, %v4456
      %v4458 = vpop.f32.mrb[0].mxu0
      %4459 = vmatprep.mubr.bf16.mxu0 0
      %4460 = vmatmul.mubr.bf16.gmra.mrb[0].mxu0 %v4360
      %v4461 = vpop.f32.mrb[0].mxu0
      %v4462 = vadd.f32 0.0, %v4461
      %v4463 = vpop.f32.mrb[0].mxu0
      %v4464 = vpop.f32.mrb[0].mxu0
      %v4465 = vadd.f32 0.0, %v4464
      %v4466 = vpop.f32.mrb[0].mxu0
      %4467 = vmatprep.mubr.bf16.mxu0 0
      %4468 = vmatmul.mubr.bf16.gmra.mrb[0].mxu0 %v4363
      %v4469 = vpop.f32.mrb[0].mxu0
      %v4470 = vadd.f32 0.0, %v4469
      %v4471 = vpop.f32.mrb[0].mxu0
      %v4472 = vpop.f32.mrb[0].mxu0
      %v4473 = vadd.f32 0.0, %v4472
      %v4474 = vpop.f32.mrb[0].mxu0
      %4475 = vmatprep.mubr.bf16.mxu0 0
      %4476 = vmatmul.mubr.bf16.gmra.mrb[0].mxu0 %v4366
      %v4477 = vpop.f32.mrb[0].mxu0
      %v4478 = vadd.f32 0.0, %v4477
      %v4479 = vpop.f32.mrb[0].mxu0
      %v4480 = vpop.f32.mrb[0].mxu0
      %v4481 = vadd.f32 0.0, %v4480
      %v4482 = vpop.f32.mrb[0].mxu0
      %4483 = vmatprep.mubr.bf16.mxu0 0
      %4484 = vmatmul.mubr.bf16.gmra.mrb[0].mxu0 %v4369
      %v4485 = vpop.f32.mrb[0].mxu0
      %v4486 = vadd.f32 0.0, %v4485
      %v4487 = vpop.f32.mrb[0].mxu0
      %v4488 = vpop.f32.mrb[0].mxu0
      %v4489 = vadd.f32 0.0, %v4488
      %v4490 = vpop.f32.mrb[0].mxu0
      %4491 = vmatprep.mubr.bf16.mxu0 0
      %4492 = vmatmul.mubr.bf16.gmra.mrb[0].mxu0 %v4372
      %v4493 = vpop.f32.mrb[0].mxu0
      %v4494 = vadd.f32 0.0, %v4493
      %v4495 = vpop.f32.mrb[0].mxu0
      %v4496 = vpop.f32.mrb[0].mxu0
      %v4497 = vadd.f32 0.0, %v4496
      %v4498 = vpop.f32.mrb[0].mxu0
      %4499 = vmatprep.mubr.bf16.mxu0 0
      %4500 = vmatmul.mubr.bf16.gmra.mrb[0].mxu0 %v4375
      %v4501 = vpop.f32.mrb[0].mxu0
      %v4502 = vadd.f32 0.0, %v4501
      %v4503 = vpop.f32.mrb[0].mxu0
      %v4504 = vpop.f32.mrb[0].mxu0
      %v4505 = vadd.f32 0.0, %v4504
      %v4506 = vpop.f32.mrb[0].mxu0
      %4507 = vmatprep.mubr.bf16.mxu0 0
      %4508 = vmatmul.mubr.bf16.gmra.mrb[0].mxu0 %v4378
      %v4509 = vpop.f32.mrb[0].mxu0
      %v4510 = vadd.f32 0.0, %v4509
      %v4511 = vpop.f32.mrb[0].mxu0
      %v4512 = vpop.f32.mrb[0].mxu0
      %v4513 = vadd.f32 0.0, %v4512
      %v4514 = vpop.f32.mrb[0].mxu0
      %4515 = vmatprep.mubr.bf16.mxu0 0
      %4516 = vmatmul.mubr.bf16.gmra.mrb[0].mxu0 %v4381
      %v4517 = vpop.f32.mrb[0].mxu0
      %v4518 = vadd.f32 0.0, %v4517
      %v4519 = vpop.f32.mrb[0].mxu0
      %v4520 = vpop.f32.mrb[0].mxu0
      %v4521 = vadd.f32 0.0, %v4520
      %v4522 = vpop.f32.mrb[0].mxu0
      %4523 = vmatprep.mubr.bf16.mxu0 0
      %4524 = vmatmul.mubr.bf16.gmra.mrb[0].mxu0 %v4384
      %v4525 = vpop.f32.mrb[0].mxu0
      %v4526 = vadd.f32 0.0, %v4525
      %v4527 = vpop.f32.mrb[0].mxu0
      %v4528 = vpop.f32.mrb[0].mxu0
      %v4529 = vadd.f32 0.0, %v4528
      %v4530 = vpop.f32.mrb[0].mxu0
      %4531 = vmatprep.mubr.bf16.mxu0 0
      %4532 = vmatmul.mubr.bf16.gmra.mrb[0].mxu0 %v4387
      %v4533 = vpop.f32.mrb[0].mxu0
      %v4534 = vadd.f32 0.0, %v4533
      %v4535 = vpop.f32.mrb[0].mxu0
      %v4536 = vpop.f32.mrb[0].mxu0
      %v4537 = vadd.f32 0.0, %v4536
      %v4538 = vpop.f32.mrb[0].mxu0
      %4539 = vmatprep.mubr.bf16.mxu0 0
      %4540 = vmatmul.mubr.bf16.gmra.mrb[0].mxu0 %v4390
      %v4541 = vpop.f32.mrb[0].mxu0
      %v4542 = vadd.f32 0.0, %v4541
      %v4543 = vpop.f32.mrb[0].mxu0
      %v4544 = vpop.f32.mrb[0].mxu0
      %v4545 = vadd.f32 0.0, %v4544
      %v4546 = vpop.f32.mrb[0].mxu0
      %4547 = vmatprep.mubr.bf16.mxu0 0
      %4548 = vmatmul.mubr.bf16.gmra.mrb[0].mxu0 %v4393
      %v4549 = vpop.f32.mrb[0].mxu0
      %v4550 = vadd.f32 0.0, %v4549
      %v4551 = vpop.f32.mrb[0].mxu0
      %v4552 = vpop.f32.mrb[0].mxu0
      %v4553 = vadd.f32 0.0, %v4552
      %v4554 = vpop.f32.mrb[0].mxu0
      %4555 = vdwg.mxu0
      %v4556 = vld [vmem:[%s231] sm:$0xff]
      %v4557 = vld [vmem:[%s231 + $0x8] sm:$0xff]
      %v4558 = vld [vmem:[%s231 + $0x10] sm:$0xff]
      %v4559 = vld [vmem:[%s231 + $0x18] sm:$0xff]
      %v4560 = vld [vmem:[%s231 + $0x20] sm:$0xff]
      %v4561 = vld [vmem:[%s231 + $0x28] sm:$0xff]
      %v4562 = vld [vmem:[%s231 + $0x30] sm:$0xff]
      %v4563 = vld [vmem:[%s231 + $0x38] sm:$0xff]
      %v4564 = vld [vmem:[%s231 + $0x40] sm:$0xff]
      %v4565 = vld [vmem:[%s231 + $0x48] sm:$0xff]
      %v4566 = vld [vmem:[%s231 + $0x50] sm:$0xff]
      %v4567 = vld [vmem:[%s231 + $0x58] sm:$0xff]
      %v4568 = vld [vmem:[%s231 + $0x60] sm:$0xff]
      %v4569 = vld [vmem:[%s231 + $0x68] sm:$0xff]
      %v4570 = vld [vmem:[%s231 + $0x70] sm:$0xff]
      %v4571 = vld [vmem:[%s231 + $0x78] sm:$0xff]
      %v4572 = vld [vmem:[%s231 + $0x80] sm:$0xff]
      %v4573 = vld [vmem:[%s231 + $0x88] sm:$0xff]
      %v4574 = vld [vmem:[%s231 + $0x90] sm:$0xff]
      %v4575 = vld [vmem:[%s231 + $0x98] sm:$0xff]
      %v4576 = vld [vmem:[%s231 + $0xa0] sm:$0xff]
      %v4577 = vld [vmem:[%s231 + $0xa8] sm:$0xff]
      %v4578 = vld [vmem:[%s231 + $0xb0] sm:$0xff]
      %v4579 = vld [vmem:[%s231 + $0xb8] sm:$0xff]
      %v4580 = vld [vmem:[%s231 + $0xc0] sm:$0xff]
      %v4581 = vld [vmem:[%s231 + $0xc8] sm:$0xff]
      %v4582 = vld [vmem:[%s231 + $0xd0] sm:$0xff]
      %v4583 = vld [vmem:[%s231 + $0xd8] sm:$0xff]
      %v4584 = vld [vmem:[%s231 + $0xe0] sm:$0xff]
      %v4585 = vld [vmem:[%s231 + $0xe8] sm:$0xff]
      %v4586 = vld [vmem:[%s231 + $0xf0] sm:$0xff]
      %v4587 = vld [vmem:[%s231 + $0xf8] sm:$0xff]
      %v4588 = vadd.f32 %v4556, %v4430
      %v4589 = vadd.f32 %v4557, %v4433
      %v4590 = vadd.f32 %v4558, %v4438
      %v4591 = vadd.f32 %v4559, %v4441
      %v4592 = vadd.f32 %v4560, %v4446
      %v4593 = vadd.f32 %v4561, %v4449
      %v4594 = vadd.f32 %v4562, %v4454
      %v4595 = vadd.f32 %v4563, %v4457
      %v4596 = vadd.f32 %v4564, %v4462
      %v4597 = vadd.f32 %v4565, %v4465
      %v4598 = vadd.f32 %v4566, %v4470
      %v4599 = vadd.f32 %v4567, %v4473
      %v4600 = vadd.f32 %v4568, %v4478
      %v4601 = vadd.f32 %v4569, %v4481
      %v4602 = vadd.f32 %v4570, %v4486
      %v4603 = vadd.f32 %v4571, %v4489
      %v4604 = vadd.f32 %v4572, %v4494
      %v4605 = vadd.f32 %v4573, %v4497
      %v4606 = vadd.f32 %v4574, %v4502
      %v4607 = vadd.f32 %v4575, %v4505
      %v4608 = vadd.f32 %v4576, %v4510
      %v4609 = vadd.f32 %v4577, %v4513
      %v4610 = vadd.f32 %v4578, %v4518
      %v4611 = vadd.f32 %v4579, %v4521
      %v4612 = vadd.f32 %v4580, %v4526
      %v4613 = vadd.f32 %v4581, %v4529
      %v4614 = vadd.f32 %v4582, %v4534
      %v4615 = vadd.f32 %v4583, %v4537
      %v4616 = vadd.f32 %v4584, %v4542
      %v4617 = vadd.f32 %v4585, %v4545
      %v4618 = vadd.f32 %v4586, %v4550
      %v4619 = vadd.f32 %v4587, %v4553
      %4620 = vst [vmem:[%s231] sm:$0xff] %v4588
      %4621 = vst [vmem:[%s231 + $0x8] sm:$0xff] %v4589
      %4622 = vst [vmem:[%s231 + $0x10] sm:$0xff] %v4590
      %4623 = vst [vmem:[%s231 + $0x18] sm:$0xff] %v4591
      %4624 = vst [vmem:[%s231 + $0x20] sm:$0xff] %v4592
      %4625 = vst [vmem:[%s231 + $0x28] sm:$0xff] %v4593
      %4626 = vst [vmem:[%s231 + $0x30] sm:$0xff] %v4594
      %4627 = vst [vmem:[%s231 + $0x38] sm:$0xff] %v4595
      %4628 = vst [vmem:[%s231 + $0x40] sm:$0xff] %v4596
      %4629 = vst [vmem:[%s231 + $0x48] sm:$0xff] %v4597
      %4630 = vst [vmem:[%s231 + $0x50] sm:$0xff] %v4598
      %4631 = vst [vmem:[%s231 + $0x58] sm:$0xff] %v4599
      %4632 = vst [vmem:[%s231 + $0x60] sm:$0xff] %v4600
      %4633 = vst [vmem:[%s231 + $0x68] sm:$0xff] %v4601
      %4634 = vst [vmem:[%s231 + $0x70] sm:$0xff] %v4602
      %4635 = vst [vmem:[%s231 + $0x78] sm:$0xff] %v4603
      %4636 = vst [vmem:[%s231 + $0x80] sm:$0xff] %v4604
      %4637 = vst [vmem:[%s231 + $0x88] sm:$0xff] %v4605
      %4638 = vst [vmem:[%s231 + $0x90] sm:$0xff] %v4606
      %4639 = vst [vmem:[%s231 + $0x98] sm:$0xff] %v4607
      %4640 = vst [vmem:[%s231 + $0xa0] sm:$0xff] %v4608
      %4641 = vst [vmem:[%s231 + $0xa8] sm:$0xff] %v4609
      %4642 = vst [vmem:[%s231 + $0xb0] sm:$0xff] %v4610
      %4643 = vst [vmem:[%s231 + $0xb8] sm:$0xff] %v4611
      %4644 = vst [vmem:[%s231 + $0xc0] sm:$0xff] %v4612
      %4645 = vst [vmem:[%s231 + $0xc8] sm:$0xff] %v4613
      %4646 = vst [vmem:[%s231 + $0xd0] sm:$0xff] %v4614
      %4647 = vst [vmem:[%s231 + $0xd8] sm:$0xff] %v4615
      %4648 = vst [vmem:[%s231 + $0xe0] sm:$0xff] %v4616
      %4649 = vst [vmem:[%s231 + $0xe8] sm:$0xff] %v4617
      %4650 = vst [vmem:[%s231 + $0xf0] sm:$0xff] %v4618
      %4651 = vst [vmem:[%s231 + $0xf8] sm:$0xff] %v4619
      %v4652 = vld [vmem:[%s3171 + $0x4] sm:$0xff]
      %v4653 = vld [vmem:[%s3171 + $0x14] sm:$0xff]
      %v4654 = vld [vmem:[%s3171 + $0x24] sm:$0xff]
      %v4655 = vld [vmem:[%s3171 + $0x34] sm:$0xff]
      %v4656 = vld [vmem:[%s3171 + $0x44] sm:$0xff]
      %v4657 = vld [vmem:[%s3171 + $0x54] sm:$0xff]
      %v4658 = vld [vmem:[%s3171 + $0x64] sm:$0xff]
      %v4659 = vld [vmem:[%s3171 + $0x74] sm:$0xff]
      %v4660 = vld [vmem:[%s3171 + $0xc4] sm:$0xff]
      %v4661 = vld [vmem:[%s3171 + $0xd4] sm:$0xff]
      %v4662 = vld [vmem:[%s3171 + $0xe4] sm:$0xff]
      %v4663 = vld [vmem:[%s3171 + $0xf4] sm:$0xff]
      %v4664 = vld [vmem:[%s3171 + $0x104] sm:$0xff]
      %v4665 = vld [vmem:[%s3171 + $0x114] sm:$0xff]
      %v4666 = vld [vmem:[%s3171 + $0x124] sm:$0xff]
      %v4667 = vld [vmem:[%s3171 + $0x134] sm:$0xff]
      %v4668 = vld [vmem:[%s3171 + $0x184] sm:$0xff]
      %v4669 = vld [vmem:[%s3171 + $0x194] sm:$0xff]
      %v4670 = vld [vmem:[%s3171 + $0x1a4] sm:$0xff]
      %v4671 = vld [vmem:[%s3171 + $0x1b4] sm:$0xff]
      %v4672 = vld [vmem:[%s3171 + $0x1c4] sm:$0xff]
      %v4673 = vld [vmem:[%s3171 + $0x1d4] sm:$0xff]
      %v4674 = vld [vmem:[%s3171 + $0x1e4] sm:$0xff]
      %v4675 = vld [vmem:[%s3171 + $0x1f4] sm:$0xff]
      %v4676 = vld [vmem:[%s3171 + $0x244] sm:$0xff]
      %v4677 = vld [vmem:[%s3171 + $0x254] sm:$0xff]
      %v4678 = vld [vmem:[%s3171 + $0x264] sm:$0xff]
      %v4679 = vld [vmem:[%s3171 + $0x274] sm:$0xff]
      %v4680 = vld [vmem:[%s3171 + $0x284] sm:$0xff]
      %v4681 = vld [vmem:[%s3171 + $0x294] sm:$0xff]
      %v4682 = vld [vmem:[%s3171 + $0x2a4] sm:$0xff]
      %v4683 = vld [vmem:[%s3171 + $0x2b4] sm:$0xff]
      %v4684 = vpack.c.bf16 %v4653, %v4652
      %v4685 = vpack.c.bf16 %v4655, %v4654
      %v4686 = vpack.c.bf16 %v4657, %v4656
      %v4687 = vpack.c.bf16 %v4659, %v4658
      %v4688 = vpack.c.bf16 %v4661, %v4660
      %v4689 = vpack.c.bf16 %v4663, %v4662
      %v4690 = vpack.c.bf16 %v4665, %v4664
      %v4691 = vpack.c.bf16 %v4667, %v4666
      %v4692 = vpack.c.bf16 %v4669, %v4668
      %v4693 = vpack.c.bf16 %v4671, %v4670
      %v4694 = vpack.c.bf16 %v4673, %v4672
      %v4695 = vpack.c.bf16 %v4675, %v4674
      %v4696 = vpack.c.bf16 %v4677, %v4676
      %v4697 = vpack.c.bf16 %v4679, %v4678
      %v4698 = vpack.c.bf16 %v4681, %v4680
      %v4699 = vpack.c.bf16 %v4683, %v4682
      %s4700 = scalar_lea.vmem %s3, 144
      %v4701 = vld [vmem:[%s4700] sm:$0xf]
      %v4702 = vld [vmem:[%s4700 + $0x4] sm:$0xf]
      %v4703 = vld [vmem:[%s4700 + $0x8] sm:$0xf]
      %v4704 = vld [vmem:[%s4700 + $0xc] sm:$0xf]
      %v4709 = vunpack.c.l.b16 %v4701
      %v4710 = vunpack.c.l.b16 %v4702
      %v4711 = vunpack.c.l.b16 %v4703
      %v4712 = vunpack.c.l.b16 %v4704
      %v4713 = vpack.c.b16 %v4710, %v4709
      %v4714 = vpack.c.b16 %v4712, %v4711
      %v4718 = vsel %vm593, %v4684, 0
      %v4721 = vsel %vm593, %v4685, 0
      %v4724 = vsel %vm593, %v4686, 0
      %v4727 = vsel %vm593, %v4687, 0
      %v4730 = vsel %vm593, %v4688, 0
      %v4733 = vsel %vm593, %v4689, 0
      %v4736 = vsel %vm593, %v4690, 0
      %v4739 = vsel %vm593, %v4691, 0
      %v4742 = vsel %vm593, %v4692, 0
      %v4745 = vsel %vm593, %v4693, 0
      %v4748 = vsel %vm593, %v4694, 0
      %v4751 = vsel %vm593, %v4695, 0
      %v4754 = vsel %vm593, %v4696, 0
      %v4757 = vsel %vm593, %v4697, 0
      %v4760 = vsel %vm593, %v4698, 0
      %v4763 = vsel %vm593, %v4699, 0
      %4765 = vmatprep.subr.bf16.mxu0 0
      %4766 = vmatpush1.bf16.msra.mxu0 %v4713
      %4767 = vmatprep.subr.bf16.mxu0 0
      %4768 = vmatpush1.bf16.msra.mxu0 %v4714
      %4769 = vmatprep.subr.bf16.mxu0 0
      %4770 = vmatpush1.bf16.msra.mxu0 0
      %4771 = vmatprep.subr.bf16.mxu0 0
      %4772 = vmatpush1.bf16.msra.mxu0 0
      %4773 = vmatprep.subr.bf16.mxu0 0
      %4774 = vmatpush1.bf16.msra.mxu0 0
      %4775 = vmatprep.subr.bf16.mxu0 0
      %4776 = vmatpush1.bf16.msra.mxu0 0
      %4777 = vmatprep.subr.bf16.mxu0 0
      %4778 = vmatpush1.bf16.msra.mxu0 0
      %4779 = vmatprep.subr.bf16.mxu0 0
      %4780 = vmatpush1.bf16.msra.mxu0 0
      %4781 = vmatprep.subr.bf16.mxu0 0
      %4782 = vmatpush1.bf16.msra.mxu0 0
      %4783 = vmatprep.subr.bf16.mxu0 0
      %4784 = vmatpush1.bf16.msra.mxu0 0
      %4785 = vmatprep.subr.bf16.mxu0 0
      %4786 = vmatpush1.bf16.msra.mxu0 0
      %4787 = vmatprep.subr.bf16.mxu0 0
      %4788 = vmatpush1.bf16.msra.mxu0 0
      %4789 = vmatprep.subr.bf16.mxu0 0
      %4790 = vmatpush1.bf16.msra.mxu0 0
      %4791 = vmatprep.subr.bf16.mxu0 0
      %4792 = vmatpush1.bf16.msra.mxu0 0
      %4793 = vmatprep.subr.bf16.mxu0 0
      %4794 = vmatpush1.bf16.msra.mxu0 0
      %4795 = vmatprep.subr.bf16.mxu0 0
      %4796 = vmatpush1.bf16.msra.mxu0 0
      %4797 = vmatprep.mubr.bf16.mxu0 0
      %4798 = vmatmul.mubr.bf16.gmra.mrb[0].mxu0 %v4718
      %v4799 = vpop.f32.mrb[0].mxu0
      %v4800 = vadd.f32 0.0, %v4799
      %v4801 = vpop.f32.mrb[0].mxu0
      %v4802 = vpop.f32.mrb[0].mxu0
      %v4803 = vadd.f32 0.0, %v4802
      %v4804 = vpop.f32.mrb[0].mxu0
      %4805 = vmatprep.mubr.bf16.mxu0 0
      %4806 = vmatmul.mubr.bf16.gmra.mrb[0].mxu0 %v4721
      %v4807 = vpop.f32.mrb[0].mxu0
      %v4808 = vadd.f32 0.0, %v4807
      %v4809 = vpop.f32.mrb[0].mxu0
      %v4810 = vpop.f32.mrb[0].mxu0
      %v4811 = vadd.f32 0.0, %v4810
      %v4812 = vpop.f32.mrb[0].mxu0
      %4813 = vmatprep.mubr.bf16.mxu0 0
      %4814 = vmatmul.mubr.bf16.gmra.mrb[0].mxu0 %v4724
      %v4815 = vpop.f32.mrb[0].mxu0
      %v4816 = vadd.f32 0.0, %v4815
      %v4817 = vpop.f32.mrb[0].mxu0
      %v4818 = vpop.f32.mrb[0].mxu0
      %v4819 = vadd.f32 0.0, %v4818
      %v4820 = vpop.f32.mrb[0].mxu0
      %4821 = vmatprep.mubr.bf16.mxu0 0
      %4822 = vmatmul.mubr.bf16.gmra.mrb[0].mxu0 %v4727
      %v4823 = vpop.f32.mrb[0].mxu0
      %v4824 = vadd.f32 0.0, %v4823
      %v4825 = vpop.f32.mrb[0].mxu0
      %v4826 = vpop.f32.mrb[0].mxu0
      %v4827 = vadd.f32 0.0, %v4826
      %v4828 = vpop.f32.mrb[0].mxu0
      %4829 = vmatprep.mubr.bf16.mxu0 0
      %4830 = vmatmul.mubr.bf16.gmra.mrb[0].mxu0 %v4730
      %v4831 = vpop.f32.mrb[0].mxu0
      %v4832 = vadd.f32 0.0, %v4831
      %v4833 = vpop.f32.mrb[0].mxu0
      %v4834 = vpop.f32.mrb[0].mxu0
      %v4835 = vadd.f32 0.0, %v4834
      %v4836 = vpop.f32.mrb[0].mxu0
      %4837 = vmatprep.mubr.bf16.mxu0 0
      %4838 = vmatmul.mubr.bf16.gmra.mrb[0].mxu0 %v4733
      %v4839 = vpop.f32.mrb[0].mxu0
      %v4840 = vadd.f32 0.0, %v4839
      %v4841 = vpop.f32.mrb[0].mxu0
      %v4842 = vpop.f32.mrb[0].mxu0
      %v4843 = vadd.f32 0.0, %v4842
      %v4844 = vpop.f32.mrb[0].mxu0
      %4845 = vmatprep.mubr.bf16.mxu0 0
      %4846 = vmatmul.mubr.bf16.gmra.mrb[0].mxu0 %v4736
      %v4847 = vpop.f32.mrb[0].mxu0
      %v4848 = vadd.f32 0.0, %v4847
      %v4849 = vpop.f32.mrb[0].mxu0
      %v4850 = vpop.f32.mrb[0].mxu0
      %v4851 = vadd.f32 0.0, %v4850
      %v4852 = vpop.f32.mrb[0].mxu0
      %4853 = vmatprep.mubr.bf16.mxu0 0
      %4854 = vmatmul.mubr.bf16.gmra.mrb[0].mxu0 %v4739
      %v4855 = vpop.f32.mrb[0].mxu0
      %v4856 = vadd.f32 0.0, %v4855
      %v4857 = vpop.f32.mrb[0].mxu0
      %v4858 = vpop.f32.mrb[0].mxu0
      %v4859 = vadd.f32 0.0, %v4858
      %v4860 = vpop.f32.mrb[0].mxu0
      %4861 = vmatprep.mubr.bf16.mxu0 0
      %4862 = vmatmul.mubr.bf16.gmra.mrb[0].mxu0 %v4742
      %v4863 = vpop.f32.mrb[0].mxu0
      %v4864 = vadd.f32 0.0, %v4863
      %v4865 = vpop.f32.mrb[0].mxu0
      %v4866 = vpop.f32.mrb[0].mxu0
      %v4867 = vadd.f32 0.0, %v4866
      %v4868 = vpop.f32.mrb[0].mxu0
      %4869 = vmatprep.mubr.bf16.mxu0 0
      %4870 = vmatmul.mubr.bf16.gmra.mrb[0].mxu0 %v4745
      %v4871 = vpop.f32.mrb[0].mxu0
      %v4872 = vadd.f32 0.0, %v4871
      %v4873 = vpop.f32.mrb[0].mxu0
      %v4874 = vpop.f32.mrb[0].mxu0
      %v4875 = vadd.f32 0.0, %v4874
      %v4876 = vpop.f32.mrb[0].mxu0
      %4877 = vmatprep.mubr.bf16.mxu0 0
      %4878 = vmatmul.mubr.bf16.gmra.mrb[0].mxu0 %v4748
      %v4879 = vpop.f32.mrb[0].mxu0
      %v4880 = vadd.f32 0.0, %v4879
      %v4881 = vpop.f32.mrb[0].mxu0
      %v4882 = vpop.f32.mrb[0].mxu0
      %v4883 = vadd.f32 0.0, %v4882
      %v4884 = vpop.f32.mrb[0].mxu0
      %4885 = vmatprep.mubr.bf16.mxu0 0
      %4886 = vmatmul.mubr.bf16.gmra.mrb[0].mxu0 %v4751
      %v4887 = vpop.f32.mrb[0].mxu0
      %v4888 = vadd.f32 0.0, %v4887
      %v4889 = vpop.f32.mrb[0].mxu0
      %v4890 = vpop.f32.mrb[0].mxu0
      %v4891 = vadd.f32 0.0, %v4890
      %v4892 = vpop.f32.mrb[0].mxu0
      %4893 = vmatprep.mubr.bf16.mxu0 0
      %4894 = vmatmul.mubr.bf16.gmra.mrb[0].mxu0 %v4754
      %v4895 = vpop.f32.mrb[0].mxu0
      %v4896 = vadd.f32 0.0, %v4895
      %v4897 = vpop.f32.mrb[0].mxu0
      %v4898 = vpop.f32.mrb[0].mxu0
      %v4899 = vadd.f32 0.0, %v4898
      %v4900 = vpop.f32.mrb[0].mxu0
      %4901 = vmatprep.mubr.bf16.mxu0 0
      %4902 = vmatmul.mubr.bf16.gmra.mrb[0].mxu0 %v4757
      %v4903 = vpop.f32.mrb[0].mxu0
      %v4904 = vadd.f32 0.0, %v4903
      %v4905 = vpop.f32.mrb[0].mxu0
      %v4906 = vpop.f32.mrb[0].mxu0
      %v4907 = vadd.f32 0.0, %v4906
      %v4908 = vpop.f32.mrb[0].mxu0
      %4909 = vmatprep.mubr.bf16.mxu0 0
      %4910 = vmatmul.mubr.bf16.gmra.mrb[0].mxu0 %v4760
      %v4911 = vpop.f32.mrb[0].mxu0
      %v4912 = vadd.f32 0.0, %v4911
      %v4913 = vpop.f32.mrb[0].mxu0
      %v4914 = vpop.f32.mrb[0].mxu0
      %v4915 = vadd.f32 0.0, %v4914
      %v4916 = vpop.f32.mrb[0].mxu0
      %4917 = vmatprep.mubr.bf16.mxu0 0
      %4918 = vmatmul.mubr.bf16.gmra.mrb[0].mxu0 %v4763
      %v4919 = vpop.f32.mrb[0].mxu0
      %v4920 = vadd.f32 0.0, %v4919
      %v4921 = vpop.f32.mrb[0].mxu0
      %v4922 = vpop.f32.mrb[0].mxu0
      %v4923 = vadd.f32 0.0, %v4922
      %v4924 = vpop.f32.mrb[0].mxu0
      %4925 = vdwg.mxu0
      %v4926 = vld [vmem:[%s231] sm:$0xff]
      %v4927 = vld [vmem:[%s231 + $0x8] sm:$0xff]
      %v4928 = vld [vmem:[%s231 + $0x10] sm:$0xff]
      %v4929 = vld [vmem:[%s231 + $0x18] sm:$0xff]
      %v4930 = vld [vmem:[%s231 + $0x20] sm:$0xff]
      %v4931 = vld [vmem:[%s231 + $0x28] sm:$0xff]
      %v4932 = vld [vmem:[%s231 + $0x30] sm:$0xff]
      %v4933 = vld [vmem:[%s231 + $0x38] sm:$0xff]
      %v4934 = vld [vmem:[%s231 + $0x40] sm:$0xff]
      %v4935 = vld [vmem:[%s231 + $0x48] sm:$0xff]
      %v4936 = vld [vmem:[%s231 + $0x50] sm:$0xff]
      %v4937 = vld [vmem:[%s231 + $0x58] sm:$0xff]
      %v4938 = vld [vmem:[%s231 + $0x60] sm:$0xff]
      %v4939 = vld [vmem:[%s231 + $0x68] sm:$0xff]
      %v4940 = vld [vmem:[%s231 + $0x70] sm:$0xff]
      %v4941 = vld [vmem:[%s231 + $0x78] sm:$0xff]
      %v4942 = vld [vmem:[%s231 + $0x80] sm:$0xff]
      %v4943 = vld [vmem:[%s231 + $0x88] sm:$0xff]
      %v4944 = vld [vmem:[%s231 + $0x90] sm:$0xff]
      %v4945 = vld [vmem:[%s231 + $0x98] sm:$0xff]
      %v4946 = vld [vmem:[%s231 + $0xa0] sm:$0xff]
      %v4947 = vld [vmem:[%s231 + $0xa8] sm:$0xff]
      %v4948 = vld [vmem:[%s231 + $0xb0] sm:$0xff]
      %v4949 = vld [vmem:[%s231 + $0xb8] sm:$0xff]
      %v4950 = vld [vmem:[%s231 + $0xc0] sm:$0xff]
      %v4951 = vld [vmem:[%s231 + $0xc8] sm:$0xff]
      %v4952 = vld [vmem:[%s231 + $0xd0] sm:$0xff]
      %v4953 = vld [vmem:[%s231 + $0xd8] sm:$0xff]
      %v4954 = vld [vmem:[%s231 + $0xe0] sm:$0xff]
      %v4955 = vld [vmem:[%s231 + $0xe8] sm:$0xff]
      %v4956 = vld [vmem:[%s231 + $0xf0] sm:$0xff]
      %v4957 = vld [vmem:[%s231 + $0xf8] sm:$0xff]
      %v4958 = vadd.f32 %v4926, %v4800
      %v4959 = vadd.f32 %v4927, %v4803
      %v4960 = vadd.f32 %v4928, %v4808
      %v4961 = vadd.f32 %v4929, %v4811
      %v4962 = vadd.f32 %v4930, %v4816
      %v4963 = vadd.f32 %v4931, %v4819
      %v4964 = vadd.f32 %v4932, %v4824
      %v4965 = vadd.f32 %v4933, %v4827
      %v4966 = vadd.f32 %v4934, %v4832
      %v4967 = vadd.f32 %v4935, %v4835
      %v4968 = vadd.f32 %v4936, %v4840
      %v4969 = vadd.f32 %v4937, %v4843
      %v4970 = vadd.f32 %v4938, %v4848
      %v4971 = vadd.f32 %v4939, %v4851
      %v4972 = vadd.f32 %v4940, %v4856
      %v4973 = vadd.f32 %v4941, %v4859
      %v4974 = vadd.f32 %v4942, %v4864
      %v4975 = vadd.f32 %v4943, %v4867
      %v4976 = vadd.f32 %v4944, %v4872
      %v4977 = vadd.f32 %v4945, %v4875
      %v4978 = vadd.f32 %v4946, %v4880
      %v4979 = vadd.f32 %v4947, %v4883
      %v4980 = vadd.f32 %v4948, %v4888
      %v4981 = vadd.f32 %v4949, %v4891
      %v4982 = vadd.f32 %v4950, %v4896
      %v4983 = vadd.f32 %v4951, %v4899
      %v4984 = vadd.f32 %v4952, %v4904
      %v4985 = vadd.f32 %v4953, %v4907
      %v4986 = vadd.f32 %v4954, %v4912
      %v4987 = vadd.f32 %v4955, %v4915
      %v4988 = vadd.f32 %v4956, %v4920
      %v4989 = vadd.f32 %v4957, %v4923
      %4990 = vst [vmem:[%s231] sm:$0xff] %v4958
      %4991 = vst [vmem:[%s231 + $0x8] sm:$0xff] %v4959
      %4992 = vst [vmem:[%s231 + $0x10] sm:$0xff] %v4960
      %4993 = vst [vmem:[%s231 + $0x18] sm:$0xff] %v4961
      %4994 = vst [vmem:[%s231 + $0x20] sm:$0xff] %v4962
      %4995 = vst [vmem:[%s231 + $0x28] sm:$0xff] %v4963
      %4996 = vst [vmem:[%s231 + $0x30] sm:$0xff] %v4964
      %4997 = vst [vmem:[%s231 + $0x38] sm:$0xff] %v4965
      %4998 = vst [vmem:[%s231 + $0x40] sm:$0xff] %v4966
      %4999 = vst [vmem:[%s231 + $0x48] sm:$0xff] %v4967
      %5000 = vst [vmem:[%s231 + $0x50] sm:$0xff] %v4968
      %5001 = vst [vmem:[%s231 + $0x58] sm:$0xff] %v4969
      %5002 = vst [vmem:[%s231 + $0x60] sm:$0xff] %v4970
      %5003 = vst [vmem:[%s231 + $0x68] sm:$0xff] %v4971
      %5004 = vst [vmem:[%s231 + $0x70] sm:$0xff] %v4972
      %5005 = vst [vmem:[%s231 + $0x78] sm:$0xff] %v4973
      %5006 = vst [vmem:[%s231 + $0x80] sm:$0xff] %v4974
      %5007 = vst [vmem:[%s231 + $0x88] sm:$0xff] %v4975
      %5008 = vst [vmem:[%s231 + $0x90] sm:$0xff] %v4976
      %5009 = vst [vmem:[%s231 + $0x98] sm:$0xff] %v4977
      %5010 = vst [vmem:[%s231 + $0xa0] sm:$0xff] %v4978
      %5011 = vst [vmem:[%s231 + $0xa8] sm:$0xff] %v4979
      %5012 = vst [vmem:[%s231 + $0xb0] sm:$0xff] %v4980
      %5013 = vst [vmem:[%s231 + $0xb8] sm:$0xff] %v4981
      %5014 = vst [vmem:[%s231 + $0xc0] sm:$0xff] %v4982
      %5015 = vst [vmem:[%s231 + $0xc8] sm:$0xff] %v4983
      %5016 = vst [vmem:[%s231 + $0xd0] sm:$0xff] %v4984
      %5017 = vst [vmem:[%s231 + $0xd8] sm:$0xff] %v4985
      %5018 = vst [vmem:[%s231 + $0xe0] sm:$0xff] %v4986
      %5019 = vst [vmem:[%s231 + $0xe8] sm:$0xff] %v4987
      %5020 = vst [vmem:[%s231 + $0xf0] sm:$0xff] %v4988
      %5021 = vst [vmem:[%s231 + $0xf8] sm:$0xff] %v4989
      %s5022 = scalar_lea.vmem [#allocation2], 32
      %v5023 = vld [vmem:[%s5022] sm:$0xff]
      %v5024 = vld [vmem:[%s5022 + $0x10] sm:$0xff]
      %v5025 = vld [vmem:[%s5022 + $0x20] sm:$0xff]
      %v5026 = vld [vmem:[%s5022 + $0x30] sm:$0xff]
      %v5027 = vld [vmem:[%s5022 + $0x40] sm:$0xff]
      %v5028 = vld [vmem:[%s5022 + $0x50] sm:$0xff]
      %v5029 = vld [vmem:[%s5022 + $0x60] sm:$0xff]
      %v5030 = vld [vmem:[%s5022 + $0x70] sm:$0xff]
      %v5031 = vld [vmem:[%s5022 + $0xc0] sm:$0xff]
      %v5032 = vld [vmem:[%s5022 + $0xd0] sm:$0xff]
      %v5033 = vld [vmem:[%s5022 + $0xe0] sm:$0xff]
      %v5034 = vld [vmem:[%s5022 + $0xf0] sm:$0xff]
      %v5035 = vld [vmem:[%s5022 + $0x100] sm:$0xff]
      %v5036 = vld [vmem:[%s5022 + $0x110] sm:$0xff]
      %v5037 = vld [vmem:[%s5022 + $0x120] sm:$0xff]
      %v5038 = vld [vmem:[%s5022 + $0x130] sm:$0xff]
      %v5039 = vld [vmem:[%s5022 + $0x180] sm:$0xff]
      %v5040 = vld [vmem:[%s5022 + $0x190] sm:$0xff]
      %v5041 = vld [vmem:[%s5022 + $0x1a0] sm:$0xff]
      %v5042 = vld [vmem:[%s5022 + $0x1b0] sm:$0xff]
      %v5043 = vld [vmem:[%s5022 + $0x1c0] sm:$0xff]
      %v5044 = vld [vmem:[%s5022 + $0x1d0] sm:$0xff]
      %v5045 = vld [vmem:[%s5022 + $0x1e0] sm:$0xff]
      %v5046 = vld [vmem:[%s5022 + $0x1f0] sm:$0xff]
      %v5047 = vld [vmem:[%s5022 + $0x240] sm:$0xff]
      %v5048 = vld [vmem:[%s5022 + $0x250] sm:$0xff]
      %v5049 = vld [vmem:[%s5022 + $0x260] sm:$0xff]
      %v5050 = vld [vmem:[%s5022 + $0x270] sm:$0xff]
      %v5051 = vld [vmem:[%s5022 + $0x280] sm:$0xff]
      %v5052 = vld [vmem:[%s5022 + $0x290] sm:$0xff]
      %v5053 = vld [vmem:[%s5022 + $0x2a0] sm:$0xff]
      %v5054 = vld [vmem:[%s5022 + $0x2b0] sm:$0xff]
      %v5055 = vpack.c.bf16 %v5024, %v5023
      %v5056 = vpack.c.bf16 %v5026, %v5025
      %v5057 = vpack.c.bf16 %v5028, %v5027
      %v5058 = vpack.c.bf16 %v5030, %v5029
      %v5059 = vpack.c.bf16 %v5032, %v5031
      %v5060 = vpack.c.bf16 %v5034, %v5033
      %v5061 = vpack.c.bf16 %v5036, %v5035
      %v5062 = vpack.c.bf16 %v5038, %v5037
      %v5063 = vpack.c.bf16 %v5040, %v5039
      %v5064 = vpack.c.bf16 %v5042, %v5041
      %v5065 = vpack.c.bf16 %v5044, %v5043
      %v5066 = vpack.c.bf16 %v5046, %v5045
      %v5067 = vpack.c.bf16 %v5048, %v5047
      %v5068 = vpack.c.bf16 %v5050, %v5049
      %v5069 = vpack.c.bf16 %v5052, %v5051
      %v5070 = vpack.c.bf16 %v5054, %v5053
      %s5071 = scalar_lea.vmem %s3, 160
      %v5072 = vld [vmem:[%s5071] sm:$0xf]
      %v5073 = vld [vmem:[%s5071 + $0x4] sm:$0xf]
      %v5074 = vld [vmem:[%s5071 + $0x8] sm:$0xf]
      %v5075 = vld [vmem:[%s5071 + $0xc] sm:$0xf]
      %v5080 = vunpack.c.l.b16 %v5072
      %v5081 = vunpack.c.l.b16 %v5073
      %v5082 = vunpack.c.l.b16 %v5074
      %v5083 = vunpack.c.l.b16 %v5075
      %v5084 = vpack.c.b16 %v5081, %v5080
      %v5085 = vpack.c.b16 %v5083, %v5082
      %v5089 = vsel %vm593, %v5055, 0
      %v5092 = vsel %vm593, %v5056, 0
      %v5095 = vsel %vm593, %v5057, 0
      %v5098 = vsel %vm593, %v5058, 0
      %v5101 = vsel %vm593, %v5059, 0
      %v5104 = vsel %vm593, %v5060, 0
      %v5107 = vsel %vm593, %v5061, 0
      %v5110 = vsel %vm593, %v5062, 0
      %v5113 = vsel %vm593, %v5063, 0
      %v5116 = vsel %vm593, %v5064, 0
      %v5119 = vsel %vm593, %v5065, 0
      %v5122 = vsel %vm593, %v5066, 0
      %v5125 = vsel %vm593, %v5067, 0
      %v5128 = vsel %vm593, %v5068, 0
      %v5131 = vsel %vm593, %v5069, 0
      %v5134 = vsel %vm593, %v5070, 0
      %5136 = vmatprep.subr.bf16.mxu0 0
      %5137 = vmatpush1.bf16.msra.mxu0 %v5084
      %5138 = vmatprep.subr.bf16.mxu0 0
      %5139 = vmatpush1.bf16.msra.mxu0 %v5085
      %5140 = vmatprep.subr.bf16.mxu0 0
      %5141 = vmatpush1.bf16.msra.mxu0 0
      %5142 = vmatprep.subr.bf16.mxu0 0
      %5143 = vmatpush1.bf16.msra.mxu0 0
      %5144 = vmatprep.subr.bf16.mxu0 0
      %5145 = vmatpush1.bf16.msra.mxu0 0
      %5146 = vmatprep.subr.bf16.mxu0 0
      %5147 = vmatpush1.bf16.msra.mxu0 0
      %5148 = vmatprep.subr.bf16.mxu0 0
      %5149 = vmatpush1.bf16.msra.mxu0 0
      %5150 = vmatprep.subr.bf16.mxu0 0
      %5151 = vmatpush1.bf16.msra.mxu0 0
      %5152 = vmatprep.subr.bf16.mxu0 0
      %5153 = vmatpush1.bf16.msra.mxu0 0
      %5154 = vmatprep.subr.bf16.mxu0 0
      %5155 = vmatpush1.bf16.msra.mxu0 0
      %5156 = vmatprep.subr.bf16.mxu0 0
      %5157 = vmatpush1.bf16.msra.mxu0 0
      %5158 = vmatprep.subr.bf16.mxu0 0
      %5159 = vmatpush1.bf16.msra.mxu0 0
      %5160 = vmatprep.subr.bf16.mxu0 0
      %5161 = vmatpush1.bf16.msra.mxu0 0
      %5162 = vmatprep.subr.bf16.mxu0 0
      %5163 = vmatpush1.bf16.msra.mxu0 0
      %5164 = vmatprep.subr.bf16.mxu0 0
      %5165 = vmatpush1.bf16.msra.mxu0 0
      %5166 = vmatprep.subr.bf16.mxu0 0
      %5167 = vmatpush1.bf16.msra.mxu0 0
      %5168 = vmatprep.mubr.bf16.mxu0 0
      %5169 = vmatmul.mubr.bf16.gmra.mrb[0].mxu0 %v5089
      %v5170 = vpop.f32.mrb[0].mxu0
      %v5171 = vadd.f32 0.0, %v5170
      %v5172 = vpop.f32.mrb[0].mxu0
      %v5173 = vpop.f32.mrb[0].mxu0
      %v5174 = vadd.f32 0.0, %v5173
      %v5175 = vpop.f32.mrb[0].mxu0
      %5176 = vmatprep.mubr.bf16.mxu0 0
      %5177 = vmatmul.mubr.bf16.gmra.mrb[0].mxu0 %v5092
      %v5178 = vpop.f32.mrb[0].mxu0
      %v5179 = vadd.f32 0.0, %v5178
      %v5180 = vpop.f32.mrb[0].mxu0
      %v5181 = vpop.f32.mrb[0].mxu0
      %v5182 = vadd.f32 0.0, %v5181
      %v5183 = vpop.f32.mrb[0].mxu0
      %5184 = vmatprep.mubr.bf16.mxu0 0
      %5185 = vmatmul.mubr.bf16.gmra.mrb[0].mxu0 %v5095
      %v5186 = vpop.f32.mrb[0].mxu0
      %v5187 = vadd.f32 0.0, %v5186
      %v5188 = vpop.f32.mrb[0].mxu0
      %v5189 = vpop.f32.mrb[0].mxu0
      %v5190 = vadd.f32 0.0, %v5189
      %v5191 = vpop.f32.mrb[0].mxu0
      %5192 = vmatprep.mubr.bf16.mxu0 0
      %5193 = vmatmul.mubr.bf16.gmra.mrb[0].mxu0 %v5098
      %v5194 = vpop.f32.mrb[0].mxu0
      %v5195 = vadd.f32 0.0, %v5194
      %v5196 = vpop.f32.mrb[0].mxu0
      %v5197 = vpop.f32.mrb[0].mxu0
      %v5198 = vadd.f32 0.0, %v5197
      %v5199 = vpop.f32.mrb[0].mxu0
      %5200 = vmatprep.mubr.bf16.mxu0 0
      %5201 = vmatmul.mubr.bf16.gmra.mrb[0].mxu0 %v5101
      %v5202 = vpop.f32.mrb[0].mxu0
      %v5203 = vadd.f32 0.0, %v5202
      %v5204 = vpop.f32.mrb[0].mxu0
      %v5205 = vpop.f32.mrb[0].mxu0
      %v5206 = vadd.f32 0.0, %v5205
      %v5207 = vpop.f32.mrb[0].mxu0
      %5208 = vmatprep.mubr.bf16.mxu0 0
      %5209 = vmatmul.mubr.bf16.gmra.mrb[0].mxu0 %v5104
      %v5210 = vpop.f32.mrb[0].mxu0
      %v5211 = vadd.f32 0.0, %v5210
      %v5212 = vpop.f32.mrb[0].mxu0
      %v5213 = vpop.f32.mrb[0].mxu0
      %v5214 = vadd.f32 0.0, %v5213
      %v5215 = vpop.f32.mrb[0].mxu0
      %5216 = vmatprep.mubr.bf16.mxu0 0
      %5217 = vmatmul.mubr.bf16.gmra.mrb[0].mxu0 %v5107
      %v5218 = vpop.f32.mrb[0].mxu0
      %v5219 = vadd.f32 0.0, %v5218
      %v5220 = vpop.f32.mrb[0].mxu0
      %v5221 = vpop.f32.mrb[0].mxu0
      %v5222 = vadd.f32 0.0, %v5221
      %v5223 = vpop.f32.mrb[0].mxu0
      %5224 = vmatprep.mubr.bf16.mxu0 0
      %5225 = vmatmul.mubr.bf16.gmra.mrb[0].mxu0 %v5110
      %v5226 = vpop.f32.mrb[0].mxu0
      %v5227 = vadd.f32 0.0, %v5226
      %v5228 = vpop.f32.mrb[0].mxu0
      %v5229 = vpop.f32.mrb[0].mxu0
      %v5230 = vadd.f32 0.0, %v5229
      %v5231 = vpop.f32.mrb[0].mxu0
      %5232 = vmatprep.mubr.bf16.mxu0 0
      %5233 = vmatmul.mubr.bf16.gmra.mrb[0].mxu0 %v5113
      %v5234 = vpop.f32.mrb[0].mxu0
      %v5235 = vadd.f32 0.0, %v5234
      %v5236 = vpop.f32.mrb[0].mxu0
      %v5237 = vpop.f32.mrb[0].mxu0
      %v5238 = vadd.f32 0.0, %v5237
      %v5239 = vpop.f32.mrb[0].mxu0
      %5240 = vmatprep.mubr.bf16.mxu0 0
      %5241 = vmatmul.mubr.bf16.gmra.mrb[0].mxu0 %v5116
      %v5242 = vpop.f32.mrb[0].mxu0
      %v5243 = vadd.f32 0.0, %v5242
      %v5244 = vpop.f32.mrb[0].mxu0
      %v5245 = vpop.f32.mrb[0].mxu0
      %v5246 = vadd.f32 0.0, %v5245
      %v5247 = vpop.f32.mrb[0].mxu0
      %5248 = vmatprep.mubr.bf16.mxu0 0
      %5249 = vmatmul.mubr.bf16.gmra.mrb[0].mxu0 %v5119
      %v5250 = vpop.f32.mrb[0].mxu0
      %v5251 = vadd.f32 0.0, %v5250
      %v5252 = vpop.f32.mrb[0].mxu0
      %v5253 = vpop.f32.mrb[0].mxu0
      %v5254 = vadd.f32 0.0, %v5253
      %v5255 = vpop.f32.mrb[0].mxu0
      %5256 = vmatprep.mubr.bf16.mxu0 0
      %5257 = vmatmul.mubr.bf16.gmra.mrb[0].mxu0 %v5122
      %v5258 = vpop.f32.mrb[0].mxu0
      %v5259 = vadd.f32 0.0, %v5258
      %v5260 = vpop.f32.mrb[0].mxu0
      %v5261 = vpop.f32.mrb[0].mxu0
      %v5262 = vadd.f32 0.0, %v5261
      %v5263 = vpop.f32.mrb[0].mxu0
      %5264 = vmatprep.mubr.bf16.mxu0 0
      %5265 = vmatmul.mubr.bf16.gmra.mrb[0].mxu0 %v5125
      %v5266 = vpop.f32.mrb[0].mxu0
      %v5267 = vadd.f32 0.0, %v5266
      %v5268 = vpop.f32.mrb[0].mxu0
      %v5269 = vpop.f32.mrb[0].mxu0
      %v5270 = vadd.f32 0.0, %v5269
      %v5271 = vpop.f32.mrb[0].mxu0
      %5272 = vmatprep.mubr.bf16.mxu0 0
      %5273 = vmatmul.mubr.bf16.gmra.mrb[0].mxu0 %v5128
      %v5274 = vpop.f32.mrb[0].mxu0
      %v5275 = vadd.f32 0.0, %v5274
      %v5276 = vpop.f32.mrb[0].mxu0
      %v5277 = vpop.f32.mrb[0].mxu0
      %v5278 = vadd.f32 0.0, %v5277
      %v5279 = vpop.f32.mrb[0].mxu0
      %5280 = vmatprep.mubr.bf16.mxu0 0
      %5281 = vmatmul.mubr.bf16.gmra.mrb[0].mxu0 %v5131
      %v5282 = vpop.f32.mrb[0].mxu0
      %v5283 = vadd.f32 0.0, %v5282
      %v5284 = vpop.f32.mrb[0].mxu0
      %v5285 = vpop.f32.mrb[0].mxu0
      %v5286 = vadd.f32 0.0, %v5285
      %v5287 = vpop.f32.mrb[0].mxu0
      %5288 = vmatprep.mubr.bf16.mxu0 0
      %5289 = vmatmul.mubr.bf16.gmra.mrb[0].mxu0 %v5134
      %v5290 = vpop.f32.mrb[0].mxu0
      %v5291 = vadd.f32 0.0, %v5290
      %v5292 = vpop.f32.mrb[0].mxu0
      %v5293 = vpop.f32.mrb[0].mxu0
      %v5294 = vadd.f32 0.0, %v5293
      %v5295 = vpop.f32.mrb[0].mxu0
      %5296 = vdwg.mxu0
      %v5297 = vld [vmem:[%s231] sm:$0xff]
      %v5298 = vld [vmem:[%s231 + $0x8] sm:$0xff]
      %v5299 = vld [vmem:[%s231 + $0x10] sm:$0xff]
      %v5300 = vld [vmem:[%s231 + $0x18] sm:$0xff]
      %v5301 = vld [vmem:[%s231 + $0x20] sm:$0xff]
      %v5302 = vld [vmem:[%s231 + $0x28] sm:$0xff]
      %v5303 = vld [vmem:[%s231 + $0x30] sm:$0xff]
      %v5304 = vld [vmem:[%s231 + $0x38] sm:$0xff]
      %v5305 = vld [vmem:[%s231 + $0x40] sm:$0xff]
      %v5306 = vld [vmem:[%s231 + $0x48] sm:$0xff]
      %v5307 = vld [vmem:[%s231 + $0x50] sm:$0xff]
      %v5308 = vld [vmem:[%s231 + $0x58] sm:$0xff]
      %v5309 = vld [vmem:[%s231 + $0x60] sm:$0xff]
      %v5310 = vld [vmem:[%s231 + $0x68] sm:$0xff]
      %v5311 = vld [vmem:[%s231 + $0x70] sm:$0xff]
      %v5312 = vld [vmem:[%s231 + $0x78] sm:$0xff]
      %v5313 = vld [vmem:[%s231 + $0x80] sm:$0xff]
      %v5314 = vld [vmem:[%s231 + $0x88] sm:$0xff]
      %v5315 = vld [vmem:[%s231 + $0x90] sm:$0xff]
      %v5316 = vld [vmem:[%s231 + $0x98] sm:$0xff]
      %v5317 = vld [vmem:[%s231 + $0xa0] sm:$0xff]
      %v5318 = vld [vmem:[%s231 + $0xa8] sm:$0xff]
      %v5319 = vld [vmem:[%s231 + $0xb0] sm:$0xff]
      %v5320 = vld [vmem:[%s231 + $0xb8] sm:$0xff]
      %v5321 = vld [vmem:[%s231 + $0xc0] sm:$0xff]
      %v5322 = vld [vmem:[%s231 + $0xc8] sm:$0xff]
      %v5323 = vld [vmem:[%s231 + $0xd0] sm:$0xff]
      %v5324 = vld [vmem:[%s231 + $0xd8] sm:$0xff]
      %v5325 = vld [vmem:[%s231 + $0xe0] sm:$0xff]
      %v5326 = vld [vmem:[%s231 + $0xe8] sm:$0xff]
      %v5327 = vld [vmem:[%s231 + $0xf0] sm:$0xff]
      %v5328 = vld [vmem:[%s231 + $0xf8] sm:$0xff]
      %v5329 = vadd.f32 %v5297, %v5171
      %v5330 = vadd.f32 %v5298, %v5174
      %v5331 = vadd.f32 %v5299, %v5179
      %v5332 = vadd.f32 %v5300, %v5182
      %v5333 = vadd.f32 %v5301, %v5187
      %v5334 = vadd.f32 %v5302, %v5190
      %v5335 = vadd.f32 %v5303, %v5195
      %v5336 = vadd.f32 %v5304, %v5198
      %v5337 = vadd.f32 %v5305, %v5203
      %v5338 = vadd.f32 %v5306, %v5206
      %v5339 = vadd.f32 %v5307, %v5211
      %v5340 = vadd.f32 %v5308, %v5214
      %v5341 = vadd.f32 %v5309, %v5219
      %v5342 = vadd.f32 %v5310, %v5222
      %v5343 = vadd.f32 %v5311, %v5227
      %v5344 = vadd.f32 %v5312, %v5230
      %v5345 = vadd.f32 %v5313, %v5235
      %v5346 = vadd.f32 %v5314, %v5238
      %v5347 = vadd.f32 %v5315, %v5243
      %v5348 = vadd.f32 %v5316, %v5246
      %v5349 = vadd.f32 %v5317, %v5251
      %v5350 = vadd.f32 %v5318, %v5254
      %v5351 = vadd.f32 %v5319, %v5259
      %v5352 = vadd.f32 %v5320, %v5262
      %v5353 = vadd.f32 %v5321, %v5267
      %v5354 = vadd.f32 %v5322, %v5270
      %v5355 = vadd.f32 %v5323, %v5275
      %v5356 = vadd.f32 %v5324, %v5278
      %v5357 = vadd.f32 %v5325, %v5283
      %v5358 = vadd.f32 %v5326, %v5286
      %v5359 = vadd.f32 %v5327, %v5291
      %v5360 = vadd.f32 %v5328, %v5294
      %5361 = vst [vmem:[%s231] sm:$0xff] %v5329
      %5362 = vst [vmem:[%s231 + $0x8] sm:$0xff] %v5330
      %5363 = vst [vmem:[%s231 + $0x10] sm:$0xff] %v5331
      %5364 = vst [vmem:[%s231 + $0x18] sm:$0xff] %v5332
      %5365 = vst [vmem:[%s231 + $0x20] sm:$0xff] %v5333
      %5366 = vst [vmem:[%s231 + $0x28] sm:$0xff] %v5334
      %5367 = vst [vmem:[%s231 + $0x30] sm:$0xff] %v5335
      %5368 = vst [vmem:[%s231 + $0x38] sm:$0xff] %v5336
      %5369 = vst [vmem:[%s231 + $0x40] sm:$0xff] %v5337
      %5370 = vst [vmem:[%s231 + $0x48] sm:$0xff] %v5338
      %5371 = vst [vmem:[%s231 + $0x50] sm:$0xff] %v5339
      %5372 = vst [vmem:[%s231 + $0x58] sm:$0xff] %v5340
      %5373 = vst [vmem:[%s231 + $0x60] sm:$0xff] %v5341
      %5374 = vst [vmem:[%s231 + $0x68] sm:$0xff] %v5342
      %5375 = vst [vmem:[%s231 + $0x70] sm:$0xff] %v5343
      %5376 = vst [vmem:[%s231 + $0x78] sm:$0xff] %v5344
      %5377 = vst [vmem:[%s231 + $0x80] sm:$0xff] %v5345
      %5378 = vst [vmem:[%s231 + $0x88] sm:$0xff] %v5346
      %5379 = vst [vmem:[%s231 + $0x90] sm:$0xff] %v5347
      %5380 = vst [vmem:[%s231 + $0x98] sm:$0xff] %v5348
      %5381 = vst [vmem:[%s231 + $0xa0] sm:$0xff] %v5349
      %5382 = vst [vmem:[%s231 + $0xa8] sm:$0xff] %v5350
      %5383 = vst [vmem:[%s231 + $0xb0] sm:$0xff] %v5351
      %5384 = vst [vmem:[%s231 + $0xb8] sm:$0xff] %v5352
      %5385 = vst [vmem:[%s231 + $0xc0] sm:$0xff] %v5353
      %5386 = vst [vmem:[%s231 + $0xc8] sm:$0xff] %v5354
      %5387 = vst [vmem:[%s231 + $0xd0] sm:$0xff] %v5355
      %5388 = vst [vmem:[%s231 + $0xd8] sm:$0xff] %v5356
      %5389 = vst [vmem:[%s231 + $0xe0] sm:$0xff] %v5357
      %5390 = vst [vmem:[%s231 + $0xe8] sm:$0xff] %v5358
      %5391 = vst [vmem:[%s231 + $0xf0] sm:$0xff] %v5359
      %5392 = vst [vmem:[%s231 + $0xf8] sm:$0xff] %v5360
      %v5393 = vld [vmem:[%s5022 + $0x1] sm:$0xff]
      %v5394 = vld [vmem:[%s5022 + $0x11] sm:$0xff]
      %v5395 = vld [vmem:[%s5022 + $0x21] sm:$0xff]
      %v5396 = vld [vmem:[%s5022 + $0x31] sm:$0xff]
      %v5397 = vld [vmem:[%s5022 + $0x41] sm:$0xff]
      %v5398 = vld [vmem:[%s5022 + $0x51] sm:$0xff]
      %v5399 = vld [vmem:[%s5022 + $0x61] sm:$0xff]
      %v5400 = vld [vmem:[%s5022 + $0x71] sm:$0xff]
      %v5401 = vld [vmem:[%s5022 + $0xc1] sm:$0xff]
      %v5402 = vld [vmem:[%s5022 + $0xd1] sm:$0xff]
      %v5403 = vld [vmem:[%s5022 + $0xe1] sm:$0xff]
      %v5404 = vld [vmem:[%s5022 + $0xf1] sm:$0xff]
      %v5405 = vld [vmem:[%s5022 + $0x101] sm:$0xff]
      %v5406 = vld [vmem:[%s5022 + $0x111] sm:$0xff]
      %v5407 = vld [vmem:[%s5022 + $0x121] sm:$0xff]
      %v5408 = vld [vmem:[%s5022 + $0x131] sm:$0xff]
      %v5409 = vld [vmem:[%s5022 + $0x181] sm:$0xff]
      %v5410 = vld [vmem:[%s5022 + $0x191] sm:$0xff]
      %v5411 = vld [vmem:[%s5022 + $0x1a1] sm:$0xff]
      %v5412 = vld [vmem:[%s5022 + $0x1b1] sm:$0xff]
      %v5413 = vld [vmem:[%s5022 + $0x1c1] sm:$0xff]
      %v5414 = vld [vmem:[%s5022 + $0x1d1] sm:$0xff]
      %v5415 = vld [vmem:[%s5022 + $0x1e1] sm:$0xff]
      %v5416 = vld [vmem:[%s5022 + $0x1f1] sm:$0xff]
      %v5417 = vld [vmem:[%s5022 + $0x241] sm:$0xff]
      %v5418 = vld [vmem:[%s5022 + $0x251] sm:$0xff]
      %v5419 = vld [vmem:[%s5022 + $0x261] sm:$0xff]
      %v5420 = vld [vmem:[%s5022 + $0x271] sm:$0xff]
      %v5421 = vld [vmem:[%s5022 + $0x281] sm:$0xff]
      %v5422 = vld [vmem:[%s5022 + $0x291] sm:$0xff]
      %v5423 = vld [vmem:[%s5022 + $0x2a1] sm:$0xff]
      %v5424 = vld [vmem:[%s5022 + $0x2b1] sm:$0xff]
      %v5425 = vpack.c.bf16 %v5394, %v5393
      %v5426 = vpack.c.bf16 %v5396, %v5395
      %v5427 = vpack.c.bf16 %v5398, %v5397
      %v5428 = vpack.c.bf16 %v5400, %v5399
      %v5429 = vpack.c.bf16 %v5402, %v5401
      %v5430 = vpack.c.bf16 %v5404, %v5403
      %v5431 = vpack.c.bf16 %v5406, %v5405
      %v5432 = vpack.c.bf16 %v5408, %v5407
      %v5433 = vpack.c.bf16 %v5410, %v5409
      %v5434 = vpack.c.bf16 %v5412, %v5411
      %v5435 = vpack.c.bf16 %v5414, %v5413
      %v5436 = vpack.c.bf16 %v5416, %v5415
      %v5437 = vpack.c.bf16 %v5418, %v5417
      %v5438 = vpack.c.bf16 %v5420, %v5419
      %v5439 = vpack.c.bf16 %v5422, %v5421
      %v5440 = vpack.c.bf16 %v5424, %v5423
      %s5441 = scalar_lea.vmem %s3, 176
      %v5442 = vld [vmem:[%s5441] sm:$0xf]
      %v5443 = vld [vmem:[%s5441 + $0x4] sm:$0xf]
      %v5444 = vld [vmem:[%s5441 + $0x8] sm:$0xf]
      %v5445 = vld [vmem:[%s5441 + $0xc] sm:$0xf]
      %v5450 = vunpack.c.l.b16 %v5442
      %v5451 = vunpack.c.l.b16 %v5443
      %v5452 = vunpack.c.l.b16 %v5444
      %v5453 = vunpack.c.l.b16 %v5445
      %v5454 = vpack.c.b16 %v5451, %v5450
      %v5455 = vpack.c.b16 %v5453, %v5452
      %v5459 = vsel %vm593, %v5425, 0
      %v5462 = vsel %vm593, %v5426, 0
      %v5465 = vsel %vm593, %v5427, 0
      %v5468 = vsel %vm593, %v5428, 0
      %v5471 = vsel %vm593, %v5429, 0
      %v5474 = vsel %vm593, %v5430, 0
      %v5477 = vsel %vm593, %v5431, 0
      %v5480 = vsel %vm593, %v5432, 0
      %v5483 = vsel %vm593, %v5433, 0
      %v5486 = vsel %vm593, %v5434, 0
      %v5489 = vsel %vm593, %v5435, 0
      %v5492 = vsel %vm593, %v5436, 0
      %v5495 = vsel %vm593, %v5437, 0
      %v5498 = vsel %vm593, %v5438, 0
      %v5501 = vsel %vm593, %v5439, 0
      %v5504 = vsel %vm593, %v5440, 0
      %5506 = vmatprep.subr.bf16.mxu0 0
      %5507 = vmatpush1.bf16.msra.mxu0 %v5454
      %5508 = vmatprep.subr.bf16.mxu0 0
      %5509 = vmatpush1.bf16.msra.mxu0 %v5455
      %5510 = vmatprep.subr.bf16.mxu0 0
      %5511 = vmatpush1.bf16.msra.mxu0 0
      %5512 = vmatprep.subr.bf16.mxu0 0
      %5513 = vmatpush1.bf16.msra.mxu0 0
      %5514 = vmatprep.subr.bf16.mxu0 0
      %5515 = vmatpush1.bf16.msra.mxu0 0
      %5516 = vmatprep.subr.bf16.mxu0 0
      %5517 = vmatpush1.bf16.msra.mxu0 0
      %5518 = vmatprep.subr.bf16.mxu0 0
      %5519 = vmatpush1.bf16.msra.mxu0 0
      %5520 = vmatprep.subr.bf16.mxu0 0
      %5521 = vmatpush1.bf16.msra.mxu0 0
      %5522 = vmatprep.subr.bf16.mxu0 0
      %5523 = vmatpush1.bf16.msra.mxu0 0
      %5524 = vmatprep.subr.bf16.mxu0 0
      %5525 = vmatpush1.bf16.msra.mxu0 0
      %5526 = vmatprep.subr.bf16.mxu0 0
      %5527 = vmatpush1.bf16.msra.mxu0 0
      %5528 = vmatprep.subr.bf16.mxu0 0
      %5529 = vmatpush1.bf16.msra.mxu0 0
      %5530 = vmatprep.subr.bf16.mxu0 0
      %5531 = vmatpush1.bf16.msra.mxu0 0
      %5532 = vmatprep.subr.bf16.mxu0 0
      %5533 = vmatpush1.bf16.msra.mxu0 0
      %5534 = vmatprep.subr.bf16.mxu0 0
      %5535 = vmatpush1.bf16.msra.mxu0 0
      %5536 = vmatprep.subr.bf16.mxu0 0
      %5537 = vmatpush1.bf16.msra.mxu0 0
      %5538 = vmatprep.mubr.bf16.mxu0 0
      %5539 = vmatmul.mubr.bf16.gmra.mrb[0].mxu0 %v5459
      %v5540 = vpop.f32.mrb[0].mxu0
      %v5541 = vadd.f32 0.0, %v5540
      %v5542 = vpop.f32.mrb[0].mxu0
      %v5543 = vpop.f32.mrb[0].mxu0
      %v5544 = vadd.f32 0.0, %v5543
      %v5545 = vpop.f32.mrb[0].mxu0
      %5546 = vmatprep.mubr.bf16.mxu0 0
      %5547 = vmatmul.mubr.bf16.gmra.mrb[0].mxu0 %v5462
      %v5548 = vpop.f32.mrb[0].mxu0
      %v5549 = vadd.f32 0.0, %v5548
      %v5550 = vpop.f32.mrb[0].mxu0
      %v5551 = vpop.f32.mrb[0].mxu0
      %v5552 = vadd.f32 0.0, %v5551
      %v5553 = vpop.f32.mrb[0].mxu0
      %5554 = vmatprep.mubr.bf16.mxu0 0
      %5555 = vmatmul.mubr.bf16.gmra.mrb[0].mxu0 %v5465
      %v5556 = vpop.f32.mrb[0].mxu0
      %v5557 = vadd.f32 0.0, %v5556
      %v5558 = vpop.f32.mrb[0].mxu0
      %v5559 = vpop.f32.mrb[0].mxu0
      %v5560 = vadd.f32 0.0, %v5559
      %v5561 = vpop.f32.mrb[0].mxu0
      %5562 = vmatprep.mubr.bf16.mxu0 0
      %5563 = vmatmul.mubr.bf16.gmra.mrb[0].mxu0 %v5468
      %v5564 = vpop.f32.mrb[0].mxu0
      %v5565 = vadd.f32 0.0, %v5564
      %v5566 = vpop.f32.mrb[0].mxu0
      %v5567 = vpop.f32.mrb[0].mxu0
      %v5568 = vadd.f32 0.0, %v5567
      %v5569 = vpop.f32.mrb[0].mxu0
      %5570 = vmatprep.mubr.bf16.mxu0 0
      %5571 = vmatmul.mubr.bf16.gmra.mrb[0].mxu0 %v5471
      %v5572 = vpop.f32.mrb[0].mxu0
      %v5573 = vadd.f32 0.0, %v5572
      %v5574 = vpop.f32.mrb[0].mxu0
      %v5575 = vpop.f32.mrb[0].mxu0
      %v5576 = vadd.f32 0.0, %v5575
      %v5577 = vpop.f32.mrb[0].mxu0
      %5578 = vmatprep.mubr.bf16.mxu0 0
      %5579 = vmatmul.mubr.bf16.gmra.mrb[0].mxu0 %v5474
      %v5580 = vpop.f32.mrb[0].mxu0
      %v5581 = vadd.f32 0.0, %v5580
      %v5582 = vpop.f32.mrb[0].mxu0
      %v5583 = vpop.f32.mrb[0].mxu0
      %v5584 = vadd.f32 0.0, %v5583
      %v5585 = vpop.f32.mrb[0].mxu0
      %5586 = vmatprep.mubr.bf16.mxu0 0
      %5587 = vmatmul.mubr.bf16.gmra.mrb[0].mxu0 %v5477
      %v5588 = vpop.f32.mrb[0].mxu0
      %v5589 = vadd.f32 0.0, %v5588
      %v5590 = vpop.f32.mrb[0].mxu0
      %v5591 = vpop.f32.mrb[0].mxu0
      %v5592 = vadd.f32 0.0, %v5591
      %v5593 = vpop.f32.mrb[0].mxu0
      %5594 = vmatprep.mubr.bf16.mxu0 0
      %5595 = vmatmul.mubr.bf16.gmra.mrb[0].mxu0 %v5480
      %v5596 = vpop.f32.mrb[0].mxu0
      %v5597 = vadd.f32 0.0, %v5596
      %v5598 = vpop.f32.mrb[0].mxu0
      %v5599 = vpop.f32.mrb[0].mxu0
      %v5600 = vadd.f32 0.0, %v5599
      %v5601 = vpop.f32.mrb[0].mxu0
      %5602 = vmatprep.mubr.bf16.mxu0 0
      %5603 = vmatmul.mubr.bf16.gmra.mrb[0].mxu0 %v5483
      %v5604 = vpop.f32.mrb[0].mxu0
      %v5605 = vadd.f32 0.0, %v5604
      %v5606 = vpop.f32.mrb[0].mxu0
      %v5607 = vpop.f32.mrb[0].mxu0
      %v5608 = vadd.f32 0.0, %v5607
      %v5609 = vpop.f32.mrb[0].mxu0
      %5610 = vmatprep.mubr.bf16.mxu0 0
      %5611 = vmatmul.mubr.bf16.gmra.mrb[0].mxu0 %v5486
      %v5612 = vpop.f32.mrb[0].mxu0
      %v5613 = vadd.f32 0.0, %v5612
      %v5614 = vpop.f32.mrb[0].mxu0
      %v5615 = vpop.f32.mrb[0].mxu0
      %v5616 = vadd.f32 0.0, %v5615
      %v5617 = vpop.f32.mrb[0].mxu0
      %5618 = vmatprep.mubr.bf16.mxu0 0
      %5619 = vmatmul.mubr.bf16.gmra.mrb[0].mxu0 %v5489
      %v5620 = vpop.f32.mrb[0].mxu0
      %v5621 = vadd.f32 0.0, %v5620
      %v5622 = vpop.f32.mrb[0].mxu0
      %v5623 = vpop.f32.mrb[0].mxu0
      %v5624 = vadd.f32 0.0, %v5623
      %v5625 = vpop.f32.mrb[0].mxu0
      %5626 = vmatprep.mubr.bf16.mxu0 0
      %5627 = vmatmul.mubr.bf16.gmra.mrb[0].mxu0 %v5492
      %v5628 = vpop.f32.mrb[0].mxu0
      %v5629 = vadd.f32 0.0, %v5628
      %v5630 = vpop.f32.mrb[0].mxu0
      %v5631 = vpop.f32.mrb[0].mxu0
      %v5632 = vadd.f32 0.0, %v5631
      %v5633 = vpop.f32.mrb[0].mxu0
      %5634 = vmatprep.mubr.bf16.mxu0 0
      %5635 = vmatmul.mubr.bf16.gmra.mrb[0].mxu0 %v5495
      %v5636 = vpop.f32.mrb[0].mxu0
      %v5637 = vadd.f32 0.0, %v5636
      %v5638 = vpop.f32.mrb[0].mxu0
      %v5639 = vpop.f32.mrb[0].mxu0
      %v5640 = vadd.f32 0.0, %v5639
      %v5641 = vpop.f32.mrb[0].mxu0
      %5642 = vmatprep.mubr.bf16.mxu0 0
      %5643 = vmatmul.mubr.bf16.gmra.mrb[0].mxu0 %v5498
      %v5644 = vpop.f32.mrb[0].mxu0
      %v5645 = vadd.f32 0.0, %v5644
      %v5646 = vpop.f32.mrb[0].mxu0
      %v5647 = vpop.f32.mrb[0].mxu0
      %v5648 = vadd.f32 0.0, %v5647
      %v5649 = vpop.f32.mrb[0].mxu0
      %5650 = vmatprep.mubr.bf16.mxu0 0
      %5651 = vmatmul.mubr.bf16.gmra.mrb[0].mxu0 %v5501
      %v5652 = vpop.f32.mrb[0].mxu0
      %v5653 = vadd.f32 0.0, %v5652
      %v5654 = vpop.f32.mrb[0].mxu0
      %v5655 = vpop.f32.mrb[0].mxu0
      %v5656 = vadd.f32 0.0, %v5655
      %v5657 = vpop.f32.mrb[0].mxu0
      %5658 = vmatprep.mubr.bf16.mxu0 0
      %5659 = vmatmul.mubr.bf16.gmra.mrb[0].mxu0 %v5504
      %v5660 = vpop.f32.mrb[0].mxu0
      %v5661 = vadd.f32 0.0, %v5660
      %v5662 = vpop.f32.mrb[0].mxu0
      %v5663 = vpop.f32.mrb[0].mxu0
      %v5664 = vadd.f32 0.0, %v5663
      %v5665 = vpop.f32.mrb[0].mxu0
      %5666 = vdwg.mxu0
      %v5667 = vld [vmem:[%s231] sm:$0xff]
      %v5668 = vld [vmem:[%s231 + $0x8] sm:$0xff]
      %v5669 = vld [vmem:[%s231 + $0x10] sm:$0xff]
      %v5670 = vld [vmem:[%s231 + $0x18] sm:$0xff]
      %v5671 = vld [vmem:[%s231 + $0x20] sm:$0xff]
      %v5672 = vld [vmem:[%s231 + $0x28] sm:$0xff]
      %v5673 = vld [vmem:[%s231 + $0x30] sm:$0xff]
      %v5674 = vld [vmem:[%s231 + $0x38] sm:$0xff]
      %v5675 = vld [vmem:[%s231 + $0x40] sm:$0xff]
      %v5676 = vld [vmem:[%s231 + $0x48] sm:$0xff]
      %v5677 = vld [vmem:[%s231 + $0x50] sm:$0xff]
      %v5678 = vld [vmem:[%s231 + $0x58] sm:$0xff]
      %v5679 = vld [vmem:[%s231 + $0x60] sm:$0xff]
      %v5680 = vld [vmem:[%s231 + $0x68] sm:$0xff]
      %v5681 = vld [vmem:[%s231 + $0x70] sm:$0xff]
      %v5682 = vld [vmem:[%s231 + $0x78] sm:$0xff]
      %v5683 = vld [vmem:[%s231 + $0x80] sm:$0xff]
      %v5684 = vld [vmem:[%s231 + $0x88] sm:$0xff]
      %v5685 = vld [vmem:[%s231 + $0x90] sm:$0xff]
      %v5686 = vld [vmem:[%s231 + $0x98] sm:$0xff]
      %v5687 = vld [vmem:[%s231 + $0xa0] sm:$0xff]
      %v5688 = vld [vmem:[%s231 + $0xa8] sm:$0xff]
      %v5689 = vld [vmem:[%s231 + $0xb0] sm:$0xff]
      %v5690 = vld [vmem:[%s231 + $0xb8] sm:$0xff]
      %v5691 = vld [vmem:[%s231 + $0xc0] sm:$0xff]
      %v5692 = vld [vmem:[%s231 + $0xc8] sm:$0xff]
      %v5693 = vld [vmem:[%s231 + $0xd0] sm:$0xff]
      %v5694 = vld [vmem:[%s231 + $0xd8] sm:$0xff]
      %v5695 = vld [vmem:[%s231 + $0xe0] sm:$0xff]
      %v5696 = vld [vmem:[%s231 + $0xe8] sm:$0xff]
      %v5697 = vld [vmem:[%s231 + $0xf0] sm:$0xff]
      %v5698 = vld [vmem:[%s231 + $0xf8] sm:$0xff]
      %v5699 = vadd.f32 %v5667, %v5541
      %v5700 = vadd.f32 %v5668, %v5544
      %v5701 = vadd.f32 %v5669, %v5549
      %v5702 = vadd.f32 %v5670, %v5552
      %v5703 = vadd.f32 %v5671, %v5557
      %v5704 = vadd.f32 %v5672, %v5560
      %v5705 = vadd.f32 %v5673, %v5565
      %v5706 = vadd.f32 %v5674, %v5568
      %v5707 = vadd.f32 %v5675, %v5573
      %v5708 = vadd.f32 %v5676, %v5576
      %v5709 = vadd.f32 %v5677, %v5581
      %v5710 = vadd.f32 %v5678, %v5584
      %v5711 = vadd.f32 %v5679, %v5589
      %v5712 = vadd.f32 %v5680, %v5592
      %v5713 = vadd.f32 %v5681, %v5597
      %v5714 = vadd.f32 %v5682, %v5600
      %v5715 = vadd.f32 %v5683, %v5605
      %v5716 = vadd.f32 %v5684, %v5608
      %v5717 = vadd.f32 %v5685, %v5613
      %v5718 = vadd.f32 %v5686, %v5616
      %v5719 = vadd.f32 %v5687, %v5621
      %v5720 = vadd.f32 %v5688, %v5624
      %v5721 = vadd.f32 %v5689, %v5629
      %v5722 = vadd.f32 %v5690, %v5632
      %v5723 = vadd.f32 %v5691, %v5637
      %v5724 = vadd.f32 %v5692, %v5640
      %v5725 = vadd.f32 %v5693, %v5645
      %v5726 = vadd.f32 %v5694, %v5648
      %v5727 = vadd.f32 %v5695, %v5653
      %v5728 = vadd.f32 %v5696, %v5656
      %v5729 = vadd.f32 %v5697, %v5661
      %v5730 = vadd.f32 %v5698, %v5664
      %5731 = vst [vmem:[%s231] sm:$0xff] %v5699
      %5732 = vst [vmem:[%s231 + $0x8] sm:$0xff] %v5700
      %5733 = vst [vmem:[%s231 + $0x10] sm:$0xff] %v5701
      %5734 = vst [vmem:[%s231 + $0x18] sm:$0xff] %v5702
      %5735 = vst [vmem:[%s231 + $0x20] sm:$0xff] %v5703
      %5736 = vst [vmem:[%s231 + $0x28] sm:$0xff] %v5704
      %5737 = vst [vmem:[%s231 + $0x30] sm:$0xff] %v5705
      %5738 = vst [vmem:[%s231 + $0x38] sm:$0xff] %v5706
      %5739 = vst [vmem:[%s231 + $0x40] sm:$0xff] %v5707
      %5740 = vst [vmem:[%s231 + $0x48] sm:$0xff] %v5708
      %5741 = vst [vmem:[%s231 + $0x50] sm:$0xff] %v5709
      %5742 = vst [vmem:[%s231 + $0x58] sm:$0xff] %v5710
      %5743 = vst [vmem:[%s231 + $0x60] sm:$0xff] %v5711
      %5744 = vst [vmem:[%s231 + $0x68] sm:$0xff] %v5712
      %5745 = vst [vmem:[%s231 + $0x70] sm:$0xff] %v5713
      %5746 = vst [vmem:[%s231 + $0x78] sm:$0xff] %v5714
      %5747 = vst [vmem:[%s231 + $0x80] sm:$0xff] %v5715
      %5748 = vst [vmem:[%s231 + $0x88] sm:$0xff] %v5716
      %5749 = vst [vmem:[%s231 + $0x90] sm:$0xff] %v5717
      %5750 = vst [vmem:[%s231 + $0x98] sm:$0xff] %v5718
      %5751 = vst [vmem:[%s231 + $0xa0] sm:$0xff] %v5719
      %5752 = vst [vmem:[%s231 + $0xa8] sm:$0xff] %v5720
      %5753 = vst [vmem:[%s231 + $0xb0] sm:$0xff] %v5721
      %5754 = vst [vmem:[%s231 + $0xb8] sm:$0xff] %v5722
      %5755 = vst [vmem:[%s231 + $0xc0] sm:$0xff] %v5723
      %5756 = vst [vmem:[%s231 + $0xc8] sm:$0xff] %v5724
      %5757 = vst [vmem:[%s231 + $0xd0] sm:$0xff] %v5725
      %5758 = vst [vmem:[%s231 + $0xd8] sm:$0xff] %v5726
      %5759 = vst [vmem:[%s231 + $0xe0] sm:$0xff] %v5727
      %5760 = vst [vmem:[%s231 + $0xe8] sm:$0xff] %v5728
      %5761 = vst [vmem:[%s231 + $0xf0] sm:$0xff] %v5729
      %5762 = vst [vmem:[%s231 + $0xf8] sm:$0xff] %v5730
      %v5763 = vld [vmem:[%s5022 + $0x2] sm:$0xff]
      %v5764 = vld [vmem:[%s5022 + $0x12] sm:$0xff]
      %v5765 = vld [vmem:[%s5022 + $0x22] sm:$0xff]
      %v5766 = vld [vmem:[%s5022 + $0x32] sm:$0xff]
      %v5767 = vld [vmem:[%s5022 + $0x42] sm:$0xff]
      %v5768 = vld [vmem:[%s5022 + $0x52] sm:$0xff]
      %v5769 = vld [vmem:[%s5022 + $0x62] sm:$0xff]
      %v5770 = vld [vmem:[%s5022 + $0x72] sm:$0xff]
      %v5771 = vld [vmem:[%s5022 + $0xc2] sm:$0xff]
      %v5772 = vld [vmem:[%s5022 + $0xd2] sm:$0xff]
      %v5773 = vld [vmem:[%s5022 + $0xe2] sm:$0xff]
      %v5774 = vld [vmem:[%s5022 + $0xf2] sm:$0xff]
      %v5775 = vld [vmem:[%s5022 + $0x102] sm:$0xff]
      %v5776 = vld [vmem:[%s5022 + $0x112] sm:$0xff]
      %v5777 = vld [vmem:[%s5022 + $0x122] sm:$0xff]
      %v5778 = vld [vmem:[%s5022 + $0x132] sm:$0xff]
      %v5779 = vld [vmem:[%s5022 + $0x182] sm:$0xff]
      %v5780 = vld [vmem:[%s5022 + $0x192] sm:$0xff]
      %v5781 = vld [vmem:[%s5022 + $0x1a2] sm:$0xff]
      %v5782 = vld [vmem:[%s5022 + $0x1b2] sm:$0xff]
      %v5783 = vld [vmem:[%s5022 + $0x1c2] sm:$0xff]
      %v5784 = vld [vmem:[%s5022 + $0x1d2] sm:$0xff]
      %v5785 = vld [vmem:[%s5022 + $0x1e2] sm:$0xff]
      %v5786 = vld [vmem:[%s5022 + $0x1f2] sm:$0xff]
      %v5787 = vld [vmem:[%s5022 + $0x242] sm:$0xff]
      %v5788 = vld [vmem:[%s5022 + $0x252] sm:$0xff]
      %v5789 = vld [vmem:[%s5022 + $0x262] sm:$0xff]
      %v5790 = vld [vmem:[%s5022 + $0x272] sm:$0xff]
      %v5791 = vld [vmem:[%s5022 + $0x282] sm:$0xff]
      %v5792 = vld [vmem:[%s5022 + $0x292] sm:$0xff]
      %v5793 = vld [vmem:[%s5022 + $0x2a2] sm:$0xff]
      %v5794 = vld [vmem:[%s5022 + $0x2b2] sm:$0xff]
      %v5795 = vpack.c.bf16 %v5764, %v5763
      %v5796 = vpack.c.bf16 %v5766, %v5765
      %v5797 = vpack.c.bf16 %v5768, %v5767
      %v5798 = vpack.c.bf16 %v5770, %v5769
      %v5799 = vpack.c.bf16 %v5772, %v5771
      %v5800 = vpack.c.bf16 %v5774, %v5773
      %v5801 = vpack.c.bf16 %v5776, %v5775
      %v5802 = vpack.c.bf16 %v5778, %v5777
      %v5803 = vpack.c.bf16 %v5780, %v5779
      %v5804 = vpack.c.bf16 %v5782, %v5781
      %v5805 = vpack.c.bf16 %v5784, %v5783
      %v5806 = vpack.c.bf16 %v5786, %v5785
      %v5807 = vpack.c.bf16 %v5788, %v5787
      %v5808 = vpack.c.bf16 %v5790, %v5789
      %v5809 = vpack.c.bf16 %v5792, %v5791
      %v5810 = vpack.c.bf16 %v5794, %v5793
      %s5811 = scalar_lea.vmem %s3, 192
      %v5812 = vld [vmem:[%s5811] sm:$0xf]
      %v5813 = vld [vmem:[%s5811 + $0x4] sm:$0xf]
      %v5814 = vld [vmem:[%s5811 + $0x8] sm:$0xf]
      %v5815 = vld [vmem:[%s5811 + $0xc] sm:$0xf]
      %v5820 = vunpack.c.l.b16 %v5812
      %v5821 = vunpack.c.l.b16 %v5813
      %v5822 = vunpack.c.l.b16 %v5814
      %v5823 = vunpack.c.l.b16 %v5815
      %v5824 = vpack.c.b16 %v5821, %v5820
      %v5825 = vpack.c.b16 %v5823, %v5822
      %v5829 = vsel %vm593, %v5795, 0
      %v5832 = vsel %vm593, %v5796, 0
      %v5835 = vsel %vm593, %v5797, 0
      %v5838 = vsel %vm593, %v5798, 0
      %v5841 = vsel %vm593, %v5799, 0
      %v5844 = vsel %vm593, %v5800, 0
      %v5847 = vsel %vm593, %v5801, 0
      %v5850 = vsel %vm593, %v5802, 0
      %v5853 = vsel %vm593, %v5803, 0
      %v5856 = vsel %vm593, %v5804, 0
      %v5859 = vsel %vm593, %v5805, 0
      %v5862 = vsel %vm593, %v5806, 0
      %v5865 = vsel %vm593, %v5807, 0
      %v5868 = vsel %vm593, %v5808, 0
      %v5871 = vsel %vm593, %v5809, 0
      %v5874 = vsel %vm593, %v5810, 0
      %5876 = vmatprep.subr.bf16.mxu0 0
      %5877 = vmatpush1.bf16.msra.mxu0 %v5824
      %5878 = vmatprep.subr.bf16.mxu0 0
      %5879 = vmatpush1.bf16.msra.mxu0 %v5825
      %5880 = vmatprep.subr.bf16.mxu0 0
      %5881 = vmatpush1.bf16.msra.mxu0 0
      %5882 = vmatprep.subr.bf16.mxu0 0
      %5883 = vmatpush1.bf16.msra.mxu0 0
      %5884 = vmatprep.subr.bf16.mxu0 0
      %5885 = vmatpush1.bf16.msra.mxu0 0
      %5886 = vmatprep.subr.bf16.mxu0 0
      %5887 = vmatpush1.bf16.msra.mxu0 0
      %5888 = vmatprep.subr.bf16.mxu0 0
      %5889 = vmatpush1.bf16.msra.mxu0 0
      %5890 = vmatprep.subr.bf16.mxu0 0
      %5891 = vmatpush1.bf16.msra.mxu0 0
      %5892 = vmatprep.subr.bf16.mxu0 0
      %5893 = vmatpush1.bf16.msra.mxu0 0
      %5894 = vmatprep.subr.bf16.mxu0 0
      %5895 = vmatpush1.bf16.msra.mxu0 0
      %5896 = vmatprep.subr.bf16.mxu0 0
      %5897 = vmatpush1.bf16.msra.mxu0 0
      %5898 = vmatprep.subr.bf16.mxu0 0
      %5899 = vmatpush1.bf16.msra.mxu0 0
      %5900 = vmatprep.subr.bf16.mxu0 0
      %5901 = vmatpush1.bf16.msra.mxu0 0
      %5902 = vmatprep.subr.bf16.mxu0 0
      %5903 = vmatpush1.bf16.msra.mxu0 0
      %5904 = vmatprep.subr.bf16.mxu0 0
      %5905 = vmatpush1.bf16.msra.mxu0 0
      %5906 = vmatprep.subr.bf16.mxu0 0
      %5907 = vmatpush1.bf16.msra.mxu0 0
      %5908 = vmatprep.mubr.bf16.mxu0 0
      %5909 = vmatmul.mubr.bf16.gmra.mrb[0].mxu0 %v5829
      %v5910 = vpop.f32.mrb[0].mxu0
      %v5911 = vadd.f32 0.0, %v5910
      %v5912 = vpop.f32.mrb[0].mxu0
      %v5913 = vpop.f32.mrb[0].mxu0
      %v5914 = vadd.f32 0.0, %v5913
      %v5915 = vpop.f32.mrb[0].mxu0
      %5916 = vmatprep.mubr.bf16.mxu0 0
      %5917 = vmatmul.mubr.bf16.gmra.mrb[0].mxu0 %v5832
      %v5918 = vpop.f32.mrb[0].mxu0
      %v5919 = vadd.f32 0.0, %v5918
      %v5920 = vpop.f32.mrb[0].mxu0
      %v5921 = vpop.f32.mrb[0].mxu0
      %v5922 = vadd.f32 0.0, %v5921
      %v5923 = vpop.f32.mrb[0].mxu0
      %5924 = vmatprep.mubr.bf16.mxu0 0
      %5925 = vmatmul.mubr.bf16.gmra.mrb[0].mxu0 %v5835
      %v5926 = vpop.f32.mrb[0].mxu0
      %v5927 = vadd.f32 0.0, %v5926
      %v5928 = vpop.f32.mrb[0].mxu0
      %v5929 = vpop.f32.mrb[0].mxu0
      %v5930 = vadd.f32 0.0, %v5929
      %v5931 = vpop.f32.mrb[0].mxu0
      %5932 = vmatprep.mubr.bf16.mxu0 0
      %5933 = vmatmul.mubr.bf16.gmra.mrb[0].mxu0 %v5838
      %v5934 = vpop.f32.mrb[0].mxu0
      %v5935 = vadd.f32 0.0, %v5934
      %v5936 = vpop.f32.mrb[0].mxu0
      %v5937 = vpop.f32.mrb[0].mxu0
      %v5938 = vadd.f32 0.0, %v5937
      %v5939 = vpop.f32.mrb[0].mxu0
      %5940 = vmatprep.mubr.bf16.mxu0 0
      %5941 = vmatmul.mubr.bf16.gmra.mrb[0].mxu0 %v5841
      %v5942 = vpop.f32.mrb[0].mxu0
      %v5943 = vadd.f32 0.0, %v5942
      %v5944 = vpop.f32.mrb[0].mxu0
      %v5945 = vpop.f32.mrb[0].mxu0
      %v5946 = vadd.f32 0.0, %v5945
      %v5947 = vpop.f32.mrb[0].mxu0
      %5948 = vmatprep.mubr.bf16.mxu0 0
      %5949 = vmatmul.mubr.bf16.gmra.mrb[0].mxu0 %v5844
      %v5950 = vpop.f32.mrb[0].mxu0
      %v5951 = vadd.f32 0.0, %v5950
      %v5952 = vpop.f32.mrb[0].mxu0
      %v5953 = vpop.f32.mrb[0].mxu0
      %v5954 = vadd.f32 0.0, %v5953
      %v5955 = vpop.f32.mrb[0].mxu0
      %5956 = vmatprep.mubr.bf16.mxu0 0
      %5957 = vmatmul.mubr.bf16.gmra.mrb[0].mxu0 %v5847
      %v5958 = vpop.f32.mrb[0].mxu0
      %v5959 = vadd.f32 0.0, %v5958
      %v5960 = vpop.f32.mrb[0].mxu0
      %v5961 = vpop.f32.mrb[0].mxu0
      %v5962 = vadd.f32 0.0, %v5961
      %v5963 = vpop.f32.mrb[0].mxu0
      %5964 = vmatprep.mubr.bf16.mxu0 0
      %5965 = vmatmul.mubr.bf16.gmra.mrb[0].mxu0 %v5850
      %v5966 = vpop.f32.mrb[0].mxu0
      %v5967 = vadd.f32 0.0, %v5966
      %v5968 = vpop.f32.mrb[0].mxu0
      %v5969 = vpop.f32.mrb[0].mxu0
      %v5970 = vadd.f32 0.0, %v5969
      %v5971 = vpop.f32.mrb[0].mxu0
      %5972 = vmatprep.mubr.bf16.mxu0 0
      %5973 = vmatmul.mubr.bf16.gmra.mrb[0].mxu0 %v5853
      %v5974 = vpop.f32.mrb[0].mxu0
      %v5975 = vadd.f32 0.0, %v5974
      %v5976 = vpop.f32.mrb[0].mxu0
      %v5977 = vpop.f32.mrb[0].mxu0
      %v5978 = vadd.f32 0.0, %v5977
      %v5979 = vpop.f32.mrb[0].mxu0
      %5980 = vmatprep.mubr.bf16.mxu0 0
      %5981 = vmatmul.mubr.bf16.gmra.mrb[0].mxu0 %v5856
      %v5982 = vpop.f32.mrb[0].mxu0
      %v5983 = vadd.f32 0.0, %v5982
      %v5984 = vpop.f32.mrb[0].mxu0
      %v5985 = vpop.f32.mrb[0].mxu0
      %v5986 = vadd.f32 0.0, %v5985
      %v5987 = vpop.f32.mrb[0].mxu0
      %5988 = vmatprep.mubr.bf16.mxu0 0
      %5989 = vmatmul.mubr.bf16.gmra.mrb[0].mxu0 %v5859
      %v5990 = vpop.f32.mrb[0].mxu0
      %v5991 = vadd.f32 0.0, %v5990
      %v5992 = vpop.f32.mrb[0].mxu0
      %v5993 = vpop.f32.mrb[0].mxu0
      %v5994 = vadd.f32 0.0, %v5993
      %v5995 = vpop.f32.mrb[0].mxu0
      %5996 = vmatprep.mubr.bf16.mxu0 0
      %5997 = vmatmul.mubr.bf16.gmra.mrb[0].mxu0 %v5862
      %v5998 = vpop.f32.mrb[0].mxu0
      %v5999 = vadd.f32 0.0, %v5998
      %v6000 = vpop.f32.mrb[0].mxu0
      %v6001 = vpop.f32.mrb[0].mxu0
      %v6002 = vadd.f32 0.0, %v6001
      %v6003 = vpop.f32.mrb[0].mxu0
      %6004 = vmatprep.mubr.bf16.mxu0 0
      %6005 = vmatmul.mubr.bf16.gmra.mrb[0].mxu0 %v5865
      %v6006 = vpop.f32.mrb[0].mxu0
      %v6007 = vadd.f32 0.0, %v6006
      %v6008 = vpop.f32.mrb[0].mxu0
      %v6009 = vpop.f32.mrb[0].mxu0
      %v6010 = vadd.f32 0.0, %v6009
      %v6011 = vpop.f32.mrb[0].mxu0
      %6012 = vmatprep.mubr.bf16.mxu0 0
      %6013 = vmatmul.mubr.bf16.gmra.mrb[0].mxu0 %v5868
      %v6014 = vpop.f32.mrb[0].mxu0
      %v6015 = vadd.f32 0.0, %v6014
      %v6016 = vpop.f32.mrb[0].mxu0
      %v6017 = vpop.f32.mrb[0].mxu0
      %v6018 = vadd.f32 0.0, %v6017
      %v6019 = vpop.f32.mrb[0].mxu0
      %6020 = vmatprep.mubr.bf16.mxu0 0
      %6021 = vmatmul.mubr.bf16.gmra.mrb[0].mxu0 %v5871
      %v6022 = vpop.f32.mrb[0].mxu0
      %v6023 = vadd.f32 0.0, %v6022
      %v6024 = vpop.f32.mrb[0].mxu0
      %v6025 = vpop.f32.mrb[0].mxu0
      %v6026 = vadd.f32 0.0, %v6025
      %v6027 = vpop.f32.mrb[0].mxu0
      %6028 = vmatprep.mubr.bf16.mxu0 0
      %6029 = vmatmul.mubr.bf16.gmra.mrb[0].mxu0 %v5874
      %v6030 = vpop.f32.mrb[0].mxu0
      %v6031 = vadd.f32 0.0, %v6030
      %v6032 = vpop.f32.mrb[0].mxu0
      %v6033 = vpop.f32.mrb[0].mxu0
      %v6034 = vadd.f32 0.0, %v6033
      %v6035 = vpop.f32.mrb[0].mxu0
      %6036 = vdwg.mxu0
      %v6037 = vld [vmem:[%s231] sm:$0xff]
      %v6038 = vld [vmem:[%s231 + $0x8] sm:$0xff]
      %v6039 = vld [vmem:[%s231 + $0x10] sm:$0xff]
      %v6040 = vld [vmem:[%s231 + $0x18] sm:$0xff]
      %v6041 = vld [vmem:[%s231 + $0x20] sm:$0xff]
      %v6042 = vld [vmem:[%s231 + $0x28] sm:$0xff]
      %v6043 = vld [vmem:[%s231 + $0x30] sm:$0xff]
      %v6044 = vld [vmem:[%s231 + $0x38] sm:$0xff]
      %v6045 = vld [vmem:[%s231 + $0x40] sm:$0xff]
      %v6046 = vld [vmem:[%s231 + $0x48] sm:$0xff]
      %v6047 = vld [vmem:[%s231 + $0x50] sm:$0xff]
      %v6048 = vld [vmem:[%s231 + $0x58] sm:$0xff]
      %v6049 = vld [vmem:[%s231 + $0x60] sm:$0xff]
      %v6050 = vld [vmem:[%s231 + $0x68] sm:$0xff]
      %v6051 = vld [vmem:[%s231 + $0x70] sm:$0xff]
      %v6052 = vld [vmem:[%s231 + $0x78] sm:$0xff]
      %v6053 = vld [vmem:[%s231 + $0x80] sm:$0xff]
      %v6054 = vld [vmem:[%s231 + $0x88] sm:$0xff]
      %v6055 = vld [vmem:[%s231 + $0x90] sm:$0xff]
      %v6056 = vld [vmem:[%s231 + $0x98] sm:$0xff]
      %v6057 = vld [vmem:[%s231 + $0xa0] sm:$0xff]
      %v6058 = vld [vmem:[%s231 + $0xa8] sm:$0xff]
      %v6059 = vld [vmem:[%s231 + $0xb0] sm:$0xff]
      %v6060 = vld [vmem:[%s231 + $0xb8] sm:$0xff]
      %v6061 = vld [vmem:[%s231 + $0xc0] sm:$0xff]
      %v6062 = vld [vmem:[%s231 + $0xc8] sm:$0xff]
      %v6063 = vld [vmem:[%s231 + $0xd0] sm:$0xff]
      %v6064 = vld [vmem:[%s231 + $0xd8] sm:$0xff]
      %v6065 = vld [vmem:[%s231 + $0xe0] sm:$0xff]
      %v6066 = vld [vmem:[%s231 + $0xe8] sm:$0xff]
      %v6067 = vld [vmem:[%s231 + $0xf0] sm:$0xff]
      %v6068 = vld [vmem:[%s231 + $0xf8] sm:$0xff]
      %v6069 = vadd.f32 %v6037, %v5911
      %v6070 = vadd.f32 %v6038, %v5914
      %v6071 = vadd.f32 %v6039, %v5919
      %v6072 = vadd.f32 %v6040, %v5922
      %v6073 = vadd.f32 %v6041, %v5927
      %v6074 = vadd.f32 %v6042, %v5930
      %v6075 = vadd.f32 %v6043, %v5935
      %v6076 = vadd.f32 %v6044, %v5938
      %v6077 = vadd.f32 %v6045, %v5943
      %v6078 = vadd.f32 %v6046, %v5946
      %v6079 = vadd.f32 %v6047, %v5951
      %v6080 = vadd.f32 %v6048, %v5954
      %v6081 = vadd.f32 %v6049, %v5959
      %v6082 = vadd.f32 %v6050, %v5962
      %v6083 = vadd.f32 %v6051, %v5967
      %v6084 = vadd.f32 %v6052, %v5970
      %v6085 = vadd.f32 %v6053, %v5975
      %v6086 = vadd.f32 %v6054, %v5978
      %v6087 = vadd.f32 %v6055, %v5983
      %v6088 = vadd.f32 %v6056, %v5986
      %v6089 = vadd.f32 %v6057, %v5991
      %v6090 = vadd.f32 %v6058, %v5994
      %v6091 = vadd.f32 %v6059, %v5999
      %v6092 = vadd.f32 %v6060, %v6002
      %v6093 = vadd.f32 %v6061, %v6007
      %v6094 = vadd.f32 %v6062, %v6010
      %v6095 = vadd.f32 %v6063, %v6015
      %v6096 = vadd.f32 %v6064, %v6018
      %v6097 = vadd.f32 %v6065, %v6023
      %v6098 = vadd.f32 %v6066, %v6026
      %v6099 = vadd.f32 %v6067, %v6031
      %v6100 = vadd.f32 %v6068, %v6034
      %6101 = vst [vmem:[%s231] sm:$0xff] %v6069
      %6102 = vst [vmem:[%s231 + $0x8] sm:$0xff] %v6070
      %6103 = vst [vmem:[%s231 + $0x10] sm:$0xff] %v6071
      %6104 = vst [vmem:[%s231 + $0x18] sm:$0xff] %v6072
      %6105 = vst [vmem:[%s231 + $0x20] sm:$0xff] %v6073
      %6106 = vst [vmem:[%s231 + $0x28] sm:$0xff] %v6074
      %6107 = vst [vmem:[%s231 + $0x30] sm:$0xff] %v6075
      %6108 = vst [vmem:[%s231 + $0x38] sm:$0xff] %v6076
      %6109 = vst [vmem:[%s231 + $0x40] sm:$0xff] %v6077
      %6110 = vst [vmem:[%s231 + $0x48] sm:$0xff] %v6078
      %6111 = vst [vmem:[%s231 + $0x50] sm:$0xff] %v6079
      %6112 = vst [vmem:[%s231 + $0x58] sm:$0xff] %v6080
      %6113 = vst [vmem:[%s231 + $0x60] sm:$0xff] %v6081
      %6114 = vst [vmem:[%s231 + $0x68] sm:$0xff] %v6082
      %6115 = vst [vmem:[%s231 + $0x70] sm:$0xff] %v6083
      %6116 = vst [vmem:[%s231 + $0x78] sm:$0xff] %v6084
      %6117 = vst [vmem:[%s231 + $0x80] sm:$0xff] %v6085
      %6118 = vst [vmem:[%s231 + $0x88] sm:$0xff] %v6086
      %6119 = vst [vmem:[%s231 + $0x90] sm:$0xff] %v6087
      %6120 = vst [vmem:[%s231 + $0x98] sm:$0xff] %v6088
      %6121 = vst [vmem:[%s231 + $0xa0] sm:$0xff] %v6089
      %6122 = vst [vmem:[%s231 + $0xa8] sm:$0xff] %v6090
      %6123 = vst [vmem:[%s231 + $0xb0] sm:$0xff] %v6091
      %6124 = vst [vmem:[%s231 + $0xb8] sm:$0xff] %v6092
      %6125 = vst [vmem:[%s231 + $0xc0] sm:$0xff] %v6093
      %6126 = vst [vmem:[%s231 + $0xc8] sm:$0xff] %v6094
      %6127 = vst [vmem:[%s231 + $0xd0] sm:$0xff] %v6095
      %6128 = vst [vmem:[%s231 + $0xd8] sm:$0xff] %v6096
      %6129 = vst [vmem:[%s231 + $0xe0] sm:$0xff] %v6097
      %6130 = vst [vmem:[%s231 + $0xe8] sm:$0xff] %v6098
      %6131 = vst [vmem:[%s231 + $0xf0] sm:$0xff] %v6099
      %6132 = vst [vmem:[%s231 + $0xf8] sm:$0xff] %v6100
      %v6133 = vld [vmem:[%s5022 + $0x3] sm:$0xff]
      %v6134 = vld [vmem:[%s5022 + $0x13] sm:$0xff]
      %v6135 = vld [vmem:[%s5022 + $0x23] sm:$0xff]
      %v6136 = vld [vmem:[%s5022 + $0x33] sm:$0xff]
      %v6137 = vld [vmem:[%s5022 + $0x43] sm:$0xff]
      %v6138 = vld [vmem:[%s5022 + $0x53] sm:$0xff]
      %v6139 = vld [vmem:[%s5022 + $0x63] sm:$0xff]
      %v6140 = vld [vmem:[%s5022 + $0x73] sm:$0xff]
      %v6141 = vld [vmem:[%s5022 + $0xc3] sm:$0xff]
      %v6142 = vld [vmem:[%s5022 + $0xd3] sm:$0xff]
      %v6143 = vld [vmem:[%s5022 + $0xe3] sm:$0xff]
      %v6144 = vld [vmem:[%s5022 + $0xf3] sm:$0xff]
      %v6145 = vld [vmem:[%s5022 + $0x103] sm:$0xff]
      %v6146 = vld [vmem:[%s5022 + $0x113] sm:$0xff]
      %v6147 = vld [vmem:[%s5022 + $0x123] sm:$0xff]
      %v6148 = vld [vmem:[%s5022 + $0x133] sm:$0xff]
      %v6149 = vld [vmem:[%s5022 + $0x183] sm:$0xff]
      %v6150 = vld [vmem:[%s5022 + $0x193] sm:$0xff]
      %v6151 = vld [vmem:[%s5022 + $0x1a3] sm:$0xff]
      %v6152 = vld [vmem:[%s5022 + $0x1b3] sm:$0xff]
      %v6153 = vld [vmem:[%s5022 + $0x1c3] sm:$0xff]
      %v6154 = vld [vmem:[%s5022 + $0x1d3] sm:$0xff]
      %v6155 = vld [vmem:[%s5022 + $0x1e3] sm:$0xff]
      %v6156 = vld [vmem:[%s5022 + $0x1f3] sm:$0xff]
      %v6157 = vld [vmem:[%s5022 + $0x243] sm:$0xff]
      %v6158 = vld [vmem:[%s5022 + $0x253] sm:$0xff]
      %v6159 = vld [vmem:[%s5022 + $0x263] sm:$0xff]
      %v6160 = vld [vmem:[%s5022 + $0x273] sm:$0xff]
      %v6161 = vld [vmem:[%s5022 + $0x283] sm:$0xff]
      %v6162 = vld [vmem:[%s5022 + $0x293] sm:$0xff]
      %v6163 = vld [vmem:[%s5022 + $0x2a3] sm:$0xff]
      %v6164 = vld [vmem:[%s5022 + $0x2b3] sm:$0xff]
      %v6165 = vpack.c.bf16 %v6134, %v6133
      %v6166 = vpack.c.bf16 %v6136, %v6135
      %v6167 = vpack.c.bf16 %v6138, %v6137
      %v6168 = vpack.c.bf16 %v6140, %v6139
      %v6169 = vpack.c.bf16 %v6142, %v6141
      %v6170 = vpack.c.bf16 %v6144, %v6143
      %v6171 = vpack.c.bf16 %v6146, %v6145
      %v6172 = vpack.c.bf16 %v6148, %v6147
      %v6173 = vpack.c.bf16 %v6150, %v6149
      %v6174 = vpack.c.bf16 %v6152, %v6151
      %v6175 = vpack.c.bf16 %v6154, %v6153
      %v6176 = vpack.c.bf16 %v6156, %v6155
      %v6177 = vpack.c.bf16 %v6158, %v6157
      %v6178 = vpack.c.bf16 %v6160, %v6159
      %v6179 = vpack.c.bf16 %v6162, %v6161
      %v6180 = vpack.c.bf16 %v6164, %v6163
      %s6181 = scalar_lea.vmem %s3, 208
      %v6182 = vld [vmem:[%s6181] sm:$0xf]
      %v6183 = vld [vmem:[%s6181 + $0x4] sm:$0xf]
      %v6184 = vld [vmem:[%s6181 + $0x8] sm:$0xf]
      %v6185 = vld [vmem:[%s6181 + $0xc] sm:$0xf]
      %v6190 = vunpack.c.l.b16 %v6182
      %v6191 = vunpack.c.l.b16 %v6183
      %v6192 = vunpack.c.l.b16 %v6184
      %v6193 = vunpack.c.l.b16 %v6185
      %v6194 = vpack.c.b16 %v6191, %v6190
      %v6195 = vpack.c.b16 %v6193, %v6192
      %v6199 = vsel %vm593, %v6165, 0
      %v6202 = vsel %vm593, %v6166, 0
      %v6205 = vsel %vm593, %v6167, 0
      %v6208 = vsel %vm593, %v6168, 0
      %v6211 = vsel %vm593, %v6169, 0
      %v6214 = vsel %vm593, %v6170, 0
      %v6217 = vsel %vm593, %v6171, 0
      %v6220 = vsel %vm593, %v6172, 0
      %v6223 = vsel %vm593, %v6173, 0
      %v6226 = vsel %vm593, %v6174, 0
      %v6229 = vsel %vm593, %v6175, 0
      %v6232 = vsel %vm593, %v6176, 0
      %v6235 = vsel %vm593, %v6177, 0
      %v6238 = vsel %vm593, %v6178, 0
      %v6241 = vsel %vm593, %v6179, 0
      %v6244 = vsel %vm593, %v6180, 0
      %6246 = vmatprep.subr.bf16.mxu0 0
      %6247 = vmatpush1.bf16.msra.mxu0 %v6194
      %6248 = vmatprep.subr.bf16.mxu0 0
      %6249 = vmatpush1.bf16.msra.mxu0 %v6195
      %6250 = vmatprep.subr.bf16.mxu0 0
      %6251 = vmatpush1.bf16.msra.mxu0 0
      %6252 = vmatprep.subr.bf16.mxu0 0
      %6253 = vmatpush1.bf16.msra.mxu0 0
      %6254 = vmatprep.subr.bf16.mxu0 0
      %6255 = vmatpush1.bf16.msra.mxu0 0
      %6256 = vmatprep.subr.bf16.mxu0 0
      %6257 = vmatpush1.bf16.msra.mxu0 0
      %6258 = vmatprep.subr.bf16.mxu0 0
      %6259 = vmatpush1.bf16.msra.mxu0 0
      %6260 = vmatprep.subr.bf16.mxu0 0
      %6261 = vmatpush1.bf16.msra.mxu0 0
      %6262 = vmatprep.subr.bf16.mxu0 0
      %6263 = vmatpush1.bf16.msra.mxu0 0
      %6264 = vmatprep.subr.bf16.mxu0 0
      %6265 = vmatpush1.bf16.msra.mxu0 0
      %6266 = vmatprep.subr.bf16.mxu0 0
      %6267 = vmatpush1.bf16.msra.mxu0 0
      %6268 = vmatprep.subr.bf16.mxu0 0
      %6269 = vmatpush1.bf16.msra.mxu0 0
      %6270 = vmatprep.subr.bf16.mxu0 0
      %6271 = vmatpush1.bf16.msra.mxu0 0
      %6272 = vmatprep.subr.bf16.mxu0 0
      %6273 = vmatpush1.bf16.msra.mxu0 0
      %6274 = vmatprep.subr.bf16.mxu0 0
      %6275 = vmatpush1.bf16.msra.mxu0 0
      %6276 = vmatprep.subr.bf16.mxu0 0
      %6277 = vmatpush1.bf16.msra.mxu0 0
      %6278 = vmatprep.mubr.bf16.mxu0 0
      %6279 = vmatmul.mubr.bf16.gmra.mrb[0].mxu0 %v6199
      %v6280 = vpop.f32.mrb[0].mxu0
      %v6281 = vadd.f32 0.0, %v6280
      %v6282 = vpop.f32.mrb[0].mxu0
      %v6283 = vpop.f32.mrb[0].mxu0
      %v6284 = vadd.f32 0.0, %v6283
      %v6285 = vpop.f32.mrb[0].mxu0
      %6286 = vmatprep.mubr.bf16.mxu0 0
      %6287 = vmatmul.mubr.bf16.gmra.mrb[0].mxu0 %v6202
      %v6288 = vpop.f32.mrb[0].mxu0
      %v6289 = vadd.f32 0.0, %v6288
      %v6290 = vpop.f32.mrb[0].mxu0
      %v6291 = vpop.f32.mrb[0].mxu0
      %v6292 = vadd.f32 0.0, %v6291
      %v6293 = vpop.f32.mrb[0].mxu0
      %6294 = vmatprep.mubr.bf16.mxu0 0
      %6295 = vmatmul.mubr.bf16.gmra.mrb[0].mxu0 %v6205
      %v6296 = vpop.f32.mrb[0].mxu0
      %v6297 = vadd.f32 0.0, %v6296
      %v6298 = vpop.f32.mrb[0].mxu0
      %v6299 = vpop.f32.mrb[0].mxu0
      %v6300 = vadd.f32 0.0, %v6299
      %v6301 = vpop.f32.mrb[0].mxu0
      %6302 = vmatprep.mubr.bf16.mxu0 0
      %6303 = vmatmul.mubr.bf16.gmra.mrb[0].mxu0 %v6208
      %v6304 = vpop.f32.mrb[0].mxu0
      %v6305 = vadd.f32 0.0, %v6304
      %v6306 = vpop.f32.mrb[0].mxu0
      %v6307 = vpop.f32.mrb[0].mxu0
      %v6308 = vadd.f32 0.0, %v6307
      %v6309 = vpop.f32.mrb[0].mxu0
      %6310 = vmatprep.mubr.bf16.mxu0 0
      %6311 = vmatmul.mubr.bf16.gmra.mrb[0].mxu0 %v6211
      %v6312 = vpop.f32.mrb[0].mxu0
      %v6313 = vadd.f32 0.0, %v6312
      %v6314 = vpop.f32.mrb[0].mxu0
      %v6315 = vpop.f32.mrb[0].mxu0
      %v6316 = vadd.f32 0.0, %v6315
      %v6317 = vpop.f32.mrb[0].mxu0
      %6318 = vmatprep.mubr.bf16.mxu0 0
      %6319 = vmatmul.mubr.bf16.gmra.mrb[0].mxu0 %v6214
      %v6320 = vpop.f32.mrb[0].mxu0
      %v6321 = vadd.f32 0.0, %v6320
      %v6322 = vpop.f32.mrb[0].mxu0
      %v6323 = vpop.f32.mrb[0].mxu0
      %v6324 = vadd.f32 0.0, %v6323
      %v6325 = vpop.f32.mrb[0].mxu0
      %6326 = vmatprep.mubr.bf16.mxu0 0
      %6327 = vmatmul.mubr.bf16.gmra.mrb[0].mxu0 %v6217
      %v6328 = vpop.f32.mrb[0].mxu0
      %v6329 = vadd.f32 0.0, %v6328
      %v6330 = vpop.f32.mrb[0].mxu0
      %v6331 = vpop.f32.mrb[0].mxu0
      %v6332 = vadd.f32 0.0, %v6331
      %v6333 = vpop.f32.mrb[0].mxu0
      %6334 = vmatprep.mubr.bf16.mxu0 0
      %6335 = vmatmul.mubr.bf16.gmra.mrb[0].mxu0 %v6220
      %v6336 = vpop.f32.mrb[0].mxu0
      %v6337 = vadd.f32 0.0, %v6336
      %v6338 = vpop.f32.mrb[0].mxu0
      %v6339 = vpop.f32.mrb[0].mxu0
      %v6340 = vadd.f32 0.0, %v6339
      %v6341 = vpop.f32.mrb[0].mxu0
      %6342 = vmatprep.mubr.bf16.mxu0 0
      %6343 = vmatmul.mubr.bf16.gmra.mrb[0].mxu0 %v6223
      %v6344 = vpop.f32.mrb[0].mxu0
      %v6345 = vadd.f32 0.0, %v6344
      %v6346 = vpop.f32.mrb[0].mxu0
      %v6347 = vpop.f32.mrb[0].mxu0
      %v6348 = vadd.f32 0.0, %v6347
      %v6349 = vpop.f32.mrb[0].mxu0
      %6350 = vmatprep.mubr.bf16.mxu0 0
      %6351 = vmatmul.mubr.bf16.gmra.mrb[0].mxu0 %v6226
      %v6352 = vpop.f32.mrb[0].mxu0
      %v6353 = vadd.f32 0.0, %v6352
      %v6354 = vpop.f32.mrb[0].mxu0
      %v6355 = vpop.f32.mrb[0].mxu0
      %v6356 = vadd.f32 0.0, %v6355
      %v6357 = vpop.f32.mrb[0].mxu0
      %6358 = vmatprep.mubr.bf16.mxu0 0
      %6359 = vmatmul.mubr.bf16.gmra.mrb[0].mxu0 %v6229
      %v6360 = vpop.f32.mrb[0].mxu0
      %v6361 = vadd.f32 0.0, %v6360
      %v6362 = vpop.f32.mrb[0].mxu0
      %v6363 = vpop.f32.mrb[0].mxu0
      %v6364 = vadd.f32 0.0, %v6363
      %v6365 = vpop.f32.mrb[0].mxu0
      %6366 = vmatprep.mubr.bf16.mxu0 0
      %6367 = vmatmul.mubr.bf16.gmra.mrb[0].mxu0 %v6232
      %v6368 = vpop.f32.mrb[0].mxu0
      %v6369 = vadd.f32 0.0, %v6368
      %v6370 = vpop.f32.mrb[0].mxu0
      %v6371 = vpop.f32.mrb[0].mxu0
      %v6372 = vadd.f32 0.0, %v6371
      %v6373 = vpop.f32.mrb[0].mxu0
      %6374 = vmatprep.mubr.bf16.mxu0 0
      %6375 = vmatmul.mubr.bf16.gmra.mrb[0].mxu0 %v6235
      %v6376 = vpop.f32.mrb[0].mxu0
      %v6377 = vadd.f32 0.0, %v6376
      %v6378 = vpop.f32.mrb[0].mxu0
      %v6379 = vpop.f32.mrb[0].mxu0
      %v6380 = vadd.f32 0.0, %v6379
      %v6381 = vpop.f32.mrb[0].mxu0
      %6382 = vmatprep.mubr.bf16.mxu0 0
      %6383 = vmatmul.mubr.bf16.gmra.mrb[0].mxu0 %v6238
      %v6384 = vpop.f32.mrb[0].mxu0
      %v6385 = vadd.f32 0.0, %v6384
      %v6386 = vpop.f32.mrb[0].mxu0
      %v6387 = vpop.f32.mrb[0].mxu0
      %v6388 = vadd.f32 0.0, %v6387
      %v6389 = vpop.f32.mrb[0].mxu0
      %6390 = vmatprep.mubr.bf16.mxu0 0
      %6391 = vmatmul.mubr.bf16.gmra.mrb[0].mxu0 %v6241
      %v6392 = vpop.f32.mrb[0].mxu0
      %v6393 = vadd.f32 0.0, %v6392
      %v6394 = vpop.f32.mrb[0].mxu0
      %v6395 = vpop.f32.mrb[0].mxu0
      %v6396 = vadd.f32 0.0, %v6395
      %v6397 = vpop.f32.mrb[0].mxu0
      %6398 = vmatprep.mubr.bf16.mxu0 0
      %6399 = vmatmul.mubr.bf16.gmra.mrb[0].mxu0 %v6244
      %v6400 = vpop.f32.mrb[0].mxu0
      %v6401 = vadd.f32 0.0, %v6400
      %v6402 = vpop.f32.mrb[0].mxu0
      %v6403 = vpop.f32.mrb[0].mxu0
      %v6404 = vadd.f32 0.0, %v6403
      %v6405 = vpop.f32.mrb[0].mxu0
      %6406 = vdwg.mxu0
      %v6407 = vld [vmem:[%s231] sm:$0xff]
      %v6408 = vld [vmem:[%s231 + $0x8] sm:$0xff]
      %v6409 = vld [vmem:[%s231 + $0x10] sm:$0xff]
      %v6410 = vld [vmem:[%s231 + $0x18] sm:$0xff]
      %v6411 = vld [vmem:[%s231 + $0x20] sm:$0xff]
      %v6412 = vld [vmem:[%s231 + $0x28] sm:$0xff]
      %v6413 = vld [vmem:[%s231 + $0x30] sm:$0xff]
      %v6414 = vld [vmem:[%s231 + $0x38] sm:$0xff]
      %v6415 = vld [vmem:[%s231 + $0x40] sm:$0xff]
      %v6416 = vld [vmem:[%s231 + $0x48] sm:$0xff]
      %v6417 = vld [vmem:[%s231 + $0x50] sm:$0xff]
      %v6418 = vld [vmem:[%s231 + $0x58] sm:$0xff]
      %v6419 = vld [vmem:[%s231 + $0x60] sm:$0xff]
      %v6420 = vld [vmem:[%s231 + $0x68] sm:$0xff]
      %v6421 = vld [vmem:[%s231 + $0x70] sm:$0xff]
      %v6422 = vld [vmem:[%s231 + $0x78] sm:$0xff]
      %v6423 = vld [vmem:[%s231 + $0x80] sm:$0xff]
      %v6424 = vld [vmem:[%s231 + $0x88] sm:$0xff]
      %v6425 = vld [vmem:[%s231 + $0x90] sm:$0xff]
      %v6426 = vld [vmem:[%s231 + $0x98] sm:$0xff]
      %v6427 = vld [vmem:[%s231 + $0xa0] sm:$0xff]
      %v6428 = vld [vmem:[%s231 + $0xa8] sm:$0xff]
      %v6429 = vld [vmem:[%s231 + $0xb0] sm:$0xff]
      %v6430 = vld [vmem:[%s231 + $0xb8] sm:$0xff]
      %v6431 = vld [vmem:[%s231 + $0xc0] sm:$0xff]
      %v6432 = vld [vmem:[%s231 + $0xc8] sm:$0xff]
      %v6433 = vld [vmem:[%s231 + $0xd0] sm:$0xff]
      %v6434 = vld [vmem:[%s231 + $0xd8] sm:$0xff]
      %v6435 = vld [vmem:[%s231 + $0xe0] sm:$0xff]
      %v6436 = vld [vmem:[%s231 + $0xe8] sm:$0xff]
      %v6437 = vld [vmem:[%s231 + $0xf0] sm:$0xff]
      %v6438 = vld [vmem:[%s231 + $0xf8] sm:$0xff]
      %v6439 = vadd.f32 %v6407, %v6281
      %v6440 = vadd.f32 %v6408, %v6284
      %v6441 = vadd.f32 %v6409, %v6289
      %v6442 = vadd.f32 %v6410, %v6292
      %v6443 = vadd.f32 %v6411, %v6297
      %v6444 = vadd.f32 %v6412, %v6300
      %v6445 = vadd.f32 %v6413, %v6305
      %v6446 = vadd.f32 %v6414, %v6308
      %v6447 = vadd.f32 %v6415, %v6313
      %v6448 = vadd.f32 %v6416, %v6316
      %v6449 = vadd.f32 %v6417, %v6321
      %v6450 = vadd.f32 %v6418, %v6324
      %v6451 = vadd.f32 %v6419, %v6329
      %v6452 = vadd.f32 %v6420, %v6332
      %v6453 = vadd.f32 %v6421, %v6337
      %v6454 = vadd.f32 %v6422, %v6340
      %v6455 = vadd.f32 %v6423, %v6345
      %v6456 = vadd.f32 %v6424, %v6348
      %v6457 = vadd.f32 %v6425, %v6353
      %v6458 = vadd.f32 %v6426, %v6356
      %v6459 = vadd.f32 %v6427, %v6361
      %v6460 = vadd.f32 %v6428, %v6364
      %v6461 = vadd.f32 %v6429, %v6369
      %v6462 = vadd.f32 %v6430, %v6372
      %v6463 = vadd.f32 %v6431, %v6377
      %v6464 = vadd.f32 %v6432, %v6380
      %v6465 = vadd.f32 %v6433, %v6385
      %v6466 = vadd.f32 %v6434, %v6388
      %v6467 = vadd.f32 %v6435, %v6393
      %v6468 = vadd.f32 %v6436, %v6396
      %v6469 = vadd.f32 %v6437, %v6401
      %v6470 = vadd.f32 %v6438, %v6404
      %6471 = vst [vmem:[%s231] sm:$0xff] %v6439
      %6472 = vst [vmem:[%s231 + $0x8] sm:$0xff] %v6440
      %6473 = vst [vmem:[%s231 + $0x10] sm:$0xff] %v6441
      %6474 = vst [vmem:[%s231 + $0x18] sm:$0xff] %v6442
      %6475 = vst [vmem:[%s231 + $0x20] sm:$0xff] %v6443
      %6476 = vst [vmem:[%s231 + $0x28] sm:$0xff] %v6444
      %6477 = vst [vmem:[%s231 + $0x30] sm:$0xff] %v6445
      %6478 = vst [vmem:[%s231 + $0x38] sm:$0xff] %v6446
      %6479 = vst [vmem:[%s231 + $0x40] sm:$0xff] %v6447
      %6480 = vst [vmem:[%s231 + $0x48] sm:$0xff] %v6448
      %6481 = vst [vmem:[%s231 + $0x50] sm:$0xff] %v6449
      %6482 = vst [vmem:[%s231 + $0x58] sm:$0xff] %v6450
      %6483 = vst [vmem:[%s231 + $0x60] sm:$0xff] %v6451
      %6484 = vst [vmem:[%s231 + $0x68] sm:$0xff] %v6452
      %6485 = vst [vmem:[%s231 + $0x70] sm:$0xff] %v6453
      %6486 = vst [vmem:[%s231 + $0x78] sm:$0xff] %v6454
      %6487 = vst [vmem:[%s231 + $0x80] sm:$0xff] %v6455
      %6488 = vst [vmem:[%s231 + $0x88] sm:$0xff] %v6456
      %6489 = vst [vmem:[%s231 + $0x90] sm:$0xff] %v6457
      %6490 = vst [vmem:[%s231 + $0x98] sm:$0xff] %v6458
      %6491 = vst [vmem:[%s231 + $0xa0] sm:$0xff] %v6459
      %6492 = vst [vmem:[%s231 + $0xa8] sm:$0xff] %v6460
      %6493 = vst [vmem:[%s231 + $0xb0] sm:$0xff] %v6461
      %6494 = vst [vmem:[%s231 + $0xb8] sm:$0xff] %v6462
      %6495 = vst [vmem:[%s231 + $0xc0] sm:$0xff] %v6463
      %6496 = vst [vmem:[%s231 + $0xc8] sm:$0xff] %v6464
      %6497 = vst [vmem:[%s231 + $0xd0] sm:$0xff] %v6465
      %6498 = vst [vmem:[%s231 + $0xd8] sm:$0xff] %v6466
      %6499 = vst [vmem:[%s231 + $0xe0] sm:$0xff] %v6467
      %6500 = vst [vmem:[%s231 + $0xe8] sm:$0xff] %v6468
      %6501 = vst [vmem:[%s231 + $0xf0] sm:$0xff] %v6469
      %6502 = vst [vmem:[%s231 + $0xf8] sm:$0xff] %v6470
      %v6503 = vld [vmem:[%s5022 + $0x4] sm:$0xff]
      %v6504 = vld [vmem:[%s5022 + $0x14] sm:$0xff]
      %v6505 = vld [vmem:[%s5022 + $0x24] sm:$0xff]
      %v6506 = vld [vmem:[%s5022 + $0x34] sm:$0xff]
      %v6507 = vld [vmem:[%s5022 + $0x44] sm:$0xff]
      %v6508 = vld [vmem:[%s5022 + $0x54] sm:$0xff]
      %v6509 = vld [vmem:[%s5022 + $0x64] sm:$0xff]
      %v6510 = vld [vmem:[%s5022 + $0x74] sm:$0xff]
      %v6511 = vld [vmem:[%s5022 + $0xc4] sm:$0xff]
      %v6512 = vld [vmem:[%s5022 + $0xd4] sm:$0xff]
      %v6513 = vld [vmem:[%s5022 + $0xe4] sm:$0xff]
      %v6514 = vld [vmem:[%s5022 + $0xf4] sm:$0xff]
      %v6515 = vld [vmem:[%s5022 + $0x104] sm:$0xff]
      %v6516 = vld [vmem:[%s5022 + $0x114] sm:$0xff]
      %v6517 = vld [vmem:[%s5022 + $0x124] sm:$0xff]
      %v6518 = vld [vmem:[%s5022 + $0x134] sm:$0xff]
      %v6519 = vld [vmem:[%s5022 + $0x184] sm:$0xff]
      %v6520 = vld [vmem:[%s5022 + $0x194] sm:$0xff]
      %v6521 = vld [vmem:[%s5022 + $0x1a4] sm:$0xff]
      %v6522 = vld [vmem:[%s5022 + $0x1b4] sm:$0xff]
      %v6523 = vld [vmem:[%s5022 + $0x1c4] sm:$0xff]
      %v6524 = vld [vmem:[%s5022 + $0x1d4] sm:$0xff]
      %v6525 = vld [vmem:[%s5022 + $0x1e4] sm:$0xff]
      %v6526 = vld [vmem:[%s5022 + $0x1f4] sm:$0xff]
      %v6527 = vld [vmem:[%s5022 + $0x244] sm:$0xff]
      %v6528 = vld [vmem:[%s5022 + $0x254] sm:$0xff]
      %v6529 = vld [vmem:[%s5022 + $0x264] sm:$0xff]
      %v6530 = vld [vmem:[%s5022 + $0x274] sm:$0xff]
      %v6531 = vld [vmem:[%s5022 + $0x284] sm:$0xff]
      %v6532 = vld [vmem:[%s5022 + $0x294] sm:$0xff]
      %v6533 = vld [vmem:[%s5022 + $0x2a4] sm:$0xff]
      %v6534 = vld [vmem:[%s5022 + $0x2b4] sm:$0xff]
      %v6535 = vpack.c.bf16 %v6504, %v6503
      %v6536 = vpack.c.bf16 %v6506, %v6505
      %v6537 = vpack.c.bf16 %v6508, %v6507
      %v6538 = vpack.c.bf16 %v6510, %v6509
      %v6539 = vpack.c.bf16 %v6512, %v6511
      %v6540 = vpack.c.bf16 %v6514, %v6513
      %v6541 = vpack.c.bf16 %v6516, %v6515
      %v6542 = vpack.c.bf16 %v6518, %v6517
      %v6543 = vpack.c.bf16 %v6520, %v6519
      %v6544 = vpack.c.bf16 %v6522, %v6521
      %v6545 = vpack.c.bf16 %v6524, %v6523
      %v6546 = vpack.c.bf16 %v6526, %v6525
      %v6547 = vpack.c.bf16 %v6528, %v6527
      %v6548 = vpack.c.bf16 %v6530, %v6529
      %v6549 = vpack.c.bf16 %v6532, %v6531
      %v6550 = vpack.c.bf16 %v6534, %v6533
      %s6551 = scalar_lea.vmem %s3, 224
      %v6552 = vld [vmem:[%s6551] sm:$0xf]
      %v6553 = vld [vmem:[%s6551 + $0x4] sm:$0xf]
      %v6554 = vld [vmem:[%s6551 + $0x8] sm:$0xf]
      %v6555 = vld [vmem:[%s6551 + $0xc] sm:$0xf]
      %v6560 = vunpack.c.l.b16 %v6552
      %v6561 = vunpack.c.l.b16 %v6553
      %v6562 = vunpack.c.l.b16 %v6554
      %v6563 = vunpack.c.l.b16 %v6555
      %v6564 = vpack.c.b16 %v6561, %v6560
      %v6565 = vpack.c.b16 %v6563, %v6562
      %v6569 = vsel %vm593, %v6535, 0
      %v6572 = vsel %vm593, %v6536, 0
      %v6575 = vsel %vm593, %v6537, 0
      %v6578 = vsel %vm593, %v6538, 0
      %v6581 = vsel %vm593, %v6539, 0
      %v6584 = vsel %vm593, %v6540, 0
      %v6587 = vsel %vm593, %v6541, 0
      %v6590 = vsel %vm593, %v6542, 0
      %v6593 = vsel %vm593, %v6543, 0
      %v6596 = vsel %vm593, %v6544, 0
      %v6599 = vsel %vm593, %v6545, 0
      %v6602 = vsel %vm593, %v6546, 0
      %v6605 = vsel %vm593, %v6547, 0
      %v6608 = vsel %vm593, %v6548, 0
      %v6611 = vsel %vm593, %v6549, 0
      %v6614 = vsel %vm593, %v6550, 0
      %6616 = vmatprep.subr.bf16.mxu0 0
      %6617 = vmatpush1.bf16.msra.mxu0 %v6564
      %6618 = vmatprep.subr.bf16.mxu0 0
      %6619 = vmatpush1.bf16.msra.mxu0 %v6565
      %6620 = vmatprep.subr.bf16.mxu0 0
      %6621 = vmatpush1.bf16.msra.mxu0 0
      %6622 = vmatprep.subr.bf16.mxu0 0
      %6623 = vmatpush1.bf16.msra.mxu0 0
      %6624 = vmatprep.subr.bf16.mxu0 0
      %6625 = vmatpush1.bf16.msra.mxu0 0
      %6626 = vmatprep.subr.bf16.mxu0 0
      %6627 = vmatpush1.bf16.msra.mxu0 0
      %6628 = vmatprep.subr.bf16.mxu0 0
      %6629 = vmatpush1.bf16.msra.mxu0 0
      %6630 = vmatprep.subr.bf16.mxu0 0
      %6631 = vmatpush1.bf16.msra.mxu0 0
      %6632 = vmatprep.subr.bf16.mxu0 0
      %6633 = vmatpush1.bf16.msra.mxu0 0
      %6634 = vmatprep.subr.bf16.mxu0 0
      %6635 = vmatpush1.bf16.msra.mxu0 0
      %6636 = vmatprep.subr.bf16.mxu0 0
      %6637 = vmatpush1.bf16.msra.mxu0 0
      %6638 = vmatprep.subr.bf16.mxu0 0
      %6639 = vmatpush1.bf16.msra.mxu0 0
      %6640 = vmatprep.subr.bf16.mxu0 0
      %6641 = vmatpush1.bf16.msra.mxu0 0
      %6642 = vmatprep.subr.bf16.mxu0 0
      %6643 = vmatpush1.bf16.msra.mxu0 0
      %6644 = vmatprep.subr.bf16.mxu0 0
      %6645 = vmatpush1.bf16.msra.mxu0 0
      %6646 = vmatprep.subr.bf16.mxu0 0
      %6647 = vmatpush1.bf16.msra.mxu0 0
      %6648 = vmatprep.mubr.bf16.mxu0 0
      %6649 = vmatmul.mubr.bf16.gmra.mrb[0].mxu0 %v6569
      %v6650 = vpop.f32.mrb[0].mxu0
      %v6651 = vadd.f32 0.0, %v6650
      %v6652 = vpop.f32.mrb[0].mxu0
      %v6653 = vpop.f32.mrb[0].mxu0
      %v6654 = vadd.f32 0.0, %v6653
      %v6655 = vpop.f32.mrb[0].mxu0
      %6656 = vmatprep.mubr.bf16.mxu0 0
      %6657 = vmatmul.mubr.bf16.gmra.mrb[0].mxu0 %v6572
      %v6658 = vpop.f32.mrb[0].mxu0
      %v6659 = vadd.f32 0.0, %v6658
      %v6660 = vpop.f32.mrb[0].mxu0
      %v6661 = vpop.f32.mrb[0].mxu0
      %v6662 = vadd.f32 0.0, %v6661
      %v6663 = vpop.f32.mrb[0].mxu0
      %6664 = vmatprep.mubr.bf16.mxu0 0
      %6665 = vmatmul.mubr.bf16.gmra.mrb[0].mxu0 %v6575
      %v6666 = vpop.f32.mrb[0].mxu0
      %v6667 = vadd.f32 0.0, %v6666
      %v6668 = vpop.f32.mrb[0].mxu0
      %v6669 = vpop.f32.mrb[0].mxu0
      %v6670 = vadd.f32 0.0, %v6669
      %v6671 = vpop.f32.mrb[0].mxu0
      %6672 = vmatprep.mubr.bf16.mxu0 0
      %6673 = vmatmul.mubr.bf16.gmra.mrb[0].mxu0 %v6578
      %v6674 = vpop.f32.mrb[0].mxu0
      %v6675 = vadd.f32 0.0, %v6674
      %v6676 = vpop.f32.mrb[0].mxu0
      %v6677 = vpop.f32.mrb[0].mxu0
      %v6678 = vadd.f32 0.0, %v6677
      %v6679 = vpop.f32.mrb[0].mxu0
      %6680 = vmatprep.mubr.bf16.mxu0 0
      %6681 = vmatmul.mubr.bf16.gmra.mrb[0].mxu0 %v6581
      %v6682 = vpop.f32.mrb[0].mxu0
      %v6683 = vadd.f32 0.0, %v6682
      %v6684 = vpop.f32.mrb[0].mxu0
      %v6685 = vpop.f32.mrb[0].mxu0
      %v6686 = vadd.f32 0.0, %v6685
      %v6687 = vpop.f32.mrb[0].mxu0
      %6688 = vmatprep.mubr.bf16.mxu0 0
      %6689 = vmatmul.mubr.bf16.gmra.mrb[0].mxu0 %v6584
      %v6690 = vpop.f32.mrb[0].mxu0
      %v6691 = vadd.f32 0.0, %v6690
      %v6692 = vpop.f32.mrb[0].mxu0
      %v6693 = vpop.f32.mrb[0].mxu0
      %v6694 = vadd.f32 0.0, %v6693
      %v6695 = vpop.f32.mrb[0].mxu0
      %6696 = vmatprep.mubr.bf16.mxu0 0
      %6697 = vmatmul.mubr.bf16.gmra.mrb[0].mxu0 %v6587
      %v6698 = vpop.f32.mrb[0].mxu0
      %v6699 = vadd.f32 0.0, %v6698
      %v6700 = vpop.f32.mrb[0].mxu0
      %v6701 = vpop.f32.mrb[0].mxu0
      %v6702 = vadd.f32 0.0, %v6701
      %v6703 = vpop.f32.mrb[0].mxu0
      %6704 = vmatprep.mubr.bf16.mxu0 0
      %6705 = vmatmul.mubr.bf16.gmra.mrb[0].mxu0 %v6590
      %v6706 = vpop.f32.mrb[0].mxu0
      %v6707 = vadd.f32 0.0, %v6706
      %v6708 = vpop.f32.mrb[0].mxu0
      %v6709 = vpop.f32.mrb[0].mxu0
      %v6710 = vadd.f32 0.0, %v6709
      %v6711 = vpop.f32.mrb[0].mxu0
      %6712 = vmatprep.mubr.bf16.mxu0 0
      %6713 = vmatmul.mubr.bf16.gmra.mrb[0].mxu0 %v6593
      %v6714 = vpop.f32.mrb[0].mxu0
      %v6715 = vadd.f32 0.0, %v6714
      %v6716 = vpop.f32.mrb[0].mxu0
      %v6717 = vpop.f32.mrb[0].mxu0
      %v6718 = vadd.f32 0.0, %v6717
      %v6719 = vpop.f32.mrb[0].mxu0
      %6720 = vmatprep.mubr.bf16.mxu0 0
      %6721 = vmatmul.mubr.bf16.gmra.mrb[0].mxu0 %v6596
      %v6722 = vpop.f32.mrb[0].mxu0
      %v6723 = vadd.f32 0.0, %v6722
      %v6724 = vpop.f32.mrb[0].mxu0
      %v6725 = vpop.f32.mrb[0].mxu0
      %v6726 = vadd.f32 0.0, %v6725
      %v6727 = vpop.f32.mrb[0].mxu0
      %6728 = vmatprep.mubr.bf16.mxu0 0
      %6729 = vmatmul.mubr.bf16.gmra.mrb[0].mxu0 %v6599
      %v6730 = vpop.f32.mrb[0].mxu0
      %v6731 = vadd.f32 0.0, %v6730
      %v6732 = vpop.f32.mrb[0].mxu0
      %v6733 = vpop.f32.mrb[0].mxu0
      %v6734 = vadd.f32 0.0, %v6733
      %v6735 = vpop.f32.mrb[0].mxu0
      %6736 = vmatprep.mubr.bf16.mxu0 0
      %6737 = vmatmul.mubr.bf16.gmra.mrb[0].mxu0 %v6602
      %v6738 = vpop.f32.mrb[0].mxu0
      %v6739 = vadd.f32 0.0, %v6738
      %v6740 = vpop.f32.mrb[0].mxu0
      %v6741 = vpop.f32.mrb[0].mxu0
      %v6742 = vadd.f32 0.0, %v6741
      %v6743 = vpop.f32.mrb[0].mxu0
      %6744 = vmatprep.mubr.bf16.mxu0 0
      %6745 = vmatmul.mubr.bf16.gmra.mrb[0].mxu0 %v6605
      %v6746 = vpop.f32.mrb[0].mxu0
      %v6747 = vadd.f32 0.0, %v6746
      %v6748 = vpop.f32.mrb[0].mxu0
      %v6749 = vpop.f32.mrb[0].mxu0
      %v6750 = vadd.f32 0.0, %v6749
      %v6751 = vpop.f32.mrb[0].mxu0
      %6752 = vmatprep.mubr.bf16.mxu0 0
      %6753 = vmatmul.mubr.bf16.gmra.mrb[0].mxu0 %v6608
      %v6754 = vpop.f32.mrb[0].mxu0
      %v6755 = vadd.f32 0.0, %v6754
      %v6756 = vpop.f32.mrb[0].mxu0
      %v6757 = vpop.f32.mrb[0].mxu0
      %v6758 = vadd.f32 0.0, %v6757
      %v6759 = vpop.f32.mrb[0].mxu0
      %6760 = vmatprep.mubr.bf16.mxu0 0
      %6761 = vmatmul.mubr.bf16.gmra.mrb[0].mxu0 %v6611
      %v6762 = vpop.f32.mrb[0].mxu0
      %v6763 = vadd.f32 0.0, %v6762
      %v6764 = vpop.f32.mrb[0].mxu0
      %v6765 = vpop.f32.mrb[0].mxu0
      %v6766 = vadd.f32 0.0, %v6765
      %v6767 = vpop.f32.mrb[0].mxu0
      %6768 = vmatprep.mubr.bf16.mxu0 0
      %6769 = vmatmul.mubr.bf16.gmra.mrb[0].mxu0 %v6614
      %v6770 = vpop.f32.mrb[0].mxu0
      %v6771 = vadd.f32 0.0, %v6770
      %v6772 = vpop.f32.mrb[0].mxu0
      %v6773 = vpop.f32.mrb[0].mxu0
      %v6774 = vadd.f32 0.0, %v6773
      %v6775 = vpop.f32.mrb[0].mxu0
      %6776 = vdwg.mxu0
      %v6777 = vld [vmem:[%s231] sm:$0xff]
      %v6778 = vld [vmem:[%s231 + $0x8] sm:$0xff]
      %v6779 = vld [vmem:[%s231 + $0x10] sm:$0xff]
      %v6780 = vld [vmem:[%s231 + $0x18] sm:$0xff]
      %v6781 = vld [vmem:[%s231 + $0x20] sm:$0xff]
      %v6782 = vld [vmem:[%s231 + $0x28] sm:$0xff]
      %v6783 = vld [vmem:[%s231 + $0x30] sm:$0xff]
      %v6784 = vld [vmem:[%s231 + $0x38] sm:$0xff]
      %v6785 = vld [vmem:[%s231 + $0x40] sm:$0xff]
      %v6786 = vld [vmem:[%s231 + $0x48] sm:$0xff]
      %v6787 = vld [vmem:[%s231 + $0x50] sm:$0xff]
      %v6788 = vld [vmem:[%s231 + $0x58] sm:$0xff]
      %v6789 = vld [vmem:[%s231 + $0x60] sm:$0xff]
      %v6790 = vld [vmem:[%s231 + $0x68] sm:$0xff]
      %v6791 = vld [vmem:[%s231 + $0x70] sm:$0xff]
      %v6792 = vld [vmem:[%s231 + $0x78] sm:$0xff]
      %v6793 = vld [vmem:[%s231 + $0x80] sm:$0xff]
      %v6794 = vld [vmem:[%s231 + $0x88] sm:$0xff]
      %v6795 = vld [vmem:[%s231 + $0x90] sm:$0xff]
      %v6796 = vld [vmem:[%s231 + $0x98] sm:$0xff]
      %v6797 = vld [vmem:[%s231 + $0xa0] sm:$0xff]
      %v6798 = vld [vmem:[%s231 + $0xa8] sm:$0xff]
      %v6799 = vld [vmem:[%s231 + $0xb0] sm:$0xff]
      %v6800 = vld [vmem:[%s231 + $0xb8] sm:$0xff]
      %v6801 = vld [vmem:[%s231 + $0xc0] sm:$0xff]
      %v6802 = vld [vmem:[%s231 + $0xc8] sm:$0xff]
      %v6803 = vld [vmem:[%s231 + $0xd0] sm:$0xff]
      %v6804 = vld [vmem:[%s231 + $0xd8] sm:$0xff]
      %v6805 = vld [vmem:[%s231 + $0xe0] sm:$0xff]
      %v6806 = vld [vmem:[%s231 + $0xe8] sm:$0xff]
      %v6807 = vld [vmem:[%s231 + $0xf0] sm:$0xff]
      %v6808 = vld [vmem:[%s231 + $0xf8] sm:$0xff]
      %v6809 = vadd.f32 %v6777, %v6651
      %v6810 = vadd.f32 %v6778, %v6654
      %v6811 = vadd.f32 %v6779, %v6659
      %v6812 = vadd.f32 %v6780, %v6662
      %v6813 = vadd.f32 %v6781, %v6667
      %v6814 = vadd.f32 %v6782, %v6670
      %v6815 = vadd.f32 %v6783, %v6675
      %v6816 = vadd.f32 %v6784, %v6678
      %v6817 = vadd.f32 %v6785, %v6683
      %v6818 = vadd.f32 %v6786, %v6686
      %v6819 = vadd.f32 %v6787, %v6691
      %v6820 = vadd.f32 %v6788, %v6694
      %v6821 = vadd.f32 %v6789, %v6699
      %v6822 = vadd.f32 %v6790, %v6702
      %v6823 = vadd.f32 %v6791, %v6707
      %v6824 = vadd.f32 %v6792, %v6710
      %v6825 = vadd.f32 %v6793, %v6715
      %v6826 = vadd.f32 %v6794, %v6718
      %v6827 = vadd.f32 %v6795, %v6723
      %v6828 = vadd.f32 %v6796, %v6726
      %v6829 = vadd.f32 %v6797, %v6731
      %v6830 = vadd.f32 %v6798, %v6734
      %v6831 = vadd.f32 %v6799, %v6739
      %v6832 = vadd.f32 %v6800, %v6742
      %v6833 = vadd.f32 %v6801, %v6747
      %v6834 = vadd.f32 %v6802, %v6750
      %v6835 = vadd.f32 %v6803, %v6755
      %v6836 = vadd.f32 %v6804, %v6758
      %v6837 = vadd.f32 %v6805, %v6763
      %v6838 = vadd.f32 %v6806, %v6766
      %v6839 = vadd.f32 %v6807, %v6771
      %v6840 = vadd.f32 %v6808, %v6774
      %6841 = vst [vmem:[%s231] sm:$0xff] %v6809
      %6842 = vst [vmem:[%s231 + $0x8] sm:$0xff] %v6810
      %6843 = vst [vmem:[%s231 + $0x10] sm:$0xff] %v6811
      %6844 = vst [vmem:[%s231 + $0x18] sm:$0xff] %v6812
      %6845 = vst [vmem:[%s231 + $0x20] sm:$0xff] %v6813
      %6846 = vst [vmem:[%s231 + $0x28] sm:$0xff] %v6814
      %6847 = vst [vmem:[%s231 + $0x30] sm:$0xff] %v6815
      %6848 = vst [vmem:[%s231 + $0x38] sm:$0xff] %v6816
      %6849 = vst [vmem:[%s231 + $0x40] sm:$0xff] %v6817
      %6850 = vst [vmem:[%s231 + $0x48] sm:$0xff] %v6818
      %6851 = vst [vmem:[%s231 + $0x50] sm:$0xff] %v6819
      %6852 = vst [vmem:[%s231 + $0x58] sm:$0xff] %v6820
      %6853 = vst [vmem:[%s231 + $0x60] sm:$0xff] %v6821
      %6854 = vst [vmem:[%s231 + $0x68] sm:$0xff] %v6822
      %6855 = vst [vmem:[%s231 + $0x70] sm:$0xff] %v6823
      %6856 = vst [vmem:[%s231 + $0x78] sm:$0xff] %v6824
      %6857 = vst [vmem:[%s231 + $0x80] sm:$0xff] %v6825
      %6858 = vst [vmem:[%s231 + $0x88] sm:$0xff] %v6826
      %6859 = vst [vmem:[%s231 + $0x90] sm:$0xff] %v6827
      %6860 = vst [vmem:[%s231 + $0x98] sm:$0xff] %v6828
      %6861 = vst [vmem:[%s231 + $0xa0] sm:$0xff] %v6829
      %6862 = vst [vmem:[%s231 + $0xa8] sm:$0xff] %v6830
      %6863 = vst [vmem:[%s231 + $0xb0] sm:$0xff] %v6831
      %6864 = vst [vmem:[%s231 + $0xb8] sm:$0xff] %v6832
      %6865 = vst [vmem:[%s231 + $0xc0] sm:$0xff] %v6833
      %6866 = vst [vmem:[%s231 + $0xc8] sm:$0xff] %v6834
      %6867 = vst [vmem:[%s231 + $0xd0] sm:$0xff] %v6835
      %6868 = vst [vmem:[%s231 + $0xd8] sm:$0xff] %v6836
      %6869 = vst [vmem:[%s231 + $0xe0] sm:$0xff] %v6837
      %6870 = vst [vmem:[%s231 + $0xe8] sm:$0xff] %v6838
      %6871 = vst [vmem:[%s231 + $0xf0] sm:$0xff] %v6839
      %6872 = vst [vmem:[%s231 + $0xf8] sm:$0xff] %v6840
      %s6873 = scalar_lea.vmem [#allocation2], 48
      %v6874 = vld [vmem:[%s6873] sm:$0xff]
      %v6875 = vld [vmem:[%s6873 + $0x10] sm:$0xff]
      %v6876 = vld [vmem:[%s6873 + $0x20] sm:$0xff]
      %v6877 = vld [vmem:[%s6873 + $0x30] sm:$0xff]
      %v6878 = vld [vmem:[%s6873 + $0x40] sm:$0xff]
      %v6879 = vld [vmem:[%s6873 + $0x50] sm:$0xff]
      %v6880 = vld [vmem:[%s6873 + $0x60] sm:$0xff]
      %v6881 = vld [vmem:[%s6873 + $0x70] sm:$0xff]
      %v6882 = vld [vmem:[%s6873 + $0xc0] sm:$0xff]
      %v6883 = vld [vmem:[%s6873 + $0xd0] sm:$0xff]
      %v6884 = vld [vmem:[%s6873 + $0xe0] sm:$0xff]
      %v6885 = vld [vmem:[%s6873 + $0xf0] sm:$0xff]
      %v6886 = vld [vmem:[%s6873 + $0x100] sm:$0xff]
      %v6887 = vld [vmem:[%s6873 + $0x110] sm:$0xff]
      %v6888 = vld [vmem:[%s6873 + $0x120] sm:$0xff]
      %v6889 = vld [vmem:[%s6873 + $0x130] sm:$0xff]
      %v6890 = vld [vmem:[%s6873 + $0x180] sm:$0xff]
      %v6891 = vld [vmem:[%s6873 + $0x190] sm:$0xff]
      %v6892 = vld [vmem:[%s6873 + $0x1a0] sm:$0xff]
      %v6893 = vld [vmem:[%s6873 + $0x1b0] sm:$0xff]
      %v6894 = vld [vmem:[%s6873 + $0x1c0] sm:$0xff]
      %v6895 = vld [vmem:[%s6873 + $0x1d0] sm:$0xff]
      %v6896 = vld [vmem:[%s6873 + $0x1e0] sm:$0xff]
      %v6897 = vld [vmem:[%s6873 + $0x1f0] sm:$0xff]
      %v6898 = vld [vmem:[%s6873 + $0x240] sm:$0xff]
      %v6899 = vld [vmem:[%s6873 + $0x250] sm:$0xff]
      %v6900 = vld [vmem:[%s6873 + $0x260] sm:$0xff]
      %v6901 = vld [vmem:[%s6873 + $0x270] sm:$0xff]
      %v6902 = vld [vmem:[%s6873 + $0x280] sm:$0xff]
      %v6903 = vld [vmem:[%s6873 + $0x290] sm:$0xff]
      %v6904 = vld [vmem:[%s6873 + $0x2a0] sm:$0xff]
      %v6905 = vld [vmem:[%s6873 + $0x2b0] sm:$0xff]
      %v6906 = vpack.c.bf16 %v6875, %v6874
      %v6907 = vpack.c.bf16 %v6877, %v6876
      %v6908 = vpack.c.bf16 %v6879, %v6878
      %v6909 = vpack.c.bf16 %v6881, %v6880
      %v6910 = vpack.c.bf16 %v6883, %v6882
      %v6911 = vpack.c.bf16 %v6885, %v6884
      %v6912 = vpack.c.bf16 %v6887, %v6886
      %v6913 = vpack.c.bf16 %v6889, %v6888
      %v6914 = vpack.c.bf16 %v6891, %v6890
      %v6915 = vpack.c.bf16 %v6893, %v6892
      %v6916 = vpack.c.bf16 %v6895, %v6894
      %v6917 = vpack.c.bf16 %v6897, %v6896
      %v6918 = vpack.c.bf16 %v6899, %v6898
      %v6919 = vpack.c.bf16 %v6901, %v6900
      %v6920 = vpack.c.bf16 %v6903, %v6902
      %v6921 = vpack.c.bf16 %v6905, %v6904
      %s6922 = scalar_lea.vmem %s3, 240
      %v6923 = vld [vmem:[%s6922] sm:$0xf]
      %v6924 = vld [vmem:[%s6922 + $0x4] sm:$0xf]
      %v6925 = vld [vmem:[%s6922 + $0x8] sm:$0xf]
      %v6926 = vld [vmem:[%s6922 + $0xc] sm:$0xf]
      %v6931 = vunpack.c.l.b16 %v6923
      %v6932 = vunpack.c.l.b16 %v6924
      %v6933 = vunpack.c.l.b16 %v6925
      %v6934 = vunpack.c.l.b16 %v6926
      %v6935 = vpack.c.b16 %v6932, %v6931
      %v6936 = vpack.c.b16 %v6934, %v6933
      %v6940 = vsel %vm593, %v6906, 0
      %v6943 = vsel %vm593, %v6907, 0
      %v6946 = vsel %vm593, %v6908, 0
      %v6949 = vsel %vm593, %v6909, 0
      %v6952 = vsel %vm593, %v6910, 0
      %v6955 = vsel %vm593, %v6911, 0
      %v6958 = vsel %vm593, %v6912, 0
      %v6961 = vsel %vm593, %v6913, 0
      %v6964 = vsel %vm593, %v6914, 0
      %v6967 = vsel %vm593, %v6915, 0
      %v6970 = vsel %vm593, %v6916, 0
      %v6973 = vsel %vm593, %v6917, 0
      %v6976 = vsel %vm593, %v6918, 0
      %v6979 = vsel %vm593, %v6919, 0
      %v6982 = vsel %vm593, %v6920, 0
      %v6985 = vsel %vm593, %v6921, 0
      %6987 = vmatprep.subr.bf16.mxu0 0
      %6988 = vmatpush1.bf16.msra.mxu0 %v6935
      %6989 = vmatprep.subr.bf16.mxu0 0
      %6990 = vmatpush1.bf16.msra.mxu0 %v6936
      %6991 = vmatprep.subr.bf16.mxu0 0
      %6992 = vmatpush1.bf16.msra.mxu0 0
      %6993 = vmatprep.subr.bf16.mxu0 0
      %6994 = vmatpush1.bf16.msra.mxu0 0
      %6995 = vmatprep.subr.bf16.mxu0 0
      %6996 = vmatpush1.bf16.msra.mxu0 0
      %6997 = vmatprep.subr.bf16.mxu0 0
      %6998 = vmatpush1.bf16.msra.mxu0 0
      %6999 = vmatprep.subr.bf16.mxu0 0
      %7000 = vmatpush1.bf16.msra.mxu0 0
      %7001 = vmatprep.subr.bf16.mxu0 0
      %7002 = vmatpush1.bf16.msra.mxu0 0
      %7003 = vmatprep.subr.bf16.mxu0 0
      %7004 = vmatpush1.bf16.msra.mxu0 0
      %7005 = vmatprep.subr.bf16.mxu0 0
      %7006 = vmatpush1.bf16.msra.mxu0 0
      %7007 = vmatprep.subr.bf16.mxu0 0
      %7008 = vmatpush1.bf16.msra.mxu0 0
      %7009 = vmatprep.subr.bf16.mxu0 0
      %7010 = vmatpush1.bf16.msra.mxu0 0
      %7011 = vmatprep.subr.bf16.mxu0 0
      %7012 = vmatpush1.bf16.msra.mxu0 0
      %7013 = vmatprep.subr.bf16.mxu0 0
      %7014 = vmatpush1.bf16.msra.mxu0 0
      %7015 = vmatprep.subr.bf16.mxu0 0
      %7016 = vmatpush1.bf16.msra.mxu0 0
      %7017 = vmatprep.subr.bf16.mxu0 0
      %7018 = vmatpush1.bf16.msra.mxu0 0
      %7019 = vmatprep.mubr.bf16.mxu0 0
      %7020 = vmatmul.mubr.bf16.gmra.mrb[0].mxu0 %v6940
      %v7021 = vpop.f32.mrb[0].mxu0
      %v7022 = vadd.f32 0.0, %v7021
      %v7023 = vpop.f32.mrb[0].mxu0
      %v7024 = vpop.f32.mrb[0].mxu0
      %v7025 = vadd.f32 0.0, %v7024
      %v7026 = vpop.f32.mrb[0].mxu0
      %7027 = vmatprep.mubr.bf16.mxu0 0
      %7028 = vmatmul.mubr.bf16.gmra.mrb[0].mxu0 %v6943
      %v7029 = vpop.f32.mrb[0].mxu0
      %v7030 = vadd.f32 0.0, %v7029
      %v7031 = vpop.f32.mrb[0].mxu0
      %v7032 = vpop.f32.mrb[0].mxu0
      %v7033 = vadd.f32 0.0, %v7032
      %v7034 = vpop.f32.mrb[0].mxu0
      %7035 = vmatprep.mubr.bf16.mxu0 0
      %7036 = vmatmul.mubr.bf16.gmra.mrb[0].mxu0 %v6946
      %v7037 = vpop.f32.mrb[0].mxu0
      %v7038 = vadd.f32 0.0, %v7037
      %v7039 = vpop.f32.mrb[0].mxu0
      %v7040 = vpop.f32.mrb[0].mxu0
      %v7041 = vadd.f32 0.0, %v7040
      %v7042 = vpop.f32.mrb[0].mxu0
      %7043 = vmatprep.mubr.bf16.mxu0 0
      %7044 = vmatmul.mubr.bf16.gmra.mrb[0].mxu0 %v6949
      %v7045 = vpop.f32.mrb[0].mxu0
      %v7046 = vadd.f32 0.0, %v7045
      %v7047 = vpop.f32.mrb[0].mxu0
      %v7048 = vpop.f32.mrb[0].mxu0
      %v7049 = vadd.f32 0.0, %v7048
      %v7050 = vpop.f32.mrb[0].mxu0
      %7051 = vmatprep.mubr.bf16.mxu0 0
      %7052 = vmatmul.mubr.bf16.gmra.mrb[0].mxu0 %v6952
      %v7053 = vpop.f32.mrb[0].mxu0
      %v7054 = vadd.f32 0.0, %v7053
      %v7055 = vpop.f32.mrb[0].mxu0
      %v7056 = vpop.f32.mrb[0].mxu0
      %v7057 = vadd.f32 0.0, %v7056
      %v7058 = vpop.f32.mrb[0].mxu0
      %7059 = vmatprep.mubr.bf16.mxu0 0
      %7060 = vmatmul.mubr.bf16.gmra.mrb[0].mxu0 %v6955
      %v7061 = vpop.f32.mrb[0].mxu0
      %v7062 = vadd.f32 0.0, %v7061
      %v7063 = vpop.f32.mrb[0].mxu0
      %v7064 = vpop.f32.mrb[0].mxu0
      %v7065 = vadd.f32 0.0, %v7064
      %v7066 = vpop.f32.mrb[0].mxu0
      %7067 = vmatprep.mubr.bf16.mxu0 0
      %7068 = vmatmul.mubr.bf16.gmra.mrb[0].mxu0 %v6958
      %v7069 = vpop.f32.mrb[0].mxu0
      %v7070 = vadd.f32 0.0, %v7069
      %v7071 = vpop.f32.mrb[0].mxu0
      %v7072 = vpop.f32.mrb[0].mxu0
      %v7073 = vadd.f32 0.0, %v7072
      %v7074 = vpop.f32.mrb[0].mxu0
      %7075 = vmatprep.mubr.bf16.mxu0 0
      %7076 = vmatmul.mubr.bf16.gmra.mrb[0].mxu0 %v6961
      %v7077 = vpop.f32.mrb[0].mxu0
      %v7078 = vadd.f32 0.0, %v7077
      %v7079 = vpop.f32.mrb[0].mxu0
      %v7080 = vpop.f32.mrb[0].mxu0
      %v7081 = vadd.f32 0.0, %v7080
      %v7082 = vpop.f32.mrb[0].mxu0
      %7083 = vmatprep.mubr.bf16.mxu0 0
      %7084 = vmatmul.mubr.bf16.gmra.mrb[0].mxu0 %v6964
      %v7085 = vpop.f32.mrb[0].mxu0
      %v7086 = vadd.f32 0.0, %v7085
      %v7087 = vpop.f32.mrb[0].mxu0
      %v7088 = vpop.f32.mrb[0].mxu0
      %v7089 = vadd.f32 0.0, %v7088
      %v7090 = vpop.f32.mrb[0].mxu0
      %7091 = vmatprep.mubr.bf16.mxu0 0
      %7092 = vmatmul.mubr.bf16.gmra.mrb[0].mxu0 %v6967
      %v7093 = vpop.f32.mrb[0].mxu0
      %v7094 = vadd.f32 0.0, %v7093
      %v7095 = vpop.f32.mrb[0].mxu0
      %v7096 = vpop.f32.mrb[0].mxu0
      %v7097 = vadd.f32 0.0, %v7096
      %v7098 = vpop.f32.mrb[0].mxu0
      %7099 = vmatprep.mubr.bf16.mxu0 0
      %7100 = vmatmul.mubr.bf16.gmra.mrb[0].mxu0 %v6970
      %v7101 = vpop.f32.mrb[0].mxu0
      %v7102 = vadd.f32 0.0, %v7101
      %v7103 = vpop.f32.mrb[0].mxu0
      %v7104 = vpop.f32.mrb[0].mxu0
      %v7105 = vadd.f32 0.0, %v7104
      %v7106 = vpop.f32.mrb[0].mxu0
      %7107 = vmatprep.mubr.bf16.mxu0 0
      %7108 = vmatmul.mubr.bf16.gmra.mrb[0].mxu0 %v6973
      %v7109 = vpop.f32.mrb[0].mxu0
      %v7110 = vadd.f32 0.0, %v7109
      %v7111 = vpop.f32.mrb[0].mxu0
      %v7112 = vpop.f32.mrb[0].mxu0
      %v7113 = vadd.f32 0.0, %v7112
      %v7114 = vpop.f32.mrb[0].mxu0
      %7115 = vmatprep.mubr.bf16.mxu0 0
      %7116 = vmatmul.mubr.bf16.gmra.mrb[0].mxu0 %v6976
      %v7117 = vpop.f32.mrb[0].mxu0
      %v7118 = vadd.f32 0.0, %v7117
      %v7119 = vpop.f32.mrb[0].mxu0
      %v7120 = vpop.f32.mrb[0].mxu0
      %v7121 = vadd.f32 0.0, %v7120
      %v7122 = vpop.f32.mrb[0].mxu0
      %7123 = vmatprep.mubr.bf16.mxu0 0
      %7124 = vmatmul.mubr.bf16.gmra.mrb[0].mxu0 %v6979
      %v7125 = vpop.f32.mrb[0].mxu0
      %v7126 = vadd.f32 0.0, %v7125
      %v7127 = vpop.f32.mrb[0].mxu0
      %v7128 = vpop.f32.mrb[0].mxu0
      %v7129 = vadd.f32 0.0, %v7128
      %v7130 = vpop.f32.mrb[0].mxu0
      %7131 = vmatprep.mubr.bf16.mxu0 0
      %7132 = vmatmul.mubr.bf16.gmra.mrb[0].mxu0 %v6982
      %v7133 = vpop.f32.mrb[0].mxu0
      %v7134 = vadd.f32 0.0, %v7133
      %v7135 = vpop.f32.mrb[0].mxu0
      %v7136 = vpop.f32.mrb[0].mxu0
      %v7137 = vadd.f32 0.0, %v7136
      %v7138 = vpop.f32.mrb[0].mxu0
      %7139 = vmatprep.mubr.bf16.mxu0 0
      %7140 = vmatmul.mubr.bf16.gmra.mrb[0].mxu0 %v6985
      %v7141 = vpop.f32.mrb[0].mxu0
      %v7142 = vadd.f32 0.0, %v7141
      %v7143 = vpop.f32.mrb[0].mxu0
      %v7144 = vpop.f32.mrb[0].mxu0
      %v7145 = vadd.f32 0.0, %v7144
      %v7146 = vpop.f32.mrb[0].mxu0
      %7147 = vdwg.mxu0
      %v7148 = vld [vmem:[%s231] sm:$0xff]
      %v7149 = vld [vmem:[%s231 + $0x8] sm:$0xff]
      %v7150 = vld [vmem:[%s231 + $0x10] sm:$0xff]
      %v7151 = vld [vmem:[%s231 + $0x18] sm:$0xff]
      %v7152 = vld [vmem:[%s231 + $0x20] sm:$0xff]
      %v7153 = vld [vmem:[%s231 + $0x28] sm:$0xff]
      %v7154 = vld [vmem:[%s231 + $0x30] sm:$0xff]
      %v7155 = vld [vmem:[%s231 + $0x38] sm:$0xff]
      %v7156 = vld [vmem:[%s231 + $0x40] sm:$0xff]
      %v7157 = vld [vmem:[%s231 + $0x48] sm:$0xff]
      %v7158 = vld [vmem:[%s231 + $0x50] sm:$0xff]
      %v7159 = vld [vmem:[%s231 + $0x58] sm:$0xff]
      %v7160 = vld [vmem:[%s231 + $0x60] sm:$0xff]
      %v7161 = vld [vmem:[%s231 + $0x68] sm:$0xff]
      %v7162 = vld [vmem:[%s231 + $0x70] sm:$0xff]
      %v7163 = vld [vmem:[%s231 + $0x78] sm:$0xff]
      %v7164 = vld [vmem:[%s231 + $0x80] sm:$0xff]
      %v7165 = vld [vmem:[%s231 + $0x88] sm:$0xff]
      %v7166 = vld [vmem:[%s231 + $0x90] sm:$0xff]
      %v7167 = vld [vmem:[%s231 + $0x98] sm:$0xff]
      %v7168 = vld [vmem:[%s231 + $0xa0] sm:$0xff]
      %v7169 = vld [vmem:[%s231 + $0xa8] sm:$0xff]
      %v7170 = vld [vmem:[%s231 + $0xb0] sm:$0xff]
      %v7171 = vld [vmem:[%s231 + $0xb8] sm:$0xff]
      %v7172 = vld [vmem:[%s231 + $0xc0] sm:$0xff]
      %v7173 = vld [vmem:[%s231 + $0xc8] sm:$0xff]
      %v7174 = vld [vmem:[%s231 + $0xd0] sm:$0xff]
      %v7175 = vld [vmem:[%s231 + $0xd8] sm:$0xff]
      %v7176 = vld [vmem:[%s231 + $0xe0] sm:$0xff]
      %v7177 = vld [vmem:[%s231 + $0xe8] sm:$0xff]
      %v7178 = vld [vmem:[%s231 + $0xf0] sm:$0xff]
      %v7179 = vld [vmem:[%s231 + $0xf8] sm:$0xff]
      %v7180 = vadd.f32 %v7148, %v7022
      %v7181 = vadd.f32 %v7149, %v7025
      %v7182 = vadd.f32 %v7150, %v7030
      %v7183 = vadd.f32 %v7151, %v7033
      %v7184 = vadd.f32 %v7152, %v7038
      %v7185 = vadd.f32 %v7153, %v7041
      %v7186 = vadd.f32 %v7154, %v7046
      %v7187 = vadd.f32 %v7155, %v7049
      %v7188 = vadd.f32 %v7156, %v7054
      %v7189 = vadd.f32 %v7157, %v7057
      %v7190 = vadd.f32 %v7158, %v7062
      %v7191 = vadd.f32 %v7159, %v7065
      %v7192 = vadd.f32 %v7160, %v7070
      %v7193 = vadd.f32 %v7161, %v7073
      %v7194 = vadd.f32 %v7162, %v7078
      %v7195 = vadd.f32 %v7163, %v7081
      %v7196 = vadd.f32 %v7164, %v7086
      %v7197 = vadd.f32 %v7165, %v7089
      %v7198 = vadd.f32 %v7166, %v7094
      %v7199 = vadd.f32 %v7167, %v7097
      %v7200 = vadd.f32 %v7168, %v7102
      %v7201 = vadd.f32 %v7169, %v7105
      %v7202 = vadd.f32 %v7170, %v7110
      %v7203 = vadd.f32 %v7171, %v7113
      %v7204 = vadd.f32 %v7172, %v7118
      %v7205 = vadd.f32 %v7173, %v7121
      %v7206 = vadd.f32 %v7174, %v7126
      %v7207 = vadd.f32 %v7175, %v7129
      %v7208 = vadd.f32 %v7176, %v7134
      %v7209 = vadd.f32 %v7177, %v7137
      %v7210 = vadd.f32 %v7178, %v7142
      %v7211 = vadd.f32 %v7179, %v7145
      %7212 = vst [vmem:[%s231] sm:$0xff] %v7180
      %7213 = vst [vmem:[%s231 + $0x8] sm:$0xff] %v7181
      %7214 = vst [vmem:[%s231 + $0x10] sm:$0xff] %v7182
      %7215 = vst [vmem:[%s231 + $0x18] sm:$0xff] %v7183
      %7216 = vst [vmem:[%s231 + $0x20] sm:$0xff] %v7184
      %7217 = vst [vmem:[%s231 + $0x28] sm:$0xff] %v7185
      %7218 = vst [vmem:[%s231 + $0x30] sm:$0xff] %v7186
      %7219 = vst [vmem:[%s231 + $0x38] sm:$0xff] %v7187
      %7220 = vst [vmem:[%s231 + $0x40] sm:$0xff] %v7188
      %7221 = vst [vmem:[%s231 + $0x48] sm:$0xff] %v7189
      %7222 = vst [vmem:[%s231 + $0x50] sm:$0xff] %v7190
      %7223 = vst [vmem:[%s231 + $0x58] sm:$0xff] %v7191
      %7224 = vst [vmem:[%s231 + $0x60] sm:$0xff] %v7192
      %7225 = vst [vmem:[%s231 + $0x68] sm:$0xff] %v7193
      %7226 = vst [vmem:[%s231 + $0x70] sm:$0xff] %v7194
      %7227 = vst [vmem:[%s231 + $0x78] sm:$0xff] %v7195
      %7228 = vst [vmem:[%s231 + $0x80] sm:$0xff] %v7196
      %7229 = vst [vmem:[%s231 + $0x88] sm:$0xff] %v7197
      %7230 = vst [vmem:[%s231 + $0x90] sm:$0xff] %v7198
      %7231 = vst [vmem:[%s231 + $0x98] sm:$0xff] %v7199
      %7232 = vst [vmem:[%s231 + $0xa0] sm:$0xff] %v7200
      %7233 = vst [vmem:[%s231 + $0xa8] sm:$0xff] %v7201
      %7234 = vst [vmem:[%s231 + $0xb0] sm:$0xff] %v7202
      %7235 = vst [vmem:[%s231 + $0xb8] sm:$0xff] %v7203
      %7236 = vst [vmem:[%s231 + $0xc0] sm:$0xff] %v7204
      %7237 = vst [vmem:[%s231 + $0xc8] sm:$0xff] %v7205
      %7238 = vst [vmem:[%s231 + $0xd0] sm:$0xff] %v7206
      %7239 = vst [vmem:[%s231 + $0xd8] sm:$0xff] %v7207
      %7240 = vst [vmem:[%s231 + $0xe0] sm:$0xff] %v7208
      %7241 = vst [vmem:[%s231 + $0xe8] sm:$0xff] %v7209
      %7242 = vst [vmem:[%s231 + $0xf0] sm:$0xff] %v7210
      %7243 = vst [vmem:[%s231 + $0xf8] sm:$0xff] %v7211
      %v7244 = vld [vmem:[%s6873 + $0x1] sm:$0xff]
      %v7245 = vld [vmem:[%s6873 + $0x11] sm:$0xff]
      %v7246 = vld [vmem:[%s6873 + $0x21] sm:$0xff]
      %v7247 = vld [vmem:[%s6873 + $0x31] sm:$0xff]
      %v7248 = vld [vmem:[%s6873 + $0x41] sm:$0xff]
      %v7249 = vld [vmem:[%s6873 + $0x51] sm:$0xff]
      %v7250 = vld [vmem:[%s6873 + $0x61] sm:$0xff]
      %v7251 = vld [vmem:[%s6873 + $0x71] sm:$0xff]
      %v7252 = vld [vmem:[%s6873 + $0xc1] sm:$0xff]
      %v7253 = vld [vmem:[%s6873 + $0xd1] sm:$0xff]
      %v7254 = vld [vmem:[%s6873 + $0xe1] sm:$0xff]
      %v7255 = vld [vmem:[%s6873 + $0xf1] sm:$0xff]
      %v7256 = vld [vmem:[%s6873 + $0x101] sm:$0xff]
      %v7257 = vld [vmem:[%s6873 + $0x111] sm:$0xff]
      %v7258 = vld [vmem:[%s6873 + $0x121] sm:$0xff]
      %v7259 = vld [vmem:[%s6873 + $0x131] sm:$0xff]
      %v7260 = vld [vmem:[%s6873 + $0x181] sm:$0xff]
      %v7261 = vld [vmem:[%s6873 + $0x191] sm:$0xff]
      %v7262 = vld [vmem:[%s6873 + $0x1a1] sm:$0xff]
      %v7263 = vld [vmem:[%s6873 + $0x1b1] sm:$0xff]
      %v7264 = vld [vmem:[%s6873 + $0x1c1] sm:$0xff]
      %v7265 = vld [vmem:[%s6873 + $0x1d1] sm:$0xff]
      %v7266 = vld [vmem:[%s6873 + $0x1e1] sm:$0xff]
      %v7267 = vld [vmem:[%s6873 + $0x1f1] sm:$0xff]
      %v7268 = vld [vmem:[%s6873 + $0x241] sm:$0xff]
      %v7269 = vld [vmem:[%s6873 + $0x251] sm:$0xff]
      %v7270 = vld [vmem:[%s6873 + $0x261] sm:$0xff]
      %v7271 = vld [vmem:[%s6873 + $0x271] sm:$0xff]
      %v7272 = vld [vmem:[%s6873 + $0x281] sm:$0xff]
      %v7273 = vld [vmem:[%s6873 + $0x291] sm:$0xff]
      %v7274 = vld [vmem:[%s6873 + $0x2a1] sm:$0xff]
      %v7275 = vld [vmem:[%s6873 + $0x2b1] sm:$0xff]
      %v7276 = vpack.c.bf16 %v7245, %v7244
      %v7277 = vpack.c.bf16 %v7247, %v7246
      %v7278 = vpack.c.bf16 %v7249, %v7248
      %v7279 = vpack.c.bf16 %v7251, %v7250
      %v7280 = vpack.c.bf16 %v7253, %v7252
      %v7281 = vpack.c.bf16 %v7255, %v7254
      %v7282 = vpack.c.bf16 %v7257, %v7256
      %v7283 = vpack.c.bf16 %v7259, %v7258
      %v7284 = vpack.c.bf16 %v7261, %v7260
      %v7285 = vpack.c.bf16 %v7263, %v7262
      %v7286 = vpack.c.bf16 %v7265, %v7264
      %v7287 = vpack.c.bf16 %v7267, %v7266
      %v7288 = vpack.c.bf16 %v7269, %v7268
      %v7289 = vpack.c.bf16 %v7271, %v7270
      %v7290 = vpack.c.bf16 %v7273, %v7272
      %v7291 = vpack.c.bf16 %v7275, %v7274
      %s7292 = scalar_lea.vmem %s3, 256
      %v7293 = vld [vmem:[%s7292] sm:$0xf]
      %v7294 = vld [vmem:[%s7292 + $0x4] sm:$0xf]
      %v7295 = vld [vmem:[%s7292 + $0x8] sm:$0xf]
      %v7296 = vld [vmem:[%s7292 + $0xc] sm:$0xf]
      %v7301 = vunpack.c.l.b16 %v7293
      %v7302 = vunpack.c.l.b16 %v7294
      %v7303 = vunpack.c.l.b16 %v7295
      %v7304 = vunpack.c.l.b16 %v7296
      %v7305 = vpack.c.b16 %v7302, %v7301
      %v7306 = vpack.c.b16 %v7304, %v7303
      %v7310 = vsel %vm593, %v7276, 0
      %v7313 = vsel %vm593, %v7277, 0
      %v7316 = vsel %vm593, %v7278, 0
      %v7319 = vsel %vm593, %v7279, 0
      %v7322 = vsel %vm593, %v7280, 0
      %v7325 = vsel %vm593, %v7281, 0
      %v7328 = vsel %vm593, %v7282, 0
      %v7331 = vsel %vm593, %v7283, 0
      %v7334 = vsel %vm593, %v7284, 0
      %v7337 = vsel %vm593, %v7285, 0
      %v7340 = vsel %vm593, %v7286, 0
      %v7343 = vsel %vm593, %v7287, 0
      %v7346 = vsel %vm593, %v7288, 0
      %v7349 = vsel %vm593, %v7289, 0
      %v7352 = vsel %vm593, %v7290, 0
      %v7355 = vsel %vm593, %v7291, 0
      %7357 = vmatprep.subr.bf16.mxu0 0
      %7358 = vmatpush1.bf16.msra.mxu0 %v7305
      %7359 = vmatprep.subr.bf16.mxu0 0
      %7360 = vmatpush1.bf16.msra.mxu0 %v7306
      %7361 = vmatprep.subr.bf16.mxu0 0
      %7362 = vmatpush1.bf16.msra.mxu0 0
      %7363 = vmatprep.subr.bf16.mxu0 0
      %7364 = vmatpush1.bf16.msra.mxu0 0
      %7365 = vmatprep.subr.bf16.mxu0 0
      %7366 = vmatpush1.bf16.msra.mxu0 0
      %7367 = vmatprep.subr.bf16.mxu0 0
      %7368 = vmatpush1.bf16.msra.mxu0 0
      %7369 = vmatprep.subr.bf16.mxu0 0
      %7370 = vmatpush1.bf16.msra.mxu0 0
      %7371 = vmatprep.subr.bf16.mxu0 0
      %7372 = vmatpush1.bf16.msra.mxu0 0
      %7373 = vmatprep.subr.bf16.mxu0 0
      %7374 = vmatpush1.bf16.msra.mxu0 0
      %7375 = vmatprep.subr.bf16.mxu0 0
      %7376 = vmatpush1.bf16.msra.mxu0 0
      %7377 = vmatprep.subr.bf16.mxu0 0
      %7378 = vmatpush1.bf16.msra.mxu0 0
      %7379 = vmatprep.subr.bf16.mxu0 0
      %7380 = vmatpush1.bf16.msra.mxu0 0
      %7381 = vmatprep.subr.bf16.mxu0 0
      %7382 = vmatpush1.bf16.msra.mxu0 0
      %7383 = vmatprep.subr.bf16.mxu0 0
      %7384 = vmatpush1.bf16.msra.mxu0 0
      %7385 = vmatprep.subr.bf16.mxu0 0
      %7386 = vmatpush1.bf16.msra.mxu0 0
      %7387 = vmatprep.subr.bf16.mxu0 0
      %7388 = vmatpush1.bf16.msra.mxu0 0
      %7389 = vmatprep.mubr.bf16.mxu0 0
      %7390 = vmatmul.mubr.bf16.gmra.mrb[0].mxu0 %v7310
      %v7391 = vpop.f32.mrb[0].mxu0
      %v7392 = vadd.f32 0.0, %v7391
      %v7393 = vpop.f32.mrb[0].mxu0
      %v7394 = vpop.f32.mrb[0].mxu0
      %v7395 = vadd.f32 0.0, %v7394
      %v7396 = vpop.f32.mrb[0].mxu0
      %7397 = vmatprep.mubr.bf16.mxu0 0
      %7398 = vmatmul.mubr.bf16.gmra.mrb[0].mxu0 %v7313
      %v7399 = vpop.f32.mrb[0].mxu0
      %v7400 = vadd.f32 0.0, %v7399
      %v7401 = vpop.f32.mrb[0].mxu0
      %v7402 = vpop.f32.mrb[0].mxu0
      %v7403 = vadd.f32 0.0, %v7402
      %v7404 = vpop.f32.mrb[0].mxu0
      %7405 = vmatprep.mubr.bf16.mxu0 0
      %7406 = vmatmul.mubr.bf16.gmra.mrb[0].mxu0 %v7316
      %v7407 = vpop.f32.mrb[0].mxu0
      %v7408 = vadd.f32 0.0, %v7407
      %v7409 = vpop.f32.mrb[0].mxu0
      %v7410 = vpop.f32.mrb[0].mxu0
      %v7411 = vadd.f32 0.0, %v7410
      %v7412 = vpop.f32.mrb[0].mxu0
      %7413 = vmatprep.mubr.bf16.mxu0 0
      %7414 = vmatmul.mubr.bf16.gmra.mrb[0].mxu0 %v7319
      %v7415 = vpop.f32.mrb[0].mxu0
      %v7416 = vadd.f32 0.0, %v7415
      %v7417 = vpop.f32.mrb[0].mxu0
      %v7418 = vpop.f32.mrb[0].mxu0
      %v7419 = vadd.f32 0.0, %v7418
      %v7420 = vpop.f32.mrb[0].mxu0
      %7421 = vmatprep.mubr.bf16.mxu0 0
      %7422 = vmatmul.mubr.bf16.gmra.mrb[0].mxu0 %v7322
      %v7423 = vpop.f32.mrb[0].mxu0
      %v7424 = vadd.f32 0.0, %v7423
      %v7425 = vpop.f32.mrb[0].mxu0
      %v7426 = vpop.f32.mrb[0].mxu0
      %v7427 = vadd.f32 0.0, %v7426
      %v7428 = vpop.f32.mrb[0].mxu0
      %7429 = vmatprep.mubr.bf16.mxu0 0
      %7430 = vmatmul.mubr.bf16.gmra.mrb[0].mxu0 %v7325
      %v7431 = vpop.f32.mrb[0].mxu0
      %v7432 = vadd.f32 0.0, %v7431
      %v7433 = vpop.f32.mrb[0].mxu0
      %v7434 = vpop.f32.mrb[0].mxu0
      %v7435 = vadd.f32 0.0, %v7434
      %v7436 = vpop.f32.mrb[0].mxu0
      %7437 = vmatprep.mubr.bf16.mxu0 0
      %7438 = vmatmul.mubr.bf16.gmra.mrb[0].mxu0 %v7328
      %v7439 = vpop.f32.mrb[0].mxu0
      %v7440 = vadd.f32 0.0, %v7439
      %v7441 = vpop.f32.mrb[0].mxu0
      %v7442 = vpop.f32.mrb[0].mxu0
      %v7443 = vadd.f32 0.0, %v7442
      %v7444 = vpop.f32.mrb[0].mxu0
      %7445 = vmatprep.mubr.bf16.mxu0 0
      %7446 = vmatmul.mubr.bf16.gmra.mrb[0].mxu0 %v7331
      %v7447 = vpop.f32.mrb[0].mxu0
      %v7448 = vadd.f32 0.0, %v7447
      %v7449 = vpop.f32.mrb[0].mxu0
      %v7450 = vpop.f32.mrb[0].mxu0
      %v7451 = vadd.f32 0.0, %v7450
      %v7452 = vpop.f32.mrb[0].mxu0
      %7453 = vmatprep.mubr.bf16.mxu0 0
      %7454 = vmatmul.mubr.bf16.gmra.mrb[0].mxu0 %v7334
      %v7455 = vpop.f32.mrb[0].mxu0
      %v7456 = vadd.f32 0.0, %v7455
      %v7457 = vpop.f32.mrb[0].mxu0
      %v7458 = vpop.f32.mrb[0].mxu0
      %v7459 = vadd.f32 0.0, %v7458
      %v7460 = vpop.f32.mrb[0].mxu0
      %7461 = vmatprep.mubr.bf16.mxu0 0
      %7462 = vmatmul.mubr.bf16.gmra.mrb[0].mxu0 %v7337
      %v7463 = vpop.f32.mrb[0].mxu0
      %v7464 = vadd.f32 0.0, %v7463
      %v7465 = vpop.f32.mrb[0].mxu0
      %v7466 = vpop.f32.mrb[0].mxu0
      %v7467 = vadd.f32 0.0, %v7466
      %v7468 = vpop.f32.mrb[0].mxu0
      %7469 = vmatprep.mubr.bf16.mxu0 0
      %7470 = vmatmul.mubr.bf16.gmra.mrb[0].mxu0 %v7340
      %v7471 = vpop.f32.mrb[0].mxu0
      %v7472 = vadd.f32 0.0, %v7471
      %v7473 = vpop.f32.mrb[0].mxu0
      %v7474 = vpop.f32.mrb[0].mxu0
      %v7475 = vadd.f32 0.0, %v7474
      %v7476 = vpop.f32.mrb[0].mxu0
      %7477 = vmatprep.mubr.bf16.mxu0 0
      %7478 = vmatmul.mubr.bf16.gmra.mrb[0].mxu0 %v7343
      %v7479 = vpop.f32.mrb[0].mxu0
      %v7480 = vadd.f32 0.0, %v7479
      %v7481 = vpop.f32.mrb[0].mxu0
      %v7482 = vpop.f32.mrb[0].mxu0
      %v7483 = vadd.f32 0.0, %v7482
      %v7484 = vpop.f32.mrb[0].mxu0
      %7485 = vmatprep.mubr.bf16.mxu0 0
      %7486 = vmatmul.mubr.bf16.gmra.mrb[0].mxu0 %v7346
      %v7487 = vpop.f32.mrb[0].mxu0
      %v7488 = vadd.f32 0.0, %v7487
      %v7489 = vpop.f32.mrb[0].mxu0
      %v7490 = vpop.f32.mrb[0].mxu0
      %v7491 = vadd.f32 0.0, %v7490
      %v7492 = vpop.f32.mrb[0].mxu0
      %7493 = vmatprep.mubr.bf16.mxu0 0
      %7494 = vmatmul.mubr.bf16.gmra.mrb[0].mxu0 %v7349
      %v7495 = vpop.f32.mrb[0].mxu0
      %v7496 = vadd.f32 0.0, %v7495
      %v7497 = vpop.f32.mrb[0].mxu0
      %v7498 = vpop.f32.mrb[0].mxu0
      %v7499 = vadd.f32 0.0, %v7498
      %v7500 = vpop.f32.mrb[0].mxu0
      %7501 = vmatprep.mubr.bf16.mxu0 0
      %7502 = vmatmul.mubr.bf16.gmra.mrb[0].mxu0 %v7352
      %v7503 = vpop.f32.mrb[0].mxu0
      %v7504 = vadd.f32 0.0, %v7503
      %v7505 = vpop.f32.mrb[0].mxu0
      %v7506 = vpop.f32.mrb[0].mxu0
      %v7507 = vadd.f32 0.0, %v7506
      %v7508 = vpop.f32.mrb[0].mxu0
      %7509 = vmatprep.mubr.bf16.mxu0 0
      %7510 = vmatmul.mubr.bf16.gmra.mrb[0].mxu0 %v7355
      %v7511 = vpop.f32.mrb[0].mxu0
      %v7512 = vadd.f32 0.0, %v7511
      %v7513 = vpop.f32.mrb[0].mxu0
      %v7514 = vpop.f32.mrb[0].mxu0
      %v7515 = vadd.f32 0.0, %v7514
      %v7516 = vpop.f32.mrb[0].mxu0
      %7517 = vdwg.mxu0
      %v7518 = vld [vmem:[%s231] sm:$0xff]
      %v7519 = vld [vmem:[%s231 + $0x8] sm:$0xff]
      %v7520 = vld [vmem:[%s231 + $0x10] sm:$0xff]
      %v7521 = vld [vmem:[%s231 + $0x18] sm:$0xff]
      %v7522 = vld [vmem:[%s231 + $0x20] sm:$0xff]
      %v7523 = vld [vmem:[%s231 + $0x28] sm:$0xff]
      %v7524 = vld [vmem:[%s231 + $0x30] sm:$0xff]
      %v7525 = vld [vmem:[%s231 + $0x38] sm:$0xff]
      %v7526 = vld [vmem:[%s231 + $0x40] sm:$0xff]
      %v7527 = vld [vmem:[%s231 + $0x48] sm:$0xff]
      %v7528 = vld [vmem:[%s231 + $0x50] sm:$0xff]
      %v7529 = vld [vmem:[%s231 + $0x58] sm:$0xff]
      %v7530 = vld [vmem:[%s231 + $0x60] sm:$0xff]
      %v7531 = vld [vmem:[%s231 + $0x68] sm:$0xff]
      %v7532 = vld [vmem:[%s231 + $0x70] sm:$0xff]
      %v7533 = vld [vmem:[%s231 + $0x78] sm:$0xff]
      %v7534 = vld [vmem:[%s231 + $0x80] sm:$0xff]
      %v7535 = vld [vmem:[%s231 + $0x88] sm:$0xff]
      %v7536 = vld [vmem:[%s231 + $0x90] sm:$0xff]
      %v7537 = vld [vmem:[%s231 + $0x98] sm:$0xff]
      %v7538 = vld [vmem:[%s231 + $0xa0] sm:$0xff]
      %v7539 = vld [vmem:[%s231 + $0xa8] sm:$0xff]
      %v7540 = vld [vmem:[%s231 + $0xb0] sm:$0xff]
      %v7541 = vld [vmem:[%s231 + $0xb8] sm:$0xff]
      %v7542 = vld [vmem:[%s231 + $0xc0] sm:$0xff]
      %v7543 = vld [vmem:[%s231 + $0xc8] sm:$0xff]
      %v7544 = vld [vmem:[%s231 + $0xd0] sm:$0xff]
      %v7545 = vld [vmem:[%s231 + $0xd8] sm:$0xff]
      %v7546 = vld [vmem:[%s231 + $0xe0] sm:$0xff]
      %v7547 = vld [vmem:[%s231 + $0xe8] sm:$0xff]
      %v7548 = vld [vmem:[%s231 + $0xf0] sm:$0xff]
      %v7549 = vld [vmem:[%s231 + $0xf8] sm:$0xff]
      %v7550 = vadd.f32 %v7518, %v7392
      %v7551 = vadd.f32 %v7519, %v7395
      %v7552 = vadd.f32 %v7520, %v7400
      %v7553 = vadd.f32 %v7521, %v7403
      %v7554 = vadd.f32 %v7522, %v7408
      %v7555 = vadd.f32 %v7523, %v7411
      %v7556 = vadd.f32 %v7524, %v7416
      %v7557 = vadd.f32 %v7525, %v7419
      %v7558 = vadd.f32 %v7526, %v7424
      %v7559 = vadd.f32 %v7527, %v7427
      %v7560 = vadd.f32 %v7528, %v7432
      %v7561 = vadd.f32 %v7529, %v7435
      %v7562 = vadd.f32 %v7530, %v7440
      %v7563 = vadd.f32 %v7531, %v7443
      %v7564 = vadd.f32 %v7532, %v7448
      %v7565 = vadd.f32 %v7533, %v7451
      %v7566 = vadd.f32 %v7534, %v7456
      %v7567 = vadd.f32 %v7535, %v7459
      %v7568 = vadd.f32 %v7536, %v7464
      %v7569 = vadd.f32 %v7537, %v7467
      %v7570 = vadd.f32 %v7538, %v7472
      %v7571 = vadd.f32 %v7539, %v7475
      %v7572 = vadd.f32 %v7540, %v7480
      %v7573 = vadd.f32 %v7541, %v7483
      %v7574 = vadd.f32 %v7542, %v7488
      %v7575 = vadd.f32 %v7543, %v7491
      %v7576 = vadd.f32 %v7544, %v7496
      %v7577 = vadd.f32 %v7545, %v7499
      %v7578 = vadd.f32 %v7546, %v7504
      %v7579 = vadd.f32 %v7547, %v7507
      %v7580 = vadd.f32 %v7548, %v7512
      %v7581 = vadd.f32 %v7549, %v7515
      %7582 = vst [vmem:[%s231] sm:$0xff] %v7550
      %7583 = vst [vmem:[%s231 + $0x8] sm:$0xff] %v7551
      %7584 = vst [vmem:[%s231 + $0x10] sm:$0xff] %v7552
      %7585 = vst [vmem:[%s231 + $0x18] sm:$0xff] %v7553
      %7586 = vst [vmem:[%s231 + $0x20] sm:$0xff] %v7554
      %7587 = vst [vmem:[%s231 + $0x28] sm:$0xff] %v7555
      %7588 = vst [vmem:[%s231 + $0x30] sm:$0xff] %v7556
      %7589 = vst [vmem:[%s231 + $0x38] sm:$0xff] %v7557
      %7590 = vst [vmem:[%s231 + $0x40] sm:$0xff] %v7558
      %7591 = vst [vmem:[%s231 + $0x48] sm:$0xff] %v7559
      %7592 = vst [vmem:[%s231 + $0x50] sm:$0xff] %v7560
      %7593 = vst [vmem:[%s231 + $0x58] sm:$0xff] %v7561
      %7594 = vst [vmem:[%s231 + $0x60] sm:$0xff] %v7562
      %7595 = vst [vmem:[%s231 + $0x68] sm:$0xff] %v7563
      %7596 = vst [vmem:[%s231 + $0x70] sm:$0xff] %v7564
      %7597 = vst [vmem:[%s231 + $0x78] sm:$0xff] %v7565
      %7598 = vst [vmem:[%s231 + $0x80] sm:$0xff] %v7566
      %7599 = vst [vmem:[%s231 + $0x88] sm:$0xff] %v7567
      %7600 = vst [vmem:[%s231 + $0x90] sm:$0xff] %v7568
      %7601 = vst [vmem:[%s231 + $0x98] sm:$0xff] %v7569
      %7602 = vst [vmem:[%s231 + $0xa0] sm:$0xff] %v7570
      %7603 = vst [vmem:[%s231 + $0xa8] sm:$0xff] %v7571
      %7604 = vst [vmem:[%s231 + $0xb0] sm:$0xff] %v7572
      %7605 = vst [vmem:[%s231 + $0xb8] sm:$0xff] %v7573
      %7606 = vst [vmem:[%s231 + $0xc0] sm:$0xff] %v7574
      %7607 = vst [vmem:[%s231 + $0xc8] sm:$0xff] %v7575
      %7608 = vst [vmem:[%s231 + $0xd0] sm:$0xff] %v7576
      %7609 = vst [vmem:[%s231 + $0xd8] sm:$0xff] %v7577
      %7610 = vst [vmem:[%s231 + $0xe0] sm:$0xff] %v7578
      %7611 = vst [vmem:[%s231 + $0xe8] sm:$0xff] %v7579
      %7612 = vst [vmem:[%s231 + $0xf0] sm:$0xff] %v7580
      %7613 = vst [vmem:[%s231 + $0xf8] sm:$0xff] %v7581
      %v7614 = vld [vmem:[%s6873 + $0x2] sm:$0xff]
      %v7615 = vld [vmem:[%s6873 + $0x12] sm:$0xff]
      %v7616 = vld [vmem:[%s6873 + $0x22] sm:$0xff]
      %v7617 = vld [vmem:[%s6873 + $0x32] sm:$0xff]
      %v7618 = vld [vmem:[%s6873 + $0x42] sm:$0xff]
      %v7619 = vld [vmem:[%s6873 + $0x52] sm:$0xff]
      %v7620 = vld [vmem:[%s6873 + $0x62] sm:$0xff]
      %v7621 = vld [vmem:[%s6873 + $0x72] sm:$0xff]
      %v7622 = vld [vmem:[%s6873 + $0xc2] sm:$0xff]
      %v7623 = vld [vmem:[%s6873 + $0xd2] sm:$0xff]
      %v7624 = vld [vmem:[%s6873 + $0xe2] sm:$0xff]
      %v7625 = vld [vmem:[%s6873 + $0xf2] sm:$0xff]
      %v7626 = vld [vmem:[%s6873 + $0x102] sm:$0xff]
      %v7627 = vld [vmem:[%s6873 + $0x112] sm:$0xff]
      %v7628 = vld [vmem:[%s6873 + $0x122] sm:$0xff]
      %v7629 = vld [vmem:[%s6873 + $0x132] sm:$0xff]
      %v7630 = vld [vmem:[%s6873 + $0x182] sm:$0xff]
      %v7631 = vld [vmem:[%s6873 + $0x192] sm:$0xff]
      %v7632 = vld [vmem:[%s6873 + $0x1a2] sm:$0xff]
      %v7633 = vld [vmem:[%s6873 + $0x1b2] sm:$0xff]
      %v7634 = vld [vmem:[%s6873 + $0x1c2] sm:$0xff]
      %v7635 = vld [vmem:[%s6873 + $0x1d2] sm:$0xff]
      %v7636 = vld [vmem:[%s6873 + $0x1e2] sm:$0xff]
      %v7637 = vld [vmem:[%s6873 + $0x1f2] sm:$0xff]
      %v7638 = vld [vmem:[%s6873 + $0x242] sm:$0xff]
      %v7639 = vld [vmem:[%s6873 + $0x252] sm:$0xff]
      %v7640 = vld [vmem:[%s6873 + $0x262] sm:$0xff]
      %v7641 = vld [vmem:[%s6873 + $0x272] sm:$0xff]
      %v7642 = vld [vmem:[%s6873 + $0x282] sm:$0xff]
      %v7643 = vld [vmem:[%s6873 + $0x292] sm:$0xff]
      %v7644 = vld [vmem:[%s6873 + $0x2a2] sm:$0xff]
      %v7645 = vld [vmem:[%s6873 + $0x2b2] sm:$0xff]
      %v7646 = vpack.c.bf16 %v7615, %v7614
      %v7647 = vpack.c.bf16 %v7617, %v7616
      %v7648 = vpack.c.bf16 %v7619, %v7618
      %v7649 = vpack.c.bf16 %v7621, %v7620
      %v7650 = vpack.c.bf16 %v7623, %v7622
      %v7651 = vpack.c.bf16 %v7625, %v7624
      %v7652 = vpack.c.bf16 %v7627, %v7626
      %v7653 = vpack.c.bf16 %v7629, %v7628
      %v7654 = vpack.c.bf16 %v7631, %v7630
      %v7655 = vpack.c.bf16 %v7633, %v7632
      %v7656 = vpack.c.bf16 %v7635, %v7634
      %v7657 = vpack.c.bf16 %v7637, %v7636
      %v7658 = vpack.c.bf16 %v7639, %v7638
      %v7659 = vpack.c.bf16 %v7641, %v7640
      %v7660 = vpack.c.bf16 %v7643, %v7642
      %v7661 = vpack.c.bf16 %v7645, %v7644
      %s7662 = scalar_lea.vmem %s3, 272
      %v7663 = vld [vmem:[%s7662] sm:$0xf]
      %v7664 = vld [vmem:[%s7662 + $0x4] sm:$0xf]
      %v7665 = vld [vmem:[%s7662 + $0x8] sm:$0xf]
      %v7666 = vld [vmem:[%s7662 + $0xc] sm:$0xf]
      %v7671 = vunpack.c.l.b16 %v7663
      %v7672 = vunpack.c.l.b16 %v7664
      %v7673 = vunpack.c.l.b16 %v7665
      %v7674 = vunpack.c.l.b16 %v7666
      %v7675 = vpack.c.b16 %v7672, %v7671
      %v7676 = vpack.c.b16 %v7674, %v7673
      %v7680 = vsel %vm593, %v7646, 0
      %v7683 = vsel %vm593, %v7647, 0
      %v7686 = vsel %vm593, %v7648, 0
      %v7689 = vsel %vm593, %v7649, 0
      %v7692 = vsel %vm593, %v7650, 0
      %v7695 = vsel %vm593, %v7651, 0
      %v7698 = vsel %vm593, %v7652, 0
      %v7701 = vsel %vm593, %v7653, 0
      %v7704 = vsel %vm593, %v7654, 0
      %v7707 = vsel %vm593, %v7655, 0
      %v7710 = vsel %vm593, %v7656, 0
      %v7713 = vsel %vm593, %v7657, 0
      %v7716 = vsel %vm593, %v7658, 0
      %v7719 = vsel %vm593, %v7659, 0
      %v7722 = vsel %vm593, %v7660, 0
      %v7725 = vsel %vm593, %v7661, 0
      %7727 = vmatprep.subr.bf16.mxu0 0
      %7728 = vmatpush1.bf16.msra.mxu0 %v7675
      %7729 = vmatprep.subr.bf16.mxu0 0
      %7730 = vmatpush1.bf16.msra.mxu0 %v7676
      %7731 = vmatprep.subr.bf16.mxu0 0
      %7732 = vmatpush1.bf16.msra.mxu0 0
      %7733 = vmatprep.subr.bf16.mxu0 0
      %7734 = vmatpush1.bf16.msra.mxu0 0
      %7735 = vmatprep.subr.bf16.mxu0 0
      %7736 = vmatpush1.bf16.msra.mxu0 0
      %7737 = vmatprep.subr.bf16.mxu0 0
      %7738 = vmatpush1.bf16.msra.mxu0 0
      %7739 = vmatprep.subr.bf16.mxu0 0
      %7740 = vmatpush1.bf16.msra.mxu0 0
      %7741 = vmatprep.subr.bf16.mxu0 0
      %7742 = vmatpush1.bf16.msra.mxu0 0
      %7743 = vmatprep.subr.bf16.mxu0 0
      %7744 = vmatpush1.bf16.msra.mxu0 0
      %7745 = vmatprep.subr.bf16.mxu0 0
      %7746 = vmatpush1.bf16.msra.mxu0 0
      %7747 = vmatprep.subr.bf16.mxu0 0
      %7748 = vmatpush1.bf16.msra.mxu0 0
      %7749 = vmatprep.subr.bf16.mxu0 0
      %7750 = vmatpush1.bf16.msra.mxu0 0
      %7751 = vmatprep.subr.bf16.mxu0 0
      %7752 = vmatpush1.bf16.msra.mxu0 0
      %7753 = vmatprep.subr.bf16.mxu0 0
      %7754 = vmatpush1.bf16.msra.mxu0 0
      %7755 = vmatprep.subr.bf16.mxu0 0
      %7756 = vmatpush1.bf16.msra.mxu0 0
      %7757 = vmatprep.subr.bf16.mxu0 0
      %7758 = vmatpush1.bf16.msra.mxu0 0
      %7759 = vmatprep.mubr.bf16.mxu0 0
      %7760 = vmatmul.mubr.bf16.gmra.mrb[0].mxu0 %v7680
      %v7761 = vpop.f32.mrb[0].mxu0
      %v7762 = vadd.f32 0.0, %v7761
      %v7763 = vpop.f32.mrb[0].mxu0
      %v7764 = vpop.f32.mrb[0].mxu0
      %v7765 = vadd.f32 0.0, %v7764
      %v7766 = vpop.f32.mrb[0].mxu0
      %7767 = vmatprep.mubr.bf16.mxu0 0
      %7768 = vmatmul.mubr.bf16.gmra.mrb[0].mxu0 %v7683
      %v7769 = vpop.f32.mrb[0].mxu0
      %v7770 = vadd.f32 0.0, %v7769
      %v7771 = vpop.f32.mrb[0].mxu0
      %v7772 = vpop.f32.mrb[0].mxu0
      %v7773 = vadd.f32 0.0, %v7772
      %v7774 = vpop.f32.mrb[0].mxu0
      %7775 = vmatprep.mubr.bf16.mxu0 0
      %7776 = vmatmul.mubr.bf16.gmra.mrb[0].mxu0 %v7686
      %v7777 = vpop.f32.mrb[0].mxu0
      %v7778 = vadd.f32 0.0, %v7777
      %v7779 = vpop.f32.mrb[0].mxu0
      %v7780 = vpop.f32.mrb[0].mxu0
      %v7781 = vadd.f32 0.0, %v7780
      %v7782 = vpop.f32.mrb[0].mxu0
      %7783 = vmatprep.mubr.bf16.mxu0 0
      %7784 = vmatmul.mubr.bf16.gmra.mrb[0].mxu0 %v7689
      %v7785 = vpop.f32.mrb[0].mxu0
      %v7786 = vadd.f32 0.0, %v7785
      %v7787 = vpop.f32.mrb[0].mxu0
      %v7788 = vpop.f32.mrb[0].mxu0
      %v7789 = vadd.f32 0.0, %v7788
      %v7790 = vpop.f32.mrb[0].mxu0
      %7791 = vmatprep.mubr.bf16.mxu0 0
      %7792 = vmatmul.mubr.bf16.gmra.mrb[0].mxu0 %v7692
      %v7793 = vpop.f32.mrb[0].mxu0
      %v7794 = vadd.f32 0.0, %v7793
      %v7795 = vpop.f32.mrb[0].mxu0
      %v7796 = vpop.f32.mrb[0].mxu0
      %v7797 = vadd.f32 0.0, %v7796
      %v7798 = vpop.f32.mrb[0].mxu0
      %7799 = vmatprep.mubr.bf16.mxu0 0
      %7800 = vmatmul.mubr.bf16.gmra.mrb[0].mxu0 %v7695
      %v7801 = vpop.f32.mrb[0].mxu0
      %v7802 = vadd.f32 0.0, %v7801
      %v7803 = vpop.f32.mrb[0].mxu0
      %v7804 = vpop.f32.mrb[0].mxu0
      %v7805 = vadd.f32 0.0, %v7804
      %v7806 = vpop.f32.mrb[0].mxu0
      %7807 = vmatprep.mubr.bf16.mxu0 0
      %7808 = vmatmul.mubr.bf16.gmra.mrb[0].mxu0 %v7698
      %v7809 = vpop.f32.mrb[0].mxu0
      %v7810 = vadd.f32 0.0, %v7809
      %v7811 = vpop.f32.mrb[0].mxu0
      %v7812 = vpop.f32.mrb[0].mxu0
      %v7813 = vadd.f32 0.0, %v7812
      %v7814 = vpop.f32.mrb[0].mxu0
      %7815 = vmatprep.mubr.bf16.mxu0 0
      %7816 = vmatmul.mubr.bf16.gmra.mrb[0].mxu0 %v7701
      %v7817 = vpop.f32.mrb[0].mxu0
      %v7818 = vadd.f32 0.0, %v7817
      %v7819 = vpop.f32.mrb[0].mxu0
      %v7820 = vpop.f32.mrb[0].mxu0
      %v7821 = vadd.f32 0.0, %v7820
      %v7822 = vpop.f32.mrb[0].mxu0
      %7823 = vmatprep.mubr.bf16.mxu0 0
      %7824 = vmatmul.mubr.bf16.gmra.mrb[0].mxu0 %v7704
      %v7825 = vpop.f32.mrb[0].mxu0
      %v7826 = vadd.f32 0.0, %v7825
      %v7827 = vpop.f32.mrb[0].mxu0
      %v7828 = vpop.f32.mrb[0].mxu0
      %v7829 = vadd.f32 0.0, %v7828
      %v7830 = vpop.f32.mrb[0].mxu0
      %7831 = vmatprep.mubr.bf16.mxu0 0
      %7832 = vmatmul.mubr.bf16.gmra.mrb[0].mxu0 %v7707
      %v7833 = vpop.f32.mrb[0].mxu0
      %v7834 = vadd.f32 0.0, %v7833
      %v7835 = vpop.f32.mrb[0].mxu0
      %v7836 = vpop.f32.mrb[0].mxu0
      %v7837 = vadd.f32 0.0, %v7836
      %v7838 = vpop.f32.mrb[0].mxu0
      %7839 = vmatprep.mubr.bf16.mxu0 0
      %7840 = vmatmul.mubr.bf16.gmra.mrb[0].mxu0 %v7710
      %v7841 = vpop.f32.mrb[0].mxu0
      %v7842 = vadd.f32 0.0, %v7841
      %v7843 = vpop.f32.mrb[0].mxu0
      %v7844 = vpop.f32.mrb[0].mxu0
      %v7845 = vadd.f32 0.0, %v7844
      %v7846 = vpop.f32.mrb[0].mxu0
      %7847 = vmatprep.mubr.bf16.mxu0 0
      %7848 = vmatmul.mubr.bf16.gmra.mrb[0].mxu0 %v7713
      %v7849 = vpop.f32.mrb[0].mxu0
      %v7850 = vadd.f32 0.0, %v7849
      %v7851 = vpop.f32.mrb[0].mxu0
      %v7852 = vpop.f32.mrb[0].mxu0
      %v7853 = vadd.f32 0.0, %v7852
      %v7854 = vpop.f32.mrb[0].mxu0
      %7855 = vmatprep.mubr.bf16.mxu0 0
      %7856 = vmatmul.mubr.bf16.gmra.mrb[0].mxu0 %v7716
      %v7857 = vpop.f32.mrb[0].mxu0
      %v7858 = vadd.f32 0.0, %v7857
      %v7859 = vpop.f32.mrb[0].mxu0
      %v7860 = vpop.f32.mrb[0].mxu0
      %v7861 = vadd.f32 0.0, %v7860
      %v7862 = vpop.f32.mrb[0].mxu0
      %7863 = vmatprep.mubr.bf16.mxu0 0
      %7864 = vmatmul.mubr.bf16.gmra.mrb[0].mxu0 %v7719
      %v7865 = vpop.f32.mrb[0].mxu0
      %v7866 = vadd.f32 0.0, %v7865
      %v7867 = vpop.f32.mrb[0].mxu0
      %v7868 = vpop.f32.mrb[0].mxu0
      %v7869 = vadd.f32 0.0, %v7868
      %v7870 = vpop.f32.mrb[0].mxu0
      %7871 = vmatprep.mubr.bf16.mxu0 0
      %7872 = vmatmul.mubr.bf16.gmra.mrb[0].mxu0 %v7722
      %v7873 = vpop.f32.mrb[0].mxu0
      %v7874 = vadd.f32 0.0, %v7873
      %v7875 = vpop.f32.mrb[0].mxu0
      %v7876 = vpop.f32.mrb[0].mxu0
      %v7877 = vadd.f32 0.0, %v7876
      %v7878 = vpop.f32.mrb[0].mxu0
      %7879 = vmatprep.mubr.bf16.mxu0 0
      %7880 = vmatmul.mubr.bf16.gmra.mrb[0].mxu0 %v7725
      %v7881 = vpop.f32.mrb[0].mxu0
      %v7882 = vadd.f32 0.0, %v7881
      %v7883 = vpop.f32.mrb[0].mxu0
      %v7884 = vpop.f32.mrb[0].mxu0
      %v7885 = vadd.f32 0.0, %v7884
      %v7886 = vpop.f32.mrb[0].mxu0
      %7887 = vdwg.mxu0
      %v7888 = vld [vmem:[%s231] sm:$0xff]
      %v7889 = vld [vmem:[%s231 + $0x8] sm:$0xff]
      %v7890 = vld [vmem:[%s231 + $0x10] sm:$0xff]
      %v7891 = vld [vmem:[%s231 + $0x18] sm:$0xff]
      %v7892 = vld [vmem:[%s231 + $0x20] sm:$0xff]
      %v7893 = vld [vmem:[%s231 + $0x28] sm:$0xff]
      %v7894 = vld [vmem:[%s231 + $0x30] sm:$0xff]
      %v7895 = vld [vmem:[%s231 + $0x38] sm:$0xff]
      %v7896 = vld [vmem:[%s231 + $0x40] sm:$0xff]
      %v7897 = vld [vmem:[%s231 + $0x48] sm:$0xff]
      %v7898 = vld [vmem:[%s231 + $0x50] sm:$0xff]
      %v7899 = vld [vmem:[%s231 + $0x58] sm:$0xff]
      %v7900 = vld [vmem:[%s231 + $0x60] sm:$0xff]
      %v7901 = vld [vmem:[%s231 + $0x68] sm:$0xff]
      %v7902 = vld [vmem:[%s231 + $0x70] sm:$0xff]
      %v7903 = vld [vmem:[%s231 + $0x78] sm:$0xff]
      %v7904 = vld [vmem:[%s231 + $0x80] sm:$0xff]
      %v7905 = vld [vmem:[%s231 + $0x88] sm:$0xff]
      %v7906 = vld [vmem:[%s231 + $0x90] sm:$0xff]
      %v7907 = vld [vmem:[%s231 + $0x98] sm:$0xff]
      %v7908 = vld [vmem:[%s231 + $0xa0] sm:$0xff]
      %v7909 = vld [vmem:[%s231 + $0xa8] sm:$0xff]
      %v7910 = vld [vmem:[%s231 + $0xb0] sm:$0xff]
      %v7911 = vld [vmem:[%s231 + $0xb8] sm:$0xff]
      %v7912 = vld [vmem:[%s231 + $0xc0] sm:$0xff]
      %v7913 = vld [vmem:[%s231 + $0xc8] sm:$0xff]
      %v7914 = vld [vmem:[%s231 + $0xd0] sm:$0xff]
      %v7915 = vld [vmem:[%s231 + $0xd8] sm:$0xff]
      %v7916 = vld [vmem:[%s231 + $0xe0] sm:$0xff]
      %v7917 = vld [vmem:[%s231 + $0xe8] sm:$0xff]
      %v7918 = vld [vmem:[%s231 + $0xf0] sm:$0xff]
      %v7919 = vld [vmem:[%s231 + $0xf8] sm:$0xff]
      %v7920 = vadd.f32 %v7888, %v7762
      %v7921 = vadd.f32 %v7889, %v7765
      %v7922 = vadd.f32 %v7890, %v7770
      %v7923 = vadd.f32 %v7891, %v7773
      %v7924 = vadd.f32 %v7892, %v7778
      %v7925 = vadd.f32 %v7893, %v7781
      %v7926 = vadd.f32 %v7894, %v7786
      %v7927 = vadd.f32 %v7895, %v7789
      %v7928 = vadd.f32 %v7896, %v7794
      %v7929 = vadd.f32 %v7897, %v7797
      %v7930 = vadd.f32 %v7898, %v7802
      %v7931 = vadd.f32 %v7899, %v7805
      %v7932 = vadd.f32 %v7900, %v7810
      %v7933 = vadd.f32 %v7901, %v7813
      %v7934 = vadd.f32 %v7902, %v7818
      %v7935 = vadd.f32 %v7903, %v7821
      %v7936 = vadd.f32 %v7904, %v7826
      %v7937 = vadd.f32 %v7905, %v7829
      %v7938 = vadd.f32 %v7906, %v7834
      %v7939 = vadd.f32 %v7907, %v7837
      %v7940 = vadd.f32 %v7908, %v7842
      %v7941 = vadd.f32 %v7909, %v7845
      %v7942 = vadd.f32 %v7910, %v7850
      %v7943 = vadd.f32 %v7911, %v7853
      %v7944 = vadd.f32 %v7912, %v7858
      %v7945 = vadd.f32 %v7913, %v7861
      %v7946 = vadd.f32 %v7914, %v7866
      %v7947 = vadd.f32 %v7915, %v7869
      %v7948 = vadd.f32 %v7916, %v7874
      %v7949 = vadd.f32 %v7917, %v7877
      %v7950 = vadd.f32 %v7918, %v7882
      %v7951 = vadd.f32 %v7919, %v7885
      %7952 = vst [vmem:[%s231] sm:$0xff] %v7920
      %7953 = vst [vmem:[%s231 + $0x8] sm:$0xff] %v7921
      %7954 = vst [vmem:[%s231 + $0x10] sm:$0xff] %v7922
      %7955 = vst [vmem:[%s231 + $0x18] sm:$0xff] %v7923
      %7956 = vst [vmem:[%s231 + $0x20] sm:$0xff] %v7924
      %7957 = vst [vmem:[%s231 + $0x28] sm:$0xff] %v7925
      %7958 = vst [vmem:[%s231 + $0x30] sm:$0xff] %v7926
      %7959 = vst [vmem:[%s231 + $0x38] sm:$0xff] %v7927
      %7960 = vst [vmem:[%s231 + $0x40] sm:$0xff] %v7928
      %7961 = vst [vmem:[%s231 + $0x48] sm:$0xff] %v7929
      %7962 = vst [vmem:[%s231 + $0x50] sm:$0xff] %v7930
      %7963 = vst [vmem:[%s231 + $0x58] sm:$0xff] %v7931
      %7964 = vst [vmem:[%s231 + $0x60] sm:$0xff] %v7932
      %7965 = vst [vmem:[%s231 + $0x68] sm:$0xff] %v7933
      %7966 = vst [vmem:[%s231 + $0x70] sm:$0xff] %v7934
      %7967 = vst [vmem:[%s231 + $0x78] sm:$0xff] %v7935
      %7968 = vst [vmem:[%s231 + $0x80] sm:$0xff] %v7936
      %7969 = vst [vmem:[%s231 + $0x88] sm:$0xff] %v7937
      %7970 = vst [vmem:[%s231 + $0x90] sm:$0xff] %v7938
      %7971 = vst [vmem:[%s231 + $0x98] sm:$0xff] %v7939
      %7972 = vst [vmem:[%s231 + $0xa0] sm:$0xff] %v7940
      %7973 = vst [vmem:[%s231 + $0xa8] sm:$0xff] %v7941
      %7974 = vst [vmem:[%s231 + $0xb0] sm:$0xff] %v7942
      %7975 = vst [vmem:[%s231 + $0xb8] sm:$0xff] %v7943
      %7976 = vst [vmem:[%s231 + $0xc0] sm:$0xff] %v7944
      %7977 = vst [vmem:[%s231 + $0xc8] sm:$0xff] %v7945
      %7978 = vst [vmem:[%s231 + $0xd0] sm:$0xff] %v7946
      %7979 = vst [vmem:[%s231 + $0xd8] sm:$0xff] %v7947
      %7980 = vst [vmem:[%s231 + $0xe0] sm:$0xff] %v7948
      %7981 = vst [vmem:[%s231 + $0xe8] sm:$0xff] %v7949
      %7982 = vst [vmem:[%s231 + $0xf0] sm:$0xff] %v7950
      %7983 = vst [vmem:[%s231 + $0xf8] sm:$0xff] %v7951
      %v7984 = vld [vmem:[%s6873 + $0x3] sm:$0xff]
      %v7985 = vld [vmem:[%s6873 + $0x13] sm:$0xff]
      %v7986 = vld [vmem:[%s6873 + $0x23] sm:$0xff]
      %v7987 = vld [vmem:[%s6873 + $0x33] sm:$0xff]
      %v7988 = vld [vmem:[%s6873 + $0x43] sm:$0xff]
      %v7989 = vld [vmem:[%s6873 + $0x53] sm:$0xff]
      %v7990 = vld [vmem:[%s6873 + $0x63] sm:$0xff]
      %v7991 = vld [vmem:[%s6873 + $0x73] sm:$0xff]
      %v7992 = vld [vmem:[%s6873 + $0xc3] sm:$0xff]
      %v7993 = vld [vmem:[%s6873 + $0xd3] sm:$0xff]
      %v7994 = vld [vmem:[%s6873 + $0xe3] sm:$0xff]
      %v7995 = vld [vmem:[%s6873 + $0xf3] sm:$0xff]
      %v7996 = vld [vmem:[%s6873 + $0x103] sm:$0xff]
      %v7997 = vld [vmem:[%s6873 + $0x113] sm:$0xff]
      %v7998 = vld [vmem:[%s6873 + $0x123] sm:$0xff]
      %v7999 = vld [vmem:[%s6873 + $0x133] sm:$0xff]
      %v8000 = vld [vmem:[%s6873 + $0x183] sm:$0xff]
      %v8001 = vld [vmem:[%s6873 + $0x193] sm:$0xff]
      %v8002 = vld [vmem:[%s6873 + $0x1a3] sm:$0xff]
      %v8003 = vld [vmem:[%s6873 + $0x1b3] sm:$0xff]
      %v8004 = vld [vmem:[%s6873 + $0x1c3] sm:$0xff]
      %v8005 = vld [vmem:[%s6873 + $0x1d3] sm:$0xff]
      %v8006 = vld [vmem:[%s6873 + $0x1e3] sm:$0xff]
      %v8007 = vld [vmem:[%s6873 + $0x1f3] sm:$0xff]
      %v8008 = vld [vmem:[%s6873 + $0x243] sm:$0xff]
      %v8009 = vld [vmem:[%s6873 + $0x253] sm:$0xff]
      %v8010 = vld [vmem:[%s6873 + $0x263] sm:$0xff]
      %v8011 = vld [vmem:[%s6873 + $0x273] sm:$0xff]
      %v8012 = vld [vmem:[%s6873 + $0x283] sm:$0xff]
      %v8013 = vld [vmem:[%s6873 + $0x293] sm:$0xff]
      %v8014 = vld [vmem:[%s6873 + $0x2a3] sm:$0xff]
      %v8015 = vld [vmem:[%s6873 + $0x2b3] sm:$0xff]
      %v8016 = vpack.c.bf16 %v7985, %v7984
      %v8017 = vpack.c.bf16 %v7987, %v7986
      %v8018 = vpack.c.bf16 %v7989, %v7988
      %v8019 = vpack.c.bf16 %v7991, %v7990
      %v8020 = vpack.c.bf16 %v7993, %v7992
      %v8021 = vpack.c.bf16 %v7995, %v7994
      %v8022 = vpack.c.bf16 %v7997, %v7996
      %v8023 = vpack.c.bf16 %v7999, %v7998
      %v8024 = vpack.c.bf16 %v8001, %v8000
      %v8025 = vpack.c.bf16 %v8003, %v8002
      %v8026 = vpack.c.bf16 %v8005, %v8004
      %v8027 = vpack.c.bf16 %v8007, %v8006
      %v8028 = vpack.c.bf16 %v8009, %v8008
      %v8029 = vpack.c.bf16 %v8011, %v8010
      %v8030 = vpack.c.bf16 %v8013, %v8012
      %v8031 = vpack.c.bf16 %v8015, %v8014
      %s8032 = scalar_lea.vmem %s3, 288
      %v8033 = vld [vmem:[%s8032] sm:$0xf]
      %v8034 = vld [vmem:[%s8032 + $0x4] sm:$0xf]
      %v8035 = vld [vmem:[%s8032 + $0x8] sm:$0xf]
      %v8036 = vld [vmem:[%s8032 + $0xc] sm:$0xf]
      %v8041 = vunpack.c.l.b16 %v8033
      %v8042 = vunpack.c.l.b16 %v8034
      %v8043 = vunpack.c.l.b16 %v8035
      %v8044 = vunpack.c.l.b16 %v8036
      %v8045 = vpack.c.b16 %v8042, %v8041
      %v8046 = vpack.c.b16 %v8044, %v8043
      %v8050 = vsel %vm593, %v8016, 0
      %v8053 = vsel %vm593, %v8017, 0
      %v8056 = vsel %vm593, %v8018, 0
      %v8059 = vsel %vm593, %v8019, 0
      %v8062 = vsel %vm593, %v8020, 0
      %v8065 = vsel %vm593, %v8021, 0
      %v8068 = vsel %vm593, %v8022, 0
      %v8071 = vsel %vm593, %v8023, 0
      %v8074 = vsel %vm593, %v8024, 0
      %v8077 = vsel %vm593, %v8025, 0
      %v8080 = vsel %vm593, %v8026, 0
      %v8083 = vsel %vm593, %v8027, 0
      %v8086 = vsel %vm593, %v8028, 0
      %v8089 = vsel %vm593, %v8029, 0
      %v8092 = vsel %vm593, %v8030, 0
      %v8095 = vsel %vm593, %v8031, 0
      %8097 = vmatprep.subr.bf16.mxu0 0
      %8098 = vmatpush1.bf16.msra.mxu0 %v8045
      %8099 = vmatprep.subr.bf16.mxu0 0
      %8100 = vmatpush1.bf16.msra.mxu0 %v8046
      %8101 = vmatprep.subr.bf16.mxu0 0
      %8102 = vmatpush1.bf16.msra.mxu0 0
      %8103 = vmatprep.subr.bf16.mxu0 0
      %8104 = vmatpush1.bf16.msra.mxu0 0
      %8105 = vmatprep.subr.bf16.mxu0 0
      %8106 = vmatpush1.bf16.msra.mxu0 0
      %8107 = vmatprep.subr.bf16.mxu0 0
      %8108 = vmatpush1.bf16.msra.mxu0 0
      %8109 = vmatprep.subr.bf16.mxu0 0
      %8110 = vmatpush1.bf16.msra.mxu0 0
      %8111 = vmatprep.subr.bf16.mxu0 0
      %8112 = vmatpush1.bf16.msra.mxu0 0
      %8113 = vmatprep.subr.bf16.mxu0 0
      %8114 = vmatpush1.bf16.msra.mxu0 0
      %8115 = vmatprep.subr.bf16.mxu0 0
      %8116 = vmatpush1.bf16.msra.mxu0 0
      %8117 = vmatprep.subr.bf16.mxu0 0
      %8118 = vmatpush1.bf16.msra.mxu0 0
      %8119 = vmatprep.subr.bf16.mxu0 0
      %8120 = vmatpush1.bf16.msra.mxu0 0
      %8121 = vmatprep.subr.bf16.mxu0 0
      %8122 = vmatpush1.bf16.msra.mxu0 0
      %8123 = vmatprep.subr.bf16.mxu0 0
      %8124 = vmatpush1.bf16.msra.mxu0 0
      %8125 = vmatprep.subr.bf16.mxu0 0
      %8126 = vmatpush1.bf16.msra.mxu0 0
      %8127 = vmatprep.subr.bf16.mxu0 0
      %8128 = vmatpush1.bf16.msra.mxu0 0
      %8129 = vmatprep.mubr.bf16.mxu0 0
      %8130 = vmatmul.mubr.bf16.gmra.mrb[0].mxu0 %v8050
      %v8131 = vpop.f32.mrb[0].mxu0
      %v8132 = vadd.f32 0.0, %v8131
      %v8133 = vpop.f32.mrb[0].mxu0
      %v8134 = vpop.f32.mrb[0].mxu0
      %v8135 = vadd.f32 0.0, %v8134
      %v8136 = vpop.f32.mrb[0].mxu0
      %8137 = vmatprep.mubr.bf16.mxu0 0
      %8138 = vmatmul.mubr.bf16.gmra.mrb[0].mxu0 %v8053
      %v8139 = vpop.f32.mrb[0].mxu0
      %v8140 = vadd.f32 0.0, %v8139
      %v8141 = vpop.f32.mrb[0].mxu0
      %v8142 = vpop.f32.mrb[0].mxu0
      %v8143 = vadd.f32 0.0, %v8142
      %v8144 = vpop.f32.mrb[0].mxu0
      %8145 = vmatprep.mubr.bf16.mxu0 0
      %8146 = vmatmul.mubr.bf16.gmra.mrb[0].mxu0 %v8056
      %v8147 = vpop.f32.mrb[0].mxu0
      %v8148 = vadd.f32 0.0, %v8147
      %v8149 = vpop.f32.mrb[0].mxu0
      %v8150 = vpop.f32.mrb[0].mxu0
      %v8151 = vadd.f32 0.0, %v8150
      %v8152 = vpop.f32.mrb[0].mxu0
      %8153 = vmatprep.mubr.bf16.mxu0 0
      %8154 = vmatmul.mubr.bf16.gmra.mrb[0].mxu0 %v8059
      %v8155 = vpop.f32.mrb[0].mxu0
      %v8156 = vadd.f32 0.0, %v8155
      %v8157 = vpop.f32.mrb[0].mxu0
      %v8158 = vpop.f32.mrb[0].mxu0
      %v8159 = vadd.f32 0.0, %v8158
      %v8160 = vpop.f32.mrb[0].mxu0
      %8161 = vmatprep.mubr.bf16.mxu0 0
      %8162 = vmatmul.mubr.bf16.gmra.mrb[0].mxu0 %v8062
      %v8163 = vpop.f32.mrb[0].mxu0
      %v8164 = vadd.f32 0.0, %v8163
      %v8165 = vpop.f32.mrb[0].mxu0
      %v8166 = vpop.f32.mrb[0].mxu0
      %v8167 = vadd.f32 0.0, %v8166
      %v8168 = vpop.f32.mrb[0].mxu0
      %8169 = vmatprep.mubr.bf16.mxu0 0
      %8170 = vmatmul.mubr.bf16.gmra.mrb[0].mxu0 %v8065
      %v8171 = vpop.f32.mrb[0].mxu0
      %v8172 = vadd.f32 0.0, %v8171
      %v8173 = vpop.f32.mrb[0].mxu0
      %v8174 = vpop.f32.mrb[0].mxu0
      %v8175 = vadd.f32 0.0, %v8174
      %v8176 = vpop.f32.mrb[0].mxu0
      %8177 = vmatprep.mubr.bf16.mxu0 0
      %8178 = vmatmul.mubr.bf16.gmra.mrb[0].mxu0 %v8068
      %v8179 = vpop.f32.mrb[0].mxu0
      %v8180 = vadd.f32 0.0, %v8179
      %v8181 = vpop.f32.mrb[0].mxu0
      %v8182 = vpop.f32.mrb[0].mxu0
      %v8183 = vadd.f32 0.0, %v8182
      %v8184 = vpop.f32.mrb[0].mxu0
      %8185 = vmatprep.mubr.bf16.mxu0 0
      %8186 = vmatmul.mubr.bf16.gmra.mrb[0].mxu0 %v8071
      %v8187 = vpop.f32.mrb[0].mxu0
      %v8188 = vadd.f32 0.0, %v8187
      %v8189 = vpop.f32.mrb[0].mxu0
      %v8190 = vpop.f32.mrb[0].mxu0
      %v8191 = vadd.f32 0.0, %v8190
      %v8192 = vpop.f32.mrb[0].mxu0
      %8193 = vmatprep.mubr.bf16.mxu0 0
      %8194 = vmatmul.mubr.bf16.gmra.mrb[0].mxu0 %v8074
      %v8195 = vpop.f32.mrb[0].mxu0
      %v8196 = vadd.f32 0.0, %v8195
      %v8197 = vpop.f32.mrb[0].mxu0
      %v8198 = vpop.f32.mrb[0].mxu0
      %v8199 = vadd.f32 0.0, %v8198
      %v8200 = vpop.f32.mrb[0].mxu0
      %8201 = vmatprep.mubr.bf16.mxu0 0
      %8202 = vmatmul.mubr.bf16.gmra.mrb[0].mxu0 %v8077
      %v8203 = vpop.f32.mrb[0].mxu0
      %v8204 = vadd.f32 0.0, %v8203
      %v8205 = vpop.f32.mrb[0].mxu0
      %v8206 = vpop.f32.mrb[0].mxu0
      %v8207 = vadd.f32 0.0, %v8206
      %v8208 = vpop.f32.mrb[0].mxu0
      %8209 = vmatprep.mubr.bf16.mxu0 0
      %8210 = vmatmul.mubr.bf16.gmra.mrb[0].mxu0 %v8080
      %v8211 = vpop.f32.mrb[0].mxu0
      %v8212 = vadd.f32 0.0, %v8211
      %v8213 = vpop.f32.mrb[0].mxu0
      %v8214 = vpop.f32.mrb[0].mxu0
      %v8215 = vadd.f32 0.0, %v8214
      %v8216 = vpop.f32.mrb[0].mxu0
      %8217 = vmatprep.mubr.bf16.mxu0 0
      %8218 = vmatmul.mubr.bf16.gmra.mrb[0].mxu0 %v8083
      %v8219 = vpop.f32.mrb[0].mxu0
      %v8220 = vadd.f32 0.0, %v8219
      %v8221 = vpop.f32.mrb[0].mxu0
      %v8222 = vpop.f32.mrb[0].mxu0
      %v8223 = vadd.f32 0.0, %v8222
      %v8224 = vpop.f32.mrb[0].mxu0
      %8225 = vmatprep.mubr.bf16.mxu0 0
      %8226 = vmatmul.mubr.bf16.gmra.mrb[0].mxu0 %v8086
      %v8227 = vpop.f32.mrb[0].mxu0
      %v8228 = vadd.f32 0.0, %v8227
      %v8229 = vpop.f32.mrb[0].mxu0
      %v8230 = vpop.f32.mrb[0].mxu0
      %v8231 = vadd.f32 0.0, %v8230
      %v8232 = vpop.f32.mrb[0].mxu0
      %8233 = vmatprep.mubr.bf16.mxu0 0
      %8234 = vmatmul.mubr.bf16.gmra.mrb[0].mxu0 %v8089
      %v8235 = vpop.f32.mrb[0].mxu0
      %v8236 = vadd.f32 0.0, %v8235
      %v8237 = vpop.f32.mrb[0].mxu0
      %v8238 = vpop.f32.mrb[0].mxu0
      %v8239 = vadd.f32 0.0, %v8238
      %v8240 = vpop.f32.mrb[0].mxu0
      %8241 = vmatprep.mubr.bf16.mxu0 0
      %8242 = vmatmul.mubr.bf16.gmra.mrb[0].mxu0 %v8092
      %v8243 = vpop.f32.mrb[0].mxu0
      %v8244 = vadd.f32 0.0, %v8243
      %v8245 = vpop.f32.mrb[0].mxu0
      %v8246 = vpop.f32.mrb[0].mxu0
      %v8247 = vadd.f32 0.0, %v8246
      %v8248 = vpop.f32.mrb[0].mxu0
      %8249 = vmatprep.mubr.bf16.mxu0 0
      %8250 = vmatmul.mubr.bf16.gmra.mrb[0].mxu0 %v8095
      %v8251 = vpop.f32.mrb[0].mxu0
      %v8252 = vadd.f32 0.0, %v8251
      %v8253 = vpop.f32.mrb[0].mxu0
      %v8254 = vpop.f32.mrb[0].mxu0
      %v8255 = vadd.f32 0.0, %v8254
      %v8256 = vpop.f32.mrb[0].mxu0
      %8257 = vdwg.mxu0
      %v8258 = vld [vmem:[%s231] sm:$0xff]
      %v8259 = vld [vmem:[%s231 + $0x8] sm:$0xff]
      %v8260 = vld [vmem:[%s231 + $0x10] sm:$0xff]
      %v8261 = vld [vmem:[%s231 + $0x18] sm:$0xff]
      %v8262 = vld [vmem:[%s231 + $0x20] sm:$0xff]
      %v8263 = vld [vmem:[%s231 + $0x28] sm:$0xff]
      %v8264 = vld [vmem:[%s231 + $0x30] sm:$0xff]
      %v8265 = vld [vmem:[%s231 + $0x38] sm:$0xff]
      %v8266 = vld [vmem:[%s231 + $0x40] sm:$0xff]
      %v8267 = vld [vmem:[%s231 + $0x48] sm:$0xff]
      %v8268 = vld [vmem:[%s231 + $0x50] sm:$0xff]
      %v8269 = vld [vmem:[%s231 + $0x58] sm:$0xff]
      %v8270 = vld [vmem:[%s231 + $0x60] sm:$0xff]
      %v8271 = vld [vmem:[%s231 + $0x68] sm:$0xff]
      %v8272 = vld [vmem:[%s231 + $0x70] sm:$0xff]
      %v8273 = vld [vmem:[%s231 + $0x78] sm:$0xff]
      %v8274 = vld [vmem:[%s231 + $0x80] sm:$0xff]
      %v8275 = vld [vmem:[%s231 + $0x88] sm:$0xff]
      %v8276 = vld [vmem:[%s231 + $0x90] sm:$0xff]
      %v8277 = vld [vmem:[%s231 + $0x98] sm:$0xff]
      %v8278 = vld [vmem:[%s231 + $0xa0] sm:$0xff]
      %v8279 = vld [vmem:[%s231 + $0xa8] sm:$0xff]
      %v8280 = vld [vmem:[%s231 + $0xb0] sm:$0xff]
      %v8281 = vld [vmem:[%s231 + $0xb8] sm:$0xff]
      %v8282 = vld [vmem:[%s231 + $0xc0] sm:$0xff]
      %v8283 = vld [vmem:[%s231 + $0xc8] sm:$0xff]
      %v8284 = vld [vmem:[%s231 + $0xd0] sm:$0xff]
      %v8285 = vld [vmem:[%s231 + $0xd8] sm:$0xff]
      %v8286 = vld [vmem:[%s231 + $0xe0] sm:$0xff]
      %v8287 = vld [vmem:[%s231 + $0xe8] sm:$0xff]
      %v8288 = vld [vmem:[%s231 + $0xf0] sm:$0xff]
      %v8289 = vld [vmem:[%s231 + $0xf8] sm:$0xff]
      %v8290 = vadd.f32 %v8258, %v8132
      %v8291 = vadd.f32 %v8259, %v8135
      %v8292 = vadd.f32 %v8260, %v8140
      %v8293 = vadd.f32 %v8261, %v8143
      %v8294 = vadd.f32 %v8262, %v8148
      %v8295 = vadd.f32 %v8263, %v8151
      %v8296 = vadd.f32 %v8264, %v8156
      %v8297 = vadd.f32 %v8265, %v8159
      %v8298 = vadd.f32 %v8266, %v8164
      %v8299 = vadd.f32 %v8267, %v8167
      %v8300 = vadd.f32 %v8268, %v8172
      %v8301 = vadd.f32 %v8269, %v8175
      %v8302 = vadd.f32 %v8270, %v8180
      %v8303 = vadd.f32 %v8271, %v8183
      %v8304 = vadd.f32 %v8272, %v8188
      %v8305 = vadd.f32 %v8273, %v8191
      %v8306 = vadd.f32 %v8274, %v8196
      %v8307 = vadd.f32 %v8275, %v8199
      %v8308 = vadd.f32 %v8276, %v8204
      %v8309 = vadd.f32 %v8277, %v8207
      %v8310 = vadd.f32 %v8278, %v8212
      %v8311 = vadd.f32 %v8279, %v8215
      %v8312 = vadd.f32 %v8280, %v8220
      %v8313 = vadd.f32 %v8281, %v8223
      %v8314 = vadd.f32 %v8282, %v8228
      %v8315 = vadd.f32 %v8283, %v8231
      %v8316 = vadd.f32 %v8284, %v8236
      %v8317 = vadd.f32 %v8285, %v8239
      %v8318 = vadd.f32 %v8286, %v8244
      %v8319 = vadd.f32 %v8287, %v8247
      %v8320 = vadd.f32 %v8288, %v8252
      %v8321 = vadd.f32 %v8289, %v8255
      %8322 = vst [vmem:[%s231] sm:$0xff] %v8290
      %8323 = vst [vmem:[%s231 + $0x8] sm:$0xff] %v8291
      %8324 = vst [vmem:[%s231 + $0x10] sm:$0xff] %v8292
      %8325 = vst [vmem:[%s231 + $0x18] sm:$0xff] %v8293
      %8326 = vst [vmem:[%s231 + $0x20] sm:$0xff] %v8294
      %8327 = vst [vmem:[%s231 + $0x28] sm:$0xff] %v8295
      %8328 = vst [vmem:[%s231 + $0x30] sm:$0xff] %v8296
      %8329 = vst [vmem:[%s231 + $0x38] sm:$0xff] %v8297
      %8330 = vst [vmem:[%s231 + $0x40] sm:$0xff] %v8298
      %8331 = vst [vmem:[%s231 + $0x48] sm:$0xff] %v8299
      %8332 = vst [vmem:[%s231 + $0x50] sm:$0xff] %v8300
      %8333 = vst [vmem:[%s231 + $0x58] sm:$0xff] %v8301
      %8334 = vst [vmem:[%s231 + $0x60] sm:$0xff] %v8302
      %8335 = vst [vmem:[%s231 + $0x68] sm:$0xff] %v8303
      %8336 = vst [vmem:[%s231 + $0x70] sm:$0xff] %v8304
      %8337 = vst [vmem:[%s231 + $0x78] sm:$0xff] %v8305
      %8338 = vst [vmem:[%s231 + $0x80] sm:$0xff] %v8306
      %8339 = vst [vmem:[%s231 + $0x88] sm:$0xff] %v8307
      %8340 = vst [vmem:[%s231 + $0x90] sm:$0xff] %v8308
      %8341 = vst [vmem:[%s231 + $0x98] sm:$0xff] %v8309
      %8342 = vst [vmem:[%s231 + $0xa0] sm:$0xff] %v8310
      %8343 = vst [vmem:[%s231 + $0xa8] sm:$0xff] %v8311
      %8344 = vst [vmem:[%s231 + $0xb0] sm:$0xff] %v8312
      %8345 = vst [vmem:[%s231 + $0xb8] sm:$0xff] %v8313
      %8346 = vst [vmem:[%s231 + $0xc0] sm:$0xff] %v8314
      %8347 = vst [vmem:[%s231 + $0xc8] sm:$0xff] %v8315
      %8348 = vst [vmem:[%s231 + $0xd0] sm:$0xff] %v8316
      %8349 = vst [vmem:[%s231 + $0xd8] sm:$0xff] %v8317
      %8350 = vst [vmem:[%s231 + $0xe0] sm:$0xff] %v8318
      %8351 = vst [vmem:[%s231 + $0xe8] sm:$0xff] %v8319
      %8352 = vst [vmem:[%s231 + $0xf0] sm:$0xff] %v8320
      %8353 = vst [vmem:[%s231 + $0xf8] sm:$0xff] %v8321
      %v8354 = vld [vmem:[%s6873 + $0x4] sm:$0xff]
      %v8355 = vld [vmem:[%s6873 + $0x14] sm:$0xff]
      %v8356 = vld [vmem:[%s6873 + $0x24] sm:$0xff]
      %v8357 = vld [vmem:[%s6873 + $0x34] sm:$0xff]
      %v8358 = vld [vmem:[%s6873 + $0x44] sm:$0xff]
      %v8359 = vld [vmem:[%s6873 + $0x54] sm:$0xff]
      %v8360 = vld [vmem:[%s6873 + $0x64] sm:$0xff]
      %v8361 = vld [vmem:[%s6873 + $0x74] sm:$0xff]
      %v8362 = vld [vmem:[%s6873 + $0xc4] sm:$0xff]
      %v8363 = vld [vmem:[%s6873 + $0xd4] sm:$0xff]
      %v8364 = vld [vmem:[%s6873 + $0xe4] sm:$0xff]
      %v8365 = vld [vmem:[%s6873 + $0xf4] sm:$0xff]
      %v8366 = vld [vmem:[%s6873 + $0x104] sm:$0xff]
      %v8367 = vld [vmem:[%s6873 + $0x114] sm:$0xff]
      %v8368 = vld [vmem:[%s6873 + $0x124] sm:$0xff]
      %v8369 = vld [vmem:[%s6873 + $0x134] sm:$0xff]
      %v8370 = vld [vmem:[%s6873 + $0x184] sm:$0xff]
      %v8371 = vld [vmem:[%s6873 + $0x194] sm:$0xff]
      %v8372 = vld [vmem:[%s6873 + $0x1a4] sm:$0xff]
      %v8373 = vld [vmem:[%s6873 + $0x1b4] sm:$0xff]
      %v8374 = vld [vmem:[%s6873 + $0x1c4] sm:$0xff]
      %v8375 = vld [vmem:[%s6873 + $0x1d4] sm:$0xff]
      %v8376 = vld [vmem:[%s6873 + $0x1e4] sm:$0xff]
      %v8377 = vld [vmem:[%s6873 + $0x1f4] sm:$0xff]
      %v8378 = vld [vmem:[%s6873 + $0x244] sm:$0xff]
      %v8379 = vld [vmem:[%s6873 + $0x254] sm:$0xff]
      %v8380 = vld [vmem:[%s6873 + $0x264] sm:$0xff]
      %v8381 = vld [vmem:[%s6873 + $0x274] sm:$0xff]
      %v8382 = vld [vmem:[%s6873 + $0x284] sm:$0xff]
      %v8383 = vld [vmem:[%s6873 + $0x294] sm:$0xff]
      %v8384 = vld [vmem:[%s6873 + $0x2a4] sm:$0xff]
      %v8385 = vld [vmem:[%s6873 + $0x2b4] sm:$0xff]
      %v8386 = vpack.c.bf16 %v8355, %v8354
      %v8387 = vpack.c.bf16 %v8357, %v8356
      %v8388 = vpack.c.bf16 %v8359, %v8358
      %v8389 = vpack.c.bf16 %v8361, %v8360
      %v8390 = vpack.c.bf16 %v8363, %v8362
      %v8391 = vpack.c.bf16 %v8365, %v8364
      %v8392 = vpack.c.bf16 %v8367, %v8366
      %v8393 = vpack.c.bf16 %v8369, %v8368
      %v8394 = vpack.c.bf16 %v8371, %v8370
      %v8395 = vpack.c.bf16 %v8373, %v8372
      %v8396 = vpack.c.bf16 %v8375, %v8374
      %v8397 = vpack.c.bf16 %v8377, %v8376
      %v8398 = vpack.c.bf16 %v8379, %v8378
      %v8399 = vpack.c.bf16 %v8381, %v8380
      %v8400 = vpack.c.bf16 %v8383, %v8382
      %v8401 = vpack.c.bf16 %v8385, %v8384
      %s8402 = scalar_lea.vmem %s3, 304
      %v8403 = vld [vmem:[%s8402] sm:$0xf]
      %v8404 = vld [vmem:[%s8402 + $0x4] sm:$0xf]
      %v8405 = vld [vmem:[%s8402 + $0x8] sm:$0xf]
      %v8406 = vld [vmem:[%s8402 + $0xc] sm:$0xf]
      %v8411 = vunpack.c.l.b16 %v8403
      %v8412 = vunpack.c.l.b16 %v8404
      %v8413 = vunpack.c.l.b16 %v8405
      %v8414 = vunpack.c.l.b16 %v8406
      %v8415 = vpack.c.b16 %v8412, %v8411
      %v8416 = vpack.c.b16 %v8414, %v8413
      %v8420 = vsel %vm593, %v8386, 0
      %v8423 = vsel %vm593, %v8387, 0
      %v8426 = vsel %vm593, %v8388, 0
      %v8429 = vsel %vm593, %v8389, 0
      %v8432 = vsel %vm593, %v8390, 0
      %v8435 = vsel %vm593, %v8391, 0
      %v8438 = vsel %vm593, %v8392, 0
      %v8441 = vsel %vm593, %v8393, 0
      %v8444 = vsel %vm593, %v8394, 0
      %v8447 = vsel %vm593, %v8395, 0
      %v8450 = vsel %vm593, %v8396, 0
      %v8453 = vsel %vm593, %v8397, 0
      %v8456 = vsel %vm593, %v8398, 0
      %v8459 = vsel %vm593, %v8399, 0
      %v8462 = vsel %vm593, %v8400, 0
      %v8465 = vsel %vm593, %v8401, 0
      %8467 = vmatprep.subr.bf16.mxu0 0
      %8468 = vmatpush1.bf16.msra.mxu0 %v8415
      %8469 = vmatprep.subr.bf16.mxu0 0
      %8470 = vmatpush1.bf16.msra.mxu0 %v8416
      %8471 = vmatprep.subr.bf16.mxu0 0
      %8472 = vmatpush1.bf16.msra.mxu0 0
      %8473 = vmatprep.subr.bf16.mxu0 0
      %8474 = vmatpush1.bf16.msra.mxu0 0
      %8475 = vmatprep.subr.bf16.mxu0 0
      %8476 = vmatpush1.bf16.msra.mxu0 0
      %8477 = vmatprep.subr.bf16.mxu0 0
      %8478 = vmatpush1.bf16.msra.mxu0 0
      %8479 = vmatprep.subr.bf16.mxu0 0
      %8480 = vmatpush1.bf16.msra.mxu0 0
      %8481 = vmatprep.subr.bf16.mxu0 0
      %8482 = vmatpush1.bf16.msra.mxu0 0
      %8483 = vmatprep.subr.bf16.mxu0 0
      %8484 = vmatpush1.bf16.msra.mxu0 0
      %8485 = vmatprep.subr.bf16.mxu0 0
      %8486 = vmatpush1.bf16.msra.mxu0 0
      %8487 = vmatprep.subr.bf16.mxu0 0
      %8488 = vmatpush1.bf16.msra.mxu0 0
      %8489 = vmatprep.subr.bf16.mxu0 0
      %8490 = vmatpush1.bf16.msra.mxu0 0
      %8491 = vmatprep.subr.bf16.mxu0 0
      %8492 = vmatpush1.bf16.msra.mxu0 0
      %8493 = vmatprep.subr.bf16.mxu0 0
      %8494 = vmatpush1.bf16.msra.mxu0 0
      %8495 = vmatprep.subr.bf16.mxu0 0
      %8496 = vmatpush1.bf16.msra.mxu0 0
      %8497 = vmatprep.subr.bf16.mxu0 0
      %8498 = vmatpush1.bf16.msra.mxu0 0
      %8499 = vmatprep.mubr.bf16.mxu0 0
      %8500 = vmatmul.mubr.bf16.gmra.mrb[0].mxu0 %v8420
      %v8501 = vpop.f32.mrb[0].mxu0
      %v8502 = vadd.f32 0.0, %v8501
      %v8503 = vpop.f32.mrb[0].mxu0
      %v8504 = vpop.f32.mrb[0].mxu0
      %v8505 = vadd.f32 0.0, %v8504
      %v8506 = vpop.f32.mrb[0].mxu0
      %8507 = vmatprep.mubr.bf16.mxu0 0
      %8508 = vmatmul.mubr.bf16.gmra.mrb[0].mxu0 %v8423
      %v8509 = vpop.f32.mrb[0].mxu0
      %v8510 = vadd.f32 0.0, %v8509
      %v8511 = vpop.f32.mrb[0].mxu0
      %v8512 = vpop.f32.mrb[0].mxu0
      %v8513 = vadd.f32 0.0, %v8512
      %v8514 = vpop.f32.mrb[0].mxu0
      %8515 = vmatprep.mubr.bf16.mxu0 0
      %8516 = vmatmul.mubr.bf16.gmra.mrb[0].mxu0 %v8426
      %v8517 = vpop.f32.mrb[0].mxu0
      %v8518 = vadd.f32 0.0, %v8517
      %v8519 = vpop.f32.mrb[0].mxu0
      %v8520 = vpop.f32.mrb[0].mxu0
      %v8521 = vadd.f32 0.0, %v8520
      %v8522 = vpop.f32.mrb[0].mxu0
      %8523 = vmatprep.mubr.bf16.mxu0 0
      %8524 = vmatmul.mubr.bf16.gmra.mrb[0].mxu0 %v8429
      %v8525 = vpop.f32.mrb[0].mxu0
      %v8526 = vadd.f32 0.0, %v8525
      %v8527 = vpop.f32.mrb[0].mxu0
      %v8528 = vpop.f32.mrb[0].mxu0
      %v8529 = vadd.f32 0.0, %v8528
      %v8530 = vpop.f32.mrb[0].mxu0
      %8531 = vmatprep.mubr.bf16.mxu0 0
      %8532 = vmatmul.mubr.bf16.gmra.mrb[0].mxu0 %v8432
      %v8533 = vpop.f32.mrb[0].mxu0
      %v8534 = vadd.f32 0.0, %v8533
      %v8535 = vpop.f32.mrb[0].mxu0
      %v8536 = vpop.f32.mrb[0].mxu0
      %v8537 = vadd.f32 0.0, %v8536
      %v8538 = vpop.f32.mrb[0].mxu0
      %8539 = vmatprep.mubr.bf16.mxu0 0
      %8540 = vmatmul.mubr.bf16.gmra.mrb[0].mxu0 %v8435
      %v8541 = vpop.f32.mrb[0].mxu0
      %v8542 = vadd.f32 0.0, %v8541
      %v8543 = vpop.f32.mrb[0].mxu0
      %v8544 = vpop.f32.mrb[0].mxu0
      %v8545 = vadd.f32 0.0, %v8544
      %v8546 = vpop.f32.mrb[0].mxu0
      %8547 = vmatprep.mubr.bf16.mxu0 0
      %8548 = vmatmul.mubr.bf16.gmra.mrb[0].mxu0 %v8438
      %v8549 = vpop.f32.mrb[0].mxu0
      %v8550 = vadd.f32 0.0, %v8549
      %v8551 = vpop.f32.mrb[0].mxu0
      %v8552 = vpop.f32.mrb[0].mxu0
      %v8553 = vadd.f32 0.0, %v8552
      %v8554 = vpop.f32.mrb[0].mxu0
      %8555 = vmatprep.mubr.bf16.mxu0 0
      %8556 = vmatmul.mubr.bf16.gmra.mrb[0].mxu0 %v8441
      %v8557 = vpop.f32.mrb[0].mxu0
      %v8558 = vadd.f32 0.0, %v8557
      %v8559 = vpop.f32.mrb[0].mxu0
      %v8560 = vpop.f32.mrb[0].mxu0
      %v8561 = vadd.f32 0.0, %v8560
      %v8562 = vpop.f32.mrb[0].mxu0
      %8563 = vmatprep.mubr.bf16.mxu0 0
      %8564 = vmatmul.mubr.bf16.gmra.mrb[0].mxu0 %v8444
      %v8565 = vpop.f32.mrb[0].mxu0
      %v8566 = vadd.f32 0.0, %v8565
      %v8567 = vpop.f32.mrb[0].mxu0
      %v8568 = vpop.f32.mrb[0].mxu0
      %v8569 = vadd.f32 0.0, %v8568
      %v8570 = vpop.f32.mrb[0].mxu0
      %8571 = vmatprep.mubr.bf16.mxu0 0
      %8572 = vmatmul.mubr.bf16.gmra.mrb[0].mxu0 %v8447
      %v8573 = vpop.f32.mrb[0].mxu0
      %v8574 = vadd.f32 0.0, %v8573
      %v8575 = vpop.f32.mrb[0].mxu0
      %v8576 = vpop.f32.mrb[0].mxu0
      %v8577 = vadd.f32 0.0, %v8576
      %v8578 = vpop.f32.mrb[0].mxu0
      %8579 = vmatprep.mubr.bf16.mxu0 0
      %8580 = vmatmul.mubr.bf16.gmra.mrb[0].mxu0 %v8450
      %v8581 = vpop.f32.mrb[0].mxu0
      %v8582 = vadd.f32 0.0, %v8581
      %v8583 = vpop.f32.mrb[0].mxu0
      %v8584 = vpop.f32.mrb[0].mxu0
      %v8585 = vadd.f32 0.0, %v8584
      %v8586 = vpop.f32.mrb[0].mxu0
      %8587 = vmatprep.mubr.bf16.mxu0 0
      %8588 = vmatmul.mubr.bf16.gmra.mrb[0].mxu0 %v8453
      %v8589 = vpop.f32.mrb[0].mxu0
      %v8590 = vadd.f32 0.0, %v8589
      %v8591 = vpop.f32.mrb[0].mxu0
      %v8592 = vpop.f32.mrb[0].mxu0
      %v8593 = vadd.f32 0.0, %v8592
      %v8594 = vpop.f32.mrb[0].mxu0
      %8595 = vmatprep.mubr.bf16.mxu0 0
      %8596 = vmatmul.mubr.bf16.gmra.mrb[0].mxu0 %v8456
      %v8597 = vpop.f32.mrb[0].mxu0
      %v8598 = vadd.f32 0.0, %v8597
      %v8599 = vpop.f32.mrb[0].mxu0
      %v8600 = vpop.f32.mrb[0].mxu0
      %v8601 = vadd.f32 0.0, %v8600
      %v8602 = vpop.f32.mrb[0].mxu0
      %8603 = vmatprep.mubr.bf16.mxu0 0
      %8604 = vmatmul.mubr.bf16.gmra.mrb[0].mxu0 %v8459
      %v8605 = vpop.f32.mrb[0].mxu0
      %v8606 = vadd.f32 0.0, %v8605
      %v8607 = vpop.f32.mrb[0].mxu0
      %v8608 = vpop.f32.mrb[0].mxu0
      %v8609 = vadd.f32 0.0, %v8608
      %v8610 = vpop.f32.mrb[0].mxu0
      %8611 = vmatprep.mubr.bf16.mxu0 0
      %8612 = vmatmul.mubr.bf16.gmra.mrb[0].mxu0 %v8462
      %v8613 = vpop.f32.mrb[0].mxu0
      %v8614 = vadd.f32 0.0, %v8613
      %v8615 = vpop.f32.mrb[0].mxu0
      %v8616 = vpop.f32.mrb[0].mxu0
      %v8617 = vadd.f32 0.0, %v8616
      %v8618 = vpop.f32.mrb[0].mxu0
      %8619 = vmatprep.mubr.bf16.mxu0 0
      %8620 = vmatmul.mubr.bf16.gmra.mrb[0].mxu0 %v8465
      %v8621 = vpop.f32.mrb[0].mxu0
      %v8622 = vadd.f32 0.0, %v8621
      %v8623 = vpop.f32.mrb[0].mxu0
      %v8624 = vpop.f32.mrb[0].mxu0
      %v8625 = vadd.f32 0.0, %v8624
      %v8626 = vpop.f32.mrb[0].mxu0
      %8627 = vdwg.mxu0
      %v8628 = vld [vmem:[%s231] sm:$0xff]
      %v8629 = vld [vmem:[%s231 + $0x8] sm:$0xff]
      %v8630 = vld [vmem:[%s231 + $0x10] sm:$0xff]
      %v8631 = vld [vmem:[%s231 + $0x18] sm:$0xff]
      %v8632 = vld [vmem:[%s231 + $0x20] sm:$0xff]
      %v8633 = vld [vmem:[%s231 + $0x28] sm:$0xff]
      %v8634 = vld [vmem:[%s231 + $0x30] sm:$0xff]
      %v8635 = vld [vmem:[%s231 + $0x38] sm:$0xff]
      %v8636 = vld [vmem:[%s231 + $0x40] sm:$0xff]
      %v8637 = vld [vmem:[%s231 + $0x48] sm:$0xff]
      %v8638 = vld [vmem:[%s231 + $0x50] sm:$0xff]
      %v8639 = vld [vmem:[%s231 + $0x58] sm:$0xff]
      %v8640 = vld [vmem:[%s231 + $0x60] sm:$0xff]
      %v8641 = vld [vmem:[%s231 + $0x68] sm:$0xff]
      %v8642 = vld [vmem:[%s231 + $0x70] sm:$0xff]
      %v8643 = vld [vmem:[%s231 + $0x78] sm:$0xff]
      %v8644 = vld [vmem:[%s231 + $0x80] sm:$0xff]
      %v8645 = vld [vmem:[%s231 + $0x88] sm:$0xff]
      %v8646 = vld [vmem:[%s231 + $0x90] sm:$0xff]
      %v8647 = vld [vmem:[%s231 + $0x98] sm:$0xff]
      %v8648 = vld [vmem:[%s231 + $0xa0] sm:$0xff]
      %v8649 = vld [vmem:[%s231 + $0xa8] sm:$0xff]
      %v8650 = vld [vmem:[%s231 + $0xb0] sm:$0xff]
      %v8651 = vld [vmem:[%s231 + $0xb8] sm:$0xff]
      %v8652 = vld [vmem:[%s231 + $0xc0] sm:$0xff]
      %v8653 = vld [vmem:[%s231 + $0xc8] sm:$0xff]
      %v8654 = vld [vmem:[%s231 + $0xd0] sm:$0xff]
      %v8655 = vld [vmem:[%s231 + $0xd8] sm:$0xff]
      %v8656 = vld [vmem:[%s231 + $0xe0] sm:$0xff]
      %v8657 = vld [vmem:[%s231 + $0xe8] sm:$0xff]
      %v8658 = vld [vmem:[%s231 + $0xf0] sm:$0xff]
      %v8659 = vld [vmem:[%s231 + $0xf8] sm:$0xff]
      %v8660 = vadd.f32 %v8628, %v8502
      %v8661 = vadd.f32 %v8629, %v8505
      %v8662 = vadd.f32 %v8630, %v8510
      %v8663 = vadd.f32 %v8631, %v8513
      %v8664 = vadd.f32 %v8632, %v8518
      %v8665 = vadd.f32 %v8633, %v8521
      %v8666 = vadd.f32 %v8634, %v8526
      %v8667 = vadd.f32 %v8635, %v8529
      %v8668 = vadd.f32 %v8636, %v8534
      %v8669 = vadd.f32 %v8637, %v8537
      %v8670 = vadd.f32 %v8638, %v8542
      %v8671 = vadd.f32 %v8639, %v8545
      %v8672 = vadd.f32 %v8640, %v8550
      %v8673 = vadd.f32 %v8641, %v8553
      %v8674 = vadd.f32 %v8642, %v8558
      %v8675 = vadd.f32 %v8643, %v8561
      %v8676 = vadd.f32 %v8644, %v8566
      %v8677 = vadd.f32 %v8645, %v8569
      %v8678 = vadd.f32 %v8646, %v8574
      %v8679 = vadd.f32 %v8647, %v8577
      %v8680 = vadd.f32 %v8648, %v8582
      %v8681 = vadd.f32 %v8649, %v8585
      %v8682 = vadd.f32 %v8650, %v8590
      %v8683 = vadd.f32 %v8651, %v8593
      %v8684 = vadd.f32 %v8652, %v8598
      %v8685 = vadd.f32 %v8653, %v8601
      %v8686 = vadd.f32 %v8654, %v8606
      %v8687 = vadd.f32 %v8655, %v8609
      %v8688 = vadd.f32 %v8656, %v8614
      %v8689 = vadd.f32 %v8657, %v8617
      %v8690 = vadd.f32 %v8658, %v8622
      %v8691 = vadd.f32 %v8659, %v8625
      %8692 = vst [vmem:[%s231] sm:$0xff] %v8660
      %8693 = vst [vmem:[%s231 + $0x8] sm:$0xff] %v8661
      %8694 = vst [vmem:[%s231 + $0x10] sm:$0xff] %v8662
      %8695 = vst [vmem:[%s231 + $0x18] sm:$0xff] %v8663
      %8696 = vst [vmem:[%s231 + $0x20] sm:$0xff] %v8664
      %8697 = vst [vmem:[%s231 + $0x28] sm:$0xff] %v8665
      %8698 = vst [vmem:[%s231 + $0x30] sm:$0xff] %v8666
      %8699 = vst [vmem:[%s231 + $0x38] sm:$0xff] %v8667
      %8700 = vst [vmem:[%s231 + $0x40] sm:$0xff] %v8668
      %8701 = vst [vmem:[%s231 + $0x48] sm:$0xff] %v8669
      %8702 = vst [vmem:[%s231 + $0x50] sm:$0xff] %v8670
      %8703 = vst [vmem:[%s231 + $0x58] sm:$0xff] %v8671
      %8704 = vst [vmem:[%s231 + $0x60] sm:$0xff] %v8672
      %8705 = vst [vmem:[%s231 + $0x68] sm:$0xff] %v8673
      %8706 = vst [vmem:[%s231 + $0x70] sm:$0xff] %v8674
      %8707 = vst [vmem:[%s231 + $0x78] sm:$0xff] %v8675
      %8708 = vst [vmem:[%s231 + $0x80] sm:$0xff] %v8676
      %8709 = vst [vmem:[%s231 + $0x88] sm:$0xff] %v8677
      %8710 = vst [vmem:[%s231 + $0x90] sm:$0xff] %v8678
      %8711 = vst [vmem:[%s231 + $0x98] sm:$0xff] %v8679
      %8712 = vst [vmem:[%s231 + $0xa0] sm:$0xff] %v8680
      %8713 = vst [vmem:[%s231 + $0xa8] sm:$0xff] %v8681
      %8714 = vst [vmem:[%s231 + $0xb0] sm:$0xff] %v8682
      %8715 = vst [vmem:[%s231 + $0xb8] sm:$0xff] %v8683
      %8716 = vst [vmem:[%s231 + $0xc0] sm:$0xff] %v8684
      %8717 = vst [vmem:[%s231 + $0xc8] sm:$0xff] %v8685
      %8718 = vst [vmem:[%s231 + $0xd0] sm:$0xff] %v8686
      %8719 = vst [vmem:[%s231 + $0xd8] sm:$0xff] %v8687
      %8720 = vst [vmem:[%s231 + $0xe0] sm:$0xff] %v8688
      %8721 = vst [vmem:[%s231 + $0xe8] sm:$0xff] %v8689
      %8722 = vst [vmem:[%s231 + $0xf0] sm:$0xff] %v8690
      %8723 = vst [vmem:[%s231 + $0xf8] sm:$0xff] %v8691
      %s8724 = scalar_lea.vmem [#allocation2], 64
      %v8725 = vld [vmem:[%s8724] sm:$0xff]
      %v8726 = vld [vmem:[%s8724 + $0x10] sm:$0xff]
      %v8727 = vld [vmem:[%s8724 + $0x20] sm:$0xff]
      %v8728 = vld [vmem:[%s8724 + $0x30] sm:$0xff]
      %v8729 = vld [vmem:[%s8724 + $0x40] sm:$0xff]
      %v8730 = vld [vmem:[%s8724 + $0x50] sm:$0xff]
      %v8731 = vld [vmem:[%s8724 + $0x60] sm:$0xff]
      %v8732 = vld [vmem:[%s8724 + $0x70] sm:$0xff]
      %v8733 = vld [vmem:[%s8724 + $0xc0] sm:$0xff]
      %v8734 = vld [vmem:[%s8724 + $0xd0] sm:$0xff]
      %v8735 = vld [vmem:[%s8724 + $0xe0] sm:$0xff]
      %v8736 = vld [vmem:[%s8724 + $0xf0] sm:$0xff]
      %v8737 = vld [vmem:[%s8724 + $0x100] sm:$0xff]
      %v8738 = vld [vmem:[%s8724 + $0x110] sm:$0xff]
      %v8739 = vld [vmem:[%s8724 + $0x120] sm:$0xff]
      %v8740 = vld [vmem:[%s8724 + $0x130] sm:$0xff]
      %v8741 = vld [vmem:[%s8724 + $0x180] sm:$0xff]
      %v8742 = vld [vmem:[%s8724 + $0x190] sm:$0xff]
      %v8743 = vld [vmem:[%s8724 + $0x1a0] sm:$0xff]
      %v8744 = vld [vmem:[%s8724 + $0x1b0] sm:$0xff]
      %v8745 = vld [vmem:[%s8724 + $0x1c0] sm:$0xff]
      %v8746 = vld [vmem:[%s8724 + $0x1d0] sm:$0xff]
      %v8747 = vld [vmem:[%s8724 + $0x1e0] sm:$0xff]
      %v8748 = vld [vmem:[%s8724 + $0x1f0] sm:$0xff]
      %v8749 = vld [vmem:[%s8724 + $0x240] sm:$0xff]
      %v8750 = vld [vmem:[%s8724 + $0x250] sm:$0xff]
      %v8751 = vld [vmem:[%s8724 + $0x260] sm:$0xff]
      %v8752 = vld [vmem:[%s8724 + $0x270] sm:$0xff]
      %v8753 = vld [vmem:[%s8724 + $0x280] sm:$0xff]
      %v8754 = vld [vmem:[%s8724 + $0x290] sm:$0xff]
      %v8755 = vld [vmem:[%s8724 + $0x2a0] sm:$0xff]
      %v8756 = vld [vmem:[%s8724 + $0x2b0] sm:$0xff]
      %v8757 = vpack.c.bf16 %v8726, %v8725
      %v8758 = vpack.c.bf16 %v8728, %v8727
      %v8759 = vpack.c.bf16 %v8730, %v8729
      %v8760 = vpack.c.bf16 %v8732, %v8731
      %v8761 = vpack.c.bf16 %v8734, %v8733
      %v8762 = vpack.c.bf16 %v8736, %v8735
      %v8763 = vpack.c.bf16 %v8738, %v8737
      %v8764 = vpack.c.bf16 %v8740, %v8739
      %v8765 = vpack.c.bf16 %v8742, %v8741
      %v8766 = vpack.c.bf16 %v8744, %v8743
      %v8767 = vpack.c.bf16 %v8746, %v8745
      %v8768 = vpack.c.bf16 %v8748, %v8747
      %v8769 = vpack.c.bf16 %v8750, %v8749
      %v8770 = vpack.c.bf16 %v8752, %v8751
      %v8771 = vpack.c.bf16 %v8754, %v8753
      %v8772 = vpack.c.bf16 %v8756, %v8755
      %s8773 = scalar_lea.vmem %s3, 320
      %v8774 = vld [vmem:[%s8773] sm:$0xf]
      %v8775 = vld [vmem:[%s8773 + $0x4] sm:$0xf]
      %v8776 = vld [vmem:[%s8773 + $0x8] sm:$0xf]
      %v8777 = vld [vmem:[%s8773 + $0xc] sm:$0xf]
      %v8782 = vunpack.c.l.b16 %v8774
      %v8783 = vunpack.c.l.b16 %v8775
      %v8784 = vunpack.c.l.b16 %v8776
      %v8785 = vunpack.c.l.b16 %v8777
      %v8786 = vpack.c.b16 %v8783, %v8782
      %v8787 = vpack.c.b16 %v8785, %v8784
      %v8791 = vsel %vm593, %v8757, 0
      %v8794 = vsel %vm593, %v8758, 0
      %v8797 = vsel %vm593, %v8759, 0
      %v8800 = vsel %vm593, %v8760, 0
      %v8803 = vsel %vm593, %v8761, 0
      %v8806 = vsel %vm593, %v8762, 0
      %v8809 = vsel %vm593, %v8763, 0
      %v8812 = vsel %vm593, %v8764, 0
      %v8815 = vsel %vm593, %v8765, 0
      %v8818 = vsel %vm593, %v8766, 0
      %v8821 = vsel %vm593, %v8767, 0
      %v8824 = vsel %vm593, %v8768, 0
      %v8827 = vsel %vm593, %v8769, 0
      %v8830 = vsel %vm593, %v8770, 0
      %v8833 = vsel %vm593, %v8771, 0
      %v8836 = vsel %vm593, %v8772, 0
      %8838 = vmatprep.subr.bf16.mxu0 0
      %8839 = vmatpush1.bf16.msra.mxu0 %v8786
      %8840 = vmatprep.subr.bf16.mxu0 0
      %8841 = vmatpush1.bf16.msra.mxu0 %v8787
      %8842 = vmatprep.subr.bf16.mxu0 0
      %8843 = vmatpush1.bf16.msra.mxu0 0
      %8844 = vmatprep.subr.bf16.mxu0 0
      %8845 = vmatpush1.bf16.msra.mxu0 0
      %8846 = vmatprep.subr.bf16.mxu0 0
      %8847 = vmatpush1.bf16.msra.mxu0 0
      %8848 = vmatprep.subr.bf16.mxu0 0
      %8849 = vmatpush1.bf16.msra.mxu0 0
      %8850 = vmatprep.subr.bf16.mxu0 0
      %8851 = vmatpush1.bf16.msra.mxu0 0
      %8852 = vmatprep.subr.bf16.mxu0 0
      %8853 = vmatpush1.bf16.msra.mxu0 0
      %8854 = vmatprep.subr.bf16.mxu0 0
      %8855 = vmatpush1.bf16.msra.mxu0 0
      %8856 = vmatprep.subr.bf16.mxu0 0
      %8857 = vmatpush1.bf16.msra.mxu0 0
      %8858 = vmatprep.subr.bf16.mxu0 0
      %8859 = vmatpush1.bf16.msra.mxu0 0
      %8860 = vmatprep.subr.bf16.mxu0 0
      %8861 = vmatpush1.bf16.msra.mxu0 0
      %8862 = vmatprep.subr.bf16.mxu0 0
      %8863 = vmatpush1.bf16.msra.mxu0 0
      %8864 = vmatprep.subr.bf16.mxu0 0
      %8865 = vmatpush1.bf16.msra.mxu0 0
      %8866 = vmatprep.subr.bf16.mxu0 0
      %8867 = vmatpush1.bf16.msra.mxu0 0
      %8868 = vmatprep.subr.bf16.mxu0 0
      %8869 = vmatpush1.bf16.msra.mxu0 0
      %8870 = vmatprep.mubr.bf16.mxu0 0
      %8871 = vmatmul.mubr.bf16.gmra.mrb[0].mxu0 %v8791
      %v8872 = vpop.f32.mrb[0].mxu0
      %v8873 = vadd.f32 0.0, %v8872
      %v8874 = vpop.f32.mrb[0].mxu0
      %v8875 = vpop.f32.mrb[0].mxu0
      %v8876 = vadd.f32 0.0, %v8875
      %v8877 = vpop.f32.mrb[0].mxu0
      %8878 = vmatprep.mubr.bf16.mxu0 0
      %8879 = vmatmul.mubr.bf16.gmra.mrb[0].mxu0 %v8794
      %v8880 = vpop.f32.mrb[0].mxu0
      %v8881 = vadd.f32 0.0, %v8880
      %v8882 = vpop.f32.mrb[0].mxu0
      %v8883 = vpop.f32.mrb[0].mxu0
      %v8884 = vadd.f32 0.0, %v8883
      %v8885 = vpop.f32.mrb[0].mxu0
      %8886 = vmatprep.mubr.bf16.mxu0 0
      %8887 = vmatmul.mubr.bf16.gmra.mrb[0].mxu0 %v8797
      %v8888 = vpop.f32.mrb[0].mxu0
      %v8889 = vadd.f32 0.0, %v8888
      %v8890 = vpop.f32.mrb[0].mxu0
      %v8891 = vpop.f32.mrb[0].mxu0
      %v8892 = vadd.f32 0.0, %v8891
      %v8893 = vpop.f32.mrb[0].mxu0
      %8894 = vmatprep.mubr.bf16.mxu0 0
      %8895 = vmatmul.mubr.bf16.gmra.mrb[0].mxu0 %v8800
      %v8896 = vpop.f32.mrb[0].mxu0
      %v8897 = vadd.f32 0.0, %v8896
      %v8898 = vpop.f32.mrb[0].mxu0
      %v8899 = vpop.f32.mrb[0].mxu0
      %v8900 = vadd.f32 0.0, %v8899
      %v8901 = vpop.f32.mrb[0].mxu0
      %8902 = vmatprep.mubr.bf16.mxu0 0
      %8903 = vmatmul.mubr.bf16.gmra.mrb[0].mxu0 %v8803
      %v8904 = vpop.f32.mrb[0].mxu0
      %v8905 = vadd.f32 0.0, %v8904
      %v8906 = vpop.f32.mrb[0].mxu0
      %v8907 = vpop.f32.mrb[0].mxu0
      %v8908 = vadd.f32 0.0, %v8907
      %v8909 = vpop.f32.mrb[0].mxu0
      %8910 = vmatprep.mubr.bf16.mxu0 0
      %8911 = vmatmul.mubr.bf16.gmra.mrb[0].mxu0 %v8806
      %v8912 = vpop.f32.mrb[0].mxu0
      %v8913 = vadd.f32 0.0, %v8912
      %v8914 = vpop.f32.mrb[0].mxu0
      %v8915 = vpop.f32.mrb[0].mxu0
      %v8916 = vadd.f32 0.0, %v8915
      %v8917 = vpop.f32.mrb[0].mxu0
      %8918 = vmatprep.mubr.bf16.mxu0 0
      %8919 = vmatmul.mubr.bf16.gmra.mrb[0].mxu0 %v8809
      %v8920 = vpop.f32.mrb[0].mxu0
      %v8921 = vadd.f32 0.0, %v8920
      %v8922 = vpop.f32.mrb[0].mxu0
      %v8923 = vpop.f32.mrb[0].mxu0
      %v8924 = vadd.f32 0.0, %v8923
      %v8925 = vpop.f32.mrb[0].mxu0
      %8926 = vmatprep.mubr.bf16.mxu0 0
      %8927 = vmatmul.mubr.bf16.gmra.mrb[0].mxu0 %v8812
      %v8928 = vpop.f32.mrb[0].mxu0
      %v8929 = vadd.f32 0.0, %v8928
      %v8930 = vpop.f32.mrb[0].mxu0
      %v8931 = vpop.f32.mrb[0].mxu0
      %v8932 = vadd.f32 0.0, %v8931
      %v8933 = vpop.f32.mrb[0].mxu0
      %8934 = vmatprep.mubr.bf16.mxu0 0
      %8935 = vmatmul.mubr.bf16.gmra.mrb[0].mxu0 %v8815
      %v8936 = vpop.f32.mrb[0].mxu0
      %v8937 = vadd.f32 0.0, %v8936
      %v8938 = vpop.f32.mrb[0].mxu0
      %v8939 = vpop.f32.mrb[0].mxu0
      %v8940 = vadd.f32 0.0, %v8939
      %v8941 = vpop.f32.mrb[0].mxu0
      %8942 = vmatprep.mubr.bf16.mxu0 0
      %8943 = vmatmul.mubr.bf16.gmra.mrb[0].mxu0 %v8818
      %v8944 = vpop.f32.mrb[0].mxu0
      %v8945 = vadd.f32 0.0, %v8944
      %v8946 = vpop.f32.mrb[0].mxu0
      %v8947 = vpop.f32.mrb[0].mxu0
      %v8948 = vadd.f32 0.0, %v8947
      %v8949 = vpop.f32.mrb[0].mxu0
      %8950 = vmatprep.mubr.bf16.mxu0 0
      %8951 = vmatmul.mubr.bf16.gmra.mrb[0].mxu0 %v8821
      %v8952 = vpop.f32.mrb[0].mxu0
      %v8953 = vadd.f32 0.0, %v8952
      %v8954 = vpop.f32.mrb[0].mxu0
      %v8955 = vpop.f32.mrb[0].mxu0
      %v8956 = vadd.f32 0.0, %v8955
      %v8957 = vpop.f32.mrb[0].mxu0
      %8958 = vmatprep.mubr.bf16.mxu0 0
      %8959 = vmatmul.mubr.bf16.gmra.mrb[0].mxu0 %v8824
      %v8960 = vpop.f32.mrb[0].mxu0
      %v8961 = vadd.f32 0.0, %v8960
      %v8962 = vpop.f32.mrb[0].mxu0
      %v8963 = vpop.f32.mrb[0].mxu0
      %v8964 = vadd.f32 0.0, %v8963
      %v8965 = vpop.f32.mrb[0].mxu0
      %8966 = vmatprep.mubr.bf16.mxu0 0
      %8967 = vmatmul.mubr.bf16.gmra.mrb[0].mxu0 %v8827
      %v8968 = vpop.f32.mrb[0].mxu0
      %v8969 = vadd.f32 0.0, %v8968
      %v8970 = vpop.f32.mrb[0].mxu0
      %v8971 = vpop.f32.mrb[0].mxu0
      %v8972 = vadd.f32 0.0, %v8971
      %v8973 = vpop.f32.mrb[0].mxu0
      %8974 = vmatprep.mubr.bf16.mxu0 0
      %8975 = vmatmul.mubr.bf16.gmra.mrb[0].mxu0 %v8830
      %v8976 = vpop.f32.mrb[0].mxu0
      %v8977 = vadd.f32 0.0, %v8976
      %v8978 = vpop.f32.mrb[0].mxu0
      %v8979 = vpop.f32.mrb[0].mxu0
      %v8980 = vadd.f32 0.0, %v8979
      %v8981 = vpop.f32.mrb[0].mxu0
      %8982 = vmatprep.mubr.bf16.mxu0 0
      %8983 = vmatmul.mubr.bf16.gmra.mrb[0].mxu0 %v8833
      %v8984 = vpop.f32.mrb[0].mxu0
      %v8985 = vadd.f32 0.0, %v8984
      %v8986 = vpop.f32.mrb[0].mxu0
      %v8987 = vpop.f32.mrb[0].mxu0
      %v8988 = vadd.f32 0.0, %v8987
      %v8989 = vpop.f32.mrb[0].mxu0
      %8990 = vmatprep.mubr.bf16.mxu0 0
      %8991 = vmatmul.mubr.bf16.gmra.mrb[0].mxu0 %v8836
      %v8992 = vpop.f32.mrb[0].mxu0
      %v8993 = vadd.f32 0.0, %v8992
      %v8994 = vpop.f32.mrb[0].mxu0
      %v8995 = vpop.f32.mrb[0].mxu0
      %v8996 = vadd.f32 0.0, %v8995
      %v8997 = vpop.f32.mrb[0].mxu0
      %8998 = vdwg.mxu0
      %v8999 = vld [vmem:[%s231] sm:$0xff]
      %v9000 = vld [vmem:[%s231 + $0x8] sm:$0xff]
      %v9001 = vld [vmem:[%s231 + $0x10] sm:$0xff]
      %v9002 = vld [vmem:[%s231 + $0x18] sm:$0xff]
      %v9003 = vld [vmem:[%s231 + $0x20] sm:$0xff]
      %v9004 = vld [vmem:[%s231 + $0x28] sm:$0xff]
      %v9005 = vld [vmem:[%s231 + $0x30] sm:$0xff]
      %v9006 = vld [vmem:[%s231 + $0x38] sm:$0xff]
      %v9007 = vld [vmem:[%s231 + $0x40] sm:$0xff]
      %v9008 = vld [vmem:[%s231 + $0x48] sm:$0xff]
      %v9009 = vld [vmem:[%s231 + $0x50] sm:$0xff]
      %v9010 = vld [vmem:[%s231 + $0x58] sm:$0xff]
      %v9011 = vld [vmem:[%s231 + $0x60] sm:$0xff]
      %v9012 = vld [vmem:[%s231 + $0x68] sm:$0xff]
      %v9013 = vld [vmem:[%s231 + $0x70] sm:$0xff]
      %v9014 = vld [vmem:[%s231 + $0x78] sm:$0xff]
      %v9015 = vld [vmem:[%s231 + $0x80] sm:$0xff]
      %v9016 = vld [vmem:[%s231 + $0x88] sm:$0xff]
      %v9017 = vld [vmem:[%s231 + $0x90] sm:$0xff]
      %v9018 = vld [vmem:[%s231 + $0x98] sm:$0xff]
      %v9019 = vld [vmem:[%s231 + $0xa0] sm:$0xff]
      %v9020 = vld [vmem:[%s231 + $0xa8] sm:$0xff]
      %v9021 = vld [vmem:[%s231 + $0xb0] sm:$0xff]
      %v9022 = vld [vmem:[%s231 + $0xb8] sm:$0xff]
      %v9023 = vld [vmem:[%s231 + $0xc0] sm:$0xff]
      %v9024 = vld [vmem:[%s231 + $0xc8] sm:$0xff]
      %v9025 = vld [vmem:[%s231 + $0xd0] sm:$0xff]
      %v9026 = vld [vmem:[%s231 + $0xd8] sm:$0xff]
      %v9027 = vld [vmem:[%s231 + $0xe0] sm:$0xff]
      %v9028 = vld [vmem:[%s231 + $0xe8] sm:$0xff]
      %v9029 = vld [vmem:[%s231 + $0xf0] sm:$0xff]
      %v9030 = vld [vmem:[%s231 + $0xf8] sm:$0xff]
      %v9031 = vadd.f32 %v8999, %v8873
      %v9032 = vadd.f32 %v9000, %v8876
      %v9033 = vadd.f32 %v9001, %v8881
      %v9034 = vadd.f32 %v9002, %v8884
      %v9035 = vadd.f32 %v9003, %v8889
      %v9036 = vadd.f32 %v9004, %v8892
      %v9037 = vadd.f32 %v9005, %v8897
      %v9038 = vadd.f32 %v9006, %v8900
      %v9039 = vadd.f32 %v9007, %v8905
      %v9040 = vadd.f32 %v9008, %v8908
      %v9041 = vadd.f32 %v9009, %v8913
      %v9042 = vadd.f32 %v9010, %v8916
      %v9043 = vadd.f32 %v9011, %v8921
      %v9044 = vadd.f32 %v9012, %v8924
      %v9045 = vadd.f32 %v9013, %v8929
      %v9046 = vadd.f32 %v9014, %v8932
      %v9047 = vadd.f32 %v9015, %v8937
      %v9048 = vadd.f32 %v9016, %v8940
      %v9049 = vadd.f32 %v9017, %v8945
      %v9050 = vadd.f32 %v9018, %v8948
      %v9051 = vadd.f32 %v9019, %v8953
      %v9052 = vadd.f32 %v9020, %v8956
      %v9053 = vadd.f32 %v9021, %v8961
      %v9054 = vadd.f32 %v9022, %v8964
      %v9055 = vadd.f32 %v9023, %v8969
      %v9056 = vadd.f32 %v9024, %v8972
      %v9057 = vadd.f32 %v9025, %v8977
      %v9058 = vadd.f32 %v9026, %v8980
      %v9059 = vadd.f32 %v9027, %v8985
      %v9060 = vadd.f32 %v9028, %v8988
      %v9061 = vadd.f32 %v9029, %v8993
      %v9062 = vadd.f32 %v9030, %v8996
      %9063 = vst [vmem:[%s231] sm:$0xff] %v9031
      %9064 = vst [vmem:[%s231 + $0x8] sm:$0xff] %v9032
      %9065 = vst [vmem:[%s231 + $0x10] sm:$0xff] %v9033
      %9066 = vst [vmem:[%s231 + $0x18] sm:$0xff] %v9034
      %9067 = vst [vmem:[%s231 + $0x20] sm:$0xff] %v9035
      %9068 = vst [vmem:[%s231 + $0x28] sm:$0xff] %v9036
      %9069 = vst [vmem:[%s231 + $0x30] sm:$0xff] %v9037
      %9070 = vst [vmem:[%s231 + $0x38] sm:$0xff] %v9038
      %9071 = vst [vmem:[%s231 + $0x40] sm:$0xff] %v9039
      %9072 = vst [vmem:[%s231 + $0x48] sm:$0xff] %v9040
      %9073 = vst [vmem:[%s231 + $0x50] sm:$0xff] %v9041
      %9074 = vst [vmem:[%s231 + $0x58] sm:$0xff] %v9042
      %9075 = vst [vmem:[%s231 + $0x60] sm:$0xff] %v9043
      %9076 = vst [vmem:[%s231 + $0x68] sm:$0xff] %v9044
      %9077 = vst [vmem:[%s231 + $0x70] sm:$0xff] %v9045
      %9078 = vst [vmem:[%s231 + $0x78] sm:$0xff] %v9046
      %9079 = vst [vmem:[%s231 + $0x80] sm:$0xff] %v9047
      %9080 = vst [vmem:[%s231 + $0x88] sm:$0xff] %v9048
      %9081 = vst [vmem:[%s231 + $0x90] sm:$0xff] %v9049
      %9082 = vst [vmem:[%s231 + $0x98] sm:$0xff] %v9050
      %9083 = vst [vmem:[%s231 + $0xa0] sm:$0xff] %v9051
      %9084 = vst [vmem:[%s231 + $0xa8] sm:$0xff] %v9052
      %9085 = vst [vmem:[%s231 + $0xb0] sm:$0xff] %v9053
      %9086 = vst [vmem:[%s231 + $0xb8] sm:$0xff] %v9054
      %9087 = vst [vmem:[%s231 + $0xc0] sm:$0xff] %v9055
      %9088 = vst [vmem:[%s231 + $0xc8] sm:$0xff] %v9056
      %9089 = vst [vmem:[%s231 + $0xd0] sm:$0xff] %v9057
      %9090 = vst [vmem:[%s231 + $0xd8] sm:$0xff] %v9058
      %9091 = vst [vmem:[%s231 + $0xe0] sm:$0xff] %v9059
      %9092 = vst [vmem:[%s231 + $0xe8] sm:$0xff] %v9060
      %9093 = vst [vmem:[%s231 + $0xf0] sm:$0xff] %v9061
      %9094 = vst [vmem:[%s231 + $0xf8] sm:$0xff] %v9062
      %v9095 = vld [vmem:[%s8724 + $0x1] sm:$0xff]
      %v9096 = vld [vmem:[%s8724 + $0x11] sm:$0xff]
      %v9097 = vld [vmem:[%s8724 + $0x21] sm:$0xff]
      %v9098 = vld [vmem:[%s8724 + $0x31] sm:$0xff]
      %v9099 = vld [vmem:[%s8724 + $0x41] sm:$0xff]
      %v9100 = vld [vmem:[%s8724 + $0x51] sm:$0xff]
      %v9101 = vld [vmem:[%s8724 + $0x61] sm:$0xff]
      %v9102 = vld [vmem:[%s8724 + $0x71] sm:$0xff]
      %v9103 = vld [vmem:[%s8724 + $0xc1] sm:$0xff]
      %v9104 = vld [vmem:[%s8724 + $0xd1] sm:$0xff]
      %v9105 = vld [vmem:[%s8724 + $0xe1] sm:$0xff]
      %v9106 = vld [vmem:[%s8724 + $0xf1] sm:$0xff]
      %v9107 = vld [vmem:[%s8724 + $0x101] sm:$0xff]
      %v9108 = vld [vmem:[%s8724 + $0x111] sm:$0xff]
      %v9109 = vld [vmem:[%s8724 + $0x121] sm:$0xff]
      %v9110 = vld [vmem:[%s8724 + $0x131] sm:$0xff]
      %v9111 = vld [vmem:[%s8724 + $0x181] sm:$0xff]
      %v9112 = vld [vmem:[%s8724 + $0x191] sm:$0xff]
      %v9113 = vld [vmem:[%s8724 + $0x1a1] sm:$0xff]
      %v9114 = vld [vmem:[%s8724 + $0x1b1] sm:$0xff]
      %v9115 = vld [vmem:[%s8724 + $0x1c1] sm:$0xff]
      %v9116 = vld [vmem:[%s8724 + $0x1d1] sm:$0xff]
      %v9117 = vld [vmem:[%s8724 + $0x1e1] sm:$0xff]
      %v9118 = vld [vmem:[%s8724 + $0x1f1] sm:$0xff]
      %v9119 = vld [vmem:[%s8724 + $0x241] sm:$0xff]
      %v9120 = vld [vmem:[%s8724 + $0x251] sm:$0xff]
      %v9121 = vld [vmem:[%s8724 + $0x261] sm:$0xff]
      %v9122 = vld [vmem:[%s8724 + $0x271] sm:$0xff]
      %v9123 = vld [vmem:[%s8724 + $0x281] sm:$0xff]
      %v9124 = vld [vmem:[%s8724 + $0x291] sm:$0xff]
      %v9125 = vld [vmem:[%s8724 + $0x2a1] sm:$0xff]
      %v9126 = vld [vmem:[%s8724 + $0x2b1] sm:$0xff]
      %v9127 = vpack.c.bf16 %v9096, %v9095
      %v9128 = vpack.c.bf16 %v9098, %v9097
      %v9129 = vpack.c.bf16 %v9100, %v9099
      %v9130 = vpack.c.bf16 %v9102, %v9101
      %v9131 = vpack.c.bf16 %v9104, %v9103
      %v9132 = vpack.c.bf16 %v9106, %v9105
      %v9133 = vpack.c.bf16 %v9108, %v9107
      %v9134 = vpack.c.bf16 %v9110, %v9109
      %v9135 = vpack.c.bf16 %v9112, %v9111
      %v9136 = vpack.c.bf16 %v9114, %v9113
      %v9137 = vpack.c.bf16 %v9116, %v9115
      %v9138 = vpack.c.bf16 %v9118, %v9117
      %v9139 = vpack.c.bf16 %v9120, %v9119
      %v9140 = vpack.c.bf16 %v9122, %v9121
      %v9141 = vpack.c.bf16 %v9124, %v9123
      %v9142 = vpack.c.bf16 %v9126, %v9125
      %s9143 = scalar_lea.vmem %s3, 336
      %v9144 = vld [vmem:[%s9143] sm:$0xf]
      %v9145 = vld [vmem:[%s9143 + $0x4] sm:$0xf]
      %v9146 = vld [vmem:[%s9143 + $0x8] sm:$0xf]
      %v9147 = vld [vmem:[%s9143 + $0xc] sm:$0xf]
      %v9152 = vunpack.c.l.b16 %v9144
      %v9153 = vunpack.c.l.b16 %v9145
      %v9154 = vunpack.c.l.b16 %v9146
      %v9155 = vunpack.c.l.b16 %v9147
      %v9156 = vpack.c.b16 %v9153, %v9152
      %v9157 = vpack.c.b16 %v9155, %v9154
      %v9161 = vsel %vm593, %v9127, 0
      %v9164 = vsel %vm593, %v9128, 0
      %v9167 = vsel %vm593, %v9129, 0
      %v9170 = vsel %vm593, %v9130, 0
      %v9173 = vsel %vm593, %v9131, 0
      %v9176 = vsel %vm593, %v9132, 0
      %v9179 = vsel %vm593, %v9133, 0
      %v9182 = vsel %vm593, %v9134, 0
      %v9185 = vsel %vm593, %v9135, 0
      %v9188 = vsel %vm593, %v9136, 0
      %v9191 = vsel %vm593, %v9137, 0
      %v9194 = vsel %vm593, %v9138, 0
      %v9197 = vsel %vm593, %v9139, 0
      %v9200 = vsel %vm593, %v9140, 0
      %v9203 = vsel %vm593, %v9141, 0
      %v9206 = vsel %vm593, %v9142, 0
      %9208 = vmatprep.subr.bf16.mxu0 0
      %9209 = vmatpush1.bf16.msra.mxu0 %v9156
      %9210 = vmatprep.subr.bf16.mxu0 0
      %9211 = vmatpush1.bf16.msra.mxu0 %v9157
      %9212 = vmatprep.subr.bf16.mxu0 0
      %9213 = vmatpush1.bf16.msra.mxu0 0
      %9214 = vmatprep.subr.bf16.mxu0 0
      %9215 = vmatpush1.bf16.msra.mxu0 0
      %9216 = vmatprep.subr.bf16.mxu0 0
      %9217 = vmatpush1.bf16.msra.mxu0 0
      %9218 = vmatprep.subr.bf16.mxu0 0
      %9219 = vmatpush1.bf16.msra.mxu0 0
      %9220 = vmatprep.subr.bf16.mxu0 0
      %9221 = vmatpush1.bf16.msra.mxu0 0
      %9222 = vmatprep.subr.bf16.mxu0 0
      %9223 = vmatpush1.bf16.msra.mxu0 0
      %9224 = vmatprep.subr.bf16.mxu0 0
      %9225 = vmatpush1.bf16.msra.mxu0 0
      %9226 = vmatprep.subr.bf16.mxu0 0
      %9227 = vmatpush1.bf16.msra.mxu0 0
      %9228 = vmatprep.subr.bf16.mxu0 0
      %9229 = vmatpush1.bf16.msra.mxu0 0
      %9230 = vmatprep.subr.bf16.mxu0 0
      %9231 = vmatpush1.bf16.msra.mxu0 0
      %9232 = vmatprep.subr.bf16.mxu0 0
      %9233 = vmatpush1.bf16.msra.mxu0 0
      %9234 = vmatprep.subr.bf16.mxu0 0
      %9235 = vmatpush1.bf16.msra.mxu0 0
      %9236 = vmatprep.subr.bf16.mxu0 0
      %9237 = vmatpush1.bf16.msra.mxu0 0
      %9238 = vmatprep.subr.bf16.mxu0 0
      %9239 = vmatpush1.bf16.msra.mxu0 0
      %9240 = vmatprep.mubr.bf16.mxu0 0
      %9241 = vmatmul.mubr.bf16.gmra.mrb[0].mxu0 %v9161
      %v9242 = vpop.f32.mrb[0].mxu0
      %v9243 = vadd.f32 0.0, %v9242
      %v9244 = vpop.f32.mrb[0].mxu0
      %v9245 = vpop.f32.mrb[0].mxu0
      %v9246 = vadd.f32 0.0, %v9245
      %v9247 = vpop.f32.mrb[0].mxu0
      %9248 = vmatprep.mubr.bf16.mxu0 0
      %9249 = vmatmul.mubr.bf16.gmra.mrb[0].mxu0 %v9164
      %v9250 = vpop.f32.mrb[0].mxu0
      %v9251 = vadd.f32 0.0, %v9250
      %v9252 = vpop.f32.mrb[0].mxu0
      %v9253 = vpop.f32.mrb[0].mxu0
      %v9254 = vadd.f32 0.0, %v9253
      %v9255 = vpop.f32.mrb[0].mxu0
      %9256 = vmatprep.mubr.bf16.mxu0 0
      %9257 = vmatmul.mubr.bf16.gmra.mrb[0].mxu0 %v9167
      %v9258 = vpop.f32.mrb[0].mxu0
      %v9259 = vadd.f32 0.0, %v9258
      %v9260 = vpop.f32.mrb[0].mxu0
      %v9261 = vpop.f32.mrb[0].mxu0
      %v9262 = vadd.f32 0.0, %v9261
      %v9263 = vpop.f32.mrb[0].mxu0
      %9264 = vmatprep.mubr.bf16.mxu0 0
      %9265 = vmatmul.mubr.bf16.gmra.mrb[0].mxu0 %v9170
      %v9266 = vpop.f32.mrb[0].mxu0
      %v9267 = vadd.f32 0.0, %v9266
      %v9268 = vpop.f32.mrb[0].mxu0
      %v9269 = vpop.f32.mrb[0].mxu0
      %v9270 = vadd.f32 0.0, %v9269
      %v9271 = vpop.f32.mrb[0].mxu0
      %9272 = vmatprep.mubr.bf16.mxu0 0
      %9273 = vmatmul.mubr.bf16.gmra.mrb[0].mxu0 %v9173
      %v9274 = vpop.f32.mrb[0].mxu0
      %v9275 = vadd.f32 0.0, %v9274
      %v9276 = vpop.f32.mrb[0].mxu0
      %v9277 = vpop.f32.mrb[0].mxu0
      %v9278 = vadd.f32 0.0, %v9277
      %v9279 = vpop.f32.mrb[0].mxu0
      %9280 = vmatprep.mubr.bf16.mxu0 0
      %9281 = vmatmul.mubr.bf16.gmra.mrb[0].mxu0 %v9176
      %v9282 = vpop.f32.mrb[0].mxu0
      %v9283 = vadd.f32 0.0, %v9282
      %v9284 = vpop.f32.mrb[0].mxu0
      %v9285 = vpop.f32.mrb[0].mxu0
      %v9286 = vadd.f32 0.0, %v9285
      %v9287 = vpop.f32.mrb[0].mxu0
      %9288 = vmatprep.mubr.bf16.mxu0 0
      %9289 = vmatmul.mubr.bf16.gmra.mrb[0].mxu0 %v9179
      %v9290 = vpop.f32.mrb[0].mxu0
      %v9291 = vadd.f32 0.0, %v9290
      %v9292 = vpop.f32.mrb[0].mxu0
      %v9293 = vpop.f32.mrb[0].mxu0
      %v9294 = vadd.f32 0.0, %v9293
      %v9295 = vpop.f32.mrb[0].mxu0
      %9296 = vmatprep.mubr.bf16.mxu0 0
      %9297 = vmatmul.mubr.bf16.gmra.mrb[0].mxu0 %v9182
      %v9298 = vpop.f32.mrb[0].mxu0
      %v9299 = vadd.f32 0.0, %v9298
      %v9300 = vpop.f32.mrb[0].mxu0
      %v9301 = vpop.f32.mrb[0].mxu0
      %v9302 = vadd.f32 0.0, %v9301
      %v9303 = vpop.f32.mrb[0].mxu0
      %9304 = vmatprep.mubr.bf16.mxu0 0
      %9305 = vmatmul.mubr.bf16.gmra.mrb[0].mxu0 %v9185
      %v9306 = vpop.f32.mrb[0].mxu0
      %v9307 = vadd.f32 0.0, %v9306
      %v9308 = vpop.f32.mrb[0].mxu0
      %v9309 = vpop.f32.mrb[0].mxu0
      %v9310 = vadd.f32 0.0, %v9309
      %v9311 = vpop.f32.mrb[0].mxu0
      %9312 = vmatprep.mubr.bf16.mxu0 0
      %9313 = vmatmul.mubr.bf16.gmra.mrb[0].mxu0 %v9188
      %v9314 = vpop.f32.mrb[0].mxu0
      %v9315 = vadd.f32 0.0, %v9314
      %v9316 = vpop.f32.mrb[0].mxu0
      %v9317 = vpop.f32.mrb[0].mxu0
      %v9318 = vadd.f32 0.0, %v9317
      %v9319 = vpop.f32.mrb[0].mxu0
      %9320 = vmatprep.mubr.bf16.mxu0 0
      %9321 = vmatmul.mubr.bf16.gmra.mrb[0].mxu0 %v9191
      %v9322 = vpop.f32.mrb[0].mxu0
      %v9323 = vadd.f32 0.0, %v9322
      %v9324 = vpop.f32.mrb[0].mxu0
      %v9325 = vpop.f32.mrb[0].mxu0
      %v9326 = vadd.f32 0.0, %v9325
      %v9327 = vpop.f32.mrb[0].mxu0
      %9328 = vmatprep.mubr.bf16.mxu0 0
      %9329 = vmatmul.mubr.bf16.gmra.mrb[0].mxu0 %v9194
      %v9330 = vpop.f32.mrb[0].mxu0
      %v9331 = vadd.f32 0.0, %v9330
      %v9332 = vpop.f32.mrb[0].mxu0
      %v9333 = vpop.f32.mrb[0].mxu0
      %v9334 = vadd.f32 0.0, %v9333
      %v9335 = vpop.f32.mrb[0].mxu0
      %9336 = vmatprep.mubr.bf16.mxu0 0
      %9337 = vmatmul.mubr.bf16.gmra.mrb[0].mxu0 %v9197
      %v9338 = vpop.f32.mrb[0].mxu0
      %v9339 = vadd.f32 0.0, %v9338
      %v9340 = vpop.f32.mrb[0].mxu0
      %v9341 = vpop.f32.mrb[0].mxu0
      %v9342 = vadd.f32 0.0, %v9341
      %v9343 = vpop.f32.mrb[0].mxu0
      %9344 = vmatprep.mubr.bf16.mxu0 0
      %9345 = vmatmul.mubr.bf16.gmra.mrb[0].mxu0 %v9200
      %v9346 = vpop.f32.mrb[0].mxu0
      %v9347 = vadd.f32 0.0, %v9346
      %v9348 = vpop.f32.mrb[0].mxu0
      %v9349 = vpop.f32.mrb[0].mxu0
      %v9350 = vadd.f32 0.0, %v9349
      %v9351 = vpop.f32.mrb[0].mxu0
      %9352 = vmatprep.mubr.bf16.mxu0 0
      %9353 = vmatmul.mubr.bf16.gmra.mrb[0].mxu0 %v9203
      %v9354 = vpop.f32.mrb[0].mxu0
      %v9355 = vadd.f32 0.0, %v9354
      %v9356 = vpop.f32.mrb[0].mxu0
      %v9357 = vpop.f32.mrb[0].mxu0
      %v9358 = vadd.f32 0.0, %v9357
      %v9359 = vpop.f32.mrb[0].mxu0
      %9360 = vmatprep.mubr.bf16.mxu0 0
      %9361 = vmatmul.mubr.bf16.gmra.mrb[0].mxu0 %v9206
      %v9362 = vpop.f32.mrb[0].mxu0
      %v9363 = vadd.f32 0.0, %v9362
      %v9364 = vpop.f32.mrb[0].mxu0
      %v9365 = vpop.f32.mrb[0].mxu0
      %v9366 = vadd.f32 0.0, %v9365
      %v9367 = vpop.f32.mrb[0].mxu0
      %9368 = vdwg.mxu0
      %v9369 = vld [vmem:[%s231] sm:$0xff]
      %v9370 = vld [vmem:[%s231 + $0x8] sm:$0xff]
      %v9371 = vld [vmem:[%s231 + $0x10] sm:$0xff]
      %v9372 = vld [vmem:[%s231 + $0x18] sm:$0xff]
      %v9373 = vld [vmem:[%s231 + $0x20] sm:$0xff]
      %v9374 = vld [vmem:[%s231 + $0x28] sm:$0xff]
      %v9375 = vld [vmem:[%s231 + $0x30] sm:$0xff]
      %v9376 = vld [vmem:[%s231 + $0x38] sm:$0xff]
      %v9377 = vld [vmem:[%s231 + $0x40] sm:$0xff]
      %v9378 = vld [vmem:[%s231 + $0x48] sm:$0xff]
      %v9379 = vld [vmem:[%s231 + $0x50] sm:$0xff]
      %v9380 = vld [vmem:[%s231 + $0x58] sm:$0xff]
      %v9381 = vld [vmem:[%s231 + $0x60] sm:$0xff]
      %v9382 = vld [vmem:[%s231 + $0x68] sm:$0xff]
      %v9383 = vld [vmem:[%s231 + $0x70] sm:$0xff]
      %v9384 = vld [vmem:[%s231 + $0x78] sm:$0xff]
      %v9385 = vld [vmem:[%s231 + $0x80] sm:$0xff]
      %v9386 = vld [vmem:[%s231 + $0x88] sm:$0xff]
      %v9387 = vld [vmem:[%s231 + $0x90] sm:$0xff]
      %v9388 = vld [vmem:[%s231 + $0x98] sm:$0xff]
      %v9389 = vld [vmem:[%s231 + $0xa0] sm:$0xff]
      %v9390 = vld [vmem:[%s231 + $0xa8] sm:$0xff]
      %v9391 = vld [vmem:[%s231 + $0xb0] sm:$0xff]
      %v9392 = vld [vmem:[%s231 + $0xb8] sm:$0xff]
      %v9393 = vld [vmem:[%s231 + $0xc0] sm:$0xff]
      %v9394 = vld [vmem:[%s231 + $0xc8] sm:$0xff]
      %v9395 = vld [vmem:[%s231 + $0xd0] sm:$0xff]
      %v9396 = vld [vmem:[%s231 + $0xd8] sm:$0xff]
      %v9397 = vld [vmem:[%s231 + $0xe0] sm:$0xff]
      %v9398 = vld [vmem:[%s231 + $0xe8] sm:$0xff]
      %v9399 = vld [vmem:[%s231 + $0xf0] sm:$0xff]
      %v9400 = vld [vmem:[%s231 + $0xf8] sm:$0xff]
      %v9401 = vadd.f32 %v9369, %v9243
      %v9402 = vadd.f32 %v9370, %v9246
      %v9403 = vadd.f32 %v9371, %v9251
      %v9404 = vadd.f32 %v9372, %v9254
      %v9405 = vadd.f32 %v9373, %v9259
      %v9406 = vadd.f32 %v9374, %v9262
      %v9407 = vadd.f32 %v9375, %v9267
      %v9408 = vadd.f32 %v9376, %v9270
      %v9409 = vadd.f32 %v9377, %v9275
      %v9410 = vadd.f32 %v9378, %v9278
      %v9411 = vadd.f32 %v9379, %v9283
      %v9412 = vadd.f32 %v9380, %v9286
      %v9413 = vadd.f32 %v9381, %v9291
      %v9414 = vadd.f32 %v9382, %v9294
      %v9415 = vadd.f32 %v9383, %v9299
      %v9416 = vadd.f32 %v9384, %v9302
      %v9417 = vadd.f32 %v9385, %v9307
      %v9418 = vadd.f32 %v9386, %v9310
      %v9419 = vadd.f32 %v9387, %v9315
      %v9420 = vadd.f32 %v9388, %v9318
      %v9421 = vadd.f32 %v9389, %v9323
      %v9422 = vadd.f32 %v9390, %v9326
      %v9423 = vadd.f32 %v9391, %v9331
      %v9424 = vadd.f32 %v9392, %v9334
      %v9425 = vadd.f32 %v9393, %v9339
      %v9426 = vadd.f32 %v9394, %v9342
      %v9427 = vadd.f32 %v9395, %v9347
      %v9428 = vadd.f32 %v9396, %v9350
      %v9429 = vadd.f32 %v9397, %v9355
      %v9430 = vadd.f32 %v9398, %v9358
      %v9431 = vadd.f32 %v9399, %v9363
      %v9432 = vadd.f32 %v9400, %v9366
      %9433 = vst [vmem:[%s231] sm:$0xff] %v9401
      %9434 = vst [vmem:[%s231 + $0x8] sm:$0xff] %v9402
      %9435 = vst [vmem:[%s231 + $0x10] sm:$0xff] %v9403
      %9436 = vst [vmem:[%s231 + $0x18] sm:$0xff] %v9404
      %9437 = vst [vmem:[%s231 + $0x20] sm:$0xff] %v9405
      %9438 = vst [vmem:[%s231 + $0x28] sm:$0xff] %v9406
      %9439 = vst [vmem:[%s231 + $0x30] sm:$0xff] %v9407
      %9440 = vst [vmem:[%s231 + $0x38] sm:$0xff] %v9408
      %9441 = vst [vmem:[%s231 + $0x40] sm:$0xff] %v9409
      %9442 = vst [vmem:[%s231 + $0x48] sm:$0xff] %v9410
      %9443 = vst [vmem:[%s231 + $0x50] sm:$0xff] %v9411
      %9444 = vst [vmem:[%s231 + $0x58] sm:$0xff] %v9412
      %9445 = vst [vmem:[%s231 + $0x60] sm:$0xff] %v9413
      %9446 = vst [vmem:[%s231 + $0x68] sm:$0xff] %v9414
      %9447 = vst [vmem:[%s231 + $0x70] sm:$0xff] %v9415
      %9448 = vst [vmem:[%s231 + $0x78] sm:$0xff] %v9416
      %9449 = vst [vmem:[%s231 + $0x80] sm:$0xff] %v9417
      %9450 = vst [vmem:[%s231 + $0x88] sm:$0xff] %v9418
      %9451 = vst [vmem:[%s231 + $0x90] sm:$0xff] %v9419
      %9452 = vst [vmem:[%s231 + $0x98] sm:$0xff] %v9420
      %9453 = vst [vmem:[%s231 + $0xa0] sm:$0xff] %v9421
      %9454 = vst [vmem:[%s231 + $0xa8] sm:$0xff] %v9422
      %9455 = vst [vmem:[%s231 + $0xb0] sm:$0xff] %v9423
      %9456 = vst [vmem:[%s231 + $0xb8] sm:$0xff] %v9424
      %9457 = vst [vmem:[%s231 + $0xc0] sm:$0xff] %v9425
      %9458 = vst [vmem:[%s231 + $0xc8] sm:$0xff] %v9426
      %9459 = vst [vmem:[%s231 + $0xd0] sm:$0xff] %v9427
      %9460 = vst [vmem:[%s231 + $0xd8] sm:$0xff] %v9428
      %9461 = vst [vmem:[%s231 + $0xe0] sm:$0xff] %v9429
      %9462 = vst [vmem:[%s231 + $0xe8] sm:$0xff] %v9430
      %9463 = vst [vmem:[%s231 + $0xf0] sm:$0xff] %v9431
      %9464 = vst [vmem:[%s231 + $0xf8] sm:$0xff] %v9432
      %v9465 = vld [vmem:[%s8724 + $0x2] sm:$0xff]
      %v9466 = vld [vmem:[%s8724 + $0x12] sm:$0xff]
      %v9467 = vld [vmem:[%s8724 + $0x22] sm:$0xff]
      %v9468 = vld [vmem:[%s8724 + $0x32] sm:$0xff]
      %v9469 = vld [vmem:[%s8724 + $0x42] sm:$0xff]
      %v9470 = vld [vmem:[%s8724 + $0x52] sm:$0xff]
      %v9471 = vld [vmem:[%s8724 + $0x62] sm:$0xff]
      %v9472 = vld [vmem:[%s8724 + $0x72] sm:$0xff]
      %v9473 = vld [vmem:[%s8724 + $0xc2] sm:$0xff]
      %v9474 = vld [vmem:[%s8724 + $0xd2] sm:$0xff]
      %v9475 = vld [vmem:[%s8724 + $0xe2] sm:$0xff]
      %v9476 = vld [vmem:[%s8724 + $0xf2] sm:$0xff]
      %v9477 = vld [vmem:[%s8724 + $0x102] sm:$0xff]
      %v9478 = vld [vmem:[%s8724 + $0x112] sm:$0xff]
      %v9479 = vld [vmem:[%s8724 + $0x122] sm:$0xff]
      %v9480 = vld [vmem:[%s8724 + $0x132] sm:$0xff]
      %v9481 = vld [vmem:[%s8724 + $0x182] sm:$0xff]
      %v9482 = vld [vmem:[%s8724 + $0x192] sm:$0xff]
      %v9483 = vld [vmem:[%s8724 + $0x1a2] sm:$0xff]
      %v9484 = vld [vmem:[%s8724 + $0x1b2] sm:$0xff]
      %v9485 = vld [vmem:[%s8724 + $0x1c2] sm:$0xff]
      %v9486 = vld [vmem:[%s8724 + $0x1d2] sm:$0xff]
      %v9487 = vld [vmem:[%s8724 + $0x1e2] sm:$0xff]
      %v9488 = vld [vmem:[%s8724 + $0x1f2] sm:$0xff]
      %v9489 = vld [vmem:[%s8724 + $0x242] sm:$0xff]
      %v9490 = vld [vmem:[%s8724 + $0x252] sm:$0xff]
      %v9491 = vld [vmem:[%s8724 + $0x262] sm:$0xff]
      %v9492 = vld [vmem:[%s8724 + $0x272] sm:$0xff]
      %v9493 = vld [vmem:[%s8724 + $0x282] sm:$0xff]
      %v9494 = vld [vmem:[%s8724 + $0x292] sm:$0xff]
      %v9495 = vld [vmem:[%s8724 + $0x2a2] sm:$0xff]
      %v9496 = vld [vmem:[%s8724 + $0x2b2] sm:$0xff]
      %v9497 = vpack.c.bf16 %v9466, %v9465
      %v9498 = vpack.c.bf16 %v9468, %v9467
      %v9499 = vpack.c.bf16 %v9470, %v9469
      %v9500 = vpack.c.bf16 %v9472, %v9471
      %v9501 = vpack.c.bf16 %v9474, %v9473
      %v9502 = vpack.c.bf16 %v9476, %v9475
      %v9503 = vpack.c.bf16 %v9478, %v9477
      %v9504 = vpack.c.bf16 %v9480, %v9479
      %v9505 = vpack.c.bf16 %v9482, %v9481
      %v9506 = vpack.c.bf16 %v9484, %v9483
      %v9507 = vpack.c.bf16 %v9486, %v9485
      %v9508 = vpack.c.bf16 %v9488, %v9487
      %v9509 = vpack.c.bf16 %v9490, %v9489
      %v9510 = vpack.c.bf16 %v9492, %v9491
      %v9511 = vpack.c.bf16 %v9494, %v9493
      %v9512 = vpack.c.bf16 %v9496, %v9495
      %s9513 = scalar_lea.vmem %s3, 352
      %v9514 = vld [vmem:[%s9513] sm:$0xf]
      %v9515 = vld [vmem:[%s9513 + $0x4] sm:$0xf]
      %v9516 = vld [vmem:[%s9513 + $0x8] sm:$0xf]
      %v9517 = vld [vmem:[%s9513 + $0xc] sm:$0xf]
      %v9522 = vunpack.c.l.b16 %v9514
      %v9523 = vunpack.c.l.b16 %v9515
      %v9524 = vunpack.c.l.b16 %v9516
      %v9525 = vunpack.c.l.b16 %v9517
      %v9526 = vpack.c.b16 %v9523, %v9522
      %v9527 = vpack.c.b16 %v9525, %v9524
      %v9531 = vsel %vm593, %v9497, 0
      %v9534 = vsel %vm593, %v9498, 0
      %v9537 = vsel %vm593, %v9499, 0
      %v9540 = vsel %vm593, %v9500, 0
      %v9543 = vsel %vm593, %v9501, 0
      %v9546 = vsel %vm593, %v9502, 0
      %v9549 = vsel %vm593, %v9503, 0
      %v9552 = vsel %vm593, %v9504, 0
      %v9555 = vsel %vm593, %v9505, 0
      %v9558 = vsel %vm593, %v9506, 0
      %v9561 = vsel %vm593, %v9507, 0
      %v9564 = vsel %vm593, %v9508, 0
      %v9567 = vsel %vm593, %v9509, 0
      %v9570 = vsel %vm593, %v9510, 0
      %v9573 = vsel %vm593, %v9511, 0
      %v9576 = vsel %vm593, %v9512, 0
      %9578 = vmatprep.subr.bf16.mxu0 0
      %9579 = vmatpush1.bf16.msra.mxu0 %v9526
      %9580 = vmatprep.subr.bf16.mxu0 0
      %9581 = vmatpush1.bf16.msra.mxu0 %v9527
      %9582 = vmatprep.subr.bf16.mxu0 0
      %9583 = vmatpush1.bf16.msra.mxu0 0
      %9584 = vmatprep.subr.bf16.mxu0 0
      %9585 = vmatpush1.bf16.msra.mxu0 0
      %9586 = vmatprep.subr.bf16.mxu0 0
      %9587 = vmatpush1.bf16.msra.mxu0 0
      %9588 = vmatprep.subr.bf16.mxu0 0
      %9589 = vmatpush1.bf16.msra.mxu0 0
      %9590 = vmatprep.subr.bf16.mxu0 0
      %9591 = vmatpush1.bf16.msra.mxu0 0
      %9592 = vmatprep.subr.bf16.mxu0 0
      %9593 = vmatpush1.bf16.msra.mxu0 0
      %9594 = vmatprep.subr.bf16.mxu0 0
      %9595 = vmatpush1.bf16.msra.mxu0 0
      %9596 = vmatprep.subr.bf16.mxu0 0
      %9597 = vmatpush1.bf16.msra.mxu0 0
      %9598 = vmatprep.subr.bf16.mxu0 0
      %9599 = vmatpush1.bf16.msra.mxu0 0
      %9600 = vmatprep.subr.bf16.mxu0 0
      %9601 = vmatpush1.bf16.msra.mxu0 0
      %9602 = vmatprep.subr.bf16.mxu0 0
      %9603 = vmatpush1.bf16.msra.mxu0 0
      %9604 = vmatprep.subr.bf16.mxu0 0
      %9605 = vmatpush1.bf16.msra.mxu0 0
      %9606 = vmatprep.subr.bf16.mxu0 0
      %9607 = vmatpush1.bf16.msra.mxu0 0
      %9608 = vmatprep.subr.bf16.mxu0 0
      %9609 = vmatpush1.bf16.msra.mxu0 0
      %9610 = vmatprep.mubr.bf16.mxu0 0
      %9611 = vmatmul.mubr.bf16.gmra.mrb[0].mxu0 %v9531
      %v9612 = vpop.f32.mrb[0].mxu0
      %v9613 = vadd.f32 0.0, %v9612
      %v9614 = vpop.f32.mrb[0].mxu0
      %v9615 = vpop.f32.mrb[0].mxu0
      %v9616 = vadd.f32 0.0, %v9615
      %v9617 = vpop.f32.mrb[0].mxu0
      %9618 = vmatprep.mubr.bf16.mxu0 0
      %9619 = vmatmul.mubr.bf16.gmra.mrb[0].mxu0 %v9534
      %v9620 = vpop.f32.mrb[0].mxu0
      %v9621 = vadd.f32 0.0, %v9620
      %v9622 = vpop.f32.mrb[0].mxu0
      %v9623 = vpop.f32.mrb[0].mxu0
      %v9624 = vadd.f32 0.0, %v9623
      %v9625 = vpop.f32.mrb[0].mxu0
      %9626 = vmatprep.mubr.bf16.mxu0 0
      %9627 = vmatmul.mubr.bf16.gmra.mrb[0].mxu0 %v9537
      %v9628 = vpop.f32.mrb[0].mxu0
      %v9629 = vadd.f32 0.0, %v9628
      %v9630 = vpop.f32.mrb[0].mxu0
      %v9631 = vpop.f32.mrb[0].mxu0
      %v9632 = vadd.f32 0.0, %v9631
      %v9633 = vpop.f32.mrb[0].mxu0
      %9634 = vmatprep.mubr.bf16.mxu0 0
      %9635 = vmatmul.mubr.bf16.gmra.mrb[0].mxu0 %v9540
      %v9636 = vpop.f32.mrb[0].mxu0
      %v9637 = vadd.f32 0.0, %v9636
      %v9638 = vpop.f32.mrb[0].mxu0
      %v9639 = vpop.f32.mrb[0].mxu0
      %v9640 = vadd.f32 0.0, %v9639
      %v9641 = vpop.f32.mrb[0].mxu0
      %9642 = vmatprep.mubr.bf16.mxu0 0
      %9643 = vmatmul.mubr.bf16.gmra.mrb[0].mxu0 %v9543
      %v9644 = vpop.f32.mrb[0].mxu0
      %v9645 = vadd.f32 0.0, %v9644
      %v9646 = vpop.f32.mrb[0].mxu0
      %v9647 = vpop.f32.mrb[0].mxu0
      %v9648 = vadd.f32 0.0, %v9647
      %v9649 = vpop.f32.mrb[0].mxu0
      %9650 = vmatprep.mubr.bf16.mxu0 0
      %9651 = vmatmul.mubr.bf16.gmra.mrb[0].mxu0 %v9546
      %v9652 = vpop.f32.mrb[0].mxu0
      %v9653 = vadd.f32 0.0, %v9652
      %v9654 = vpop.f32.mrb[0].mxu0
      %v9655 = vpop.f32.mrb[0].mxu0
      %v9656 = vadd.f32 0.0, %v9655
      %v9657 = vpop.f32.mrb[0].mxu0
      %9658 = vmatprep.mubr.bf16.mxu0 0
      %9659 = vmatmul.mubr.bf16.gmra.mrb[0].mxu0 %v9549
      %v9660 = vpop.f32.mrb[0].mxu0
      %v9661 = vadd.f32 0.0, %v9660
      %v9662 = vpop.f32.mrb[0].mxu0
      %v9663 = vpop.f32.mrb[0].mxu0
      %v9664 = vadd.f32 0.0, %v9663
      %v9665 = vpop.f32.mrb[0].mxu0
      %9666 = vmatprep.mubr.bf16.mxu0 0
      %9667 = vmatmul.mubr.bf16.gmra.mrb[0].mxu0 %v9552
      %v9668 = vpop.f32.mrb[0].mxu0
      %v9669 = vadd.f32 0.0, %v9668
      %v9670 = vpop.f32.mrb[0].mxu0
      %v9671 = vpop.f32.mrb[0].mxu0
      %v9672 = vadd.f32 0.0, %v9671
      %v9673 = vpop.f32.mrb[0].mxu0
      %9674 = vmatprep.mubr.bf16.mxu0 0
      %9675 = vmatmul.mubr.bf16.gmra.mrb[0].mxu0 %v9555
      %v9676 = vpop.f32.mrb[0].mxu0
      %v9677 = vadd.f32 0.0, %v9676
      %v9678 = vpop.f32.mrb[0].mxu0
      %v9679 = vpop.f32.mrb[0].mxu0
      %v9680 = vadd.f32 0.0, %v9679
      %v9681 = vpop.f32.mrb[0].mxu0
      %9682 = vmatprep.mubr.bf16.mxu0 0
      %9683 = vmatmul.mubr.bf16.gmra.mrb[0].mxu0 %v9558
      %v9684 = vpop.f32.mrb[0].mxu0
      %v9685 = vadd.f32 0.0, %v9684
      %v9686 = vpop.f32.mrb[0].mxu0
      %v9687 = vpop.f32.mrb[0].mxu0
      %v9688 = vadd.f32 0.0, %v9687
      %v9689 = vpop.f32.mrb[0].mxu0
      %9690 = vmatprep.mubr.bf16.mxu0 0
      %9691 = vmatmul.mubr.bf16.gmra.mrb[0].mxu0 %v9561
      %v9692 = vpop.f32.mrb[0].mxu0
      %v9693 = vadd.f32 0.0, %v9692
      %v9694 = vpop.f32.mrb[0].mxu0
      %v9695 = vpop.f32.mrb[0].mxu0
      %v9696 = vadd.f32 0.0, %v9695
      %v9697 = vpop.f32.mrb[0].mxu0
      %9698 = vmatprep.mubr.bf16.mxu0 0
      %9699 = vmatmul.mubr.bf16.gmra.mrb[0].mxu0 %v9564
      %v9700 = vpop.f32.mrb[0].mxu0
      %v9701 = vadd.f32 0.0, %v9700
      %v9702 = vpop.f32.mrb[0].mxu0
      %v9703 = vpop.f32.mrb[0].mxu0
      %v9704 = vadd.f32 0.0, %v9703
      %v9705 = vpop.f32.mrb[0].mxu0
      %9706 = vmatprep.mubr.bf16.mxu0 0
      %9707 = vmatmul.mubr.bf16.gmra.mrb[0].mxu0 %v9567
      %v9708 = vpop.f32.mrb[0].mxu0
      %v9709 = vadd.f32 0.0, %v9708
      %v9710 = vpop.f32.mrb[0].mxu0
      %v9711 = vpop.f32.mrb[0].mxu0
      %v9712 = vadd.f32 0.0, %v9711
      %v9713 = vpop.f32.mrb[0].mxu0
      %9714 = vmatprep.mubr.bf16.mxu0 0
      %9715 = vmatmul.mubr.bf16.gmra.mrb[0].mxu0 %v9570
      %v9716 = vpop.f32.mrb[0].mxu0
      %v9717 = vadd.f32 0.0, %v9716
      %v9718 = vpop.f32.mrb[0].mxu0
      %v9719 = vpop.f32.mrb[0].mxu0
      %v9720 = vadd.f32 0.0, %v9719
      %v9721 = vpop.f32.mrb[0].mxu0
      %9722 = vmatprep.mubr.bf16.mxu0 0
      %9723 = vmatmul.mubr.bf16.gmra.mrb[0].mxu0 %v9573
      %v9724 = vpop.f32.mrb[0].mxu0
      %v9725 = vadd.f32 0.0, %v9724
      %v9726 = vpop.f32.mrb[0].mxu0
      %v9727 = vpop.f32.mrb[0].mxu0
      %v9728 = vadd.f32 0.0, %v9727
      %v9729 = vpop.f32.mrb[0].mxu0
      %9730 = vmatprep.mubr.bf16.mxu0 0
      %9731 = vmatmul.mubr.bf16.gmra.mrb[0].mxu0 %v9576
      %v9732 = vpop.f32.mrb[0].mxu0
      %v9733 = vadd.f32 0.0, %v9732
      %v9734 = vpop.f32.mrb[0].mxu0
      %v9735 = vpop.f32.mrb[0].mxu0
      %v9736 = vadd.f32 0.0, %v9735
      %v9737 = vpop.f32.mrb[0].mxu0
      %9738 = vdwg.mxu0
      %v9739 = vld [vmem:[%s231] sm:$0xff]
      %v9740 = vld [vmem:[%s231 + $0x8] sm:$0xff]
      %v9741 = vld [vmem:[%s231 + $0x10] sm:$0xff]
      %v9742 = vld [vmem:[%s231 + $0x18] sm:$0xff]
      %v9743 = vld [vmem:[%s231 + $0x20] sm:$0xff]
      %v9744 = vld [vmem:[%s231 + $0x28] sm:$0xff]
      %v9745 = vld [vmem:[%s231 + $0x30] sm:$0xff]
      %v9746 = vld [vmem:[%s231 + $0x38] sm:$0xff]
      %v9747 = vld [vmem:[%s231 + $0x40] sm:$0xff]
      %v9748 = vld [vmem:[%s231 + $0x48] sm:$0xff]
      %v9749 = vld [vmem:[%s231 + $0x50] sm:$0xff]
      %v9750 = vld [vmem:[%s231 + $0x58] sm:$0xff]
      %v9751 = vld [vmem:[%s231 + $0x60] sm:$0xff]
      %v9752 = vld [vmem:[%s231 + $0x68] sm:$0xff]
      %v9753 = vld [vmem:[%s231 + $0x70] sm:$0xff]
      %v9754 = vld [vmem:[%s231 + $0x78] sm:$0xff]
      %v9755 = vld [vmem:[%s231 + $0x80] sm:$0xff]
      %v9756 = vld [vmem:[%s231 + $0x88] sm:$0xff]
      %v9757 = vld [vmem:[%s231 + $0x90] sm:$0xff]
      %v9758 = vld [vmem:[%s231 + $0x98] sm:$0xff]
      %v9759 = vld [vmem:[%s231 + $0xa0] sm:$0xff]
      %v9760 = vld [vmem:[%s231 + $0xa8] sm:$0xff]
      %v9761 = vld [vmem:[%s231 + $0xb0] sm:$0xff]
      %v9762 = vld [vmem:[%s231 + $0xb8] sm:$0xff]
      %v9763 = vld [vmem:[%s231 + $0xc0] sm:$0xff]
      %v9764 = vld [vmem:[%s231 + $0xc8] sm:$0xff]
      %v9765 = vld [vmem:[%s231 + $0xd0] sm:$0xff]
      %v9766 = vld [vmem:[%s231 + $0xd8] sm:$0xff]
      %v9767 = vld [vmem:[%s231 + $0xe0] sm:$0xff]
      %v9768 = vld [vmem:[%s231 + $0xe8] sm:$0xff]
      %v9769 = vld [vmem:[%s231 + $0xf0] sm:$0xff]
      %v9770 = vld [vmem:[%s231 + $0xf8] sm:$0xff]
      %v9771 = vadd.f32 %v9739, %v9613
      %v9772 = vadd.f32 %v9740, %v9616
      %v9773 = vadd.f32 %v9741, %v9621
      %v9774 = vadd.f32 %v9742, %v9624
      %v9775 = vadd.f32 %v9743, %v9629
      %v9776 = vadd.f32 %v9744, %v9632
      %v9777 = vadd.f32 %v9745, %v9637
      %v9778 = vadd.f32 %v9746, %v9640
      %v9779 = vadd.f32 %v9747, %v9645
      %v9780 = vadd.f32 %v9748, %v9648
      %v9781 = vadd.f32 %v9749, %v9653
      %v9782 = vadd.f32 %v9750, %v9656
      %v9783 = vadd.f32 %v9751, %v9661
      %v9784 = vadd.f32 %v9752, %v9664
      %v9785 = vadd.f32 %v9753, %v9669
      %v9786 = vadd.f32 %v9754, %v9672
      %v9787 = vadd.f32 %v9755, %v9677
      %v9788 = vadd.f32 %v9756, %v9680
      %v9789 = vadd.f32 %v9757, %v9685
      %v9790 = vadd.f32 %v9758, %v9688
      %v9791 = vadd.f32 %v9759, %v9693
      %v9792 = vadd.f32 %v9760, %v9696
      %v9793 = vadd.f32 %v9761, %v9701
      %v9794 = vadd.f32 %v9762, %v9704
      %v9795 = vadd.f32 %v9763, %v9709
      %v9796 = vadd.f32 %v9764, %v9712
      %v9797 = vadd.f32 %v9765, %v9717
      %v9798 = vadd.f32 %v9766, %v9720
      %v9799 = vadd.f32 %v9767, %v9725
      %v9800 = vadd.f32 %v9768, %v9728
      %v9801 = vadd.f32 %v9769, %v9733
      %v9802 = vadd.f32 %v9770, %v9736
      %9803 = vst [vmem:[%s231] sm:$0xff] %v9771
      %9804 = vst [vmem:[%s231 + $0x8] sm:$0xff] %v9772
      %9805 = vst [vmem:[%s231 + $0x10] sm:$0xff] %v9773
      %9806 = vst [vmem:[%s231 + $0x18] sm:$0xff] %v9774
      %9807 = vst [vmem:[%s231 + $0x20] sm:$0xff] %v9775
      %9808 = vst [vmem:[%s231 + $0x28] sm:$0xff] %v9776
      %9809 = vst [vmem:[%s231 + $0x30] sm:$0xff] %v9777
      %9810 = vst [vmem:[%s231 + $0x38] sm:$0xff] %v9778
      %9811 = vst [vmem:[%s231 + $0x40] sm:$0xff] %v9779
      %9812 = vst [vmem:[%s231 + $0x48] sm:$0xff] %v9780
      %9813 = vst [vmem:[%s231 + $0x50] sm:$0xff] %v9781
      %9814 = vst [vmem:[%s231 + $0x58] sm:$0xff] %v9782
      %9815 = vst [vmem:[%s231 + $0x60] sm:$0xff] %v9783
      %9816 = vst [vmem:[%s231 + $0x68] sm:$0xff] %v9784
      %9817 = vst [vmem:[%s231 + $0x70] sm:$0xff] %v9785
      %9818 = vst [vmem:[%s231 + $0x78] sm:$0xff] %v9786
      %9819 = vst [vmem:[%s231 + $0x80] sm:$0xff] %v9787
      %9820 = vst [vmem:[%s231 + $0x88] sm:$0xff] %v9788
      %9821 = vst [vmem:[%s231 + $0x90] sm:$0xff] %v9789
      %9822 = vst [vmem:[%s231 + $0x98] sm:$0xff] %v9790
      %9823 = vst [vmem:[%s231 + $0xa0] sm:$0xff] %v9791
      %9824 = vst [vmem:[%s231 + $0xa8] sm:$0xff] %v9792
      %9825 = vst [vmem:[%s231 + $0xb0] sm:$0xff] %v9793
      %9826 = vst [vmem:[%s231 + $0xb8] sm:$0xff] %v9794
      %9827 = vst [vmem:[%s231 + $0xc0] sm:$0xff] %v9795
      %9828 = vst [vmem:[%s231 + $0xc8] sm:$0xff] %v9796
      %9829 = vst [vmem:[%s231 + $0xd0] sm:$0xff] %v9797
      %9830 = vst [vmem:[%s231 + $0xd8] sm:$0xff] %v9798
      %9831 = vst [vmem:[%s231 + $0xe0] sm:$0xff] %v9799
      %9832 = vst [vmem:[%s231 + $0xe8] sm:$0xff] %v9800
      %9833 = vst [vmem:[%s231 + $0xf0] sm:$0xff] %v9801
      %9834 = vst [vmem:[%s231 + $0xf8] sm:$0xff] %v9802
      %v9835 = vld [vmem:[%s8724 + $0x3] sm:$0xff]
      %v9836 = vld [vmem:[%s8724 + $0x13] sm:$0xff]
      %v9837 = vld [vmem:[%s8724 + $0x23] sm:$0xff]
      %v9838 = vld [vmem:[%s8724 + $0x33] sm:$0xff]
      %v9839 = vld [vmem:[%s8724 + $0x43] sm:$0xff]
      %v9840 = vld [vmem:[%s8724 + $0x53] sm:$0xff]
      %v9841 = vld [vmem:[%s8724 + $0x63] sm:$0xff]
      %v9842 = vld [vmem:[%s8724 + $0x73] sm:$0xff]
      %v9843 = vld [vmem:[%s8724 + $0xc3] sm:$0xff]
      %v9844 = vld [vmem:[%s8724 + $0xd3] sm:$0xff]
      %v9845 = vld [vmem:[%s8724 + $0xe3] sm:$0xff]
      %v9846 = vld [vmem:[%s8724 + $0xf3] sm:$0xff]
      %v9847 = vld [vmem:[%s8724 + $0x103] sm:$0xff]
      %v9848 = vld [vmem:[%s8724 + $0x113] sm:$0xff]
      %v9849 = vld [vmem:[%s8724 + $0x123] sm:$0xff]
      %v9850 = vld [vmem:[%s8724 + $0x133] sm:$0xff]
      %v9851 = vld [vmem:[%s8724 + $0x183] sm:$0xff]
      %v9852 = vld [vmem:[%s8724 + $0x193] sm:$0xff]
      %v9853 = vld [vmem:[%s8724 + $0x1a3] sm:$0xff]
      %v9854 = vld [vmem:[%s8724 + $0x1b3] sm:$0xff]
      %v9855 = vld [vmem:[%s8724 + $0x1c3] sm:$0xff]
      %v9856 = vld [vmem:[%s8724 + $0x1d3] sm:$0xff]
      %v9857 = vld [vmem:[%s8724 + $0x1e3] sm:$0xff]
      %v9858 = vld [vmem:[%s8724 + $0x1f3] sm:$0xff]
      %v9859 = vld [vmem:[%s8724 + $0x243] sm:$0xff]
      %v9860 = vld [vmem:[%s8724 + $0x253] sm:$0xff]
      %v9861 = vld [vmem:[%s8724 + $0x263] sm:$0xff]
      %v9862 = vld [vmem:[%s8724 + $0x273] sm:$0xff]
      %v9863 = vld [vmem:[%s8724 + $0x283] sm:$0xff]
      %v9864 = vld [vmem:[%s8724 + $0x293] sm:$0xff]
      %v9865 = vld [vmem:[%s8724 + $0x2a3] sm:$0xff]
      %v9866 = vld [vmem:[%s8724 + $0x2b3] sm:$0xff]
      %v9867 = vpack.c.bf16 %v9836, %v9835
      %v9868 = vpack.c.bf16 %v9838, %v9837
      %v9869 = vpack.c.bf16 %v9840, %v9839
      %v9870 = vpack.c.bf16 %v9842, %v9841
      %v9871 = vpack.c.bf16 %v9844, %v9843
      %v9872 = vpack.c.bf16 %v9846, %v9845
      %v9873 = vpack.c.bf16 %v9848, %v9847
      %v9874 = vpack.c.bf16 %v9850, %v9849
      %v9875 = vpack.c.bf16 %v9852, %v9851
      %v9876 = vpack.c.bf16 %v9854, %v9853
      %v9877 = vpack.c.bf16 %v9856, %v9855
      %v9878 = vpack.c.bf16 %v9858, %v9857
      %v9879 = vpack.c.bf16 %v9860, %v9859
      %v9880 = vpack.c.bf16 %v9862, %v9861
      %v9881 = vpack.c.bf16 %v9864, %v9863
      %v9882 = vpack.c.bf16 %v9866, %v9865
      %s9883 = scalar_lea.vmem %s3, 368
      %v9884 = vld [vmem:[%s9883] sm:$0xf]
      %v9885 = vld [vmem:[%s9883 + $0x4] sm:$0xf]
      %v9886 = vld [vmem:[%s9883 + $0x8] sm:$0xf]
      %v9887 = vld [vmem:[%s9883 + $0xc] sm:$0xf]
      %v9892 = vunpack.c.l.b16 %v9884
      %v9893 = vunpack.c.l.b16 %v9885
      %v9894 = vunpack.c.l.b16 %v9886
      %v9895 = vunpack.c.l.b16 %v9887
      %v9896 = vpack.c.b16 %v9893, %v9892
      %v9897 = vpack.c.b16 %v9895, %v9894
      %v9901 = vsel %vm593, %v9867, 0
      %v9904 = vsel %vm593, %v9868, 0
      %v9907 = vsel %vm593, %v9869, 0
      %v9910 = vsel %vm593, %v9870, 0
      %v9913 = vsel %vm593, %v9871, 0
      %v9916 = vsel %vm593, %v9872, 0
      %v9919 = vsel %vm593, %v9873, 0
      %v9922 = vsel %vm593, %v9874, 0
      %v9925 = vsel %vm593, %v9875, 0
      %v9928 = vsel %vm593, %v9876, 0
      %v9931 = vsel %vm593, %v9877, 0
      %v9934 = vsel %vm593, %v9878, 0
      %v9937 = vsel %vm593, %v9879, 0
      %v9940 = vsel %vm593, %v9880, 0
      %v9943 = vsel %vm593, %v9881, 0
      %v9946 = vsel %vm593, %v9882, 0
      %9948 = vmatprep.subr.bf16.mxu0 0
      %9949 = vmatpush1.bf16.msra.mxu0 %v9896
      %9950 = vmatprep.subr.bf16.mxu0 0
      %9951 = vmatpush1.bf16.msra.mxu0 %v9897
      %9952 = vmatprep.subr.bf16.mxu0 0
      %9953 = vmatpush1.bf16.msra.mxu0 0
      %9954 = vmatprep.subr.bf16.mxu0 0
      %9955 = vmatpush1.bf16.msra.mxu0 0
      %9956 = vmatprep.subr.bf16.mxu0 0
      %9957 = vmatpush1.bf16.msra.mxu0 0
      %9958 = vmatprep.subr.bf16.mxu0 0
      %9959 = vmatpush1.bf16.msra.mxu0 0
      %9960 = vmatprep.subr.bf16.mxu0 0
      %9961 = vmatpush1.bf16.msra.mxu0 0
      %9962 = vmatprep.subr.bf16.mxu0 0
      %9963 = vmatpush1.bf16.msra.mxu0 0
      %9964 = vmatprep.subr.bf16.mxu0 0
      %9965 = vmatpush1.bf16.msra.mxu0 0
      %9966 = vmatprep.subr.bf16.mxu0 0
      %9967 = vmatpush1.bf16.msra.mxu0 0
      %9968 = vmatprep.subr.bf16.mxu0 0
      %9969 = vmatpush1.bf16.msra.mxu0 0
      %9970 = vmatprep.subr.bf16.mxu0 0
      %9971 = vmatpush1.bf16.msra.mxu0 0
      %9972 = vmatprep.subr.bf16.mxu0 0
      %9973 = vmatpush1.bf16.msra.mxu0 0
      %9974 = vmatprep.subr.bf16.mxu0 0
      %9975 = vmatpush1.bf16.msra.mxu0 0
      %9976 = vmatprep.subr.bf16.mxu0 0
      %9977 = vmatpush1.bf16.msra.mxu0 0
      %9978 = vmatprep.subr.bf16.mxu0 0
      %9979 = vmatpush1.bf16.msra.mxu0 0
      %9980 = vmatprep.mubr.bf16.mxu0 0
      %9981 = vmatmul.mubr.bf16.gmra.mrb[0].mxu0 %v9901
      %v9982 = vpop.f32.mrb[0].mxu0
      %v9983 = vadd.f32 0.0, %v9982
      %v9984 = vpop.f32.mrb[0].mxu0
      %v9985 = vpop.f32.mrb[0].mxu0
      %v9986 = vadd.f32 0.0, %v9985
      %v9987 = vpop.f32.mrb[0].mxu0
      %9988 = vmatprep.mubr.bf16.mxu0 0
      %9989 = vmatmul.mubr.bf16.gmra.mrb[0].mxu0 %v9904
      %v9990 = vpop.f32.mrb[0].mxu0
      %v9991 = vadd.f32 0.0, %v9990
      %v9992 = vpop.f32.mrb[0].mxu0
      %v9993 = vpop.f32.mrb[0].mxu0
      %v9994 = vadd.f32 0.0, %v9993
      %v9995 = vpop.f32.mrb[0].mxu0
      %9996 = vmatprep.mubr.bf16.mxu0 0
      %9997 = vmatmul.mubr.bf16.gmra.mrb[0].mxu0 %v9907
      %v9998 = vpop.f32.mrb[0].mxu0
      %v9999 = vadd.f32 0.0, %v9998
      %v10000 = vpop.f32.mrb[0].mxu0
      %v10001 = vpop.f32.mrb[0].mxu0
      %v10002 = vadd.f32 0.0, %v10001
      %v10003 = vpop.f32.mrb[0].mxu0
      %10004 = vmatprep.mubr.bf16.mxu0 0
      %10005 = vmatmul.mubr.bf16.gmra.mrb[0].mxu0 %v9910
      %v10006 = vpop.f32.mrb[0].mxu0
      %v10007 = vadd.f32 0.0, %v10006
      %v10008 = vpop.f32.mrb[0].mxu0
      %v10009 = vpop.f32.mrb[0].mxu0
      %v10010 = vadd.f32 0.0, %v10009
      %v10011 = vpop.f32.mrb[0].mxu0
      %10012 = vmatprep.mubr.bf16.mxu0 0
      %10013 = vmatmul.mubr.bf16.gmra.mrb[0].mxu0 %v9913
      %v10014 = vpop.f32.mrb[0].mxu0
      %v10015 = vadd.f32 0.0, %v10014
      %v10016 = vpop.f32.mrb[0].mxu0
      %v10017 = vpop.f32.mrb[0].mxu0
      %v10018 = vadd.f32 0.0, %v10017
      %v10019 = vpop.f32.mrb[0].mxu0
      %10020 = vmatprep.mubr.bf16.mxu0 0
      %10021 = vmatmul.mubr.bf16.gmra.mrb[0].mxu0 %v9916
      %v10022 = vpop.f32.mrb[0].mxu0
      %v10023 = vadd.f32 0.0, %v10022
      %v10024 = vpop.f32.mrb[0].mxu0
      %v10025 = vpop.f32.mrb[0].mxu0
      %v10026 = vadd.f32 0.0, %v10025
      %v10027 = vpop.f32.mrb[0].mxu0
      %10028 = vmatprep.mubr.bf16.mxu0 0
      %10029 = vmatmul.mubr.bf16.gmra.mrb[0].mxu0 %v9919
      %v10030 = vpop.f32.mrb[0].mxu0
      %v10031 = vadd.f32 0.0, %v10030
      %v10032 = vpop.f32.mrb[0].mxu0
      %v10033 = vpop.f32.mrb[0].mxu0
      %v10034 = vadd.f32 0.0, %v10033
      %v10035 = vpop.f32.mrb[0].mxu0
      %10036 = vmatprep.mubr.bf16.mxu0 0
      %10037 = vmatmul.mubr.bf16.gmra.mrb[0].mxu0 %v9922
      %v10038 = vpop.f32.mrb[0].mxu0
      %v10039 = vadd.f32 0.0, %v10038
      %v10040 = vpop.f32.mrb[0].mxu0
      %v10041 = vpop.f32.mrb[0].mxu0
      %v10042 = vadd.f32 0.0, %v10041
      %v10043 = vpop.f32.mrb[0].mxu0
      %10044 = vmatprep.mubr.bf16.mxu0 0
      %10045 = vmatmul.mubr.bf16.gmra.mrb[0].mxu0 %v9925
      %v10046 = vpop.f32.mrb[0].mxu0
      %v10047 = vadd.f32 0.0, %v10046
      %v10048 = vpop.f32.mrb[0].mxu0
      %v10049 = vpop.f32.mrb[0].mxu0
      %v10050 = vadd.f32 0.0, %v10049
      %v10051 = vpop.f32.mrb[0].mxu0
      %10052 = vmatprep.mubr.bf16.mxu0 0
      %10053 = vmatmul.mubr.bf16.gmra.mrb[0].mxu0 %v9928
      %v10054 = vpop.f32.mrb[0].mxu0
      %v10055 = vadd.f32 0.0, %v10054
      %v10056 = vpop.f32.mrb[0].mxu0
      %v10057 = vpop.f32.mrb[0].mxu0
      %v10058 = vadd.f32 0.0, %v10057
      %v10059 = vpop.f32.mrb[0].mxu0
      %10060 = vmatprep.mubr.bf16.mxu0 0
      %10061 = vmatmul.mubr.bf16.gmra.mrb[0].mxu0 %v9931
      %v10062 = vpop.f32.mrb[0].mxu0
      %v10063 = vadd.f32 0.0, %v10062
      %v10064 = vpop.f32.mrb[0].mxu0
      %v10065 = vpop.f32.mrb[0].mxu0
      %v10066 = vadd.f32 0.0, %v10065
      %v10067 = vpop.f32.mrb[0].mxu0
      %10068 = vmatprep.mubr.bf16.mxu0 0
      %10069 = vmatmul.mubr.bf16.gmra.mrb[0].mxu0 %v9934
      %v10070 = vpop.f32.mrb[0].mxu0
      %v10071 = vadd.f32 0.0, %v10070
      %v10072 = vpop.f32.mrb[0].mxu0
      %v10073 = vpop.f32.mrb[0].mxu0
      %v10074 = vadd.f32 0.0, %v10073
      %v10075 = vpop.f32.mrb[0].mxu0
      %10076 = vmatprep.mubr.bf16.mxu0 0
      %10077 = vmatmul.mubr.bf16.gmra.mrb[0].mxu0 %v9937
      %v10078 = vpop.f32.mrb[0].mxu0
      %v10079 = vadd.f32 0.0, %v10078
      %v10080 = vpop.f32.mrb[0].mxu0
      %v10081 = vpop.f32.mrb[0].mxu0
      %v10082 = vadd.f32 0.0, %v10081
      %v10083 = vpop.f32.mrb[0].mxu0
      %10084 = vmatprep.mubr.bf16.mxu0 0
      %10085 = vmatmul.mubr.bf16.gmra.mrb[0].mxu0 %v9940
      %v10086 = vpop.f32.mrb[0].mxu0
      %v10087 = vadd.f32 0.0, %v10086
      %v10088 = vpop.f32.mrb[0].mxu0
      %v10089 = vpop.f32.mrb[0].mxu0
      %v10090 = vadd.f32 0.0, %v10089
      %v10091 = vpop.f32.mrb[0].mxu0
      %10092 = vmatprep.mubr.bf16.mxu0 0
      %10093 = vmatmul.mubr.bf16.gmra.mrb[0].mxu0 %v9943
      %v10094 = vpop.f32.mrb[0].mxu0
      %v10095 = vadd.f32 0.0, %v10094
      %v10096 = vpop.f32.mrb[0].mxu0
      %v10097 = vpop.f32.mrb[0].mxu0
      %v10098 = vadd.f32 0.0, %v10097
      %v10099 = vpop.f32.mrb[0].mxu0
      %10100 = vmatprep.mubr.bf16.mxu0 0
      %10101 = vmatmul.mubr.bf16.gmra.mrb[0].mxu0 %v9946
      %v10102 = vpop.f32.mrb[0].mxu0
      %v10103 = vadd.f32 0.0, %v10102
      %v10104 = vpop.f32.mrb[0].mxu0
      %v10105 = vpop.f32.mrb[0].mxu0
      %v10106 = vadd.f32 0.0, %v10105
      %v10107 = vpop.f32.mrb[0].mxu0
      %10108 = vdwg.mxu0
      %v10109 = vld [vmem:[%s231] sm:$0xff]
      %v10110 = vld [vmem:[%s231 + $0x8] sm:$0xff]
      %v10111 = vld [vmem:[%s231 + $0x10] sm:$0xff]
      %v10112 = vld [vmem:[%s231 + $0x18] sm:$0xff]
      %v10113 = vld [vmem:[%s231 + $0x20] sm:$0xff]
      %v10114 = vld [vmem:[%s231 + $0x28] sm:$0xff]
      %v10115 = vld [vmem:[%s231 + $0x30] sm:$0xff]
      %v10116 = vld [vmem:[%s231 + $0x38] sm:$0xff]
      %v10117 = vld [vmem:[%s231 + $0x40] sm:$0xff]
      %v10118 = vld [vmem:[%s231 + $0x48] sm:$0xff]
      %v10119 = vld [vmem:[%s231 + $0x50] sm:$0xff]
      %v10120 = vld [vmem:[%s231 + $0x58] sm:$0xff]
      %v10121 = vld [vmem:[%s231 + $0x60] sm:$0xff]
      %v10122 = vld [vmem:[%s231 + $0x68] sm:$0xff]
      %v10123 = vld [vmem:[%s231 + $0x70] sm:$0xff]
      %v10124 = vld [vmem:[%s231 + $0x78] sm:$0xff]
      %v10125 = vld [vmem:[%s231 + $0x80] sm:$0xff]
      %v10126 = vld [vmem:[%s231 + $0x88] sm:$0xff]
      %v10127 = vld [vmem:[%s231 + $0x90] sm:$0xff]
      %v10128 = vld [vmem:[%s231 + $0x98] sm:$0xff]
      %v10129 = vld [vmem:[%s231 + $0xa0] sm:$0xff]
      %v10130 = vld [vmem:[%s231 + $0xa8] sm:$0xff]
      %v10131 = vld [vmem:[%s231 + $0xb0] sm:$0xff]
      %v10132 = vld [vmem:[%s231 + $0xb8] sm:$0xff]
      %v10133 = vld [vmem:[%s231 + $0xc0] sm:$0xff]
      %v10134 = vld [vmem:[%s231 + $0xc8] sm:$0xff]
      %v10135 = vld [vmem:[%s231 + $0xd0] sm:$0xff]
      %v10136 = vld [vmem:[%s231 + $0xd8] sm:$0xff]
      %v10137 = vld [vmem:[%s231 + $0xe0] sm:$0xff]
      %v10138 = vld [vmem:[%s231 + $0xe8] sm:$0xff]
      %v10139 = vld [vmem:[%s231 + $0xf0] sm:$0xff]
      %v10140 = vld [vmem:[%s231 + $0xf8] sm:$0xff]
      %v10141 = vadd.f32 %v10109, %v9983
      %v10142 = vadd.f32 %v10110, %v9986
      %v10143 = vadd.f32 %v10111, %v9991
      %v10144 = vadd.f32 %v10112, %v9994
      %v10145 = vadd.f32 %v10113, %v9999
      %v10146 = vadd.f32 %v10114, %v10002
      %v10147 = vadd.f32 %v10115, %v10007
      %v10148 = vadd.f32 %v10116, %v10010
      %v10149 = vadd.f32 %v10117, %v10015
      %v10150 = vadd.f32 %v10118, %v10018
      %v10151 = vadd.f32 %v10119, %v10023
      %v10152 = vadd.f32 %v10120, %v10026
      %v10153 = vadd.f32 %v10121, %v10031
      %v10154 = vadd.f32 %v10122, %v10034
      %v10155 = vadd.f32 %v10123, %v10039
      %v10156 = vadd.f32 %v10124, %v10042
      %v10157 = vadd.f32 %v10125, %v10047
      %v10158 = vadd.f32 %v10126, %v10050
      %v10159 = vadd.f32 %v10127, %v10055
      %v10160 = vadd.f32 %v10128, %v10058
      %v10161 = vadd.f32 %v10129, %v10063
      %v10162 = vadd.f32 %v10130, %v10066
      %v10163 = vadd.f32 %v10131, %v10071
      %v10164 = vadd.f32 %v10132, %v10074
      %v10165 = vadd.f32 %v10133, %v10079
      %v10166 = vadd.f32 %v10134, %v10082
      %v10167 = vadd.f32 %v10135, %v10087
      %v10168 = vadd.f32 %v10136, %v10090
      %v10169 = vadd.f32 %v10137, %v10095
      %v10170 = vadd.f32 %v10138, %v10098
      %v10171 = vadd.f32 %v10139, %v10103
      %v10172 = vadd.f32 %v10140, %v10106
      %10173 = vst [vmem:[%s231] sm:$0xff] %v10141
      %10174 = vst [vmem:[%s231 + $0x8] sm:$0xff] %v10142
      %10175 = vst [vmem:[%s231 + $0x10] sm:$0xff] %v10143
      %10176 = vst [vmem:[%s231 + $0x18] sm:$0xff] %v10144
      %10177 = vst [vmem:[%s231 + $0x20] sm:$0xff] %v10145
      %10178 = vst [vmem:[%s231 + $0x28] sm:$0xff] %v10146
      %10179 = vst [vmem:[%s231 + $0x30] sm:$0xff] %v10147
      %10180 = vst [vmem:[%s231 + $0x38] sm:$0xff] %v10148
      %10181 = vst [vmem:[%s231 + $0x40] sm:$0xff] %v10149
      %10182 = vst [vmem:[%s231 + $0x48] sm:$0xff] %v10150
      %10183 = vst [vmem:[%s231 + $0x50] sm:$0xff] %v10151
      %10184 = vst [vmem:[%s231 + $0x58] sm:$0xff] %v10152
      %10185 = vst [vmem:[%s231 + $0x60] sm:$0xff] %v10153
      %10186 = vst [vmem:[%s231 + $0x68] sm:$0xff] %v10154
      %10187 = vst [vmem:[%s231 + $0x70] sm:$0xff] %v10155
      %10188 = vst [vmem:[%s231 + $0x78] sm:$0xff] %v10156
      %10189 = vst [vmem:[%s231 + $0x80] sm:$0xff] %v10157
      %10190 = vst [vmem:[%s231 + $0x88] sm:$0xff] %v10158
      %10191 = vst [vmem:[%s231 + $0x90] sm:$0xff] %v10159
      %10192 = vst [vmem:[%s231 + $0x98] sm:$0xff] %v10160
      %10193 = vst [vmem:[%s231 + $0xa0] sm:$0xff] %v10161
      %10194 = vst [vmem:[%s231 + $0xa8] sm:$0xff] %v10162
      %10195 = vst [vmem:[%s231 + $0xb0] sm:$0xff] %v10163
      %10196 = vst [vmem:[%s231 + $0xb8] sm:$0xff] %v10164
      %10197 = vst [vmem:[%s231 + $0xc0] sm:$0xff] %v10165
      %10198 = vst [vmem:[%s231 + $0xc8] sm:$0xff] %v10166
      %10199 = vst [vmem:[%s231 + $0xd0] sm:$0xff] %v10167
      %10200 = vst [vmem:[%s231 + $0xd8] sm:$0xff] %v10168
      %10201 = vst [vmem:[%s231 + $0xe0] sm:$0xff] %v10169
      %10202 = vst [vmem:[%s231 + $0xe8] sm:$0xff] %v10170
      %10203 = vst [vmem:[%s231 + $0xf0] sm:$0xff] %v10171
      %10204 = vst [vmem:[%s231 + $0xf8] sm:$0xff] %v10172
      %v10205 = vld [vmem:[%s8724 + $0x4] sm:$0xff]
      %v10206 = vld [vmem:[%s8724 + $0x14] sm:$0xff]
      %v10207 = vld [vmem:[%s8724 + $0x24] sm:$0xff]
      %v10208 = vld [vmem:[%s8724 + $0x34] sm:$0xff]
      %v10209 = vld [vmem:[%s8724 + $0x44] sm:$0xff]
      %v10210 = vld [vmem:[%s8724 + $0x54] sm:$0xff]
      %v10211 = vld [vmem:[%s8724 + $0x64] sm:$0xff]
      %v10212 = vld [vmem:[%s8724 + $0x74] sm:$0xff]
      %v10213 = vld [vmem:[%s8724 + $0xc4] sm:$0xff]
      %v10214 = vld [vmem:[%s8724 + $0xd4] sm:$0xff]
      %v10215 = vld [vmem:[%s8724 + $0xe4] sm:$0xff]
      %v10216 = vld [vmem:[%s8724 + $0xf4] sm:$0xff]
      %v10217 = vld [vmem:[%s8724 + $0x104] sm:$0xff]
      %v10218 = vld [vmem:[%s8724 + $0x114] sm:$0xff]
      %v10219 = vld [vmem:[%s8724 + $0x124] sm:$0xff]
      %v10220 = vld [vmem:[%s8724 + $0x134] sm:$0xff]
      %v10221 = vld [vmem:[%s8724 + $0x184] sm:$0xff]
      %v10222 = vld [vmem:[%s8724 + $0x194] sm:$0xff]
      %v10223 = vld [vmem:[%s8724 + $0x1a4] sm:$0xff]
      %v10224 = vld [vmem:[%s8724 + $0x1b4] sm:$0xff]
      %v10225 = vld [vmem:[%s8724 + $0x1c4] sm:$0xff]
      %v10226 = vld [vmem:[%s8724 + $0x1d4] sm:$0xff]
      %v10227 = vld [vmem:[%s8724 + $0x1e4] sm:$0xff]
      %v10228 = vld [vmem:[%s8724 + $0x1f4] sm:$0xff]
      %v10229 = vld [vmem:[%s8724 + $0x244] sm:$0xff]
      %v10230 = vld [vmem:[%s8724 + $0x254] sm:$0xff]
      %v10231 = vld [vmem:[%s8724 + $0x264] sm:$0xff]
      %v10232 = vld [vmem:[%s8724 + $0x274] sm:$0xff]
      %v10233 = vld [vmem:[%s8724 + $0x284] sm:$0xff]
      %v10234 = vld [vmem:[%s8724 + $0x294] sm:$0xff]
      %v10235 = vld [vmem:[%s8724 + $0x2a4] sm:$0xff]
      %v10236 = vld [vmem:[%s8724 + $0x2b4] sm:$0xff]
      %v10237 = vpack.c.bf16 %v10206, %v10205
      %v10238 = vpack.c.bf16 %v10208, %v10207
      %v10239 = vpack.c.bf16 %v10210, %v10209
      %v10240 = vpack.c.bf16 %v10212, %v10211
      %v10241 = vpack.c.bf16 %v10214, %v10213
      %v10242 = vpack.c.bf16 %v10216, %v10215
      %v10243 = vpack.c.bf16 %v10218, %v10217
      %v10244 = vpack.c.bf16 %v10220, %v10219
      %v10245 = vpack.c.bf16 %v10222, %v10221
      %v10246 = vpack.c.bf16 %v10224, %v10223
      %v10247 = vpack.c.bf16 %v10226, %v10225
      %v10248 = vpack.c.bf16 %v10228, %v10227
      %v10249 = vpack.c.bf16 %v10230, %v10229
      %v10250 = vpack.c.bf16 %v10232, %v10231
      %v10251 = vpack.c.bf16 %v10234, %v10233
      %v10252 = vpack.c.bf16 %v10236, %v10235
      %s10253 = scalar_lea.vmem %s3, 384
      %v10254 = vld [vmem:[%s10253] sm:$0xf]
      %v10255 = vld [vmem:[%s10253 + $0x4] sm:$0xf]
      %v10256 = vld [vmem:[%s10253 + $0x8] sm:$0xf]
      %v10257 = vld [vmem:[%s10253 + $0xc] sm:$0xf]
      %v10262 = vunpack.c.l.b16 %v10254
      %v10263 = vunpack.c.l.b16 %v10255
      %v10264 = vunpack.c.l.b16 %v10256
      %v10265 = vunpack.c.l.b16 %v10257
      %v10266 = vpack.c.b16 %v10263, %v10262
      %v10267 = vpack.c.b16 %v10265, %v10264
      %v10271 = vsel %vm593, %v10237, 0
      %v10274 = vsel %vm593, %v10238, 0
      %v10277 = vsel %vm593, %v10239, 0
      %v10280 = vsel %vm593, %v10240, 0
      %v10283 = vsel %vm593, %v10241, 0
      %v10286 = vsel %vm593, %v10242, 0
      %v10289 = vsel %vm593, %v10243, 0
      %v10292 = vsel %vm593, %v10244, 0
      %v10295 = vsel %vm593, %v10245, 0
      %v10298 = vsel %vm593, %v10246, 0
      %v10301 = vsel %vm593, %v10247, 0
      %v10304 = vsel %vm593, %v10248, 0
      %v10307 = vsel %vm593, %v10249, 0
      %v10310 = vsel %vm593, %v10250, 0
      %v10313 = vsel %vm593, %v10251, 0
      %v10316 = vsel %vm593, %v10252, 0
      %10318 = vmatprep.subr.bf16.mxu0 0
      %10319 = vmatpush1.bf16.msra.mxu0 %v10266
      %10320 = vmatprep.subr.bf16.mxu0 0
      %10321 = vmatpush1.bf16.msra.mxu0 %v10267
      %10322 = vmatprep.subr.bf16.mxu0 0
      %10323 = vmatpush1.bf16.msra.mxu0 0
      %10324 = vmatprep.subr.bf16.mxu0 0
      %10325 = vmatpush1.bf16.msra.mxu0 0
      %10326 = vmatprep.subr.bf16.mxu0 0
      %10327 = vmatpush1.bf16.msra.mxu0 0
      %10328 = vmatprep.subr.bf16.mxu0 0
      %10329 = vmatpush1.bf16.msra.mxu0 0
      %10330 = vmatprep.subr.bf16.mxu0 0
      %10331 = vmatpush1.bf16.msra.mxu0 0
      %10332 = vmatprep.subr.bf16.mxu0 0
      %10333 = vmatpush1.bf16.msra.mxu0 0
      %10334 = vmatprep.subr.bf16.mxu0 0
      %10335 = vmatpush1.bf16.msra.mxu0 0
      %10336 = vmatprep.subr.bf16.mxu0 0
      %10337 = vmatpush1.bf16.msra.mxu0 0
      %10338 = vmatprep.subr.bf16.mxu0 0
      %10339 = vmatpush1.bf16.msra.mxu0 0
      %10340 = vmatprep.subr.bf16.mxu0 0
      %10341 = vmatpush1.bf16.msra.mxu0 0
      %10342 = vmatprep.subr.bf16.mxu0 0
      %10343 = vmatpush1.bf16.msra.mxu0 0
      %10344 = vmatprep.subr.bf16.mxu0 0
      %10345 = vmatpush1.bf16.msra.mxu0 0
      %10346 = vmatprep.subr.bf16.mxu0 0
      %10347 = vmatpush1.bf16.msra.mxu0 0
      %10348 = vmatprep.subr.bf16.mxu0 0
      %10349 = vmatpush1.bf16.msra.mxu0 0
      %10350 = vmatprep.mubr.bf16.mxu0 0
      %10351 = vmatmul.mubr.bf16.gmra.mrb[0].mxu0 %v10271
      %v10352 = vpop.f32.mrb[0].mxu0
      %v10353 = vadd.f32 0.0, %v10352
      %v10354 = vpop.f32.mrb[0].mxu0
      %v10355 = vpop.f32.mrb[0].mxu0
      %v10356 = vadd.f32 0.0, %v10355
      %v10357 = vpop.f32.mrb[0].mxu0
      %10358 = vmatprep.mubr.bf16.mxu0 0
      %10359 = vmatmul.mubr.bf16.gmra.mrb[0].mxu0 %v10274
      %v10360 = vpop.f32.mrb[0].mxu0
      %v10361 = vadd.f32 0.0, %v10360
      %v10362 = vpop.f32.mrb[0].mxu0
      %v10363 = vpop.f32.mrb[0].mxu0
      %v10364 = vadd.f32 0.0, %v10363
      %v10365 = vpop.f32.mrb[0].mxu0
      %10366 = vmatprep.mubr.bf16.mxu0 0
      %10367 = vmatmul.mubr.bf16.gmra.mrb[0].mxu0 %v10277
      %v10368 = vpop.f32.mrb[0].mxu0
      %v10369 = vadd.f32 0.0, %v10368
      %v10370 = vpop.f32.mrb[0].mxu0
      %v10371 = vpop.f32.mrb[0].mxu0
      %v10372 = vadd.f32 0.0, %v10371
      %v10373 = vpop.f32.mrb[0].mxu0
      %10374 = vmatprep.mubr.bf16.mxu0 0
      %10375 = vmatmul.mubr.bf16.gmra.mrb[0].mxu0 %v10280
      %v10376 = vpop.f32.mrb[0].mxu0
      %v10377 = vadd.f32 0.0, %v10376
      %v10378 = vpop.f32.mrb[0].mxu0
      %v10379 = vpop.f32.mrb[0].mxu0
      %v10380 = vadd.f32 0.0, %v10379
      %v10381 = vpop.f32.mrb[0].mxu0
      %10382 = vmatprep.mubr.bf16.mxu0 0
      %10383 = vmatmul.mubr.bf16.gmra.mrb[0].mxu0 %v10283
      %v10384 = vpop.f32.mrb[0].mxu0
      %v10385 = vadd.f32 0.0, %v10384
      %v10386 = vpop.f32.mrb[0].mxu0
      %v10387 = vpop.f32.mrb[0].mxu0
      %v10388 = vadd.f32 0.0, %v10387
      %v10389 = vpop.f32.mrb[0].mxu0
      %10390 = vmatprep.mubr.bf16.mxu0 0
      %10391 = vmatmul.mubr.bf16.gmra.mrb[0].mxu0 %v10286
      %v10392 = vpop.f32.mrb[0].mxu0
      %v10393 = vadd.f32 0.0, %v10392
      %v10394 = vpop.f32.mrb[0].mxu0
      %v10395 = vpop.f32.mrb[0].mxu0
      %v10396 = vadd.f32 0.0, %v10395
      %v10397 = vpop.f32.mrb[0].mxu0
      %10398 = vmatprep.mubr.bf16.mxu0 0
      %10399 = vmatmul.mubr.bf16.gmra.mrb[0].mxu0 %v10289
      %v10400 = vpop.f32.mrb[0].mxu0
      %v10401 = vadd.f32 0.0, %v10400
      %v10402 = vpop.f32.mrb[0].mxu0
      %v10403 = vpop.f32.mrb[0].mxu0
      %v10404 = vadd.f32 0.0, %v10403
      %v10405 = vpop.f32.mrb[0].mxu0
      %10406 = vmatprep.mubr.bf16.mxu0 0
      %10407 = vmatmul.mubr.bf16.gmra.mrb[0].mxu0 %v10292
      %v10408 = vpop.f32.mrb[0].mxu0
      %v10409 = vadd.f32 0.0, %v10408
      %v10410 = vpop.f32.mrb[0].mxu0
      %v10411 = vpop.f32.mrb[0].mxu0
      %v10412 = vadd.f32 0.0, %v10411
      %v10413 = vpop.f32.mrb[0].mxu0
      %10414 = vmatprep.mubr.bf16.mxu0 0
      %10415 = vmatmul.mubr.bf16.gmra.mrb[0].mxu0 %v10295
      %v10416 = vpop.f32.mrb[0].mxu0
      %v10417 = vadd.f32 0.0, %v10416
      %v10418 = vpop.f32.mrb[0].mxu0
      %v10419 = vpop.f32.mrb[0].mxu0
      %v10420 = vadd.f32 0.0, %v10419
      %v10421 = vpop.f32.mrb[0].mxu0
      %10422 = vmatprep.mubr.bf16.mxu0 0
      %10423 = vmatmul.mubr.bf16.gmra.mrb[0].mxu0 %v10298
      %v10424 = vpop.f32.mrb[0].mxu0
      %v10425 = vadd.f32 0.0, %v10424
      %v10426 = vpop.f32.mrb[0].mxu0
      %v10427 = vpop.f32.mrb[0].mxu0
      %v10428 = vadd.f32 0.0, %v10427
      %v10429 = vpop.f32.mrb[0].mxu0
      %10430 = vmatprep.mubr.bf16.mxu0 0
      %10431 = vmatmul.mubr.bf16.gmra.mrb[0].mxu0 %v10301
      %v10432 = vpop.f32.mrb[0].mxu0
      %v10433 = vadd.f32 0.0, %v10432
      %v10434 = vpop.f32.mrb[0].mxu0
      %v10435 = vpop.f32.mrb[0].mxu0
      %v10436 = vadd.f32 0.0, %v10435
      %v10437 = vpop.f32.mrb[0].mxu0
      %10438 = vmatprep.mubr.bf16.mxu0 0
      %10439 = vmatmul.mubr.bf16.gmra.mrb[0].mxu0 %v10304
      %v10440 = vpop.f32.mrb[0].mxu0
      %v10441 = vadd.f32 0.0, %v10440
      %v10442 = vpop.f32.mrb[0].mxu0
      %v10443 = vpop.f32.mrb[0].mxu0
      %v10444 = vadd.f32 0.0, %v10443
      %v10445 = vpop.f32.mrb[0].mxu0
      %10446 = vmatprep.mubr.bf16.mxu0 0
      %10447 = vmatmul.mubr.bf16.gmra.mrb[0].mxu0 %v10307
      %v10448 = vpop.f32.mrb[0].mxu0
      %v10449 = vadd.f32 0.0, %v10448
      %v10450 = vpop.f32.mrb[0].mxu0
      %v10451 = vpop.f32.mrb[0].mxu0
      %v10452 = vadd.f32 0.0, %v10451
      %v10453 = vpop.f32.mrb[0].mxu0
      %10454 = vmatprep.mubr.bf16.mxu0 0
      %10455 = vmatmul.mubr.bf16.gmra.mrb[0].mxu0 %v10310
      %v10456 = vpop.f32.mrb[0].mxu0
      %v10457 = vadd.f32 0.0, %v10456
      %v10458 = vpop.f32.mrb[0].mxu0
      %v10459 = vpop.f32.mrb[0].mxu0
      %v10460 = vadd.f32 0.0, %v10459
      %v10461 = vpop.f32.mrb[0].mxu0
      %10462 = vmatprep.mubr.bf16.mxu0 0
      %10463 = vmatmul.mubr.bf16.gmra.mrb[0].mxu0 %v10313
      %v10464 = vpop.f32.mrb[0].mxu0
      %v10465 = vadd.f32 0.0, %v10464
      %v10466 = vpop.f32.mrb[0].mxu0
      %v10467 = vpop.f32.mrb[0].mxu0
      %v10468 = vadd.f32 0.0, %v10467
      %v10469 = vpop.f32.mrb[0].mxu0
      %10470 = vmatprep.mubr.bf16.mxu0 0
      %10471 = vmatmul.mubr.bf16.gmra.mrb[0].mxu0 %v10316
      %v10472 = vpop.f32.mrb[0].mxu0
      %v10473 = vadd.f32 0.0, %v10472
      %v10474 = vpop.f32.mrb[0].mxu0
      %v10475 = vpop.f32.mrb[0].mxu0
      %v10476 = vadd.f32 0.0, %v10475
      %v10477 = vpop.f32.mrb[0].mxu0
      %10478 = vdwg.mxu0
      %v10479 = vld [vmem:[%s231] sm:$0xff]
      %v10480 = vld [vmem:[%s231 + $0x8] sm:$0xff]
      %v10481 = vld [vmem:[%s231 + $0x10] sm:$0xff]
      %v10482 = vld [vmem:[%s231 + $0x18] sm:$0xff]
      %v10483 = vld [vmem:[%s231 + $0x20] sm:$0xff]
      %v10484 = vld [vmem:[%s231 + $0x28] sm:$0xff]
      %v10485 = vld [vmem:[%s231 + $0x30] sm:$0xff]
      %v10486 = vld [vmem:[%s231 + $0x38] sm:$0xff]
      %v10487 = vld [vmem:[%s231 + $0x40] sm:$0xff]
      %v10488 = vld [vmem:[%s231 + $0x48] sm:$0xff]
      %v10489 = vld [vmem:[%s231 + $0x50] sm:$0xff]
      %v10490 = vld [vmem:[%s231 + $0x58] sm:$0xff]
      %v10491 = vld [vmem:[%s231 + $0x60] sm:$0xff]
      %v10492 = vld [vmem:[%s231 + $0x68] sm:$0xff]
      %v10493 = vld [vmem:[%s231 + $0x70] sm:$0xff]
      %v10494 = vld [vmem:[%s231 + $0x78] sm:$0xff]
      %v10495 = vld [vmem:[%s231 + $0x80] sm:$0xff]
      %v10496 = vld [vmem:[%s231 + $0x88] sm:$0xff]
      %v10497 = vld [vmem:[%s231 + $0x90] sm:$0xff]
      %v10498 = vld [vmem:[%s231 + $0x98] sm:$0xff]
      %v10499 = vld [vmem:[%s231 + $0xa0] sm:$0xff]
      %v10500 = vld [vmem:[%s231 + $0xa8] sm:$0xff]
      %v10501 = vld [vmem:[%s231 + $0xb0] sm:$0xff]
      %v10502 = vld [vmem:[%s231 + $0xb8] sm:$0xff]
      %v10503 = vld [vmem:[%s231 + $0xc0] sm:$0xff]
      %v10504 = vld [vmem:[%s231 + $0xc8] sm:$0xff]
      %v10505 = vld [vmem:[%s231 + $0xd0] sm:$0xff]
      %v10506 = vld [vmem:[%s231 + $0xd8] sm:$0xff]
      %v10507 = vld [vmem:[%s231 + $0xe0] sm:$0xff]
      %v10508 = vld [vmem:[%s231 + $0xe8] sm:$0xff]
      %v10509 = vld [vmem:[%s231 + $0xf0] sm:$0xff]
      %v10510 = vld [vmem:[%s231 + $0xf8] sm:$0xff]
      %v10511 = vadd.f32 %v10479, %v10353
      %v10512 = vadd.f32 %v10480, %v10356
      %v10513 = vadd.f32 %v10481, %v10361
      %v10514 = vadd.f32 %v10482, %v10364
      %v10515 = vadd.f32 %v10483, %v10369
      %v10516 = vadd.f32 %v10484, %v10372
      %v10517 = vadd.f32 %v10485, %v10377
      %v10518 = vadd.f32 %v10486, %v10380
      %v10519 = vadd.f32 %v10487, %v10385
      %v10520 = vadd.f32 %v10488, %v10388
      %v10521 = vadd.f32 %v10489, %v10393
      %v10522 = vadd.f32 %v10490, %v10396
      %v10523 = vadd.f32 %v10491, %v10401
      %v10524 = vadd.f32 %v10492, %v10404
      %v10525 = vadd.f32 %v10493, %v10409
      %v10526 = vadd.f32 %v10494, %v10412
      %v10527 = vadd.f32 %v10495, %v10417
      %v10528 = vadd.f32 %v10496, %v10420
      %v10529 = vadd.f32 %v10497, %v10425
      %v10530 = vadd.f32 %v10498, %v10428
      %v10531 = vadd.f32 %v10499, %v10433
      %v10532 = vadd.f32 %v10500, %v10436
      %v10533 = vadd.f32 %v10501, %v10441
      %v10534 = vadd.f32 %v10502, %v10444
      %v10535 = vadd.f32 %v10503, %v10449
      %v10536 = vadd.f32 %v10504, %v10452
      %v10537 = vadd.f32 %v10505, %v10457
      %v10538 = vadd.f32 %v10506, %v10460
      %v10539 = vadd.f32 %v10507, %v10465
      %v10540 = vadd.f32 %v10508, %v10468
      %v10541 = vadd.f32 %v10509, %v10473
      %v10542 = vadd.f32 %v10510, %v10476
      %10543 = vst [vmem:[%s231] sm:$0xff] %v10511
      %10544 = vst [vmem:[%s231 + $0x8] sm:$0xff] %v10512
      %10545 = vst [vmem:[%s231 + $0x10] sm:$0xff] %v10513
      %10546 = vst [vmem:[%s231 + $0x18] sm:$0xff] %v10514
      %10547 = vst [vmem:[%s231 + $0x20] sm:$0xff] %v10515
      %10548 = vst [vmem:[%s231 + $0x28] sm:$0xff] %v10516
      %10549 = vst [vmem:[%s231 + $0x30] sm:$0xff] %v10517
      %10550 = vst [vmem:[%s231 + $0x38] sm:$0xff] %v10518
      %10551 = vst [vmem:[%s231 + $0x40] sm:$0xff] %v10519
      %10552 = vst [vmem:[%s231 + $0x48] sm:$0xff] %v10520
      %10553 = vst [vmem:[%s231 + $0x50] sm:$0xff] %v10521
      %10554 = vst [vmem:[%s231 + $0x58] sm:$0xff] %v10522
      %10555 = vst [vmem:[%s231 + $0x60] sm:$0xff] %v10523
      %10556 = vst [vmem:[%s231 + $0x68] sm:$0xff] %v10524
      %10557 = vst [vmem:[%s231 + $0x70] sm:$0xff] %v10525
      %10558 = vst [vmem:[%s231 + $0x78] sm:$0xff] %v10526
      %10559 = vst [vmem:[%s231 + $0x80] sm:$0xff] %v10527
      %10560 = vst [vmem:[%s231 + $0x88] sm:$0xff] %v10528
      %10561 = vst [vmem:[%s231 + $0x90] sm:$0xff] %v10529
      %10562 = vst [vmem:[%s231 + $0x98] sm:$0xff] %v10530
      %10563 = vst [vmem:[%s231 + $0xa0] sm:$0xff] %v10531
      %10564 = vst [vmem:[%s231 + $0xa8] sm:$0xff] %v10532
      %10565 = vst [vmem:[%s231 + $0xb0] sm:$0xff] %v10533
      %10566 = vst [vmem:[%s231 + $0xb8] sm:$0xff] %v10534
      %10567 = vst [vmem:[%s231 + $0xc0] sm:$0xff] %v10535
      %10568 = vst [vmem:[%s231 + $0xc8] sm:$0xff] %v10536
      %10569 = vst [vmem:[%s231 + $0xd0] sm:$0xff] %v10537
      %10570 = vst [vmem:[%s231 + $0xd8] sm:$0xff] %v10538
      %10571 = vst [vmem:[%s231 + $0xe0] sm:$0xff] %v10539
      %10572 = vst [vmem:[%s231 + $0xe8] sm:$0xff] %v10540
      %10573 = vst [vmem:[%s231 + $0xf0] sm:$0xff] %v10541
      %10574 = vst [vmem:[%s231 + $0xf8] sm:$0xff] %v10542
      %v10575 = vld [vmem:[%s231] sm:$0xff]
      %v10576 = vld [vmem:[%s231 + $0x8] sm:$0xff]
      %v10577 = vld [vmem:[%s231 + $0x10] sm:$0xff]
      %v10578 = vld [vmem:[%s231 + $0x18] sm:$0xff]
      %v10579 = vld [vmem:[%s231 + $0x20] sm:$0xff]
      %v10580 = vld [vmem:[%s231 + $0x28] sm:$0xff]
      %v10581 = vld [vmem:[%s231 + $0x30] sm:$0xff]
      %v10582 = vld [vmem:[%s231 + $0x38] sm:$0xff]
      %v10583 = vld [vmem:[%s231 + $0x40] sm:$0xff]
      %v10584 = vld [vmem:[%s231 + $0x48] sm:$0xff]
      %v10585 = vld [vmem:[%s231 + $0x50] sm:$0xff]
      %v10586 = vld [vmem:[%s231 + $0x58] sm:$0xff]
      %v10587 = vld [vmem:[%s231 + $0x60] sm:$0xff]
      %v10588 = vld [vmem:[%s231 + $0x68] sm:$0xff]
      %v10589 = vld [vmem:[%s231 + $0x70] sm:$0xff]
      %v10590 = vld [vmem:[%s231 + $0x78] sm:$0xff]
      %v10591 = vld [vmem:[%s231 + $0x80] sm:$0xff]
      %v10592 = vld [vmem:[%s231 + $0x88] sm:$0xff]
      %v10593 = vld [vmem:[%s231 + $0x90] sm:$0xff]
      %v10594 = vld [vmem:[%s231 + $0x98] sm:$0xff]
      %v10595 = vld [vmem:[%s231 + $0xa0] sm:$0xff]
      %v10596 = vld [vmem:[%s231 + $0xa8] sm:$0xff]
      %v10597 = vld [vmem:[%s231 + $0xb0] sm:$0xff]
      %v10598 = vld [vmem:[%s231 + $0xb8] sm:$0xff]
      %v10599 = vld [vmem:[%s231 + $0xc0] sm:$0xff]
      %v10600 = vld [vmem:[%s231 + $0xc8] sm:$0xff]
      %v10601 = vld [vmem:[%s231 + $0xd0] sm:$0xff]
      %v10602 = vld [vmem:[%s231 + $0xd8] sm:$0xff]
      %v10603 = vld [vmem:[%s231 + $0xe0] sm:$0xff]
      %v10604 = vld [vmem:[%s231 + $0xe8] sm:$0xff]
      %v10605 = vld [vmem:[%s231 + $0xf0] sm:$0xff]
      %v10606 = vld [vmem:[%s231 + $0xf8] sm:$0xff]
      %v10607 = vmax.f32 %v10575, 0.0
      %v10608 = vmax.f32 %v10576, 0.0
      %v10609 = vmax.f32 %v10577, 0.0
      %v10610 = vmax.f32 %v10578, 0.0
      %v10611 = vmax.f32 %v10579, 0.0
      %v10612 = vmax.f32 %v10580, 0.0
      %v10613 = vmax.f32 %v10581, 0.0
      %v10614 = vmax.f32 %v10582, 0.0
      %v10615 = vmax.f32 %v10583, 0.0
      %v10616 = vmax.f32 %v10584, 0.0
      %v10617 = vmax.f32 %v10585, 0.0
      %v10618 = vmax.f32 %v10586, 0.0
      %v10619 = vmax.f32 %v10587, 0.0
      %v10620 = vmax.f32 %v10588, 0.0
      %v10621 = vmax.f32 %v10589, 0.0
      %v10622 = vmax.f32 %v10590, 0.0
      %v10623 = vmax.f32 %v10591, 0.0
      %v10624 = vmax.f32 %v10592, 0.0
      %v10625 = vmax.f32 %v10593, 0.0
      %v10626 = vmax.f32 %v10594, 0.0
      %v10627 = vmax.f32 %v10595, 0.0
      %v10628 = vmax.f32 %v10596, 0.0
      %v10629 = vmax.f32 %v10597, 0.0
      %v10630 = vmax.f32 %v10598, 0.0
      %v10631 = vmax.f32 %v10599, 0.0
      %v10632 = vmax.f32 %v10600, 0.0
      %v10633 = vmax.f32 %v10601, 0.0
      %v10634 = vmax.f32 %v10602, 0.0
      %v10635 = vmax.f32 %v10603, 0.0
      %v10636 = vmax.f32 %v10604, 0.0
      %v10637 = vmax.f32 %v10605, 0.0
      %v10638 = vmax.f32 %v10606, 0.0
      %10639 = vst [vmem:[%s231] sm:$0xff] %v10607
      %10640 = vst [vmem:[%s231 + $0x8] sm:$0xff] %v10608
      %10641 = vst [vmem:[%s231 + $0x10] sm:$0xff] %v10609
      %10642 = vst [vmem:[%s231 + $0x18] sm:$0xff] %v10610
      %10643 = vst [vmem:[%s231 + $0x20] sm:$0xff] %v10611
      %10644 = vst [vmem:[%s231 + $0x28] sm:$0xff] %v10612
      %10645 = vst [vmem:[%s231 + $0x30] sm:$0xff] %v10613
      %10646 = vst [vmem:[%s231 + $0x38] sm:$0xff] %v10614
      %10647 = vst [vmem:[%s231 + $0x40] sm:$0xff] %v10615
      %10648 = vst [vmem:[%s231 + $0x48] sm:$0xff] %v10616
      %10649 = vst [vmem:[%s231 + $0x50] sm:$0xff] %v10617
      %10650 = vst [vmem:[%s231 + $0x58] sm:$0xff] %v10618
      %10651 = vst [vmem:[%s231 + $0x60] sm:$0xff] %v10619
      %10652 = vst [vmem:[%s231 + $0x68] sm:$0xff] %v10620
      %10653 = vst [vmem:[%s231 + $0x70] sm:$0xff] %v10621
      %10654 = vst [vmem:[%s231 + $0x78] sm:$0xff] %v10622
      %10655 = vst [vmem:[%s231 + $0x80] sm:$0xff] %v10623
      %10656 = vst [vmem:[%s231 + $0x88] sm:$0xff] %v10624
      %10657 = vst [vmem:[%s231 + $0x90] sm:$0xff] %v10625
      %10658 = vst [vmem:[%s231 + $0x98] sm:$0xff] %v10626
      %10659 = vst [vmem:[%s231 + $0xa0] sm:$0xff] %v10627
      %10660 = vst [vmem:[%s231 + $0xa8] sm:$0xff] %v10628
      %10661 = vst [vmem:[%s231 + $0xb0] sm:$0xff] %v10629
      %10662 = vst [vmem:[%s231 + $0xb8] sm:$0xff] %v10630
      %10663 = vst [vmem:[%s231 + $0xc0] sm:$0xff] %v10631
      %10664 = vst [vmem:[%s231 + $0xc8] sm:$0xff] %v10632
      %10665 = vst [vmem:[%s231 + $0xd0] sm:$0xff] %v10633
      %10666 = vst [vmem:[%s231 + $0xd8] sm:$0xff] %v10634
      %10667 = vst [vmem:[%s231 + $0xe0] sm:$0xff] %v10635
      %10668 = vst [vmem:[%s231 + $0xe8] sm:$0xff] %v10636
      %10669 = vst [vmem:[%s231 + $0xf0] sm:$0xff] %v10637
      %10670 = vst [vmem:[%s231 + $0xf8] sm:$0xff] %v10638
      %s10671 = smul.u32 4, %s16
      %p10672 = scmp.lt.s32.totalorder %s10671, 7
      %s10673 = scalar_select %p10672, %s10671, 7
      %s10674 = smul.addr %s10673, 8
      %s10675 = smul.addr %s10674, 8
      %s10676 = scalar_lea.vmem %s5, %s10675
      // Predicated region
      $region41: #{model_forward.1} parent=39 // pred_check
        %p10677 = pneg %p144
      $region42: #{model_forward.1} parent=39 // pred_check_branch
        %10679 = sbr.rel (%p10677) target = $region44
      $region43: #{model_forward.1} parent=39 // pred_region
        %s10680 = smul.u32 4, %s16
      $region44: #{model_forward.1} parent=39 // pred_fallthru
        _
    $region40: #{model_forward.1} parent=5 // pred_fallthru
      _
    %p10681 = scmp.le.s32.totalorder 2, %s11
    // Predicated region
    $region45: #{model_forward.1} parent=5 // pred_check
      %p10682 = pneg %p10681
    $region46: #{model_forward.1} parent=5 // pred_check_branch
      %10684 = sbr.rel (%p10682) target = $region48
    $region47: #{model_forward.1} parent=5 // pred_region
      %s10685 = ssub.s32 %s11, 2
      // Predicated region
      $region49: #{model_forward.1} parent=47 // pred_check
        %p10686 = pneg %p150
      $region50: #{model_forward.1} parent=47 // pred_check_branch
        %10688 = sbr.rel (%p10686) target = $region52
      $region51: #{model_forward.1} parent=47 // pred_region
        %s10689 = smul.u32 4, %s17
        %p10690 = scmp.lt.s32.totalorder %s10689, 7
        %s10691 = scalar_select %p10690, %s10689, 7
        %s10692 = smul.addr %s10691, 8
        %s10693 = smul.addr %s10692, 8
        %s10694 = scalar_lea.vmem %s5, %s10693
      $region52: #{model_forward.1} parent=47 // pred_fallthru
        _
    $region48: #{model_forward.1} parent=5 // pred_fallthru
      _
  $region6: #{model_forward.1} parent=0 // loop_footer
    %s15 = sadd.s32 1, %s11
  $region7: #{model_forward.1} parent=0 // loop_footer_branch
    %10 = sbr.rel target = $region3
  $region8: #{model_forward.1} parent=0 // loop_exit
    _

</llo_original>
